<compile_context>
chip_gen: v7x
topology: tpu7x:2x2x1
jax: 0.10.0
libtpu: 0.0.40
codegen_flags: <defaults>
</compile_context>

<pallas_src>
import functools

import jax
import jax.numpy as jnp
from jax import lax
from jax.experimental import pallas as pl
from jax.experimental.pallas import tpu as pltpu


# ------------------------------ fused kernel --------------------------------

def fused_cnn_kernel(taps1_ref, w1c_ref, b1c_ref, w2c_ref, b2c_ref,
                     w1_hbm, b1_ref, w2_ref, b2_ref,
                     out_ref,
                     conv1_scr, pool1_scr, taps2_scr, conv2_scr, x1_scr,
                     w1_vmem, w1_sem, *, batch):
    """Whole SimpleCNN forward in one VMEM-resident kernel.

    taps1_ref : (B*784, 16) bf16  conv1 im2col (K padded 9->16), rows (b,i,jperm)
    w1c_ref   : (16, 32)    bf16  conv1 weights, rows ordered (kh,kw)
    w2c_ref   : (288, 64)   bf16  conv2 weights, rows ordered (kh,kw,ci)
    w1_hbm    : (3136, 128) bf16  fc1 weights, left in HBM (manual DMA)
    w2_ref    : (128, 128)  bf16  fc2 weights, outputs zero-padded 10->128
    out_ref   : (B, 128)    f32   logits (first 10 lanes valid)
    """
    Wp2 = 16          # conv2 padded spatial extent (14 + 2)

    # -- prologue: start the fc1 weight fetch so it overlaps all conv work.
    w1_copy = pltpu.make_async_copy(w1_hbm, w1_vmem, w1_sem)
    w1_copy.start()

    # -- stage 1: conv1 as ONE im2col matmul + bias + ReLU.
    c1 = jnp.dot(taps1_ref[...], w1c_ref[...],
                 preferred_element_type=jnp.float32)           # (B*784, 32)
    conv1_scr[...] = jnp.maximum(c1 + b1c_ref[...], 0.0)

    # -- stage 2: 2x2/2 max-pool of conv1, written straight into the
    #    zero-initialised padded flat grid that conv2 consumes
    #    (row r = b*256 + (ho+1)*16 + (wo+1); border ring + tail stay zero).
    #    conv1_scr rows per (b,i) are [even-j block | odd-j block], so every
    #    pool corner is a CONTIGUOUS 14-row slice -- no strided loads.
    pool1_scr[...] = jnp.zeros_like(pool1_scr)
    for b in range(batch):
        for ho in range(14):
            base = b * 784 + (2 * ho) * 28
            p = jnp.maximum(
                jnp.maximum(conv1_scr[pl.ds(base, 14), :],
                            conv1_scr[pl.ds(base + 14, 14), :]),
                jnp.maximum(conv1_scr[pl.ds(base + 28, 14), :],
                            conv1_scr[pl.ds(base + 42, 14), :]))
            dst = b * 256 + (ho + 1) * Wp2 + 1
            pool1_scr[pl.ds(dst, 14), :] = p

    # -- stage 3: conv2 im2col in VMEM (9 shifted slab copies -> (B*256, 288)),
    #    then a single K=288 MXU dot (full depth instead of 9x K=32 + adds).
    m2 = batch * 256
    for kh in range(3):
        for kw in range(3):
            t = kh * 3 + kw
            taps2_scr[:, pl.ds(t * 32, 32)] = (
                pool1_scr[pl.ds(kh * Wp2 + kw, m2), :].astype(jnp.bfloat16))
    c2 = jnp.dot(taps2_scr[...], w2c_ref[...],
                 preferred_element_type=jnp.float32)           # (B*256, 64)
    conv2_scr[...] = jnp.maximum(c2 + b2c_ref[...], 0.0)

    # -- stage 4: 2x2/2 max-pool of conv2, flattened directly into the fc1
    #    input slab (B, 3136) in (h, w, c) order (fc1 weights pre-permuted).
    #    Only the B*7*7 valid anchors are touched; halo anchors are ignored.
    for b in range(batch):
        for po in range(7):
            r0 = b * 256 + (2 * po) * Wp2
            v = jnp.maximum(conv2_scr[pl.ds(r0, Wp2), :],
                            conv2_scr[pl.ds(r0 + Wp2, Wp2), :])   # vertical max
            for qo in range(7):
                hm = jnp.maximum(v[2 * qo:2 * qo + 1, :],
                                 v[2 * qo + 1:2 * qo + 2, :])     # (1, 64)
                x1_scr[pl.ds(b, 1), pl.ds((po * 7 + qo) * 64, 64)] = hm

    # -- stage 5: MLP.  Wait for the prefetched fc1 weights, then two dots.
    w1_copy.wait()
    h = jnp.dot(x1_scr[...].astype(jnp.bfloat16), w1_vmem[...],
                preferred_element_type=jnp.float32)            # (B, 128)
    h = jnp.maximum(h + b1_ref[...], 0.0)
    out_ref[...] = jnp.dot(h.astype(jnp.bfloat16), w2_ref[...],
                           preferred_element_type=jnp.float32) + b2_ref[...]


# ------------------------- parameter prep (one-time) ------------------------

def prepare_params(params):
    """Hoist every weight re-layout out of the forward path (done once)."""
    (c1w, c1b, c2w, c2b, f1w, f1b, f2w, f2b) = params

    # conv1: (32,1,3,3) -> (16, 32), rows ordered (kh,kw), K zero-padded 9->16.
    w1c = jnp.transpose(c1w, (2, 3, 1, 0)).reshape(9, 32)
    w1c = jnp.pad(w1c, ((0, 7), (0, 0))).astype(jnp.bfloat16)
    b1c = c1b.reshape(1, -1).astype(jnp.float32)

    # conv2: (64,32,3,3) -> (288, 64), rows ordered (kh, kw, ci).
    w2c = jnp.transpose(c2w, (2, 3, 1, 0)).reshape(9 * 32, 64).astype(jnp.bfloat16)
    b2c = c2b.reshape(1, -1).astype(jnp.float32)

    # fc1: permute input columns from PyTorch's NCHW flatten (c,h,w) to the
    # kernel's NHWC flatten (h,w,c) so the activation needs NO runtime shuffle.
    w1 = f1w.reshape(128, 64, 7, 7).transpose(0, 2, 3, 1).reshape(128, 3136)
    w1 = jnp.transpose(w1).astype(jnp.bfloat16)                 # (3136, 128)
    b1 = f1b.reshape(1, -1).astype(jnp.float32)

    # fc2: pre-transpose and pad the 10 outputs to a lane-dense 128.
    w2 = jnp.zeros((128, 128), jnp.float32).at[:, :10].set(f2w.T).astype(jnp.bfloat16)
    b2 = jnp.zeros((1, 128), jnp.float32).at[0, :10].set(f2b)

    return (w1c, b1c, w2c, b2c, w1, b1, w2, b2)


# --------------------------------- forward ----------------------------------

@jax.jit
def simple_cnn_forward(x_nchw, prep):
    w1c, b1c, w2c, b2c, w1, b1, w2, b2 = prep
    B = x_nchw.shape[0]
    H = W = 28

    # conv1 im2col built in the wrapper (tiny 1-channel input; sanctioned):
    # 9 statically shifted slices of the zero-padded image, then the j axis is
    # reordered to [even j | odd j] so the in-kernel pool uses contiguous rows.
    xp = jnp.pad(x_nchw[:, 0], ((0, 0), (1, 1), (1, 1)))        # (B, 30, 30)
    taps = jnp.stack([xp[:, kh:kh + H, kw:kw + W]
                      for kh in range(3) for kw in range(3)], axis=-1)
    taps = jnp.concatenate([taps[:, :, 0::2, :], taps[:, :, 1::2, :]], axis=2)
    taps1 = jnp.pad(taps.reshape(B * H * W, 9),
                    ((0, 0), (0, 7))).astype(jnp.bfloat16)      # (B*784, 16)

    kernel = functools.partial(fused_cnn_kernel, batch=B)
    vmem = pltpu.MemorySpace.VMEM
    out128 = pl.pallas_call(
        kernel,
        out_shape=jax.ShapeDtypeStruct((B, 128), jnp.float32),
        in_specs=[pl.BlockSpec(memory_space=vmem),      # taps1
                  pl.BlockSpec(memory_space=vmem),      # conv1 w
                  pl.BlockSpec(memory_space=vmem),      # conv1 b
                  pl.BlockSpec(memory_space=vmem),      # conv2 w
                  pl.BlockSpec(memory_space=vmem),      # conv2 b
                  pl.BlockSpec(memory_space=pl.ANY),    # fc1 w (stays in HBM)
                  pl.BlockSpec(memory_space=vmem),      # fc1 b
                  pl.BlockSpec(memory_space=vmem),      # fc2 w
                  pl.BlockSpec(memory_space=vmem)],     # fc2 b
        out_specs=pl.BlockSpec(memory_space=vmem),
        scratch_shapes=[
            pltpu.VMEM((B * 784, 32), jnp.float32),       # conv1 relu map
            pltpu.VMEM((B * 256 + 40, 32), jnp.float32),  # pool1 on conv2 padded grid
            pltpu.VMEM((B * 256, 288), jnp.bfloat16),     # conv2 im2col taps
            pltpu.VMEM((B * 256, 64), jnp.float32),       # conv2 relu map
            pltpu.VMEM((B, 3136), jnp.float32),           # fc1 input slab (NHWC)
            pltpu.VMEM((3136, 128), jnp.bfloat16),        # fc1 weight landing buffer
            pltpu.SemaphoreType.DMA(()),                  # fc1 weight DMA sem
        ],
    )(taps1, w1c, b1c, w2c, b2c, w1, b1, w2, b2)
    return out128[:, :10]                                 # (B, 10)


# ------------------------- pure-JAX reference model -------------------------

def reference_forward(x_nchw, params):
    (c1w, c1b, c2w, c2b, f1w, f1b, f2w, f2b) = params
    dn = ('NCHW', 'OIHW', 'NCHW')

    def pool(y):
        return lax.reduce_window(y, -jnp.inf, lax.max,
                                 (1, 1, 2, 2), (1, 1, 2, 2), 'VALID')

    y = lax.conv_general_dilated(x_nchw, c1w, (1, 1), 'SAME',
                                 dimension_numbers=dn)
    y = pool(jax.nn.relu(y + c1b[None, :, None, None]))
    y = lax.conv_general_dilated(y, c2w, (1, 1), 'SAME',
                                 dimension_numbers=dn)
    y = pool(jax.nn.relu(y + c2b[None, :, None, None]))
    y = y.reshape(y.shape[0], -1)
    y = jax.nn.relu(y @ f1w.T + f1b)
    return y @ f2w.T + f2b


# ---------------------------------- main ------------------------------------

if __name__ == "__main__":
    key = jax.random.PRNGKey(0)
    ks = jax.random.split(key, 9)

    # Deterministic synthetic parameters (PyTorch layouts: conv OIHW, fc (out,in)).
    conv1_w = 0.10 * jax.random.normal(ks[0], (32, 1, 3, 3), jnp.float32)
    conv1_b = 0.10 * jax.random.normal(ks[1], (32,), jnp.float32)
    conv2_w = 0.05 * jax.random.normal(ks[2], (64, 32, 3, 3), jnp.float32)
    conv2_b = 0.05 * jax.random.normal(ks[3], (64,), jnp.float32)
    fc1_w = 0.02 * jax.random.normal(ks[4], (128, 64 * 7 * 7), jnp.float32)
    fc1_b = 0.02 * jax.random.normal(ks[5], (128,), jnp.float32)
    fc2_w = 0.05 * jax.random.normal(ks[6], (10, 128), jnp.float32)
    fc2_b = 0.05 * jax.random.normal(ks[7], (10,), jnp.float32)
    params = (conv1_w, conv1_b, conv2_w, conv2_b,
              fc1_w, fc1_b, fc2_w, fc2_b)

    # One-time weight re-layout (outside the forward path).
    prep = prepare_params(params)

    # Input: NCHW, MNIST-sized (fc1 dim 64*7*7 implies 28x28 single-channel).
    x = jax.random.normal(ks[8], (2, 1, 28, 28), jnp.float32)

    out = jax.block_until_ready(simple_cnn_forward(x, prep))
    ref = jax.block_until_ready(reference_forward(x, params))

    assert out.shape == (2, 10), out.shape
    assert jnp.all(jnp.isfinite(out))
    # bf16 matmul operands with f32 accumulation -> small, bounded error.
    err = jnp.max(jnp.abs(out - ref))
    assert jnp.allclose(out, ref, rtol=2e-2, atol=2e-2), (
        "mismatch vs reference (max abs err %.5f):\n%s\n%s" % (err, out, ref))

    print("KERNEL_OK")
</pallas_src>

<mosaic_0001>
module attributes {stable_mosaic.version = 11 : i64} {
  func.func @fused_cnn_kernel(%arg0: memref<1568x16xbf16, #tpu.memory_space<vmem>>, %arg1: memref<16x32xbf16, #tpu.memory_space<vmem>>, %arg2: memref<1x32xf32, #tpu.memory_space<vmem>>, %arg3: memref<288x64xbf16, #tpu.memory_space<vmem>>, %arg4: memref<1x64xf32, #tpu.memory_space<vmem>>, %arg5: memref<3136x128xbf16, #tpu.memory_space<any>>, %arg6: memref<1x128xf32, #tpu.memory_space<vmem>>, %arg7: memref<128x128xbf16, #tpu.memory_space<vmem>>, %arg8: memref<1x128xf32, #tpu.memory_space<vmem>>, %arg9: memref<2x128xf32, #tpu.memory_space<vmem>>, %arg10: memref<1568x32xf32, #tpu.memory_space<vmem>>, %arg11: memref<552x32xf32, #tpu.memory_space<vmem>>, %arg12: memref<512x288xbf16, #tpu.memory_space<vmem>>, %arg13: memref<512x64xf32, #tpu.memory_space<vmem>>, %arg14: memref<2x3136xf32, #tpu.memory_space<vmem>>, %arg15: memref<3136x128xbf16, #tpu.memory_space<vmem>>, %arg16: memref<!tpu.dma_semaphore, #tpu.memory_space<semaphore_mem>>) attributes {dimension_semantics = [], scalar_prefetch = 0 : i64, scratch_operands = 7 : i64, tpu.core_type = #tpu.core_type<tc>} {
    tpu.enqueue_dma source(%arg5 : memref<3136x128xbf16, #tpu.memory_space<any>>) target(%arg15 : memref<3136x128xbf16, #tpu.memory_space<vmem>>) target_semaphore(%arg16 : memref<!tpu.dma_semaphore, #tpu.memory_space<semaphore_mem>>)
    %c0 = arith.constant 0 : index
    %c0_0 = arith.constant 0 : index
    %0 = vector.load %arg0[%c0, %c0_0] : memref<1568x16xbf16, #tpu.memory_space<vmem>>, vector<1568x16xbf16>
    %c0_1 = arith.constant 0 : index
    %c0_2 = arith.constant 0 : index
    %1 = vector.load %arg1[%c0_1, %c0_2] : memref<16x32xbf16, #tpu.memory_space<vmem>>, vector<16x32xbf16>
    %cst = arith.constant dense<0.000000e+00> : vector<1568x32xf32>
    %2 = tpu.matmul %0, %1, %cst {dimension_numbers = #tpu.dot_dimension_numbers<[1], [0], [0], [1], [0, 0, 1, 1], [], []>} : vector<1568x16xbf16>, vector<16x32xbf16>, vector<1568x32xf32> -> vector<1568x32xf32>
    %c0_3 = arith.constant 0 : index
    %c0_4 = arith.constant 0 : index
    %3 = vector.load %arg2[%c0_3, %c0_4] : memref<1x32xf32, #tpu.memory_space<vmem>>, vector<1x32xf32>
    %4 = vector.broadcast %3 : vector<1x32xf32> to vector<1568x32xf32>
    %5 = arith.addf %2, %4 : vector<1568x32xf32>
    %cst_5 = arith.constant 0.000000e+00 : f32
    %6 = vector.broadcast %cst_5 : f32 to vector<1568x32xf32>
    %7 = arith.maximumf %5, %6 : vector<1568x32xf32>
    %c0_6 = arith.constant 0 : index
    %c0_7 = arith.constant 0 : index
    %8 = vector.load %arg10[%c0_6, %c0_7] : memref<1568x32xf32, #tpu.memory_space<vmem>>, vector<1568x32xf32>
    tpu.vector_store %arg10[%c0_6, %c0_7], %7 {strides = array<i32>} : memref<1568x32xf32, #tpu.memory_space<vmem>>, vector<1568x32xf32>,
    %cst_8 = arith.constant 0.000000e+00 : f32
    %9 = vector.broadcast %cst_8 : f32 to vector<552x32xf32>
    %c0_9 = arith.constant 0 : index
    %c0_10 = arith.constant 0 : index
    %10 = vector.load %arg11[%c0_9, %c0_10] : memref<552x32xf32, #tpu.memory_space<vmem>>, vector<552x32xf32>
    tpu.vector_store %arg11[%c0_9, %c0_10], %9 {strides = array<i32>} : memref<552x32xf32, #tpu.memory_space<vmem>>, vector<552x32xf32>,
    %c0_11 = arith.constant 0 : index
    %c0_12 = arith.constant 0 : index
    %11 = vector.load %arg10[%c0_11, %c0_12] : memref<1568x32xf32, #tpu.memory_space<vmem>>, vector<14x32xf32>
    %c14 = arith.constant 14 : index
    %c0_13 = arith.constant 0 : index
    %12 = vector.load %arg10[%c14, %c0_13] : memref<1568x32xf32, #tpu.memory_space<vmem>>, vector<14x32xf32>
    %13 = arith.maximumf %11, %12 : vector<14x32xf32>
    %c28 = arith.constant 28 : index
    %c0_14 = arith.constant 0 : index
    %14 = vector.load %arg10[%c28, %c0_14] : memref<1568x32xf32, #tpu.memory_space<vmem>>, vector<14x32xf32>
    %c42 = arith.constant 42 : index
    %c0_15 = arith.constant 0 : index
    %15 = vector.load %arg10[%c42, %c0_15] : memref<1568x32xf32, #tpu.memory_space<vmem>>, vector<14x32xf32>
    %16 = arith.maximumf %14, %15 : vector<14x32xf32>
    %17 = arith.maximumf %13, %16 : vector<14x32xf32>
    %c17 = arith.constant 17 : index
    %c0_16 = arith.constant 0 : index
    %18 = vector.load %arg11[%c17, %c0_16] : memref<552x32xf32, #tpu.memory_space<vmem>>, vector<14x32xf32>
    tpu.vector_store %arg11[%c17, %c0_16], %17 {strides = array<i32>} : memref<552x32xf32, #tpu.memory_space<vmem>>, vector<14x32xf32>,
    %c56 = arith.constant 56 : index
    %c0_17 = arith.constant 0 : index
    %19 = vector.load %arg10[%c56, %c0_17] : memref<1568x32xf32, #tpu.memory_space<vmem>>, vector<14x32xf32>
    %c70 = arith.constant 70 : index
    %c0_18 = arith.constant 0 : index
    %20 = vector.load %arg10[%c70, %c0_18] : memref<1568x32xf32, #tpu.memory_space<vmem>>, vector<14x32xf32>
    %21 = arith.maximumf %19, %20 : vector<14x32xf32>
    %c84 = arith.constant 84 : index
    %c0_19 = arith.constant 0 : index
    %22 = vector.load %arg10[%c84, %c0_19] : memref<1568x32xf32, #tpu.memory_space<vmem>>, vector<14x32xf32>
    %c98 = arith.constant 98 : index
    %c0_20 = arith.constant 0 : index
    %23 = vector.load %arg10[%c98, %c0_20] : memref<1568x32xf32, #tpu.memory_space<vmem>>, vector<14x32xf32>
    %24 = arith.maximumf %22, %23 : vector<14x32xf32>
    %25 = arith.maximumf %21, %24 : vector<14x32xf32>
    %c33 = arith.constant 33 : index
    %c0_21 = arith.constant 0 : index
    %26 = vector.load %arg11[%c33, %c0_21] : memref<552x32xf32, #tpu.memory_space<vmem>>, vector<14x32xf32>
    tpu.vector_store %arg11[%c33, %c0_21], %25 {strides = array<i32>} : memref<552x32xf32, #tpu.memory_space<vmem>>, vector<14x32xf32>,
    %c112 = arith.constant 112 : index
    %c0_22 = arith.constant 0 : index
    %27 = vector.load %arg10[%c112, %c0_22] : memref<1568x32xf32, #tpu.memory_space<vmem>>, vector<14x32xf32>
    %c126 = arith.constant 126 : index
    %c0_23 = arith.constant 0 : index
    %28 = vector.load %arg10[%c126, %c0_23] : memref<1568x32xf32, #tpu.memory_space<vmem>>, vector<14x32xf32>
    %29 = arith.maximumf %27, %28 : vector<14x32xf32>
    %c140 = arith.constant 140 : index
    %c0_24 = arith.constant 0 : index
    %30 = vector.load %arg10[%c140, %c0_24] : memref<1568x32xf32, #tpu.memory_space<vmem>>, vector<14x32xf32>
    %c154 = arith.constant 154 : index
    %c0_25 = arith.constant 0 : index
    %31 = vector.load %arg10[%c154, %c0_25] : memref<1568x32xf32, #tpu.memory_space<vmem>>, vector<14x32xf32>
    %32 = arith.maximumf %30, %31 : vector<14x32xf32>
    %33 = arith.maximumf %29, %32 : vector<14x32xf32>
    %c49 = arith.constant 49 : index
    %c0_26 = arith.constant 0 : index
    %34 = vector.load %arg11[%c49, %c0_26] : memref<552x32xf32, #tpu.memory_space<vmem>>, vector<14x32xf32>
    tpu.vector_store %arg11[%c49, %c0_26], %33 {strides = array<i32>} : memref<552x32xf32, #tpu.memory_space<vmem>>, vector<14x32xf32>,
    %c168 = arith.constant 168 : index
    %c0_27 = arith.constant 0 : index
    %35 = vector.load %arg10[%c168, %c0_27] : memref<1568x32xf32, #tpu.memory_space<vmem>>, vector<14x32xf32>
    %c182 = arith.constant 182 : index
    %c0_28 = arith.constant 0 : index
    %36 = vector.load %arg10[%c182, %c0_28] : memref<1568x32xf32, #tpu.memory_space<vmem>>, vector<14x32xf32>
    %37 = arith.maximumf %35, %36 : vector<14x32xf32>
    %c196 = arith.constant 196 : index
    %c0_29 = arith.constant 0 : index
    %38 = vector.load %arg10[%c196, %c0_29] : memref<1568x32xf32, #tpu.memory_space<vmem>>, vector<14x32xf32>
    %c210 = arith.constant 210 : index
    %c0_30 = arith.constant 0 : index
    %39 = vector.load %arg10[%c210, %c0_30] : memref<1568x32xf32, #tpu.memory_space<vmem>>, vector<14x32xf32>
    %40 = arith.maximumf %38, %39 : vector<14x32xf32>
    %41 = arith.maximumf %37, %40 : vector<14x32xf32>
    %c65 = arith.constant 65 : index
    %c0_31 = arith.constant 0 : index
    %42 = vector.load %arg11[%c65, %c0_31] : memref<552x32xf32, #tpu.memory_space<vmem>>, vector<14x32xf32>
    tpu.vector_store %arg11[%c65, %c0_31], %41 {strides = array<i32>} : memref<552x32xf32, #tpu.memory_space<vmem>>, vector<14x32xf32>,
    %c224 = arith.constant 224 : index
    %c0_32 = arith.constant 0 : index
    %43 = vector.load %arg10[%c224, %c0_32] : memref<1568x32xf32, #tpu.memory_space<vmem>>, vector<14x32xf32>
    %c238 = arith.constant 238 : index
    %c0_33 = arith.constant 0 : index
    %44 = vector.load %arg10[%c238, %c0_33] : memref<1568x32xf32, #tpu.memory_space<vmem>>, vector<14x32xf32>
    %45 = arith.maximumf %43, %44 : vector<14x32xf32>
    %c252 = arith.constant 252 : index
    %c0_34 = arith.constant 0 : index
    %46 = vector.load %arg10[%c252, %c0_34] : memref<1568x32xf32, #tpu.memory_space<vmem>>, vector<14x32xf32>
    %c266 = arith.constant 266 : index
    %c0_35 = arith.constant 0 : index
    %47 = vector.load %arg10[%c266, %c0_35] : memref<1568x32xf32, #tpu.memory_space<vmem>>, vector<14x32xf32>
    %48 = arith.maximumf %46, %47 : vector<14x32xf32>
    %49 = arith.maximumf %45, %48 : vector<14x32xf32>
    %c81 = arith.constant 81 : index
    %c0_36 = arith.constant 0 : index
    %50 = vector.load %arg11[%c81, %c0_36] : memref<552x32xf32, #tpu.memory_space<vmem>>, vector<14x32xf32>
    tpu.vector_store %arg11[%c81, %c0_36], %49 {strides = array<i32>} : memref<552x32xf32, #tpu.memory_space<vmem>>, vector<14x32xf32>,
    %c280 = arith.constant 280 : index
    %c0_37 = arith.constant 0 : index
    %51 = vector.load %arg10[%c280, %c0_37] : memref<1568x32xf32, #tpu.memory_space<vmem>>, vector<14x32xf32>
    %c294 = arith.constant 294 : index
    %c0_38 = arith.constant 0 : index
    %52 = vector.load %arg10[%c294, %c0_38] : memref<1568x32xf32, #tpu.memory_space<vmem>>, vector<14x32xf32>
    %53 = arith.maximumf %51, %52 : vector<14x32xf32>
    %c308 = arith.constant 308 : index
    %c0_39 = arith.constant 0 : index
    %54 = vector.load %arg10[%c308, %c0_39] : memref<1568x32xf32, #tpu.memory_space<vmem>>, vector<14x32xf32>
    %c322 = arith.constant 322 : index
    %c0_40 = arith.constant 0 : index
    %55 = vector.load %arg10[%c322, %c0_40] : memref<1568x32xf32, #tpu.memory_space<vmem>>, vector<14x32xf32>
    %56 = arith.maximumf %54, %55 : vector<14x32xf32>
    %57 = arith.maximumf %53, %56 : vector<14x32xf32>
    %c97 = arith.constant 97 : index
    %c0_41 = arith.constant 0 : index
    %58 = vector.load %arg11[%c97, %c0_41] : memref<552x32xf32, #tpu.memory_space<vmem>>, vector<14x32xf32>
    tpu.vector_store %arg11[%c97, %c0_41], %57 {strides = array<i32>} : memref<552x32xf32, #tpu.memory_space<vmem>>, vector<14x32xf32>,
    %c336 = arith.constant 336 : index
    %c0_42 = arith.constant 0 : index
    %59 = vector.load %arg10[%c336, %c0_42] : memref<1568x32xf32, #tpu.memory_space<vmem>>, vector<14x32xf32>
    %c350 = arith.constant 350 : index
    %c0_43 = arith.constant 0 : index
    %60 = vector.load %arg10[%c350, %c0_43] : memref<1568x32xf32, #tpu.memory_space<vmem>>, vector<14x32xf32>
    %61 = arith.maximumf %59, %60 : vector<14x32xf32>
    %c364 = arith.constant 364 : index
    %c0_44 = arith.constant 0 : index
    %62 = vector.load %arg10[%c364, %c0_44] : memref<1568x32xf32, #tpu.memory_space<vmem>>, vector<14x32xf32>
    %c378 = arith.constant 378 : index
    %c0_45 = arith.constant 0 : index
    %63 = vector.load %arg10[%c378, %c0_45] : memref<1568x32xf32, #tpu.memory_space<vmem>>, vector<14x32xf32>
    %64 = arith.maximumf %62, %63 : vector<14x32xf32>
    %65 = arith.maximumf %61, %64 : vector<14x32xf32>
    %c113 = arith.constant 113 : index
    %c0_46 = arith.constant 0 : index
    %66 = vector.load %arg11[%c113, %c0_46] : memref<552x32xf32, #tpu.memory_space<vmem>>, vector<14x32xf32>
    tpu.vector_store %arg11[%c113, %c0_46], %65 {strides = array<i32>} : memref<552x32xf32, #tpu.memory_space<vmem>>, vector<14x32xf32>,
    %c392 = arith.constant 392 : index
    %c0_47 = arith.constant 0 : index
    %67 = vector.load %arg10[%c392, %c0_47] : memref<1568x32xf32, #tpu.memory_space<vmem>>, vector<14x32xf32>
    %c406 = arith.constant 406 : index
    %c0_48 = arith.constant 0 : index
    %68 = vector.load %arg10[%c406, %c0_48] : memref<1568x32xf32, #tpu.memory_space<vmem>>, vector<14x32xf32>
    %69 = arith.maximumf %67, %68 : vector<14x32xf32>
    %c420 = arith.constant 420 : index
    %c0_49 = arith.constant 0 : index
    %70 = vector.load %arg10[%c420, %c0_49] : memref<1568x32xf32, #tpu.memory_space<vmem>>, vector<14x32xf32>
    %c434 = arith.constant 434 : index
    %c0_50 = arith.constant 0 : index
    %71 = vector.load %arg10[%c434, %c0_50] : memref<1568x32xf32, #tpu.memory_space<vmem>>, vector<14x32xf32>
    %72 = arith.maximumf %70, %71 : vector<14x32xf32>
    %73 = arith.maximumf %69, %72 : vector<14x32xf32>
    %c129 = arith.constant 129 : index
    %c0_51 = arith.constant 0 : index
    %74 = vector.load %arg11[%c129, %c0_51] : memref<552x32xf32, #tpu.memory_space<vmem>>, vector<14x32xf32>
    tpu.vector_store %arg11[%c129, %c0_51], %73 {strides = array<i32>} : memref<552x32xf32, #tpu.memory_space<vmem>>, vector<14x32xf32>,
    %c448 = arith.constant 448 : index
    %c0_52 = arith.constant 0 : index
    %75 = vector.load %arg10[%c448, %c0_52] : memref<1568x32xf32, #tpu.memory_space<vmem>>, vector<14x32xf32>
    %c462 = arith.constant 462 : index
    %c0_53 = arith.constant 0 : index
    %76 = vector.load %arg10[%c462, %c0_53] : memref<1568x32xf32, #tpu.memory_space<vmem>>, vector<14x32xf32>
    %77 = arith.maximumf %75, %76 : vector<14x32xf32>
    %c476 = arith.constant 476 : index
    %c0_54 = arith.constant 0 : index
    %78 = vector.load %arg10[%c476, %c0_54] : memref<1568x32xf32, #tpu.memory_space<vmem>>, vector<14x32xf32>
    %c490 = arith.constant 490 : index
    %c0_55 = arith.constant 0 : index
    %79 = vector.load %arg10[%c490, %c0_55] : memref<1568x32xf32, #tpu.memory_space<vmem>>, vector<14x32xf32>
    %80 = arith.maximumf %78, %79 : vector<14x32xf32>
    %81 = arith.maximumf %77, %80 : vector<14x32xf32>
    %c145 = arith.constant 145 : index
    %c0_56 = arith.constant 0 : index
    %82 = vector.load %arg11[%c145, %c0_56] : memref<552x32xf32, #tpu.memory_space<vmem>>, vector<14x32xf32>
    tpu.vector_store %arg11[%c145, %c0_56], %81 {strides = array<i32>} : memref<552x32xf32, #tpu.memory_space<vmem>>, vector<14x32xf32>,
    %c504 = arith.constant 504 : index
    %c0_57 = arith.constant 0 : index
    %83 = vector.load %arg10[%c504, %c0_57] : memref<1568x32xf32, #tpu.memory_space<vmem>>, vector<14x32xf32>
    %c518 = arith.constant 518 : index
    %c0_58 = arith.constant 0 : index
    %84 = vector.load %arg10[%c518, %c0_58] : memref<1568x32xf32, #tpu.memory_space<vmem>>, vector<14x32xf32>
    %85 = arith.maximumf %83, %84 : vector<14x32xf32>
    %c532 = arith.constant 532 : index
    %c0_59 = arith.constant 0 : index
    %86 = vector.load %arg10[%c532, %c0_59] : memref<1568x32xf32, #tpu.memory_space<vmem>>, vector<14x32xf32>
    %c546 = arith.constant 546 : index
    %c0_60 = arith.constant 0 : index
    %87 = vector.load %arg10[%c546, %c0_60] : memref<1568x32xf32, #tpu.memory_space<vmem>>, vector<14x32xf32>
    %88 = arith.maximumf %86, %87 : vector<14x32xf32>
    %89 = arith.maximumf %85, %88 : vector<14x32xf32>
    %c161 = arith.constant 161 : index
    %c0_61 = arith.constant 0 : index
    %90 = vector.load %arg11[%c161, %c0_61] : memref<552x32xf32, #tpu.memory_space<vmem>>, vector<14x32xf32>
    tpu.vector_store %arg11[%c161, %c0_61], %89 {strides = array<i32>} : memref<552x32xf32, #tpu.memory_space<vmem>>, vector<14x32xf32>,
    %c560 = arith.constant 560 : index
    %c0_62 = arith.constant 0 : index
    %91 = vector.load %arg10[%c560, %c0_62] : memref<1568x32xf32, #tpu.memory_space<vmem>>, vector<14x32xf32>
    %c574 = arith.constant 574 : index
    %c0_63 = arith.constant 0 : index
    %92 = vector.load %arg10[%c574, %c0_63] : memref<1568x32xf32, #tpu.memory_space<vmem>>, vector<14x32xf32>
    %93 = arith.maximumf %91, %92 : vector<14x32xf32>
    %c588 = arith.constant 588 : index
    %c0_64 = arith.constant 0 : index
    %94 = vector.load %arg10[%c588, %c0_64] : memref<1568x32xf32, #tpu.memory_space<vmem>>, vector<14x32xf32>
    %c602 = arith.constant 602 : index
    %c0_65 = arith.constant 0 : index
    %95 = vector.load %arg10[%c602, %c0_65] : memref<1568x32xf32, #tpu.memory_space<vmem>>, vector<14x32xf32>
    %96 = arith.maximumf %94, %95 : vector<14x32xf32>
    %97 = arith.maximumf %93, %96 : vector<14x32xf32>
    %c177 = arith.constant 177 : index
    %c0_66 = arith.constant 0 : index
    %98 = vector.load %arg11[%c177, %c0_66] : memref<552x32xf32, #tpu.memory_space<vmem>>, vector<14x32xf32>
    tpu.vector_store %arg11[%c177, %c0_66], %97 {strides = array<i32>} : memref<552x32xf32, #tpu.memory_space<vmem>>, vector<14x32xf32>,
    %c616 = arith.constant 616 : index
    %c0_67 = arith.constant 0 : index
    %99 = vector.load %arg10[%c616, %c0_67] : memref<1568x32xf32, #tpu.memory_space<vmem>>, vector<14x32xf32>
    %c630 = arith.constant 630 : index
    %c0_68 = arith.constant 0 : index
    %100 = vector.load %arg10[%c630, %c0_68] : memref<1568x32xf32, #tpu.memory_space<vmem>>, vector<14x32xf32>
    %101 = arith.maximumf %99, %100 : vector<14x32xf32>
    %c644 = arith.constant 644 : index
    %c0_69 = arith.constant 0 : index
    %102 = vector.load %arg10[%c644, %c0_69] : memref<1568x32xf32, #tpu.memory_space<vmem>>, vector<14x32xf32>
    %c658 = arith.constant 658 : index
    %c0_70 = arith.constant 0 : index
    %103 = vector.load %arg10[%c658, %c0_70] : memref<1568x32xf32, #tpu.memory_space<vmem>>, vector<14x32xf32>
    %104 = arith.maximumf %102, %103 : vector<14x32xf32>
    %105 = arith.maximumf %101, %104 : vector<14x32xf32>
    %c193 = arith.constant 193 : index
    %c0_71 = arith.constant 0 : index
    %106 = vector.load %arg11[%c193, %c0_71] : memref<552x32xf32, #tpu.memory_space<vmem>>, vector<14x32xf32>
    tpu.vector_store %arg11[%c193, %c0_71], %105 {strides = array<i32>} : memref<552x32xf32, #tpu.memory_space<vmem>>, vector<14x32xf32>,
    %c672 = arith.constant 672 : index
    %c0_72 = arith.constant 0 : index
    %107 = vector.load %arg10[%c672, %c0_72] : memref<1568x32xf32, #tpu.memory_space<vmem>>, vector<14x32xf32>
    %c686 = arith.constant 686 : index
    %c0_73 = arith.constant 0 : index
    %108 = vector.load %arg10[%c686, %c0_73] : memref<1568x32xf32, #tpu.memory_space<vmem>>, vector<14x32xf32>
    %109 = arith.maximumf %107, %108 : vector<14x32xf32>
    %c700 = arith.constant 700 : index
    %c0_74 = arith.constant 0 : index
    %110 = vector.load %arg10[%c700, %c0_74] : memref<1568x32xf32, #tpu.memory_space<vmem>>, vector<14x32xf32>
    %c714 = arith.constant 714 : index
    %c0_75 = arith.constant 0 : index
    %111 = vector.load %arg10[%c714, %c0_75] : memref<1568x32xf32, #tpu.memory_space<vmem>>, vector<14x32xf32>
    %112 = arith.maximumf %110, %111 : vector<14x32xf32>
    %113 = arith.maximumf %109, %112 : vector<14x32xf32>
    %c209 = arith.constant 209 : index
    %c0_76 = arith.constant 0 : index
    %114 = vector.load %arg11[%c209, %c0_76] : memref<552x32xf32, #tpu.memory_space<vmem>>, vector<14x32xf32>
    tpu.vector_store %arg11[%c209, %c0_76], %113 {strides = array<i32>} : memref<552x32xf32, #tpu.memory_space<vmem>>, vector<14x32xf32>,
    %c728 = arith.constant 728 : index
    %c0_77 = arith.constant 0 : index
    %115 = vector.load %arg10[%c728, %c0_77] : memref<1568x32xf32, #tpu.memory_space<vmem>>, vector<14x32xf32>
    %c742 = arith.constant 742 : index
    %c0_78 = arith.constant 0 : index
    %116 = vector.load %arg10[%c742, %c0_78] : memref<1568x32xf32, #tpu.memory_space<vmem>>, vector<14x32xf32>
    %117 = arith.maximumf %115, %116 : vector<14x32xf32>
    %c756 = arith.constant 756 : index
    %c0_79 = arith.constant 0 : index
    %118 = vector.load %arg10[%c756, %c0_79] : memref<1568x32xf32, #tpu.memory_space<vmem>>, vector<14x32xf32>
    %c770 = arith.constant 770 : index
    %c0_80 = arith.constant 0 : index
    %119 = vector.load %arg10[%c770, %c0_80] : memref<1568x32xf32, #tpu.memory_space<vmem>>, vector<14x32xf32>
    %120 = arith.maximumf %118, %119 : vector<14x32xf32>
    %121 = arith.maximumf %117, %120 : vector<14x32xf32>
    %c225 = arith.constant 225 : index
    %c0_81 = arith.constant 0 : index
    %122 = vector.load %arg11[%c225, %c0_81] : memref<552x32xf32, #tpu.memory_space<vmem>>, vector<14x32xf32>
    tpu.vector_store %arg11[%c225, %c0_81], %121 {strides = array<i32>} : memref<552x32xf32, #tpu.memory_space<vmem>>, vector<14x32xf32>,
    %c784 = arith.constant 784 : index
    %c0_82 = arith.constant 0 : index
    %123 = vector.load %arg10[%c784, %c0_82] : memref<1568x32xf32, #tpu.memory_space<vmem>>, vector<14x32xf32>
    %c798 = arith.constant 798 : index
    %c0_83 = arith.constant 0 : index
    %124 = vector.load %arg10[%c798, %c0_83] : memref<1568x32xf32, #tpu.memory_space<vmem>>, vector<14x32xf32>
    %125 = arith.maximumf %123, %124 : vector<14x32xf32>
    %c812 = arith.constant 812 : index
    %c0_84 = arith.constant 0 : index
    %126 = vector.load %arg10[%c812, %c0_84] : memref<1568x32xf32, #tpu.memory_space<vmem>>, vector<14x32xf32>
    %c826 = arith.constant 826 : index
    %c0_85 = arith.constant 0 : index
    %127 = vector.load %arg10[%c826, %c0_85] : memref<1568x32xf32, #tpu.memory_space<vmem>>, vector<14x32xf32>
    %128 = arith.maximumf %126, %127 : vector<14x32xf32>
    %129 = arith.maximumf %125, %128 : vector<14x32xf32>
    %c273 = arith.constant 273 : index
    %c0_86 = arith.constant 0 : index
    %130 = vector.load %arg11[%c273, %c0_86] : memref<552x32xf32, #tpu.memory_space<vmem>>, vector<14x32xf32>
    tpu.vector_store %arg11[%c273, %c0_86], %129 {strides = array<i32>} : memref<552x32xf32, #tpu.memory_space<vmem>>, vector<14x32xf32>,
    %c840 = arith.constant 840 : index
    %c0_87 = arith.constant 0 : index
    %131 = vector.load %arg10[%c840, %c0_87] : memref<1568x32xf32, #tpu.memory_space<vmem>>, vector<14x32xf32>
    %c854 = arith.constant 854 : index
    %c0_88 = arith.constant 0 : index
    %132 = vector.load %arg10[%c854, %c0_88] : memref<1568x32xf32, #tpu.memory_space<vmem>>, vector<14x32xf32>
    %133 = arith.maximumf %131, %132 : vector<14x32xf32>
    %c868 = arith.constant 868 : index
    %c0_89 = arith.constant 0 : index
    %134 = vector.load %arg10[%c868, %c0_89] : memref<1568x32xf32, #tpu.memory_space<vmem>>, vector<14x32xf32>
    %c882 = arith.constant 882 : index
    %c0_90 = arith.constant 0 : index
    %135 = vector.load %arg10[%c882, %c0_90] : memref<1568x32xf32, #tpu.memory_space<vmem>>, vector<14x32xf32>
    %136 = arith.maximumf %134, %135 : vector<14x32xf32>
    %137 = arith.maximumf %133, %136 : vector<14x32xf32>
    %c289 = arith.constant 289 : index
    %c0_91 = arith.constant 0 : index
    %138 = vector.load %arg11[%c289, %c0_91] : memref<552x32xf32, #tpu.memory_space<vmem>>, vector<14x32xf32>
    tpu.vector_store %arg11[%c289, %c0_91], %137 {strides = array<i32>} : memref<552x32xf32, #tpu.memory_space<vmem>>, vector<14x32xf32>,
    %c896 = arith.constant 896 : index
    %c0_92 = arith.constant 0 : index
    %139 = vector.load %arg10[%c896, %c0_92] : memref<1568x32xf32, #tpu.memory_space<vmem>>, vector<14x32xf32>
    %c910 = arith.constant 910 : index
    %c0_93 = arith.constant 0 : index
    %140 = vector.load %arg10[%c910, %c0_93] : memref<1568x32xf32, #tpu.memory_space<vmem>>, vector<14x32xf32>
    %141 = arith.maximumf %139, %140 : vector<14x32xf32>
    %c924 = arith.constant 924 : index
    %c0_94 = arith.constant 0 : index
    %142 = vector.load %arg10[%c924, %c0_94] : memref<1568x32xf32, #tpu.memory_space<vmem>>, vector<14x32xf32>
    %c938 = arith.constant 938 : index
    %c0_95 = arith.constant 0 : index
    %143 = vector.load %arg10[%c938, %c0_95] : memref<1568x32xf32, #tpu.memory_space<vmem>>, vector<14x32xf32>
    %144 = arith.maximumf %142, %143 : vector<14x32xf32>
    %145 = arith.maximumf %141, %144 : vector<14x32xf32>
    %c305 = arith.constant 305 : index
    %c0_96 = arith.constant 0 : index
    %146 = vector.load %arg11[%c305, %c0_96] : memref<552x32xf32, #tpu.memory_space<vmem>>, vector<14x32xf32>
    tpu.vector_store %arg11[%c305, %c0_96], %145 {strides = array<i32>} : memref<552x32xf32, #tpu.memory_space<vmem>>, vector<14x32xf32>,
    %c952 = arith.constant 952 : index
    %c0_97 = arith.constant 0 : index
    %147 = vector.load %arg10[%c952, %c0_97] : memref<1568x32xf32, #tpu.memory_space<vmem>>, vector<14x32xf32>
    %c966 = arith.constant 966 : index
    %c0_98 = arith.constant 0 : index
    %148 = vector.load %arg10[%c966, %c0_98] : memref<1568x32xf32, #tpu.memory_space<vmem>>, vector<14x32xf32>
    %149 = arith.maximumf %147, %148 : vector<14x32xf32>
    %c980 = arith.constant 980 : index
    %c0_99 = arith.constant 0 : index
    %150 = vector.load %arg10[%c980, %c0_99] : memref<1568x32xf32, #tpu.memory_space<vmem>>, vector<14x32xf32>
    %c994 = arith.constant 994 : index
    %c0_100 = arith.constant 0 : index
    %151 = vector.load %arg10[%c994, %c0_100] : memref<1568x32xf32, #tpu.memory_space<vmem>>, vector<14x32xf32>
    %152 = arith.maximumf %150, %151 : vector<14x32xf32>
    %153 = arith.maximumf %149, %152 : vector<14x32xf32>
    %c321 = arith.constant 321 : index
    %c0_101 = arith.constant 0 : index
    %154 = vector.load %arg11[%c321, %c0_101] : memref<552x32xf32, #tpu.memory_space<vmem>>, vector<14x32xf32>
    tpu.vector_store %arg11[%c321, %c0_101], %153 {strides = array<i32>} : memref<552x32xf32, #tpu.memory_space<vmem>>, vector<14x32xf32>,
    %c1008 = arith.constant 1008 : index
    %c0_102 = arith.constant 0 : index
    %155 = vector.load %arg10[%c1008, %c0_102] : memref<1568x32xf32, #tpu.memory_space<vmem>>, vector<14x32xf32>
    %c1022 = arith.constant 1022 : index
    %c0_103 = arith.constant 0 : index
    %156 = vector.load %arg10[%c1022, %c0_103] : memref<1568x32xf32, #tpu.memory_space<vmem>>, vector<14x32xf32>
    %157 = arith.maximumf %155, %156 : vector<14x32xf32>
    %c1036 = arith.constant 1036 : index
    %c0_104 = arith.constant 0 : index
    %158 = vector.load %arg10[%c1036, %c0_104] : memref<1568x32xf32, #tpu.memory_space<vmem>>, vector<14x32xf32>
    %c1050 = arith.constant 1050 : index
    %c0_105 = arith.constant 0 : index
    %159 = vector.load %arg10[%c1050, %c0_105] : memref<1568x32xf32, #tpu.memory_space<vmem>>, vector<14x32xf32>
    %160 = arith.maximumf %158, %159 : vector<14x32xf32>
    %161 = arith.maximumf %157, %160 : vector<14x32xf32>
    %c337 = arith.constant 337 : index
    %c0_106 = arith.constant 0 : index
    %162 = vector.load %arg11[%c337, %c0_106] : memref<552x32xf32, #tpu.memory_space<vmem>>, vector<14x32xf32>
    tpu.vector_store %arg11[%c337, %c0_106], %161 {strides = array<i32>} : memref<552x32xf32, #tpu.memory_space<vmem>>, vector<14x32xf32>,
    %c1064 = arith.constant 1064 : index
    %c0_107 = arith.constant 0 : index
    %163 = vector.load %arg10[%c1064, %c0_107] : memref<1568x32xf32, #tpu.memory_space<vmem>>, vector<14x32xf32>
    %c1078 = arith.constant 1078 : index
    %c0_108 = arith.constant 0 : index
    %164 = vector.load %arg10[%c1078, %c0_108] : memref<1568x32xf32, #tpu.memory_space<vmem>>, vector<14x32xf32>
    %165 = arith.maximumf %163, %164 : vector<14x32xf32>
    %c1092 = arith.constant 1092 : index
    %c0_109 = arith.constant 0 : index
    %166 = vector.load %arg10[%c1092, %c0_109] : memref<1568x32xf32, #tpu.memory_space<vmem>>, vector<14x32xf32>
    %c1106 = arith.constant 1106 : index
    %c0_110 = arith.constant 0 : index
    %167 = vector.load %arg10[%c1106, %c0_110] : memref<1568x32xf32, #tpu.memory_space<vmem>>, vector<14x32xf32>
    %168 = arith.maximumf %166, %167 : vector<14x32xf32>
    %169 = arith.maximumf %165, %168 : vector<14x32xf32>
    %c353 = arith.constant 353 : index
    %c0_111 = arith.constant 0 : index
    %170 = vector.load %arg11[%c353, %c0_111] : memref<552x32xf32, #tpu.memory_space<vmem>>, vector<14x32xf32>
    tpu.vector_store %arg11[%c353, %c0_111], %169 {strides = array<i32>} : memref<552x32xf32, #tpu.memory_space<vmem>>, vector<14x32xf32>,
    %c1120 = arith.constant 1120 : index
    %c0_112 = arith.constant 0 : index
    %171 = vector.load %arg10[%c1120, %c0_112] : memref<1568x32xf32, #tpu.memory_space<vmem>>, vector<14x32xf32>
    %c1134 = arith.constant 1134 : index
    %c0_113 = arith.constant 0 : index
    %172 = vector.load %arg10[%c1134, %c0_113] : memref<1568x32xf32, #tpu.memory_space<vmem>>, vector<14x32xf32>
    %173 = arith.maximumf %171, %172 : vector<14x32xf32>
    %c1148 = arith.constant 1148 : index
    %c0_114 = arith.constant 0 : index
    %174 = vector.load %arg10[%c1148, %c0_114] : memref<1568x32xf32, #tpu.memory_space<vmem>>, vector<14x32xf32>
    %c1162 = arith.constant 1162 : index
    %c0_115 = arith.constant 0 : index
    %175 = vector.load %arg10[%c1162, %c0_115] : memref<1568x32xf32, #tpu.memory_space<vmem>>, vector<14x32xf32>
    %176 = arith.maximumf %174, %175 : vector<14x32xf32>
    %177 = arith.maximumf %173, %176 : vector<14x32xf32>
    %c369 = arith.constant 369 : index
    %c0_116 = arith.constant 0 : index
    %178 = vector.load %arg11[%c369, %c0_116] : memref<552x32xf32, #tpu.memory_space<vmem>>, vector<14x32xf32>
    tpu.vector_store %arg11[%c369, %c0_116], %177 {strides = array<i32>} : memref<552x32xf32, #tpu.memory_space<vmem>>, vector<14x32xf32>,
    %c1176 = arith.constant 1176 : index
    %c0_117 = arith.constant 0 : index
    %179 = vector.load %arg10[%c1176, %c0_117] : memref<1568x32xf32, #tpu.memory_space<vmem>>, vector<14x32xf32>
    %c1190 = arith.constant 1190 : index
    %c0_118 = arith.constant 0 : index
    %180 = vector.load %arg10[%c1190, %c0_118] : memref<1568x32xf32, #tpu.memory_space<vmem>>, vector<14x32xf32>
    %181 = arith.maximumf %179, %180 : vector<14x32xf32>
    %c1204 = arith.constant 1204 : index
    %c0_119 = arith.constant 0 : index
    %182 = vector.load %arg10[%c1204, %c0_119] : memref<1568x32xf32, #tpu.memory_space<vmem>>, vector<14x32xf32>
    %c1218 = arith.constant 1218 : index
    %c0_120 = arith.constant 0 : index
    %183 = vector.load %arg10[%c1218, %c0_120] : memref<1568x32xf32, #tpu.memory_space<vmem>>, vector<14x32xf32>
    %184 = arith.maximumf %182, %183 : vector<14x32xf32>
    %185 = arith.maximumf %181, %184 : vector<14x32xf32>
    %c385 = arith.constant 385 : index
    %c0_121 = arith.constant 0 : index
    %186 = vector.load %arg11[%c385, %c0_121] : memref<552x32xf32, #tpu.memory_space<vmem>>, vector<14x32xf32>
    tpu.vector_store %arg11[%c385, %c0_121], %185 {strides = array<i32>} : memref<552x32xf32, #tpu.memory_space<vmem>>, vector<14x32xf32>,
    %c1232 = arith.constant 1232 : index
    %c0_122 = arith.constant 0 : index
    %187 = vector.load %arg10[%c1232, %c0_122] : memref<1568x32xf32, #tpu.memory_space<vmem>>, vector<14x32xf32>
    %c1246 = arith.constant 1246 : index
    %c0_123 = arith.constant 0 : index
    %188 = vector.load %arg10[%c1246, %c0_123] : memref<1568x32xf32, #tpu.memory_space<vmem>>, vector<14x32xf32>
    %189 = arith.maximumf %187, %188 : vector<14x32xf32>
    %c1260 = arith.constant 1260 : index
    %c0_124 = arith.constant 0 : index
    %190 = vector.load %arg10[%c1260, %c0_124] : memref<1568x32xf32, #tpu.memory_space<vmem>>, vector<14x32xf32>
    %c1274 = arith.constant 1274 : index
    %c0_125 = arith.constant 0 : index
    %191 = vector.load %arg10[%c1274, %c0_125] : memref<1568x32xf32, #tpu.memory_space<vmem>>, vector<14x32xf32>
    %192 = arith.maximumf %190, %191 : vector<14x32xf32>
    %193 = arith.maximumf %189, %192 : vector<14x32xf32>
    %c401 = arith.constant 401 : index
    %c0_126 = arith.constant 0 : index
    %194 = vector.load %arg11[%c401, %c0_126] : memref<552x32xf32, #tpu.memory_space<vmem>>, vector<14x32xf32>
    tpu.vector_store %arg11[%c401, %c0_126], %193 {strides = array<i32>} : memref<552x32xf32, #tpu.memory_space<vmem>>, vector<14x32xf32>,
    %c1288 = arith.constant 1288 : index
    %c0_127 = arith.constant 0 : index
    %195 = vector.load %arg10[%c1288, %c0_127] : memref<1568x32xf32, #tpu.memory_space<vmem>>, vector<14x32xf32>
    %c1302 = arith.constant 1302 : index
    %c0_128 = arith.constant 0 : index
    %196 = vector.load %arg10[%c1302, %c0_128] : memref<1568x32xf32, #tpu.memory_space<vmem>>, vector<14x32xf32>
    %197 = arith.maximumf %195, %196 : vector<14x32xf32>
    %c1316 = arith.constant 1316 : index
    %c0_129 = arith.constant 0 : index
    %198 = vector.load %arg10[%c1316, %c0_129] : memref<1568x32xf32, #tpu.memory_space<vmem>>, vector<14x32xf32>
    %c1330 = arith.constant 1330 : index
    %c0_130 = arith.constant 0 : index
    %199 = vector.load %arg10[%c1330, %c0_130] : memref<1568x32xf32, #tpu.memory_space<vmem>>, vector<14x32xf32>
    %200 = arith.maximumf %198, %199 : vector<14x32xf32>
    %201 = arith.maximumf %197, %200 : vector<14x32xf32>
    %c417 = arith.constant 417 : index
    %c0_131 = arith.constant 0 : index
    %202 = vector.load %arg11[%c417, %c0_131] : memref<552x32xf32, #tpu.memory_space<vmem>>, vector<14x32xf32>
    tpu.vector_store %arg11[%c417, %c0_131], %201 {strides = array<i32>} : memref<552x32xf32, #tpu.memory_space<vmem>>, vector<14x32xf32>,
    %c1344 = arith.constant 1344 : index
    %c0_132 = arith.constant 0 : index
    %203 = vector.load %arg10[%c1344, %c0_132] : memref<1568x32xf32, #tpu.memory_space<vmem>>, vector<14x32xf32>
    %c1358 = arith.constant 1358 : index
    %c0_133 = arith.constant 0 : index
    %204 = vector.load %arg10[%c1358, %c0_133] : memref<1568x32xf32, #tpu.memory_space<vmem>>, vector<14x32xf32>
    %205 = arith.maximumf %203, %204 : vector<14x32xf32>
    %c1372 = arith.constant 1372 : index
    %c0_134 = arith.constant 0 : index
    %206 = vector.load %arg10[%c1372, %c0_134] : memref<1568x32xf32, #tpu.memory_space<vmem>>, vector<14x32xf32>
    %c1386 = arith.constant 1386 : index
    %c0_135 = arith.constant 0 : index
    %207 = vector.load %arg10[%c1386, %c0_135] : memref<1568x32xf32, #tpu.memory_space<vmem>>, vector<14x32xf32>
    %208 = arith.maximumf %206, %207 : vector<14x32xf32>
    %209 = arith.maximumf %205, %208 : vector<14x32xf32>
    %c433 = arith.constant 433 : index
    %c0_136 = arith.constant 0 : index
    %210 = vector.load %arg11[%c433, %c0_136] : memref<552x32xf32, #tpu.memory_space<vmem>>, vector<14x32xf32>
    tpu.vector_store %arg11[%c433, %c0_136], %209 {strides = array<i32>} : memref<552x32xf32, #tpu.memory_space<vmem>>, vector<14x32xf32>,
    %c1400 = arith.constant 1400 : index
    %c0_137 = arith.constant 0 : index
    %211 = vector.load %arg10[%c1400, %c0_137] : memref<1568x32xf32, #tpu.memory_space<vmem>>, vector<14x32xf32>
    %c1414 = arith.constant 1414 : index
    %c0_138 = arith.constant 0 : index
    %212 = vector.load %arg10[%c1414, %c0_138] : memref<1568x32xf32, #tpu.memory_space<vmem>>, vector<14x32xf32>
    %213 = arith.maximumf %211, %212 : vector<14x32xf32>
    %c1428 = arith.constant 1428 : index
    %c0_139 = arith.constant 0 : index
    %214 = vector.load %arg10[%c1428, %c0_139] : memref<1568x32xf32, #tpu.memory_space<vmem>>, vector<14x32xf32>
    %c1442 = arith.constant 1442 : index
    %c0_140 = arith.constant 0 : index
    %215 = vector.load %arg10[%c1442, %c0_140] : memref<1568x32xf32, #tpu.memory_space<vmem>>, vector<14x32xf32>
    %216 = arith.maximumf %214, %215 : vector<14x32xf32>
    %217 = arith.maximumf %213, %216 : vector<14x32xf32>
    %c449 = arith.constant 449 : index
    %c0_141 = arith.constant 0 : index
    %218 = vector.load %arg11[%c449, %c0_141] : memref<552x32xf32, #tpu.memory_space<vmem>>, vector<14x32xf32>
    tpu.vector_store %arg11[%c449, %c0_141], %217 {strides = array<i32>} : memref<552x32xf32, #tpu.memory_space<vmem>>, vector<14x32xf32>,
    %c1456 = arith.constant 1456 : index
    %c0_142 = arith.constant 0 : index
    %219 = vector.load %arg10[%c1456, %c0_142] : memref<1568x32xf32, #tpu.memory_space<vmem>>, vector<14x32xf32>
    %c1470 = arith.constant 1470 : index
    %c0_143 = arith.constant 0 : index
    %220 = vector.load %arg10[%c1470, %c0_143] : memref<1568x32xf32, #tpu.memory_space<vmem>>, vector<14x32xf32>
    %221 = arith.maximumf %219, %220 : vector<14x32xf32>
    %c1484 = arith.constant 1484 : index
    %c0_144 = arith.constant 0 : index
    %222 = vector.load %arg10[%c1484, %c0_144] : memref<1568x32xf32, #tpu.memory_space<vmem>>, vector<14x32xf32>
    %c1498 = arith.constant 1498 : index
    %c0_145 = arith.constant 0 : index
    %223 = vector.load %arg10[%c1498, %c0_145] : memref<1568x32xf32, #tpu.memory_space<vmem>>, vector<14x32xf32>
    %224 = arith.maximumf %222, %223 : vector<14x32xf32>
    %225 = arith.maximumf %221, %224 : vector<14x32xf32>
    %c465 = arith.constant 465 : index
    %c0_146 = arith.constant 0 : index
    %226 = vector.load %arg11[%c465, %c0_146] : memref<552x32xf32, #tpu.memory_space<vmem>>, vector<14x32xf32>
    tpu.vector_store %arg11[%c465, %c0_146], %225 {strides = array<i32>} : memref<552x32xf32, #tpu.memory_space<vmem>>, vector<14x32xf32>,
    %c1512 = arith.constant 1512 : index
    %c0_147 = arith.constant 0 : index
    %227 = vector.load %arg10[%c1512, %c0_147] : memref<1568x32xf32, #tpu.memory_space<vmem>>, vector<14x32xf32>
    %c1526 = arith.constant 1526 : index
    %c0_148 = arith.constant 0 : index
    %228 = vector.load %arg10[%c1526, %c0_148] : memref<1568x32xf32, #tpu.memory_space<vmem>>, vector<14x32xf32>
    %229 = arith.maximumf %227, %228 : vector<14x32xf32>
    %c1540 = arith.constant 1540 : index
    %c0_149 = arith.constant 0 : index
    %230 = vector.load %arg10[%c1540, %c0_149] : memref<1568x32xf32, #tpu.memory_space<vmem>>, vector<14x32xf32>
    %c1554 = arith.constant 1554 : index
    %c0_150 = arith.constant 0 : index
    %231 = vector.load %arg10[%c1554, %c0_150] : memref<1568x32xf32, #tpu.memory_space<vmem>>, vector<14x32xf32>
    %232 = arith.maximumf %230, %231 : vector<14x32xf32>
    %233 = arith.maximumf %229, %232 : vector<14x32xf32>
    %c481 = arith.constant 481 : index
    %c0_151 = arith.constant 0 : index
    %234 = vector.load %arg11[%c481, %c0_151] : memref<552x32xf32, #tpu.memory_space<vmem>>, vector<14x32xf32>
    tpu.vector_store %arg11[%c481, %c0_151], %233 {strides = array<i32>} : memref<552x32xf32, #tpu.memory_space<vmem>>, vector<14x32xf32>,
    %c0_152 = arith.constant 0 : index
    %c0_153 = arith.constant 0 : index
    %235 = vector.load %arg11[%c0_152, %c0_153] : memref<552x32xf32, #tpu.memory_space<vmem>>, vector<512x32xf32>
    %236 = arith.truncf %235 : vector<512x32xf32> to vector<512x32xbf16>
    %c0_154 = arith.constant 0 : index
    %c0_155 = arith.constant 0 : index
    %237 = vector.load %arg12[%c0_154, %c0_155] : memref<512x288xbf16, #tpu.memory_space<vmem>>, vector<512x32xbf16>
    tpu.vector_store %arg12[%c0_154, %c0_155], %236 {strides = array<i32>} : memref<512x288xbf16, #tpu.memory_space<vmem>>, vector<512x32xbf16>,
    %c1 = arith.constant 1 : index
    %c0_156 = arith.constant 0 : index
    %238 = vector.load %arg11[%c1, %c0_156] : memref<552x32xf32, #tpu.memory_space<vmem>>, vector<512x32xf32>
    %239 = arith.truncf %238 : vector<512x32xf32> to vector<512x32xbf16>
    %c0_157 = arith.constant 0 : index
    %c32 = arith.constant 32 : index
    %240 = vector.load %arg12[%c0_157, %c32] : memref<512x288xbf16, #tpu.memory_space<vmem>>, vector<512x32xbf16>
    tpu.vector_store %arg12[%c0_157, %c32], %239 {strides = array<i32>} : memref<512x288xbf16, #tpu.memory_space<vmem>>, vector<512x32xbf16>,
    %c2 = arith.constant 2 : index
    %c0_158 = arith.constant 0 : index
    %241 = vector.load %arg11[%c2, %c0_158] : memref<552x32xf32, #tpu.memory_space<vmem>>, vector<512x32xf32>
    %242 = arith.truncf %241 : vector<512x32xf32> to vector<512x32xbf16>
    %c0_159 = arith.constant 0 : index
    %c64 = arith.constant 64 : index
    %243 = vector.load %arg12[%c0_159, %c64] : memref<512x288xbf16, #tpu.memory_space<vmem>>, vector<512x32xbf16>
    tpu.vector_store %arg12[%c0_159, %c64], %242 {strides = array<i32>} : memref<512x288xbf16, #tpu.memory_space<vmem>>, vector<512x32xbf16>,
    %c16 = arith.constant 16 : index
    %c0_160 = arith.constant 0 : index
    %244 = vector.load %arg11[%c16, %c0_160] : memref<552x32xf32, #tpu.memory_space<vmem>>, vector<512x32xf32>
    %245 = arith.truncf %244 : vector<512x32xf32> to vector<512x32xbf16>
    %c0_161 = arith.constant 0 : index
    %c96 = arith.constant 96 : index
    %246 = vector.load %arg12[%c0_161, %c96] : memref<512x288xbf16, #tpu.memory_space<vmem>>, vector<512x32xbf16>
    tpu.vector_store %arg12[%c0_161, %c96], %245 {strides = array<i32>} : memref<512x288xbf16, #tpu.memory_space<vmem>>, vector<512x32xbf16>,
    %c17_162 = arith.constant 17 : index
    %c0_163 = arith.constant 0 : index
    %247 = vector.load %arg11[%c17_162, %c0_163] : memref<552x32xf32, #tpu.memory_space<vmem>>, vector<512x32xf32>
    %248 = arith.truncf %247 : vector<512x32xf32> to vector<512x32xbf16>
    %c0_164 = arith.constant 0 : index
    %c128 = arith.constant 128 : index
    %249 = vector.load %arg12[%c0_164, %c128] : memref<512x288xbf16, #tpu.memory_space<vmem>>, vector<512x32xbf16>
    tpu.vector_store %arg12[%c0_164, %c128], %248 {strides = array<i32>} : memref<512x288xbf16, #tpu.memory_space<vmem>>, vector<512x32xbf16>,
    %c18 = arith.constant 18 : index
    %c0_165 = arith.constant 0 : index
    %250 = vector.load %arg11[%c18, %c0_165] : memref<552x32xf32, #tpu.memory_space<vmem>>, vector<512x32xf32>
    %251 = arith.truncf %250 : vector<512x32xf32> to vector<512x32xbf16>
    %c0_166 = arith.constant 0 : index
    %c160 = arith.constant 160 : index
    %252 = vector.load %arg12[%c0_166, %c160] : memref<512x288xbf16, #tpu.memory_space<vmem>>, vector<512x32xbf16>
    tpu.vector_store %arg12[%c0_166, %c160], %251 {strides = array<i32>} : memref<512x288xbf16, #tpu.memory_space<vmem>>, vector<512x32xbf16>,
    %c32_167 = arith.constant 32 : index
    %c0_168 = arith.constant 0 : index
    %253 = vector.load %arg11[%c32_167, %c0_168] : memref<552x32xf32, #tpu.memory_space<vmem>>, vector<512x32xf32>
    %254 = arith.truncf %253 : vector<512x32xf32> to vector<512x32xbf16>
    %c0_169 = arith.constant 0 : index
    %c192 = arith.constant 192 : index
    %255 = vector.load %arg12[%c0_169, %c192] : memref<512x288xbf16, #tpu.memory_space<vmem>>, vector<512x32xbf16>
    tpu.vector_store %arg12[%c0_169, %c192], %254 {strides = array<i32>} : memref<512x288xbf16, #tpu.memory_space<vmem>>, vector<512x32xbf16>,
    %c33_170 = arith.constant 33 : index
    %c0_171 = arith.constant 0 : index
    %256 = vector.load %arg11[%c33_170, %c0_171] : memref<552x32xf32, #tpu.memory_space<vmem>>, vector<512x32xf32>
    %257 = arith.truncf %256 : vector<512x32xf32> to vector<512x32xbf16>
    %c0_172 = arith.constant 0 : index
    %c224_173 = arith.constant 224 : index
    %258 = vector.load %arg12[%c0_172, %c224_173] : memref<512x288xbf16, #tpu.memory_space<vmem>>, vector<512x32xbf16>
    tpu.vector_store %arg12[%c0_172, %c224_173], %257 {strides = array<i32>} : memref<512x288xbf16, #tpu.memory_space<vmem>>, vector<512x32xbf16>,
    %c34 = arith.constant 34 : index
    %c0_174 = arith.constant 0 : index
    %259 = vector.load %arg11[%c34, %c0_174] : memref<552x32xf32, #tpu.memory_space<vmem>>, vector<512x32xf32>
    %260 = arith.truncf %259 : vector<512x32xf32> to vector<512x32xbf16>
    %c0_175 = arith.constant 0 : index
    %c256 = arith.constant 256 : index
    %261 = vector.load %arg12[%c0_175, %c256] : memref<512x288xbf16, #tpu.memory_space<vmem>>, vector<512x32xbf16>
    tpu.vector_store %arg12[%c0_175, %c256], %260 {strides = array<i32>} : memref<512x288xbf16, #tpu.memory_space<vmem>>, vector<512x32xbf16>,
    %c0_176 = arith.constant 0 : index
    %c0_177 = arith.constant 0 : index
    %262 = vector.load %arg12[%c0_176, %c0_177] : memref<512x288xbf16, #tpu.memory_space<vmem>>, vector<512x288xbf16>
    %c0_178 = arith.constant 0 : index
    %c0_179 = arith.constant 0 : index
    %263 = vector.load %arg3[%c0_178, %c0_179] : memref<288x64xbf16, #tpu.memory_space<vmem>>, vector<288x64xbf16>
    %cst_180 = arith.constant dense<0.000000e+00> : vector<512x64xf32>
    %264 = tpu.matmul %262, %263, %cst_180 {dimension_numbers = #tpu.dot_dimension_numbers<[1], [0], [0], [1], [0, 0, 1, 1], [], []>} : vector<512x288xbf16>, vector<288x64xbf16>, vector<512x64xf32> -> vector<512x64xf32>
    %c0_181 = arith.constant 0 : index
    %c0_182 = arith.constant 0 : index
    %265 = vector.load %arg4[%c0_181, %c0_182] : memref<1x64xf32, #tpu.memory_space<vmem>>, vector<1x64xf32>
    %266 = vector.broadcast %265 : vector<1x64xf32> to vector<512x64xf32>
    %267 = arith.addf %264, %266 : vector<512x64xf32>
    %cst_183 = arith.constant 0.000000e+00 : f32
    %268 = vector.broadcast %cst_183 : f32 to vector<512x64xf32>
    %269 = arith.maximumf %267, %268 : vector<512x64xf32>
    %c0_184 = arith.constant 0 : index
    %c0_185 = arith.constant 0 : index
    %270 = vector.load %arg13[%c0_184, %c0_185] : memref<512x64xf32, #tpu.memory_space<vmem>>, vector<512x64xf32>
    tpu.vector_store %arg13[%c0_184, %c0_185], %269 {strides = array<i32>} : memref<512x64xf32, #tpu.memory_space<vmem>>, vector<512x64xf32>,
    %c0_186 = arith.constant 0 : index
    %c0_187 = arith.constant 0 : index
    %271 = vector.load %arg13[%c0_186, %c0_187] : memref<512x64xf32, #tpu.memory_space<vmem>>, vector<16x64xf32>
    %c16_188 = arith.constant 16 : index
    %c0_189 = arith.constant 0 : index
    %272 = vector.load %arg13[%c16_188, %c0_189] : memref<512x64xf32, #tpu.memory_space<vmem>>, vector<16x64xf32>
    %273 = arith.maximumf %271, %272 : vector<16x64xf32>
    %274 = vector.extract_strided_slice %273 {offsets = [0, 0], sizes = [1, 64], strides = [1, 1]} : vector<16x64xf32> to vector<1x64xf32>
    %275 = vector.extract_strided_slice %273 {offsets = [1, 0], sizes = [1, 64], strides = [1, 1]} : vector<16x64xf32> to vector<1x64xf32>
    %276 = arith.maximumf %274, %275 : vector<1x64xf32>
    %c0_190 = arith.constant 0 : index
    %c0_191 = arith.constant 0 : index
    %277 = vector.load %arg14[%c0_190, %c0_191] : memref<2x3136xf32, #tpu.memory_space<vmem>>, vector<1x64xf32>
    tpu.vector_store %arg14[%c0_190, %c0_191], %276 {strides = array<i32>} : memref<2x3136xf32, #tpu.memory_space<vmem>>, vector<1x64xf32>,
    %278 = vector.extract_strided_slice %273 {offsets = [2, 0], sizes = [1, 64], strides = [1, 1]} : vector<16x64xf32> to vector<1x64xf32>
    %279 = vector.extract_strided_slice %273 {offsets = [3, 0], sizes = [1, 64], strides = [1, 1]} : vector<16x64xf32> to vector<1x64xf32>
    %280 = arith.maximumf %278, %279 : vector<1x64xf32>
    %c0_192 = arith.constant 0 : index
    %c64_193 = arith.constant 64 : index
    %281 = vector.load %arg14[%c0_192, %c64_193] : memref<2x3136xf32, #tpu.memory_space<vmem>>, vector<1x64xf32>
    tpu.vector_store %arg14[%c0_192, %c64_193], %280 {strides = array<i32>} : memref<2x3136xf32, #tpu.memory_space<vmem>>, vector<1x64xf32>,
    %282 = vector.extract_strided_slice %273 {offsets = [4, 0], sizes = [1, 64], strides = [1, 1]} : vector<16x64xf32> to vector<1x64xf32>
    %283 = vector.extract_strided_slice %273 {offsets = [5, 0], sizes = [1, 64], strides = [1, 1]} : vector<16x64xf32> to vector<1x64xf32>
    %284 = arith.maximumf %282, %283 : vector<1x64xf32>
    %c0_194 = arith.constant 0 : index
    %c128_195 = arith.constant 128 : index
    %285 = vector.load %arg14[%c0_194, %c128_195] : memref<2x3136xf32, #tpu.memory_space<vmem>>, vector<1x64xf32>
    tpu.vector_store %arg14[%c0_194, %c128_195], %284 {strides = array<i32>} : memref<2x3136xf32, #tpu.memory_space<vmem>>, vector<1x64xf32>,
    %286 = vector.extract_strided_slice %273 {offsets = [6, 0], sizes = [1, 64], strides = [1, 1]} : vector<16x64xf32> to vector<1x64xf32>
    %287 = vector.extract_strided_slice %273 {offsets = [7, 0], sizes = [1, 64], strides = [1, 1]} : vector<16x64xf32> to vector<1x64xf32>
    %288 = arith.maximumf %286, %287 : vector<1x64xf32>
    %c0_196 = arith.constant 0 : index
    %c192_197 = arith.constant 192 : index
    %289 = vector.load %arg14[%c0_196, %c192_197] : memref<2x3136xf32, #tpu.memory_space<vmem>>, vector<1x64xf32>
    tpu.vector_store %arg14[%c0_196, %c192_197], %288 {strides = array<i32>} : memref<2x3136xf32, #tpu.memory_space<vmem>>, vector<1x64xf32>,
    %290 = vector.extract_strided_slice %273 {offsets = [8, 0], sizes = [1, 64], strides = [1, 1]} : vector<16x64xf32> to vector<1x64xf32>
    %291 = vector.extract_strided_slice %273 {offsets = [9, 0], sizes = [1, 64], strides = [1, 1]} : vector<16x64xf32> to vector<1x64xf32>
    %292 = arith.maximumf %290, %291 : vector<1x64xf32>
    %c0_198 = arith.constant 0 : index
    %c256_199 = arith.constant 256 : index
    %293 = vector.load %arg14[%c0_198, %c256_199] : memref<2x3136xf32, #tpu.memory_space<vmem>>, vector<1x64xf32>
    tpu.vector_store %arg14[%c0_198, %c256_199], %292 {strides = array<i32>} : memref<2x3136xf32, #tpu.memory_space<vmem>>, vector<1x64xf32>,
    %294 = vector.extract_strided_slice %273 {offsets = [10, 0], sizes = [1, 64], strides = [1, 1]} : vector<16x64xf32> to vector<1x64xf32>
    %295 = vector.extract_strided_slice %273 {offsets = [11, 0], sizes = [1, 64], strides = [1, 1]} : vector<16x64xf32> to vector<1x64xf32>
    %296 = arith.maximumf %294, %295 : vector<1x64xf32>
    %c0_200 = arith.constant 0 : index
    %c320 = arith.constant 320 : index
    %297 = vector.load %arg14[%c0_200, %c320] : memref<2x3136xf32, #tpu.memory_space<vmem>>, vector<1x64xf32>
    tpu.vector_store %arg14[%c0_200, %c320], %296 {strides = array<i32>} : memref<2x3136xf32, #tpu.memory_space<vmem>>, vector<1x64xf32>,
    %298 = vector.extract_strided_slice %273 {offsets = [12, 0], sizes = [1, 64], strides = [1, 1]} : vector<16x64xf32> to vector<1x64xf32>
    %299 = vector.extract_strided_slice %273 {offsets = [13, 0], sizes = [1, 64], strides = [1, 1]} : vector<16x64xf32> to vector<1x64xf32>
    %300 = arith.maximumf %298, %299 : vector<1x64xf32>
    %c0_201 = arith.constant 0 : index
    %c384 = arith.constant 384 : index
    %301 = vector.load %arg14[%c0_201, %c384] : memref<2x3136xf32, #tpu.memory_space<vmem>>, vector<1x64xf32>
    tpu.vector_store %arg14[%c0_201, %c384], %300 {strides = array<i32>} : memref<2x3136xf32, #tpu.memory_space<vmem>>, vector<1x64xf32>,
    %c32_202 = arith.constant 32 : index
    %c0_203 = arith.constant 0 : index
    %302 = vector.load %arg13[%c32_202, %c0_203] : memref<512x64xf32, #tpu.memory_space<vmem>>, vector<16x64xf32>
    %c48 = arith.constant 48 : index
    %c0_204 = arith.constant 0 : index
    %303 = vector.load %arg13[%c48, %c0_204] : memref<512x64xf32, #tpu.memory_space<vmem>>, vector<16x64xf32>
    %304 = arith.maximumf %302, %303 : vector<16x64xf32>
    %305 = vector.extract_strided_slice %304 {offsets = [0, 0], sizes = [1, 64], strides = [1, 1]} : vector<16x64xf32> to vector<1x64xf32>
    %306 = vector.extract_strided_slice %304 {offsets = [1, 0], sizes = [1, 64], strides = [1, 1]} : vector<16x64xf32> to vector<1x64xf32>
    %307 = arith.maximumf %305, %306 : vector<1x64xf32>
    %c0_205 = arith.constant 0 : index
    %c448_206 = arith.constant 448 : index
    %308 = vector.load %arg14[%c0_205, %c448_206] : memref<2x3136xf32, #tpu.memory_space<vmem>>, vector<1x64xf32>
    tpu.vector_store %arg14[%c0_205, %c448_206], %307 {strides = array<i32>} : memref<2x3136xf32, #tpu.memory_space<vmem>>, vector<1x64xf32>,
    %309 = vector.extract_strided_slice %304 {offsets = [2, 0], sizes = [1, 64], strides = [1, 1]} : vector<16x64xf32> to vector<1x64xf32>
    %310 = vector.extract_strided_slice %304 {offsets = [3, 0], sizes = [1, 64], strides = [1, 1]} : vector<16x64xf32> to vector<1x64xf32>
    %311 = arith.maximumf %309, %310 : vector<1x64xf32>
    %c0_207 = arith.constant 0 : index
    %c512 = arith.constant 512 : index
    %312 = vector.load %arg14[%c0_207, %c512] : memref<2x3136xf32, #tpu.memory_space<vmem>>, vector<1x64xf32>
    tpu.vector_store %arg14[%c0_207, %c512], %311 {strides = array<i32>} : memref<2x3136xf32, #tpu.memory_space<vmem>>, vector<1x64xf32>,
    %313 = vector.extract_strided_slice %304 {offsets = [4, 0], sizes = [1, 64], strides = [1, 1]} : vector<16x64xf32> to vector<1x64xf32>
    %314 = vector.extract_strided_slice %304 {offsets = [5, 0], sizes = [1, 64], strides = [1, 1]} : vector<16x64xf32> to vector<1x64xf32>
    %315 = arith.maximumf %313, %314 : vector<1x64xf32>
    %c0_208 = arith.constant 0 : index
    %c576 = arith.constant 576 : index
    %316 = vector.load %arg14[%c0_208, %c576] : memref<2x3136xf32, #tpu.memory_space<vmem>>, vector<1x64xf32>
    tpu.vector_store %arg14[%c0_208, %c576], %315 {strides = array<i32>} : memref<2x3136xf32, #tpu.memory_space<vmem>>, vector<1x64xf32>,
    %317 = vector.extract_strided_slice %304 {offsets = [6, 0], sizes = [1, 64], strides = [1, 1]} : vector<16x64xf32> to vector<1x64xf32>
    %318 = vector.extract_strided_slice %304 {offsets = [7, 0], sizes = [1, 64], strides = [1, 1]} : vector<16x64xf32> to vector<1x64xf32>
    %319 = arith.maximumf %317, %318 : vector<1x64xf32>
    %c0_209 = arith.constant 0 : index
    %c640 = arith.constant 640 : index
    %320 = vector.load %arg14[%c0_209, %c640] : memref<2x3136xf32, #tpu.memory_space<vmem>>, vector<1x64xf32>
    tpu.vector_store %arg14[%c0_209, %c640], %319 {strides = array<i32>} : memref<2x3136xf32, #tpu.memory_space<vmem>>, vector<1x64xf32>,
    %321 = vector.extract_strided_slice %304 {offsets = [8, 0], sizes = [1, 64], strides = [1, 1]} : vector<16x64xf32> to vector<1x64xf32>
    %322 = vector.extract_strided_slice %304 {offsets = [9, 0], sizes = [1, 64], strides = [1, 1]} : vector<16x64xf32> to vector<1x64xf32>
    %323 = arith.maximumf %321, %322 : vector<1x64xf32>
    %c0_210 = arith.constant 0 : index
    %c704 = arith.constant 704 : index
    %324 = vector.load %arg14[%c0_210, %c704] : memref<2x3136xf32, #tpu.memory_space<vmem>>, vector<1x64xf32>
    tpu.vector_store %arg14[%c0_210, %c704], %323 {strides = array<i32>} : memref<2x3136xf32, #tpu.memory_space<vmem>>, vector<1x64xf32>,
    %325 = vector.extract_strided_slice %304 {offsets = [10, 0], sizes = [1, 64], strides = [1, 1]} : vector<16x64xf32> to vector<1x64xf32>
    %326 = vector.extract_strided_slice %304 {offsets = [11, 0], sizes = [1, 64], strides = [1, 1]} : vector<16x64xf32> to vector<1x64xf32>
    %327 = arith.maximumf %325, %326 : vector<1x64xf32>
    %c0_211 = arith.constant 0 : index
    %c768 = arith.constant 768 : index
    %328 = vector.load %arg14[%c0_211, %c768] : memref<2x3136xf32, #tpu.memory_space<vmem>>, vector<1x64xf32>
    tpu.vector_store %arg14[%c0_211, %c768], %327 {strides = array<i32>} : memref<2x3136xf32, #tpu.memory_space<vmem>>, vector<1x64xf32>,
    %329 = vector.extract_strided_slice %304 {offsets = [12, 0], sizes = [1, 64], strides = [1, 1]} : vector<16x64xf32> to vector<1x64xf32>
    %330 = vector.extract_strided_slice %304 {offsets = [13, 0], sizes = [1, 64], strides = [1, 1]} : vector<16x64xf32> to vector<1x64xf32>
    %331 = arith.maximumf %329, %330 : vector<1x64xf32>
    %c0_212 = arith.constant 0 : index
    %c832 = arith.constant 832 : index
    %332 = vector.load %arg14[%c0_212, %c832] : memref<2x3136xf32, #tpu.memory_space<vmem>>, vector<1x64xf32>
    tpu.vector_store %arg14[%c0_212, %c832], %331 {strides = array<i32>} : memref<2x3136xf32, #tpu.memory_space<vmem>>, vector<1x64xf32>,
    %c64_213 = arith.constant 64 : index
    %c0_214 = arith.constant 0 : index
    %333 = vector.load %arg13[%c64_213, %c0_214] : memref<512x64xf32, #tpu.memory_space<vmem>>, vector<16x64xf32>
    %c80 = arith.constant 80 : index
    %c0_215 = arith.constant 0 : index
    %334 = vector.load %arg13[%c80, %c0_215] : memref<512x64xf32, #tpu.memory_space<vmem>>, vector<16x64xf32>
    %335 = arith.maximumf %333, %334 : vector<16x64xf32>
    %336 = vector.extract_strided_slice %335 {offsets = [0, 0], sizes = [1, 64], strides = [1, 1]} : vector<16x64xf32> to vector<1x64xf32>
    %337 = vector.extract_strided_slice %335 {offsets = [1, 0], sizes = [1, 64], strides = [1, 1]} : vector<16x64xf32> to vector<1x64xf32>
    %338 = arith.maximumf %336, %337 : vector<1x64xf32>
    %c0_216 = arith.constant 0 : index
    %c896_217 = arith.constant 896 : index
    %339 = vector.load %arg14[%c0_216, %c896_217] : memref<2x3136xf32, #tpu.memory_space<vmem>>, vector<1x64xf32>
    tpu.vector_store %arg14[%c0_216, %c896_217], %338 {strides = array<i32>} : memref<2x3136xf32, #tpu.memory_space<vmem>>, vector<1x64xf32>,
    %340 = vector.extract_strided_slice %335 {offsets = [2, 0], sizes = [1, 64], strides = [1, 1]} : vector<16x64xf32> to vector<1x64xf32>
    %341 = vector.extract_strided_slice %335 {offsets = [3, 0], sizes = [1, 64], strides = [1, 1]} : vector<16x64xf32> to vector<1x64xf32>
    %342 = arith.maximumf %340, %341 : vector<1x64xf32>
    %c0_218 = arith.constant 0 : index
    %c960 = arith.constant 960 : index
    %343 = vector.load %arg14[%c0_218, %c960] : memref<2x3136xf32, #tpu.memory_space<vmem>>, vector<1x64xf32>
    tpu.vector_store %arg14[%c0_218, %c960], %342 {strides = array<i32>} : memref<2x3136xf32, #tpu.memory_space<vmem>>, vector<1x64xf32>,
    %344 = vector.extract_strided_slice %335 {offsets = [4, 0], sizes = [1, 64], strides = [1, 1]} : vector<16x64xf32> to vector<1x64xf32>
    %345 = vector.extract_strided_slice %335 {offsets = [5, 0], sizes = [1, 64], strides = [1, 1]} : vector<16x64xf32> to vector<1x64xf32>
    %346 = arith.maximumf %344, %345 : vector<1x64xf32>
    %c0_219 = arith.constant 0 : index
    %c1024 = arith.constant 1024 : index
    %347 = vector.load %arg14[%c0_219, %c1024] : memref<2x3136xf32, #tpu.memory_space<vmem>>, vector<1x64xf32>
    tpu.vector_store %arg14[%c0_219, %c1024], %346 {strides = array<i32>} : memref<2x3136xf32, #tpu.memory_space<vmem>>, vector<1x64xf32>,
    %348 = vector.extract_strided_slice %335 {offsets = [6, 0], sizes = [1, 64], strides = [1, 1]} : vector<16x64xf32> to vector<1x64xf32>
    %349 = vector.extract_strided_slice %335 {offsets = [7, 0], sizes = [1, 64], strides = [1, 1]} : vector<16x64xf32> to vector<1x64xf32>
    %350 = arith.maximumf %348, %349 : vector<1x64xf32>
    %c0_220 = arith.constant 0 : index
    %c1088 = arith.constant 1088 : index
    %351 = vector.load %arg14[%c0_220, %c1088] : memref<2x3136xf32, #tpu.memory_space<vmem>>, vector<1x64xf32>
    tpu.vector_store %arg14[%c0_220, %c1088], %350 {strides = array<i32>} : memref<2x3136xf32, #tpu.memory_space<vmem>>, vector<1x64xf32>,
    %352 = vector.extract_strided_slice %335 {offsets = [8, 0], sizes = [1, 64], strides = [1, 1]} : vector<16x64xf32> to vector<1x64xf32>
    %353 = vector.extract_strided_slice %335 {offsets = [9, 0], sizes = [1, 64], strides = [1, 1]} : vector<16x64xf32> to vector<1x64xf32>
    %354 = arith.maximumf %352, %353 : vector<1x64xf32>
    %c0_221 = arith.constant 0 : index
    %c1152 = arith.constant 1152 : index
    %355 = vector.load %arg14[%c0_221, %c1152] : memref<2x3136xf32, #tpu.memory_space<vmem>>, vector<1x64xf32>
    tpu.vector_store %arg14[%c0_221, %c1152], %354 {strides = array<i32>} : memref<2x3136xf32, #tpu.memory_space<vmem>>, vector<1x64xf32>,
    %356 = vector.extract_strided_slice %335 {offsets = [10, 0], sizes = [1, 64], strides = [1, 1]} : vector<16x64xf32> to vector<1x64xf32>
    %357 = vector.extract_strided_slice %335 {offsets = [11, 0], sizes = [1, 64], strides = [1, 1]} : vector<16x64xf32> to vector<1x64xf32>
    %358 = arith.maximumf %356, %357 : vector<1x64xf32>
    %c0_222 = arith.constant 0 : index
    %c1216 = arith.constant 1216 : index
    %359 = vector.load %arg14[%c0_222, %c1216] : memref<2x3136xf32, #tpu.memory_space<vmem>>, vector<1x64xf32>
    tpu.vector_store %arg14[%c0_222, %c1216], %358 {strides = array<i32>} : memref<2x3136xf32, #tpu.memory_space<vmem>>, vector<1x64xf32>,
    %360 = vector.extract_strided_slice %335 {offsets = [12, 0], sizes = [1, 64], strides = [1, 1]} : vector<16x64xf32> to vector<1x64xf32>
    %361 = vector.extract_strided_slice %335 {offsets = [13, 0], sizes = [1, 64], strides = [1, 1]} : vector<16x64xf32> to vector<1x64xf32>
    %362 = arith.maximumf %360, %361 : vector<1x64xf32>
    %c0_223 = arith.constant 0 : index
    %c1280 = arith.constant 1280 : index
    %363 = vector.load %arg14[%c0_223, %c1280] : memref<2x3136xf32, #tpu.memory_space<vmem>>, vector<1x64xf32>
    tpu.vector_store %arg14[%c0_223, %c1280], %362 {strides = array<i32>} : memref<2x3136xf32, #tpu.memory_space<vmem>>, vector<1x64xf32>,
    %c96_224 = arith.constant 96 : index
    %c0_225 = arith.constant 0 : index
    %364 = vector.load %arg13[%c96_224, %c0_225] : memref<512x64xf32, #tpu.memory_space<vmem>>, vector<16x64xf32>
    %c112_226 = arith.constant 112 : index
    %c0_227 = arith.constant 0 : index
    %365 = vector.load %arg13[%c112_226, %c0_227] : memref<512x64xf32, #tpu.memory_space<vmem>>, vector<16x64xf32>
    %366 = arith.maximumf %364, %365 : vector<16x64xf32>
    %367 = vector.extract_strided_slice %366 {offsets = [0, 0], sizes = [1, 64], strides = [1, 1]} : vector<16x64xf32> to vector<1x64xf32>
    %368 = vector.extract_strided_slice %366 {offsets = [1, 0], sizes = [1, 64], strides = [1, 1]} : vector<16x64xf32> to vector<1x64xf32>
    %369 = arith.maximumf %367, %368 : vector<1x64xf32>
    %c0_228 = arith.constant 0 : index
    %c1344_229 = arith.constant 1344 : index
    %370 = vector.load %arg14[%c0_228, %c1344_229] : memref<2x3136xf32, #tpu.memory_space<vmem>>, vector<1x64xf32>
    tpu.vector_store %arg14[%c0_228, %c1344_229], %369 {strides = array<i32>} : memref<2x3136xf32, #tpu.memory_space<vmem>>, vector<1x64xf32>,
    %371 = vector.extract_strided_slice %366 {offsets = [2, 0], sizes = [1, 64], strides = [1, 1]} : vector<16x64xf32> to vector<1x64xf32>
    %372 = vector.extract_strided_slice %366 {offsets = [3, 0], sizes = [1, 64], strides = [1, 1]} : vector<16x64xf32> to vector<1x64xf32>
    %373 = arith.maximumf %371, %372 : vector<1x64xf32>
    %c0_230 = arith.constant 0 : index
    %c1408 = arith.constant 1408 : index
    %374 = vector.load %arg14[%c0_230, %c1408] : memref<2x3136xf32, #tpu.memory_space<vmem>>, vector<1x64xf32>
    tpu.vector_store %arg14[%c0_230, %c1408], %373 {strides = array<i32>} : memref<2x3136xf32, #tpu.memory_space<vmem>>, vector<1x64xf32>,
    %375 = vector.extract_strided_slice %366 {offsets = [4, 0], sizes = [1, 64], strides = [1, 1]} : vector<16x64xf32> to vector<1x64xf32>
    %376 = vector.extract_strided_slice %366 {offsets = [5, 0], sizes = [1, 64], strides = [1, 1]} : vector<16x64xf32> to vector<1x64xf32>
    %377 = arith.maximumf %375, %376 : vector<1x64xf32>
    %c0_231 = arith.constant 0 : index
    %c1472 = arith.constant 1472 : index
    %378 = vector.load %arg14[%c0_231, %c1472] : memref<2x3136xf32, #tpu.memory_space<vmem>>, vector<1x64xf32>
    tpu.vector_store %arg14[%c0_231, %c1472], %377 {strides = array<i32>} : memref<2x3136xf32, #tpu.memory_space<vmem>>, vector<1x64xf32>,
    %379 = vector.extract_strided_slice %366 {offsets = [6, 0], sizes = [1, 64], strides = [1, 1]} : vector<16x64xf32> to vector<1x64xf32>
    %380 = vector.extract_strided_slice %366 {offsets = [7, 0], sizes = [1, 64], strides = [1, 1]} : vector<16x64xf32> to vector<1x64xf32>
    %381 = arith.maximumf %379, %380 : vector<1x64xf32>
    %c0_232 = arith.constant 0 : index
    %c1536 = arith.constant 1536 : index
    %382 = vector.load %arg14[%c0_232, %c1536] : memref<2x3136xf32, #tpu.memory_space<vmem>>, vector<1x64xf32>
    tpu.vector_store %arg14[%c0_232, %c1536], %381 {strides = array<i32>} : memref<2x3136xf32, #tpu.memory_space<vmem>>, vector<1x64xf32>,
    %383 = vector.extract_strided_slice %366 {offsets = [8, 0], sizes = [1, 64], strides = [1, 1]} : vector<16x64xf32> to vector<1x64xf32>
    %384 = vector.extract_strided_slice %366 {offsets = [9, 0], sizes = [1, 64], strides = [1, 1]} : vector<16x64xf32> to vector<1x64xf32>
    %385 = arith.maximumf %383, %384 : vector<1x64xf32>
    %c0_233 = arith.constant 0 : index
    %c1600 = arith.constant 1600 : index
    %386 = vector.load %arg14[%c0_233, %c1600] : memref<2x3136xf32, #tpu.memory_space<vmem>>, vector<1x64xf32>
    tpu.vector_store %arg14[%c0_233, %c1600], %385 {strides = array<i32>} : memref<2x3136xf32, #tpu.memory_space<vmem>>, vector<1x64xf32>,
    %387 = vector.extract_strided_slice %366 {offsets = [10, 0], sizes = [1, 64], strides = [1, 1]} : vector<16x64xf32> to vector<1x64xf32>
    %388 = vector.extract_strided_slice %366 {offsets = [11, 0], sizes = [1, 64], strides = [1, 1]} : vector<16x64xf32> to vector<1x64xf32>
    %389 = arith.maximumf %387, %388 : vector<1x64xf32>
    %c0_234 = arith.constant 0 : index
    %c1664 = arith.constant 1664 : index
    %390 = vector.load %arg14[%c0_234, %c1664] : memref<2x3136xf32, #tpu.memory_space<vmem>>, vector<1x64xf32>
    tpu.vector_store %arg14[%c0_234, %c1664], %389 {strides = array<i32>} : memref<2x3136xf32, #tpu.memory_space<vmem>>, vector<1x64xf32>,
    %391 = vector.extract_strided_slice %366 {offsets = [12, 0], sizes = [1, 64], strides = [1, 1]} : vector<16x64xf32> to vector<1x64xf32>
    %392 = vector.extract_strided_slice %366 {offsets = [13, 0], sizes = [1, 64], strides = [1, 1]} : vector<16x64xf32> to vector<1x64xf32>
    %393 = arith.maximumf %391, %392 : vector<1x64xf32>
    %c0_235 = arith.constant 0 : index
    %c1728 = arith.constant 1728 : index
    %394 = vector.load %arg14[%c0_235, %c1728] : memref<2x3136xf32, #tpu.memory_space<vmem>>, vector<1x64xf32>
    tpu.vector_store %arg14[%c0_235, %c1728], %393 {strides = array<i32>} : memref<2x3136xf32, #tpu.memory_space<vmem>>, vector<1x64xf32>,
    %c128_236 = arith.constant 128 : index
    %c0_237 = arith.constant 0 : index
    %395 = vector.load %arg13[%c128_236, %c0_237] : memref<512x64xf32, #tpu.memory_space<vmem>>, vector<16x64xf32>
    %c144 = arith.constant 144 : index
    %c0_238 = arith.constant 0 : index
    %396 = vector.load %arg13[%c144, %c0_238] : memref<512x64xf32, #tpu.memory_space<vmem>>, vector<16x64xf32>
    %397 = arith.maximumf %395, %396 : vector<16x64xf32>
    %398 = vector.extract_strided_slice %397 {offsets = [0, 0], sizes = [1, 64], strides = [1, 1]} : vector<16x64xf32> to vector<1x64xf32>
    %399 = vector.extract_strided_slice %397 {offsets = [1, 0], sizes = [1, 64], strides = [1, 1]} : vector<16x64xf32> to vector<1x64xf32>
    %400 = arith.maximumf %398, %399 : vector<1x64xf32>
    %c0_239 = arith.constant 0 : index
    %c1792 = arith.constant 1792 : index
    %401 = vector.load %arg14[%c0_239, %c1792] : memref<2x3136xf32, #tpu.memory_space<vmem>>, vector<1x64xf32>
    tpu.vector_store %arg14[%c0_239, %c1792], %400 {strides = array<i32>} : memref<2x3136xf32, #tpu.memory_space<vmem>>, vector<1x64xf32>,
    %402 = vector.extract_strided_slice %397 {offsets = [2, 0], sizes = [1, 64], strides = [1, 1]} : vector<16x64xf32> to vector<1x64xf32>
    %403 = vector.extract_strided_slice %397 {offsets = [3, 0], sizes = [1, 64], strides = [1, 1]} : vector<16x64xf32> to vector<1x64xf32>
    %404 = arith.maximumf %402, %403 : vector<1x64xf32>
    %c0_240 = arith.constant 0 : index
    %c1856 = arith.constant 1856 : index
    %405 = vector.load %arg14[%c0_240, %c1856] : memref<2x3136xf32, #tpu.memory_space<vmem>>, vector<1x64xf32>
    tpu.vector_store %arg14[%c0_240, %c1856], %404 {strides = array<i32>} : memref<2x3136xf32, #tpu.memory_space<vmem>>, vector<1x64xf32>,
    %406 = vector.extract_strided_slice %397 {offsets = [4, 0], sizes = [1, 64], strides = [1, 1]} : vector<16x64xf32> to vector<1x64xf32>
    %407 = vector.extract_strided_slice %397 {offsets = [5, 0], sizes = [1, 64], strides = [1, 1]} : vector<16x64xf32> to vector<1x64xf32>
    %408 = arith.maximumf %406, %407 : vector<1x64xf32>
    %c0_241 = arith.constant 0 : index
    %c1920 = arith.constant 1920 : index
    %409 = vector.load %arg14[%c0_241, %c1920] : memref<2x3136xf32, #tpu.memory_space<vmem>>, vector<1x64xf32>
    tpu.vector_store %arg14[%c0_241, %c1920], %408 {strides = array<i32>} : memref<2x3136xf32, #tpu.memory_space<vmem>>, vector<1x64xf32>,
    %410 = vector.extract_strided_slice %397 {offsets = [6, 0], sizes = [1, 64], strides = [1, 1]} : vector<16x64xf32> to vector<1x64xf32>
    %411 = vector.extract_strided_slice %397 {offsets = [7, 0], sizes = [1, 64], strides = [1, 1]} : vector<16x64xf32> to vector<1x64xf32>
    %412 = arith.maximumf %410, %411 : vector<1x64xf32>
    %c0_242 = arith.constant 0 : index
    %c1984 = arith.constant 1984 : index
    %413 = vector.load %arg14[%c0_242, %c1984] : memref<2x3136xf32, #tpu.memory_space<vmem>>, vector<1x64xf32>
    tpu.vector_store %arg14[%c0_242, %c1984], %412 {strides = array<i32>} : memref<2x3136xf32, #tpu.memory_space<vmem>>, vector<1x64xf32>,
    %414 = vector.extract_strided_slice %397 {offsets = [8, 0], sizes = [1, 64], strides = [1, 1]} : vector<16x64xf32> to vector<1x64xf32>
    %415 = vector.extract_strided_slice %397 {offsets = [9, 0], sizes = [1, 64], strides = [1, 1]} : vector<16x64xf32> to vector<1x64xf32>
    %416 = arith.maximumf %414, %415 : vector<1x64xf32>
    %c0_243 = arith.constant 0 : index
    %c2048 = arith.constant 2048 : index
    %417 = vector.load %arg14[%c0_243, %c2048] : memref<2x3136xf32, #tpu.memory_space<vmem>>, vector<1x64xf32>
    tpu.vector_store %arg14[%c0_243, %c2048], %416 {strides = array<i32>} : memref<2x3136xf32, #tpu.memory_space<vmem>>, vector<1x64xf32>,
    %418 = vector.extract_strided_slice %397 {offsets = [10, 0], sizes = [1, 64], strides = [1, 1]} : vector<16x64xf32> to vector<1x64xf32>
    %419 = vector.extract_strided_slice %397 {offsets = [11, 0], sizes = [1, 64], strides = [1, 1]} : vector<16x64xf32> to vector<1x64xf32>
    %420 = arith.maximumf %418, %419 : vector<1x64xf32>
    %c0_244 = arith.constant 0 : index
    %c2112 = arith.constant 2112 : index
    %421 = vector.load %arg14[%c0_244, %c2112] : memref<2x3136xf32, #tpu.memory_space<vmem>>, vector<1x64xf32>
    tpu.vector_store %arg14[%c0_244, %c2112], %420 {strides = array<i32>} : memref<2x3136xf32, #tpu.memory_space<vmem>>, vector<1x64xf32>,
    %422 = vector.extract_strided_slice %397 {offsets = [12, 0], sizes = [1, 64], strides = [1, 1]} : vector<16x64xf32> to vector<1x64xf32>
    %423 = vector.extract_strided_slice %397 {offsets = [13, 0], sizes = [1, 64], strides = [1, 1]} : vector<16x64xf32> to vector<1x64xf32>
    %424 = arith.maximumf %422, %423 : vector<1x64xf32>
    %c0_245 = arith.constant 0 : index
    %c2176 = arith.constant 2176 : index
    %425 = vector.load %arg14[%c0_245, %c2176] : memref<2x3136xf32, #tpu.memory_space<vmem>>, vector<1x64xf32>
    tpu.vector_store %arg14[%c0_245, %c2176], %424 {strides = array<i32>} : memref<2x3136xf32, #tpu.memory_space<vmem>>, vector<1x64xf32>,
    %c160_246 = arith.constant 160 : index
    %c0_247 = arith.constant 0 : index
    %426 = vector.load %arg13[%c160_246, %c0_247] : memref<512x64xf32, #tpu.memory_space<vmem>>, vector<16x64xf32>
    %c176 = arith.constant 176 : index
    %c0_248 = arith.constant 0 : index
    %427 = vector.load %arg13[%c176, %c0_248] : memref<512x64xf32, #tpu.memory_space<vmem>>, vector<16x64xf32>
    %428 = arith.maximumf %426, %427 : vector<16x64xf32>
    %429 = vector.extract_strided_slice %428 {offsets = [0, 0], sizes = [1, 64], strides = [1, 1]} : vector<16x64xf32> to vector<1x64xf32>
    %430 = vector.extract_strided_slice %428 {offsets = [1, 0], sizes = [1, 64], strides = [1, 1]} : vector<16x64xf32> to vector<1x64xf32>
    %431 = arith.maximumf %429, %430 : vector<1x64xf32>
    %c0_249 = arith.constant 0 : index
    %c2240 = arith.constant 2240 : index
    %432 = vector.load %arg14[%c0_249, %c2240] : memref<2x3136xf32, #tpu.memory_space<vmem>>, vector<1x64xf32>
    tpu.vector_store %arg14[%c0_249, %c2240], %431 {strides = array<i32>} : memref<2x3136xf32, #tpu.memory_space<vmem>>, vector<1x64xf32>,
    %433 = vector.extract_strided_slice %428 {offsets = [2, 0], sizes = [1, 64], strides = [1, 1]} : vector<16x64xf32> to vector<1x64xf32>
    %434 = vector.extract_strided_slice %428 {offsets = [3, 0], sizes = [1, 64], strides = [1, 1]} : vector<16x64xf32> to vector<1x64xf32>
    %435 = arith.maximumf %433, %434 : vector<1x64xf32>
    %c0_250 = arith.constant 0 : index
    %c2304 = arith.constant 2304 : index
    %436 = vector.load %arg14[%c0_250, %c2304] : memref<2x3136xf32, #tpu.memory_space<vmem>>, vector<1x64xf32>
    tpu.vector_store %arg14[%c0_250, %c2304], %435 {strides = array<i32>} : memref<2x3136xf32, #tpu.memory_space<vmem>>, vector<1x64xf32>,
    %437 = vector.extract_strided_slice %428 {offsets = [4, 0], sizes = [1, 64], strides = [1, 1]} : vector<16x64xf32> to vector<1x64xf32>
    %438 = vector.extract_strided_slice %428 {offsets = [5, 0], sizes = [1, 64], strides = [1, 1]} : vector<16x64xf32> to vector<1x64xf32>
    %439 = arith.maximumf %437, %438 : vector<1x64xf32>
    %c0_251 = arith.constant 0 : index
    %c2368 = arith.constant 2368 : index
    %440 = vector.load %arg14[%c0_251, %c2368] : memref<2x3136xf32, #tpu.memory_space<vmem>>, vector<1x64xf32>
    tpu.vector_store %arg14[%c0_251, %c2368], %439 {strides = array<i32>} : memref<2x3136xf32, #tpu.memory_space<vmem>>, vector<1x64xf32>,
    %441 = vector.extract_strided_slice %428 {offsets = [6, 0], sizes = [1, 64], strides = [1, 1]} : vector<16x64xf32> to vector<1x64xf32>
    %442 = vector.extract_strided_slice %428 {offsets = [7, 0], sizes = [1, 64], strides = [1, 1]} : vector<16x64xf32> to vector<1x64xf32>
    %443 = arith.maximumf %441, %442 : vector<1x64xf32>
    %c0_252 = arith.constant 0 : index
    %c2432 = arith.constant 2432 : index
    %444 = vector.load %arg14[%c0_252, %c2432] : memref<2x3136xf32, #tpu.memory_space<vmem>>, vector<1x64xf32>
    tpu.vector_store %arg14[%c0_252, %c2432], %443 {strides = array<i32>} : memref<2x3136xf32, #tpu.memory_space<vmem>>, vector<1x64xf32>,
    %445 = vector.extract_strided_slice %428 {offsets = [8, 0], sizes = [1, 64], strides = [1, 1]} : vector<16x64xf32> to vector<1x64xf32>
    %446 = vector.extract_strided_slice %428 {offsets = [9, 0], sizes = [1, 64], strides = [1, 1]} : vector<16x64xf32> to vector<1x64xf32>
    %447 = arith.maximumf %445, %446 : vector<1x64xf32>
    %c0_253 = arith.constant 0 : index
    %c2496 = arith.constant 2496 : index
    %448 = vector.load %arg14[%c0_253, %c2496] : memref<2x3136xf32, #tpu.memory_space<vmem>>, vector<1x64xf32>
    tpu.vector_store %arg14[%c0_253, %c2496], %447 {strides = array<i32>} : memref<2x3136xf32, #tpu.memory_space<vmem>>, vector<1x64xf32>,
    %449 = vector.extract_strided_slice %428 {offsets = [10, 0], sizes = [1, 64], strides = [1, 1]} : vector<16x64xf32> to vector<1x64xf32>
    %450 = vector.extract_strided_slice %428 {offsets = [11, 0], sizes = [1, 64], strides = [1, 1]} : vector<16x64xf32> to vector<1x64xf32>
    %451 = arith.maximumf %449, %450 : vector<1x64xf32>
    %c0_254 = arith.constant 0 : index
    %c2560 = arith.constant 2560 : index
    %452 = vector.load %arg14[%c0_254, %c2560] : memref<2x3136xf32, #tpu.memory_space<vmem>>, vector<1x64xf32>
    tpu.vector_store %arg14[%c0_254, %c2560], %451 {strides = array<i32>} : memref<2x3136xf32, #tpu.memory_space<vmem>>, vector<1x64xf32>,
    %453 = vector.extract_strided_slice %428 {offsets = [12, 0], sizes = [1, 64], strides = [1, 1]} : vector<16x64xf32> to vector<1x64xf32>
    %454 = vector.extract_strided_slice %428 {offsets = [13, 0], sizes = [1, 64], strides = [1, 1]} : vector<16x64xf32> to vector<1x64xf32>
    %455 = arith.maximumf %453, %454 : vector<1x64xf32>
    %c0_255 = arith.constant 0 : index
    %c2624 = arith.constant 2624 : index
    %456 = vector.load %arg14[%c0_255, %c2624] : memref<2x3136xf32, #tpu.memory_space<vmem>>, vector<1x64xf32>
    tpu.vector_store %arg14[%c0_255, %c2624], %455 {strides = array<i32>} : memref<2x3136xf32, #tpu.memory_space<vmem>>, vector<1x64xf32>,
    %c192_256 = arith.constant 192 : index
    %c0_257 = arith.constant 0 : index
    %457 = vector.load %arg13[%c192_256, %c0_257] : memref<512x64xf32, #tpu.memory_space<vmem>>, vector<16x64xf32>
    %c208 = arith.constant 208 : index
    %c0_258 = arith.constant 0 : index
    %458 = vector.load %arg13[%c208, %c0_258] : memref<512x64xf32, #tpu.memory_space<vmem>>, vector<16x64xf32>
    %459 = arith.maximumf %457, %458 : vector<16x64xf32>
    %460 = vector.extract_strided_slice %459 {offsets = [0, 0], sizes = [1, 64], strides = [1, 1]} : vector<16x64xf32> to vector<1x64xf32>
    %461 = vector.extract_strided_slice %459 {offsets = [1, 0], sizes = [1, 64], strides = [1, 1]} : vector<16x64xf32> to vector<1x64xf32>
    %462 = arith.maximumf %460, %461 : vector<1x64xf32>
    %c0_259 = arith.constant 0 : index
    %c2688 = arith.constant 2688 : index
    %463 = vector.load %arg14[%c0_259, %c2688] : memref<2x3136xf32, #tpu.memory_space<vmem>>, vector<1x64xf32>
    tpu.vector_store %arg14[%c0_259, %c2688], %462 {strides = array<i32>} : memref<2x3136xf32, #tpu.memory_space<vmem>>, vector<1x64xf32>,
    %464 = vector.extract_strided_slice %459 {offsets = [2, 0], sizes = [1, 64], strides = [1, 1]} : vector<16x64xf32> to vector<1x64xf32>
    %465 = vector.extract_strided_slice %459 {offsets = [3, 0], sizes = [1, 64], strides = [1, 1]} : vector<16x64xf32> to vector<1x64xf32>
    %466 = arith.maximumf %464, %465 : vector<1x64xf32>
    %c0_260 = arith.constant 0 : index
    %c2752 = arith.constant 2752 : index
    %467 = vector.load %arg14[%c0_260, %c2752] : memref<2x3136xf32, #tpu.memory_space<vmem>>, vector<1x64xf32>
    tpu.vector_store %arg14[%c0_260, %c2752], %466 {strides = array<i32>} : memref<2x3136xf32, #tpu.memory_space<vmem>>, vector<1x64xf32>,
    %468 = vector.extract_strided_slice %459 {offsets = [4, 0], sizes = [1, 64], strides = [1, 1]} : vector<16x64xf32> to vector<1x64xf32>
    %469 = vector.extract_strided_slice %459 {offsets = [5, 0], sizes = [1, 64], strides = [1, 1]} : vector<16x64xf32> to vector<1x64xf32>
    %470 = arith.maximumf %468, %469 : vector<1x64xf32>
    %c0_261 = arith.constant 0 : index
    %c2816 = arith.constant 2816 : index
    %471 = vector.load %arg14[%c0_261, %c2816] : memref<2x3136xf32, #tpu.memory_space<vmem>>, vector<1x64xf32>
    tpu.vector_store %arg14[%c0_261, %c2816], %470 {strides = array<i32>} : memref<2x3136xf32, #tpu.memory_space<vmem>>, vector<1x64xf32>,
    %472 = vector.extract_strided_slice %459 {offsets = [6, 0], sizes = [1, 64], strides = [1, 1]} : vector<16x64xf32> to vector<1x64xf32>
    %473 = vector.extract_strided_slice %459 {offsets = [7, 0], sizes = [1, 64], strides = [1, 1]} : vector<16x64xf32> to vector<1x64xf32>
    %474 = arith.maximumf %472, %473 : vector<1x64xf32>
    %c0_262 = arith.constant 0 : index
    %c2880 = arith.constant 2880 : index
    %475 = vector.load %arg14[%c0_262, %c2880] : memref<2x3136xf32, #tpu.memory_space<vmem>>, vector<1x64xf32>
    tpu.vector_store %arg14[%c0_262, %c2880], %474 {strides = array<i32>} : memref<2x3136xf32, #tpu.memory_space<vmem>>, vector<1x64xf32>,
    %476 = vector.extract_strided_slice %459 {offsets = [8, 0], sizes = [1, 64], strides = [1, 1]} : vector<16x64xf32> to vector<1x64xf32>
    %477 = vector.extract_strided_slice %459 {offsets = [9, 0], sizes = [1, 64], strides = [1, 1]} : vector<16x64xf32> to vector<1x64xf32>
    %478 = arith.maximumf %476, %477 : vector<1x64xf32>
    %c0_263 = arith.constant 0 : index
    %c2944 = arith.constant 2944 : index
    %479 = vector.load %arg14[%c0_263, %c2944] : memref<2x3136xf32, #tpu.memory_space<vmem>>, vector<1x64xf32>
    tpu.vector_store %arg14[%c0_263, %c2944], %478 {strides = array<i32>} : memref<2x3136xf32, #tpu.memory_space<vmem>>, vector<1x64xf32>,
    %480 = vector.extract_strided_slice %459 {offsets = [10, 0], sizes = [1, 64], strides = [1, 1]} : vector<16x64xf32> to vector<1x64xf32>
    %481 = vector.extract_strided_slice %459 {offsets = [11, 0], sizes = [1, 64], strides = [1, 1]} : vector<16x64xf32> to vector<1x64xf32>
    %482 = arith.maximumf %480, %481 : vector<1x64xf32>
    %c0_264 = arith.constant 0 : index
    %c3008 = arith.constant 3008 : index
    %483 = vector.load %arg14[%c0_264, %c3008] : memref<2x3136xf32, #tpu.memory_space<vmem>>, vector<1x64xf32>
    tpu.vector_store %arg14[%c0_264, %c3008], %482 {strides = array<i32>} : memref<2x3136xf32, #tpu.memory_space<vmem>>, vector<1x64xf32>,
    %484 = vector.extract_strided_slice %459 {offsets = [12, 0], sizes = [1, 64], strides = [1, 1]} : vector<16x64xf32> to vector<1x64xf32>
    %485 = vector.extract_strided_slice %459 {offsets = [13, 0], sizes = [1, 64], strides = [1, 1]} : vector<16x64xf32> to vector<1x64xf32>
    %486 = arith.maximumf %484, %485 : vector<1x64xf32>
    %c0_265 = arith.constant 0 : index
    %c3072 = arith.constant 3072 : index
    %487 = vector.load %arg14[%c0_265, %c3072] : memref<2x3136xf32, #tpu.memory_space<vmem>>, vector<1x64xf32>
    tpu.vector_store %arg14[%c0_265, %c3072], %486 {strides = array<i32>} : memref<2x3136xf32, #tpu.memory_space<vmem>>, vector<1x64xf32>,
    %c256_266 = arith.constant 256 : index
    %c0_267 = arith.constant 0 : index
    %488 = vector.load %arg13[%c256_266, %c0_267] : memref<512x64xf32, #tpu.memory_space<vmem>>, vector<16x64xf32>
    %c272 = arith.constant 272 : index
    %c0_268 = arith.constant 0 : index
    %489 = vector.load %arg13[%c272, %c0_268] : memref<512x64xf32, #tpu.memory_space<vmem>>, vector<16x64xf32>
    %490 = arith.maximumf %488, %489 : vector<16x64xf32>
    %491 = vector.extract_strided_slice %490 {offsets = [0, 0], sizes = [1, 64], strides = [1, 1]} : vector<16x64xf32> to vector<1x64xf32>
    %492 = vector.extract_strided_slice %490 {offsets = [1, 0], sizes = [1, 64], strides = [1, 1]} : vector<16x64xf32> to vector<1x64xf32>
    %493 = arith.maximumf %491, %492 : vector<1x64xf32>
    %c1_269 = arith.constant 1 : index
    %c0_270 = arith.constant 0 : index
    %494 = vector.load %arg14[%c1_269, %c0_270] : memref<2x3136xf32, #tpu.memory_space<vmem>>, vector<1x64xf32>
    tpu.vector_store %arg14[%c1_269, %c0_270], %493 {strides = array<i32>} : memref<2x3136xf32, #tpu.memory_space<vmem>>, vector<1x64xf32>,
    %495 = vector.extract_strided_slice %490 {offsets = [2, 0], sizes = [1, 64], strides = [1, 1]} : vector<16x64xf32> to vector<1x64xf32>
    %496 = vector.extract_strided_slice %490 {offsets = [3, 0], sizes = [1, 64], strides = [1, 1]} : vector<16x64xf32> to vector<1x64xf32>
    %497 = arith.maximumf %495, %496 : vector<1x64xf32>
    %c1_271 = arith.constant 1 : index
    %c64_272 = arith.constant 64 : index
    %498 = vector.load %arg14[%c1_271, %c64_272] : memref<2x3136xf32, #tpu.memory_space<vmem>>, vector<1x64xf32>
    tpu.vector_store %arg14[%c1_271, %c64_272], %497 {strides = array<i32>} : memref<2x3136xf32, #tpu.memory_space<vmem>>, vector<1x64xf32>,
    %499 = vector.extract_strided_slice %490 {offsets = [4, 0], sizes = [1, 64], strides = [1, 1]} : vector<16x64xf32> to vector<1x64xf32>
    %500 = vector.extract_strided_slice %490 {offsets = [5, 0], sizes = [1, 64], strides = [1, 1]} : vector<16x64xf32> to vector<1x64xf32>
    %501 = arith.maximumf %499, %500 : vector<1x64xf32>
    %c1_273 = arith.constant 1 : index
    %c128_274 = arith.constant 128 : index
    %502 = vector.load %arg14[%c1_273, %c128_274] : memref<2x3136xf32, #tpu.memory_space<vmem>>, vector<1x64xf32>
    tpu.vector_store %arg14[%c1_273, %c128_274], %501 {strides = array<i32>} : memref<2x3136xf32, #tpu.memory_space<vmem>>, vector<1x64xf32>,
    %503 = vector.extract_strided_slice %490 {offsets = [6, 0], sizes = [1, 64], strides = [1, 1]} : vector<16x64xf32> to vector<1x64xf32>
    %504 = vector.extract_strided_slice %490 {offsets = [7, 0], sizes = [1, 64], strides = [1, 1]} : vector<16x64xf32> to vector<1x64xf32>
    %505 = arith.maximumf %503, %504 : vector<1x64xf32>
    %c1_275 = arith.constant 1 : index
    %c192_276 = arith.constant 192 : index
    %506 = vector.load %arg14[%c1_275, %c192_276] : memref<2x3136xf32, #tpu.memory_space<vmem>>, vector<1x64xf32>
    tpu.vector_store %arg14[%c1_275, %c192_276], %505 {strides = array<i32>} : memref<2x3136xf32, #tpu.memory_space<vmem>>, vector<1x64xf32>,
    %507 = vector.extract_strided_slice %490 {offsets = [8, 0], sizes = [1, 64], strides = [1, 1]} : vector<16x64xf32> to vector<1x64xf32>
    %508 = vector.extract_strided_slice %490 {offsets = [9, 0], sizes = [1, 64], strides = [1, 1]} : vector<16x64xf32> to vector<1x64xf32>
    %509 = arith.maximumf %507, %508 : vector<1x64xf32>
    %c1_277 = arith.constant 1 : index
    %c256_278 = arith.constant 256 : index
    %510 = vector.load %arg14[%c1_277, %c256_278] : memref<2x3136xf32, #tpu.memory_space<vmem>>, vector<1x64xf32>
    tpu.vector_store %arg14[%c1_277, %c256_278], %509 {strides = array<i32>} : memref<2x3136xf32, #tpu.memory_space<vmem>>, vector<1x64xf32>,
    %511 = vector.extract_strided_slice %490 {offsets = [10, 0], sizes = [1, 64], strides = [1, 1]} : vector<16x64xf32> to vector<1x64xf32>
    %512 = vector.extract_strided_slice %490 {offsets = [11, 0], sizes = [1, 64], strides = [1, 1]} : vector<16x64xf32> to vector<1x64xf32>
    %513 = arith.maximumf %511, %512 : vector<1x64xf32>
    %c1_279 = arith.constant 1 : index
    %c320_280 = arith.constant 320 : index
    %514 = vector.load %arg14[%c1_279, %c320_280] : memref<2x3136xf32, #tpu.memory_space<vmem>>, vector<1x64xf32>
    tpu.vector_store %arg14[%c1_279, %c320_280], %513 {strides = array<i32>} : memref<2x3136xf32, #tpu.memory_space<vmem>>, vector<1x64xf32>,
    %515 = vector.extract_strided_slice %490 {offsets = [12, 0], sizes = [1, 64], strides = [1, 1]} : vector<16x64xf32> to vector<1x64xf32>
    %516 = vector.extract_strided_slice %490 {offsets = [13, 0], sizes = [1, 64], strides = [1, 1]} : vector<16x64xf32> to vector<1x64xf32>
    %517 = arith.maximumf %515, %516 : vector<1x64xf32>
    %c1_281 = arith.constant 1 : index
    %c384_282 = arith.constant 384 : index
    %518 = vector.load %arg14[%c1_281, %c384_282] : memref<2x3136xf32, #tpu.memory_space<vmem>>, vector<1x64xf32>
    tpu.vector_store %arg14[%c1_281, %c384_282], %517 {strides = array<i32>} : memref<2x3136xf32, #tpu.memory_space<vmem>>, vector<1x64xf32>,
    %c288 = arith.constant 288 : index
    %c0_283 = arith.constant 0 : index
    %519 = vector.load %arg13[%c288, %c0_283] : memref<512x64xf32, #tpu.memory_space<vmem>>, vector<16x64xf32>
    %c304 = arith.constant 304 : index
    %c0_284 = arith.constant 0 : index
    %520 = vector.load %arg13[%c304, %c0_284] : memref<512x64xf32, #tpu.memory_space<vmem>>, vector<16x64xf32>
    %521 = arith.maximumf %519, %520 : vector<16x64xf32>
    %522 = vector.extract_strided_slice %521 {offsets = [0, 0], sizes = [1, 64], strides = [1, 1]} : vector<16x64xf32> to vector<1x64xf32>
    %523 = vector.extract_strided_slice %521 {offsets = [1, 0], sizes = [1, 64], strides = [1, 1]} : vector<16x64xf32> to vector<1x64xf32>
    %524 = arith.maximumf %522, %523 : vector<1x64xf32>
    %c1_285 = arith.constant 1 : index
    %c448_286 = arith.constant 448 : index
    %525 = vector.load %arg14[%c1_285, %c448_286] : memref<2x3136xf32, #tpu.memory_space<vmem>>, vector<1x64xf32>
    tpu.vector_store %arg14[%c1_285, %c448_286], %524 {strides = array<i32>} : memref<2x3136xf32, #tpu.memory_space<vmem>>, vector<1x64xf32>,
    %526 = vector.extract_strided_slice %521 {offsets = [2, 0], sizes = [1, 64], strides = [1, 1]} : vector<16x64xf32> to vector<1x64xf32>
    %527 = vector.extract_strided_slice %521 {offsets = [3, 0], sizes = [1, 64], strides = [1, 1]} : vector<16x64xf32> to vector<1x64xf32>
    %528 = arith.maximumf %526, %527 : vector<1x64xf32>
    %c1_287 = arith.constant 1 : index
    %c512_288 = arith.constant 512 : index
    %529 = vector.load %arg14[%c1_287, %c512_288] : memref<2x3136xf32, #tpu.memory_space<vmem>>, vector<1x64xf32>
    tpu.vector_store %arg14[%c1_287, %c512_288], %528 {strides = array<i32>} : memref<2x3136xf32, #tpu.memory_space<vmem>>, vector<1x64xf32>,
    %530 = vector.extract_strided_slice %521 {offsets = [4, 0], sizes = [1, 64], strides = [1, 1]} : vector<16x64xf32> to vector<1x64xf32>
    %531 = vector.extract_strided_slice %521 {offsets = [5, 0], sizes = [1, 64], strides = [1, 1]} : vector<16x64xf32> to vector<1x64xf32>
    %532 = arith.maximumf %530, %531 : vector<1x64xf32>
    %c1_289 = arith.constant 1 : index
    %c576_290 = arith.constant 576 : index
    %533 = vector.load %arg14[%c1_289, %c576_290] : memref<2x3136xf32, #tpu.memory_space<vmem>>, vector<1x64xf32>
    tpu.vector_store %arg14[%c1_289, %c576_290], %532 {strides = array<i32>} : memref<2x3136xf32, #tpu.memory_space<vmem>>, vector<1x64xf32>,
    %534 = vector.extract_strided_slice %521 {offsets = [6, 0], sizes = [1, 64], strides = [1, 1]} : vector<16x64xf32> to vector<1x64xf32>
    %535 = vector.extract_strided_slice %521 {offsets = [7, 0], sizes = [1, 64], strides = [1, 1]} : vector<16x64xf32> to vector<1x64xf32>
    %536 = arith.maximumf %534, %535 : vector<1x64xf32>
    %c1_291 = arith.constant 1 : index
    %c640_292 = arith.constant 640 : index
    %537 = vector.load %arg14[%c1_291, %c640_292] : memref<2x3136xf32, #tpu.memory_space<vmem>>, vector<1x64xf32>
    tpu.vector_store %arg14[%c1_291, %c640_292], %536 {strides = array<i32>} : memref<2x3136xf32, #tpu.memory_space<vmem>>, vector<1x64xf32>,
    %538 = vector.extract_strided_slice %521 {offsets = [8, 0], sizes = [1, 64], strides = [1, 1]} : vector<16x64xf32> to vector<1x64xf32>
    %539 = vector.extract_strided_slice %521 {offsets = [9, 0], sizes = [1, 64], strides = [1, 1]} : vector<16x64xf32> to vector<1x64xf32>
    %540 = arith.maximumf %538, %539 : vector<1x64xf32>
    %c1_293 = arith.constant 1 : index
    %c704_294 = arith.constant 704 : index
    %541 = vector.load %arg14[%c1_293, %c704_294] : memref<2x3136xf32, #tpu.memory_space<vmem>>, vector<1x64xf32>
    tpu.vector_store %arg14[%c1_293, %c704_294], %540 {strides = array<i32>} : memref<2x3136xf32, #tpu.memory_space<vmem>>, vector<1x64xf32>,
    %542 = vector.extract_strided_slice %521 {offsets = [10, 0], sizes = [1, 64], strides = [1, 1]} : vector<16x64xf32> to vector<1x64xf32>
    %543 = vector.extract_strided_slice %521 {offsets = [11, 0], sizes = [1, 64], strides = [1, 1]} : vector<16x64xf32> to vector<1x64xf32>
    %544 = arith.maximumf %542, %543 : vector<1x64xf32>
    %c1_295 = arith.constant 1 : index
    %c768_296 = arith.constant 768 : index
    %545 = vector.load %arg14[%c1_295, %c768_296] : memref<2x3136xf32, #tpu.memory_space<vmem>>, vector<1x64xf32>
    tpu.vector_store %arg14[%c1_295, %c768_296], %544 {strides = array<i32>} : memref<2x3136xf32, #tpu.memory_space<vmem>>, vector<1x64xf32>,
    %546 = vector.extract_strided_slice %521 {offsets = [12, 0], sizes = [1, 64], strides = [1, 1]} : vector<16x64xf32> to vector<1x64xf32>
    %547 = vector.extract_strided_slice %521 {offsets = [13, 0], sizes = [1, 64], strides = [1, 1]} : vector<16x64xf32> to vector<1x64xf32>
    %548 = arith.maximumf %546, %547 : vector<1x64xf32>
    %c1_297 = arith.constant 1 : index
    %c832_298 = arith.constant 832 : index
    %549 = vector.load %arg14[%c1_297, %c832_298] : memref<2x3136xf32, #tpu.memory_space<vmem>>, vector<1x64xf32>
    tpu.vector_store %arg14[%c1_297, %c832_298], %548 {strides = array<i32>} : memref<2x3136xf32, #tpu.memory_space<vmem>>, vector<1x64xf32>,
    %c320_299 = arith.constant 320 : index
    %c0_300 = arith.constant 0 : index
    %550 = vector.load %arg13[%c320_299, %c0_300] : memref<512x64xf32, #tpu.memory_space<vmem>>, vector<16x64xf32>
    %c336_301 = arith.constant 336 : index
    %c0_302 = arith.constant 0 : index
    %551 = vector.load %arg13[%c336_301, %c0_302] : memref<512x64xf32, #tpu.memory_space<vmem>>, vector<16x64xf32>
    %552 = arith.maximumf %550, %551 : vector<16x64xf32>
    %553 = vector.extract_strided_slice %552 {offsets = [0, 0], sizes = [1, 64], strides = [1, 1]} : vector<16x64xf32> to vector<1x64xf32>
    %554 = vector.extract_strided_slice %552 {offsets = [1, 0], sizes = [1, 64], strides = [1, 1]} : vector<16x64xf32> to vector<1x64xf32>
    %555 = arith.maximumf %553, %554 : vector<1x64xf32>
    %c1_303 = arith.constant 1 : index
    %c896_304 = arith.constant 896 : index
    %556 = vector.load %arg14[%c1_303, %c896_304] : memref<2x3136xf32, #tpu.memory_space<vmem>>, vector<1x64xf32>
    tpu.vector_store %arg14[%c1_303, %c896_304], %555 {strides = array<i32>} : memref<2x3136xf32, #tpu.memory_space<vmem>>, vector<1x64xf32>,
    %557 = vector.extract_strided_slice %552 {offsets = [2, 0], sizes = [1, 64], strides = [1, 1]} : vector<16x64xf32> to vector<1x64xf32>
    %558 = vector.extract_strided_slice %552 {offsets = [3, 0], sizes = [1, 64], strides = [1, 1]} : vector<16x64xf32> to vector<1x64xf32>
    %559 = arith.maximumf %557, %558 : vector<1x64xf32>
    %c1_305 = arith.constant 1 : index
    %c960_306 = arith.constant 960 : index
    %560 = vector.load %arg14[%c1_305, %c960_306] : memref<2x3136xf32, #tpu.memory_space<vmem>>, vector<1x64xf32>
    tpu.vector_store %arg14[%c1_305, %c960_306], %559 {strides = array<i32>} : memref<2x3136xf32, #tpu.memory_space<vmem>>, vector<1x64xf32>,
    %561 = vector.extract_strided_slice %552 {offsets = [4, 0], sizes = [1, 64], strides = [1, 1]} : vector<16x64xf32> to vector<1x64xf32>
    %562 = vector.extract_strided_slice %552 {offsets = [5, 0], sizes = [1, 64], strides = [1, 1]} : vector<16x64xf32> to vector<1x64xf32>
    %563 = arith.maximumf %561, %562 : vector<1x64xf32>
    %c1_307 = arith.constant 1 : index
    %c1024_308 = arith.constant 1024 : index
    %564 = vector.load %arg14[%c1_307, %c1024_308] : memref<2x3136xf32, #tpu.memory_space<vmem>>, vector<1x64xf32>
    tpu.vector_store %arg14[%c1_307, %c1024_308], %563 {strides = array<i32>} : memref<2x3136xf32, #tpu.memory_space<vmem>>, vector<1x64xf32>,
    %565 = vector.extract_strided_slice %552 {offsets = [6, 0], sizes = [1, 64], strides = [1, 1]} : vector<16x64xf32> to vector<1x64xf32>
    %566 = vector.extract_strided_slice %552 {offsets = [7, 0], sizes = [1, 64], strides = [1, 1]} : vector<16x64xf32> to vector<1x64xf32>
    %567 = arith.maximumf %565, %566 : vector<1x64xf32>
    %c1_309 = arith.constant 1 : index
    %c1088_310 = arith.constant 1088 : index
    %568 = vector.load %arg14[%c1_309, %c1088_310] : memref<2x3136xf32, #tpu.memory_space<vmem>>, vector<1x64xf32>
    tpu.vector_store %arg14[%c1_309, %c1088_310], %567 {strides = array<i32>} : memref<2x3136xf32, #tpu.memory_space<vmem>>, vector<1x64xf32>,
    %569 = vector.extract_strided_slice %552 {offsets = [8, 0], sizes = [1, 64], strides = [1, 1]} : vector<16x64xf32> to vector<1x64xf32>
    %570 = vector.extract_strided_slice %552 {offsets = [9, 0], sizes = [1, 64], strides = [1, 1]} : vector<16x64xf32> to vector<1x64xf32>
    %571 = arith.maximumf %569, %570 : vector<1x64xf32>
    %c1_311 = arith.constant 1 : index
    %c1152_312 = arith.constant 1152 : index
    %572 = vector.load %arg14[%c1_311, %c1152_312] : memref<2x3136xf32, #tpu.memory_space<vmem>>, vector<1x64xf32>
    tpu.vector_store %arg14[%c1_311, %c1152_312], %571 {strides = array<i32>} : memref<2x3136xf32, #tpu.memory_space<vmem>>, vector<1x64xf32>,
    %573 = vector.extract_strided_slice %552 {offsets = [10, 0], sizes = [1, 64], strides = [1, 1]} : vector<16x64xf32> to vector<1x64xf32>
    %574 = vector.extract_strided_slice %552 {offsets = [11, 0], sizes = [1, 64], strides = [1, 1]} : vector<16x64xf32> to vector<1x64xf32>
    %575 = arith.maximumf %573, %574 : vector<1x64xf32>
    %c1_313 = arith.constant 1 : index
    %c1216_314 = arith.constant 1216 : index
    %576 = vector.load %arg14[%c1_313, %c1216_314] : memref<2x3136xf32, #tpu.memory_space<vmem>>, vector<1x64xf32>
    tpu.vector_store %arg14[%c1_313, %c1216_314], %575 {strides = array<i32>} : memref<2x3136xf32, #tpu.memory_space<vmem>>, vector<1x64xf32>,
    %577 = vector.extract_strided_slice %552 {offsets = [12, 0], sizes = [1, 64], strides = [1, 1]} : vector<16x64xf32> to vector<1x64xf32>
    %578 = vector.extract_strided_slice %552 {offsets = [13, 0], sizes = [1, 64], strides = [1, 1]} : vector<16x64xf32> to vector<1x64xf32>
    %579 = arith.maximumf %577, %578 : vector<1x64xf32>
    %c1_315 = arith.constant 1 : index
    %c1280_316 = arith.constant 1280 : index
    %580 = vector.load %arg14[%c1_315, %c1280_316] : memref<2x3136xf32, #tpu.memory_space<vmem>>, vector<1x64xf32>
    tpu.vector_store %arg14[%c1_315, %c1280_316], %579 {strides = array<i32>} : memref<2x3136xf32, #tpu.memory_space<vmem>>, vector<1x64xf32>,
    %c352 = arith.constant 352 : index
    %c0_317 = arith.constant 0 : index
    %581 = vector.load %arg13[%c352, %c0_317] : memref<512x64xf32, #tpu.memory_space<vmem>>, vector<16x64xf32>
    %c368 = arith.constant 368 : index
    %c0_318 = arith.constant 0 : index
    %582 = vector.load %arg13[%c368, %c0_318] : memref<512x64xf32, #tpu.memory_space<vmem>>, vector<16x64xf32>
    %583 = arith.maximumf %581, %582 : vector<16x64xf32>
    %584 = vector.extract_strided_slice %583 {offsets = [0, 0], sizes = [1, 64], strides = [1, 1]} : vector<16x64xf32> to vector<1x64xf32>
    %585 = vector.extract_strided_slice %583 {offsets = [1, 0], sizes = [1, 64], strides = [1, 1]} : vector<16x64xf32> to vector<1x64xf32>
    %586 = arith.maximumf %584, %585 : vector<1x64xf32>
    %c1_319 = arith.constant 1 : index
    %c1344_320 = arith.constant 1344 : index
    %587 = vector.load %arg14[%c1_319, %c1344_320] : memref<2x3136xf32, #tpu.memory_space<vmem>>, vector<1x64xf32>
    tpu.vector_store %arg14[%c1_319, %c1344_320], %586 {strides = array<i32>} : memref<2x3136xf32, #tpu.memory_space<vmem>>, vector<1x64xf32>,
    %588 = vector.extract_strided_slice %583 {offsets = [2, 0], sizes = [1, 64], strides = [1, 1]} : vector<16x64xf32> to vector<1x64xf32>
    %589 = vector.extract_strided_slice %583 {offsets = [3, 0], sizes = [1, 64], strides = [1, 1]} : vector<16x64xf32> to vector<1x64xf32>
    %590 = arith.maximumf %588, %589 : vector<1x64xf32>
    %c1_321 = arith.constant 1 : index
    %c1408_322 = arith.constant 1408 : index
    %591 = vector.load %arg14[%c1_321, %c1408_322] : memref<2x3136xf32, #tpu.memory_space<vmem>>, vector<1x64xf32>
    tpu.vector_store %arg14[%c1_321, %c1408_322], %590 {strides = array<i32>} : memref<2x3136xf32, #tpu.memory_space<vmem>>, vector<1x64xf32>,
    %592 = vector.extract_strided_slice %583 {offsets = [4, 0], sizes = [1, 64], strides = [1, 1]} : vector<16x64xf32> to vector<1x64xf32>
    %593 = vector.extract_strided_slice %583 {offsets = [5, 0], sizes = [1, 64], strides = [1, 1]} : vector<16x64xf32> to vector<1x64xf32>
    %594 = arith.maximumf %592, %593 : vector<1x64xf32>
    %c1_323 = arith.constant 1 : index
    %c1472_324 = arith.constant 1472 : index
    %595 = vector.load %arg14[%c1_323, %c1472_324] : memref<2x3136xf32, #tpu.memory_space<vmem>>, vector<1x64xf32>
    tpu.vector_store %arg14[%c1_323, %c1472_324], %594 {strides = array<i32>} : memref<2x3136xf32, #tpu.memory_space<vmem>>, vector<1x64xf32>,
    %596 = vector.extract_strided_slice %583 {offsets = [6, 0], sizes = [1, 64], strides = [1, 1]} : vector<16x64xf32> to vector<1x64xf32>
    %597 = vector.extract_strided_slice %583 {offsets = [7, 0], sizes = [1, 64], strides = [1, 1]} : vector<16x64xf32> to vector<1x64xf32>
    %598 = arith.maximumf %596, %597 : vector<1x64xf32>
    %c1_325 = arith.constant 1 : index
    %c1536_326 = arith.constant 1536 : index
    %599 = vector.load %arg14[%c1_325, %c1536_326] : memref<2x3136xf32, #tpu.memory_space<vmem>>, vector<1x64xf32>
    tpu.vector_store %arg14[%c1_325, %c1536_326], %598 {strides = array<i32>} : memref<2x3136xf32, #tpu.memory_space<vmem>>, vector<1x64xf32>,
    %600 = vector.extract_strided_slice %583 {offsets = [8, 0], sizes = [1, 64], strides = [1, 1]} : vector<16x64xf32> to vector<1x64xf32>
    %601 = vector.extract_strided_slice %583 {offsets = [9, 0], sizes = [1, 64], strides = [1, 1]} : vector<16x64xf32> to vector<1x64xf32>
    %602 = arith.maximumf %600, %601 : vector<1x64xf32>
    %c1_327 = arith.constant 1 : index
    %c1600_328 = arith.constant 1600 : index
    %603 = vector.load %arg14[%c1_327, %c1600_328] : memref<2x3136xf32, #tpu.memory_space<vmem>>, vector<1x64xf32>
    tpu.vector_store %arg14[%c1_327, %c1600_328], %602 {strides = array<i32>} : memref<2x3136xf32, #tpu.memory_space<vmem>>, vector<1x64xf32>,
    %604 = vector.extract_strided_slice %583 {offsets = [10, 0], sizes = [1, 64], strides = [1, 1]} : vector<16x64xf32> to vector<1x64xf32>
    %605 = vector.extract_strided_slice %583 {offsets = [11, 0], sizes = [1, 64], strides = [1, 1]} : vector<16x64xf32> to vector<1x64xf32>
    %606 = arith.maximumf %604, %605 : vector<1x64xf32>
    %c1_329 = arith.constant 1 : index
    %c1664_330 = arith.constant 1664 : index
    %607 = vector.load %arg14[%c1_329, %c1664_330] : memref<2x3136xf32, #tpu.memory_space<vmem>>, vector<1x64xf32>
    tpu.vector_store %arg14[%c1_329, %c1664_330], %606 {strides = array<i32>} : memref<2x3136xf32, #tpu.memory_space<vmem>>, vector<1x64xf32>,
    %608 = vector.extract_strided_slice %583 {offsets = [12, 0], sizes = [1, 64], strides = [1, 1]} : vector<16x64xf32> to vector<1x64xf32>
    %609 = vector.extract_strided_slice %583 {offsets = [13, 0], sizes = [1, 64], strides = [1, 1]} : vector<16x64xf32> to vector<1x64xf32>
    %610 = arith.maximumf %608, %609 : vector<1x64xf32>
    %c1_331 = arith.constant 1 : index
    %c1728_332 = arith.constant 1728 : index
    %611 = vector.load %arg14[%c1_331, %c1728_332] : memref<2x3136xf32, #tpu.memory_space<vmem>>, vector<1x64xf32>
    tpu.vector_store %arg14[%c1_331, %c1728_332], %610 {strides = array<i32>} : memref<2x3136xf32, #tpu.memory_space<vmem>>, vector<1x64xf32>,
    %c384_333 = arith.constant 384 : index
    %c0_334 = arith.constant 0 : index
    %612 = vector.load %arg13[%c384_333, %c0_334] : memref<512x64xf32, #tpu.memory_space<vmem>>, vector<16x64xf32>
    %c400 = arith.constant 400 : index
    %c0_335 = arith.constant 0 : index
    %613 = vector.load %arg13[%c400, %c0_335] : memref<512x64xf32, #tpu.memory_space<vmem>>, vector<16x64xf32>
    %614 = arith.maximumf %612, %613 : vector<16x64xf32>
    %615 = vector.extract_strided_slice %614 {offsets = [0, 0], sizes = [1, 64], strides = [1, 1]} : vector<16x64xf32> to vector<1x64xf32>
    %616 = vector.extract_strided_slice %614 {offsets = [1, 0], sizes = [1, 64], strides = [1, 1]} : vector<16x64xf32> to vector<1x64xf32>
    %617 = arith.maximumf %615, %616 : vector<1x64xf32>
    %c1_336 = arith.constant 1 : index
    %c1792_337 = arith.constant 1792 : index
    %618 = vector.load %arg14[%c1_336, %c1792_337] : memref<2x3136xf32, #tpu.memory_space<vmem>>, vector<1x64xf32>
    tpu.vector_store %arg14[%c1_336, %c1792_337], %617 {strides = array<i32>} : memref<2x3136xf32, #tpu.memory_space<vmem>>, vector<1x64xf32>,
    %619 = vector.extract_strided_slice %614 {offsets = [2, 0], sizes = [1, 64], strides = [1, 1]} : vector<16x64xf32> to vector<1x64xf32>
    %620 = vector.extract_strided_slice %614 {offsets = [3, 0], sizes = [1, 64], strides = [1, 1]} : vector<16x64xf32> to vector<1x64xf32>
    %621 = arith.maximumf %619, %620 : vector<1x64xf32>
    %c1_338 = arith.constant 1 : index
    %c1856_339 = arith.constant 1856 : index
    %622 = vector.load %arg14[%c1_338, %c1856_339] : memref<2x3136xf32, #tpu.memory_space<vmem>>, vector<1x64xf32>
    tpu.vector_store %arg14[%c1_338, %c1856_339], %621 {strides = array<i32>} : memref<2x3136xf32, #tpu.memory_space<vmem>>, vector<1x64xf32>,
    %623 = vector.extract_strided_slice %614 {offsets = [4, 0], sizes = [1, 64], strides = [1, 1]} : vector<16x64xf32> to vector<1x64xf32>
    %624 = vector.extract_strided_slice %614 {offsets = [5, 0], sizes = [1, 64], strides = [1, 1]} : vector<16x64xf32> to vector<1x64xf32>
    %625 = arith.maximumf %623, %624 : vector<1x64xf32>
    %c1_340 = arith.constant 1 : index
    %c1920_341 = arith.constant 1920 : index
    %626 = vector.load %arg14[%c1_340, %c1920_341] : memref<2x3136xf32, #tpu.memory_space<vmem>>, vector<1x64xf32>
    tpu.vector_store %arg14[%c1_340, %c1920_341], %625 {strides = array<i32>} : memref<2x3136xf32, #tpu.memory_space<vmem>>, vector<1x64xf32>,
    %627 = vector.extract_strided_slice %614 {offsets = [6, 0], sizes = [1, 64], strides = [1, 1]} : vector<16x64xf32> to vector<1x64xf32>
    %628 = vector.extract_strided_slice %614 {offsets = [7, 0], sizes = [1, 64], strides = [1, 1]} : vector<16x64xf32> to vector<1x64xf32>
    %629 = arith.maximumf %627, %628 : vector<1x64xf32>
    %c1_342 = arith.constant 1 : index
    %c1984_343 = arith.constant 1984 : index
    %630 = vector.load %arg14[%c1_342, %c1984_343] : memref<2x3136xf32, #tpu.memory_space<vmem>>, vector<1x64xf32>
    tpu.vector_store %arg14[%c1_342, %c1984_343], %629 {strides = array<i32>} : memref<2x3136xf32, #tpu.memory_space<vmem>>, vector<1x64xf32>,
    %631 = vector.extract_strided_slice %614 {offsets = [8, 0], sizes = [1, 64], strides = [1, 1]} : vector<16x64xf32> to vector<1x64xf32>
    %632 = vector.extract_strided_slice %614 {offsets = [9, 0], sizes = [1, 64], strides = [1, 1]} : vector<16x64xf32> to vector<1x64xf32>
    %633 = arith.maximumf %631, %632 : vector<1x64xf32>
    %c1_344 = arith.constant 1 : index
    %c2048_345 = arith.constant 2048 : index
    %634 = vector.load %arg14[%c1_344, %c2048_345] : memref<2x3136xf32, #tpu.memory_space<vmem>>, vector<1x64xf32>
    tpu.vector_store %arg14[%c1_344, %c2048_345], %633 {strides = array<i32>} : memref<2x3136xf32, #tpu.memory_space<vmem>>, vector<1x64xf32>,
    %635 = vector.extract_strided_slice %614 {offsets = [10, 0], sizes = [1, 64], strides = [1, 1]} : vector<16x64xf32> to vector<1x64xf32>
    %636 = vector.extract_strided_slice %614 {offsets = [11, 0], sizes = [1, 64], strides = [1, 1]} : vector<16x64xf32> to vector<1x64xf32>
    %637 = arith.maximumf %635, %636 : vector<1x64xf32>
    %c1_346 = arith.constant 1 : index
    %c2112_347 = arith.constant 2112 : index
    %638 = vector.load %arg14[%c1_346, %c2112_347] : memref<2x3136xf32, #tpu.memory_space<vmem>>, vector<1x64xf32>
    tpu.vector_store %arg14[%c1_346, %c2112_347], %637 {strides = array<i32>} : memref<2x3136xf32, #tpu.memory_space<vmem>>, vector<1x64xf32>,
    %639 = vector.extract_strided_slice %614 {offsets = [12, 0], sizes = [1, 64], strides = [1, 1]} : vector<16x64xf32> to vector<1x64xf32>
    %640 = vector.extract_strided_slice %614 {offsets = [13, 0], sizes = [1, 64], strides = [1, 1]} : vector<16x64xf32> to vector<1x64xf32>
    %641 = arith.maximumf %639, %640 : vector<1x64xf32>
    %c1_348 = arith.constant 1 : index
    %c2176_349 = arith.constant 2176 : index
    %642 = vector.load %arg14[%c1_348, %c2176_349] : memref<2x3136xf32, #tpu.memory_space<vmem>>, vector<1x64xf32>
    tpu.vector_store %arg14[%c1_348, %c2176_349], %641 {strides = array<i32>} : memref<2x3136xf32, #tpu.memory_space<vmem>>, vector<1x64xf32>,
    %c416 = arith.constant 416 : index
    %c0_350 = arith.constant 0 : index
    %643 = vector.load %arg13[%c416, %c0_350] : memref<512x64xf32, #tpu.memory_space<vmem>>, vector<16x64xf32>
    %c432 = arith.constant 432 : index
    %c0_351 = arith.constant 0 : index
    %644 = vector.load %arg13[%c432, %c0_351] : memref<512x64xf32, #tpu.memory_space<vmem>>, vector<16x64xf32>
    %645 = arith.maximumf %643, %644 : vector<16x64xf32>
    %646 = vector.extract_strided_slice %645 {offsets = [0, 0], sizes = [1, 64], strides = [1, 1]} : vector<16x64xf32> to vector<1x64xf32>
    %647 = vector.extract_strided_slice %645 {offsets = [1, 0], sizes = [1, 64], strides = [1, 1]} : vector<16x64xf32> to vector<1x64xf32>
    %648 = arith.maximumf %646, %647 : vector<1x64xf32>
    %c1_352 = arith.constant 1 : index
    %c2240_353 = arith.constant 2240 : index
    %649 = vector.load %arg14[%c1_352, %c2240_353] : memref<2x3136xf32, #tpu.memory_space<vmem>>, vector<1x64xf32>
    tpu.vector_store %arg14[%c1_352, %c2240_353], %648 {strides = array<i32>} : memref<2x3136xf32, #tpu.memory_space<vmem>>, vector<1x64xf32>,
    %650 = vector.extract_strided_slice %645 {offsets = [2, 0], sizes = [1, 64], strides = [1, 1]} : vector<16x64xf32> to vector<1x64xf32>
    %651 = vector.extract_strided_slice %645 {offsets = [3, 0], sizes = [1, 64], strides = [1, 1]} : vector<16x64xf32> to vector<1x64xf32>
    %652 = arith.maximumf %650, %651 : vector<1x64xf32>
    %c1_354 = arith.constant 1 : index
    %c2304_355 = arith.constant 2304 : index
    %653 = vector.load %arg14[%c1_354, %c2304_355] : memref<2x3136xf32, #tpu.memory_space<vmem>>, vector<1x64xf32>
    tpu.vector_store %arg14[%c1_354, %c2304_355], %652 {strides = array<i32>} : memref<2x3136xf32, #tpu.memory_space<vmem>>, vector<1x64xf32>,
    %654 = vector.extract_strided_slice %645 {offsets = [4, 0], sizes = [1, 64], strides = [1, 1]} : vector<16x64xf32> to vector<1x64xf32>
    %655 = vector.extract_strided_slice %645 {offsets = [5, 0], sizes = [1, 64], strides = [1, 1]} : vector<16x64xf32> to vector<1x64xf32>
    %656 = arith.maximumf %654, %655 : vector<1x64xf32>
    %c1_356 = arith.constant 1 : index
    %c2368_357 = arith.constant 2368 : index
    %657 = vector.load %arg14[%c1_356, %c2368_357] : memref<2x3136xf32, #tpu.memory_space<vmem>>, vector<1x64xf32>
    tpu.vector_store %arg14[%c1_356, %c2368_357], %656 {strides = array<i32>} : memref<2x3136xf32, #tpu.memory_space<vmem>>, vector<1x64xf32>,
    %658 = vector.extract_strided_slice %645 {offsets = [6, 0], sizes = [1, 64], strides = [1, 1]} : vector<16x64xf32> to vector<1x64xf32>
    %659 = vector.extract_strided_slice %645 {offsets = [7, 0], sizes = [1, 64], strides = [1, 1]} : vector<16x64xf32> to vector<1x64xf32>
    %660 = arith.maximumf %658, %659 : vector<1x64xf32>
    %c1_358 = arith.constant 1 : index
    %c2432_359 = arith.constant 2432 : index
    %661 = vector.load %arg14[%c1_358, %c2432_359] : memref<2x3136xf32, #tpu.memory_space<vmem>>, vector<1x64xf32>
    tpu.vector_store %arg14[%c1_358, %c2432_359], %660 {strides = array<i32>} : memref<2x3136xf32, #tpu.memory_space<vmem>>, vector<1x64xf32>,
    %662 = vector.extract_strided_slice %645 {offsets = [8, 0], sizes = [1, 64], strides = [1, 1]} : vector<16x64xf32> to vector<1x64xf32>
    %663 = vector.extract_strided_slice %645 {offsets = [9, 0], sizes = [1, 64], strides = [1, 1]} : vector<16x64xf32> to vector<1x64xf32>
    %664 = arith.maximumf %662, %663 : vector<1x64xf32>
    %c1_360 = arith.constant 1 : index
    %c2496_361 = arith.constant 2496 : index
    %665 = vector.load %arg14[%c1_360, %c2496_361] : memref<2x3136xf32, #tpu.memory_space<vmem>>, vector<1x64xf32>
    tpu.vector_store %arg14[%c1_360, %c2496_361], %664 {strides = array<i32>} : memref<2x3136xf32, #tpu.memory_space<vmem>>, vector<1x64xf32>,
    %666 = vector.extract_strided_slice %645 {offsets = [10, 0], sizes = [1, 64], strides = [1, 1]} : vector<16x64xf32> to vector<1x64xf32>
    %667 = vector.extract_strided_slice %645 {offsets = [11, 0], sizes = [1, 64], strides = [1, 1]} : vector<16x64xf32> to vector<1x64xf32>
    %668 = arith.maximumf %666, %667 : vector<1x64xf32>
    %c1_362 = arith.constant 1 : index
    %c2560_363 = arith.constant 2560 : index
    %669 = vector.load %arg14[%c1_362, %c2560_363] : memref<2x3136xf32, #tpu.memory_space<vmem>>, vector<1x64xf32>
    tpu.vector_store %arg14[%c1_362, %c2560_363], %668 {strides = array<i32>} : memref<2x3136xf32, #tpu.memory_space<vmem>>, vector<1x64xf32>,
    %670 = vector.extract_strided_slice %645 {offsets = [12, 0], sizes = [1, 64], strides = [1, 1]} : vector<16x64xf32> to vector<1x64xf32>
    %671 = vector.extract_strided_slice %645 {offsets = [13, 0], sizes = [1, 64], strides = [1, 1]} : vector<16x64xf32> to vector<1x64xf32>
    %672 = arith.maximumf %670, %671 : vector<1x64xf32>
    %c1_364 = arith.constant 1 : index
    %c2624_365 = arith.constant 2624 : index
    %673 = vector.load %arg14[%c1_364, %c2624_365] : memref<2x3136xf32, #tpu.memory_space<vmem>>, vector<1x64xf32>
    tpu.vector_store %arg14[%c1_364, %c2624_365], %672 {strides = array<i32>} : memref<2x3136xf32, #tpu.memory_space<vmem>>, vector<1x64xf32>,
    %c448_366 = arith.constant 448 : index
    %c0_367 = arith.constant 0 : index
    %674 = vector.load %arg13[%c448_366, %c0_367] : memref<512x64xf32, #tpu.memory_space<vmem>>, vector<16x64xf32>
    %c464 = arith.constant 464 : index
    %c0_368 = arith.constant 0 : index
    %675 = vector.load %arg13[%c464, %c0_368] : memref<512x64xf32, #tpu.memory_space<vmem>>, vector<16x64xf32>
    %676 = arith.maximumf %674, %675 : vector<16x64xf32>
    %677 = vector.extract_strided_slice %676 {offsets = [0, 0], sizes = [1, 64], strides = [1, 1]} : vector<16x64xf32> to vector<1x64xf32>
    %678 = vector.extract_strided_slice %676 {offsets = [1, 0], sizes = [1, 64], strides = [1, 1]} : vector<16x64xf32> to vector<1x64xf32>
    %679 = arith.maximumf %677, %678 : vector<1x64xf32>
    %c1_369 = arith.constant 1 : index
    %c2688_370 = arith.constant 2688 : index
    %680 = vector.load %arg14[%c1_369, %c2688_370] : memref<2x3136xf32, #tpu.memory_space<vmem>>, vector<1x64xf32>
    tpu.vector_store %arg14[%c1_369, %c2688_370], %679 {strides = array<i32>} : memref<2x3136xf32, #tpu.memory_space<vmem>>, vector<1x64xf32>,
    %681 = vector.extract_strided_slice %676 {offsets = [2, 0], sizes = [1, 64], strides = [1, 1]} : vector<16x64xf32> to vector<1x64xf32>
    %682 = vector.extract_strided_slice %676 {offsets = [3, 0], sizes = [1, 64], strides = [1, 1]} : vector<16x64xf32> to vector<1x64xf32>
    %683 = arith.maximumf %681, %682 : vector<1x64xf32>
    %c1_371 = arith.constant 1 : index
    %c2752_372 = arith.constant 2752 : index
    %684 = vector.load %arg14[%c1_371, %c2752_372] : memref<2x3136xf32, #tpu.memory_space<vmem>>, vector<1x64xf32>
    tpu.vector_store %arg14[%c1_371, %c2752_372], %683 {strides = array<i32>} : memref<2x3136xf32, #tpu.memory_space<vmem>>, vector<1x64xf32>,
    %685 = vector.extract_strided_slice %676 {offsets = [4, 0], sizes = [1, 64], strides = [1, 1]} : vector<16x64xf32> to vector<1x64xf32>
    %686 = vector.extract_strided_slice %676 {offsets = [5, 0], sizes = [1, 64], strides = [1, 1]} : vector<16x64xf32> to vector<1x64xf32>
    %687 = arith.maximumf %685, %686 : vector<1x64xf32>
    %c1_373 = arith.constant 1 : index
    %c2816_374 = arith.constant 2816 : index
    %688 = vector.load %arg14[%c1_373, %c2816_374] : memref<2x3136xf32, #tpu.memory_space<vmem>>, vector<1x64xf32>
    tpu.vector_store %arg14[%c1_373, %c2816_374], %687 {strides = array<i32>} : memref<2x3136xf32, #tpu.memory_space<vmem>>, vector<1x64xf32>,
    %689 = vector.extract_strided_slice %676 {offsets = [6, 0], sizes = [1, 64], strides = [1, 1]} : vector<16x64xf32> to vector<1x64xf32>
    %690 = vector.extract_strided_slice %676 {offsets = [7, 0], sizes = [1, 64], strides = [1, 1]} : vector<16x64xf32> to vector<1x64xf32>
    %691 = arith.maximumf %689, %690 : vector<1x64xf32>
    %c1_375 = arith.constant 1 : index
    %c2880_376 = arith.constant 2880 : index
    %692 = vector.load %arg14[%c1_375, %c2880_376] : memref<2x3136xf32, #tpu.memory_space<vmem>>, vector<1x64xf32>
    tpu.vector_store %arg14[%c1_375, %c2880_376], %691 {strides = array<i32>} : memref<2x3136xf32, #tpu.memory_space<vmem>>, vector<1x64xf32>,
    %693 = vector.extract_strided_slice %676 {offsets = [8, 0], sizes = [1, 64], strides = [1, 1]} : vector<16x64xf32> to vector<1x64xf32>
    %694 = vector.extract_strided_slice %676 {offsets = [9, 0], sizes = [1, 64], strides = [1, 1]} : vector<16x64xf32> to vector<1x64xf32>
    %695 = arith.maximumf %693, %694 : vector<1x64xf32>
    %c1_377 = arith.constant 1 : index
    %c2944_378 = arith.constant 2944 : index
    %696 = vector.load %arg14[%c1_377, %c2944_378] : memref<2x3136xf32, #tpu.memory_space<vmem>>, vector<1x64xf32>
    tpu.vector_store %arg14[%c1_377, %c2944_378], %695 {strides = array<i32>} : memref<2x3136xf32, #tpu.memory_space<vmem>>, vector<1x64xf32>,
    %697 = vector.extract_strided_slice %676 {offsets = [10, 0], sizes = [1, 64], strides = [1, 1]} : vector<16x64xf32> to vector<1x64xf32>
    %698 = vector.extract_strided_slice %676 {offsets = [11, 0], sizes = [1, 64], strides = [1, 1]} : vector<16x64xf32> to vector<1x64xf32>
    %699 = arith.maximumf %697, %698 : vector<1x64xf32>
    %c1_379 = arith.constant 1 : index
    %c3008_380 = arith.constant 3008 : index
    %700 = vector.load %arg14[%c1_379, %c3008_380] : memref<2x3136xf32, #tpu.memory_space<vmem>>, vector<1x64xf32>
    tpu.vector_store %arg14[%c1_379, %c3008_380], %699 {strides = array<i32>} : memref<2x3136xf32, #tpu.memory_space<vmem>>, vector<1x64xf32>,
    %701 = vector.extract_strided_slice %676 {offsets = [12, 0], sizes = [1, 64], strides = [1, 1]} : vector<16x64xf32> to vector<1x64xf32>
    %702 = vector.extract_strided_slice %676 {offsets = [13, 0], sizes = [1, 64], strides = [1, 1]} : vector<16x64xf32> to vector<1x64xf32>
    %703 = arith.maximumf %701, %702 : vector<1x64xf32>
    %c1_381 = arith.constant 1 : index
    %c3072_382 = arith.constant 3072 : index
    %704 = vector.load %arg14[%c1_381, %c3072_382] : memref<2x3136xf32, #tpu.memory_space<vmem>>, vector<1x64xf32>
    tpu.vector_store %arg14[%c1_381, %c3072_382], %703 {strides = array<i32>} : memref<2x3136xf32, #tpu.memory_space<vmem>>, vector<1x64xf32>,
    tpu.wait_dma2 semaphore(%arg16 : memref<!tpu.dma_semaphore, #tpu.memory_space<semaphore_mem>>) src(%arg5 : memref<3136x128xbf16, #tpu.memory_space<any>>) dst(%arg15 : memref<3136x128xbf16, #tpu.memory_space<vmem>>)
    %c0_383 = arith.constant 0 : index
    %c0_384 = arith.constant 0 : index
    %705 = vector.load %arg14[%c0_383, %c0_384] : memref<2x3136xf32, #tpu.memory_space<vmem>>, vector<2x3136xf32>
    %706 = arith.truncf %705 : vector<2x3136xf32> to vector<2x3136xbf16>
    %c0_385 = arith.constant 0 : index
    %c0_386 = arith.constant 0 : index
    %707 = vector.load %arg15[%c0_385, %c0_386] : memref<3136x128xbf16, #tpu.memory_space<vmem>>, vector<3136x128xbf16>
    %cst_387 = arith.constant dense<0.000000e+00> : vector<2x128xf32>
    %708 = tpu.matmul %706, %707, %cst_387 {dimension_numbers = #tpu.dot_dimension_numbers<[1], [0], [0], [1], [0, 0, 1, 1], [], []>} : vector<2x3136xbf16>, vector<3136x128xbf16>, vector<2x128xf32> -> vector<2x128xf32>
    %c0_388 = arith.constant 0 : index
    %c0_389 = arith.constant 0 : index
    %709 = vector.load %arg6[%c0_388, %c0_389] : memref<1x128xf32, #tpu.memory_space<vmem>>, vector<1x128xf32>
    %710 = vector.broadcast %709 : vector<1x128xf32> to vector<2x128xf32>
    %711 = arith.addf %708, %710 : vector<2x128xf32>
    %cst_390 = arith.constant 0.000000e+00 : f32
    %712 = vector.broadcast %cst_390 : f32 to vector<2x128xf32>
    %713 = arith.maximumf %711, %712 : vector<2x128xf32>
    %714 = arith.truncf %713 : vector<2x128xf32> to vector<2x128xbf16>
    %c0_391 = arith.constant 0 : index
    %c0_392 = arith.constant 0 : index
    %715 = vector.load %arg7[%c0_391, %c0_392] : memref<128x128xbf16, #tpu.memory_space<vmem>>, vector<128x128xbf16>
    %cst_393 = arith.constant dense<0.000000e+00> : vector<2x128xf32>
    %716 = tpu.matmul %714, %715, %cst_393 {dimension_numbers = #tpu.dot_dimension_numbers<[1], [0], [0], [1], [0, 0, 1, 1], [], []>} : vector<2x128xbf16>, vector<128x128xbf16>, vector<2x128xf32> -> vector<2x128xf32>
    %c0_394 = arith.constant 0 : index
    %c0_395 = arith.constant 0 : index
    %717 = vector.load %arg8[%c0_394, %c0_395] : memref<1x128xf32, #tpu.memory_space<vmem>>, vector<1x128xf32>
    %718 = vector.broadcast %717 : vector<1x128xf32> to vector<2x128xf32>
    %719 = arith.addf %716, %718 : vector<2x128xf32>
    %c0_396 = arith.constant 0 : index
    %c0_397 = arith.constant 0 : index
    %720 = vector.load %arg9[%c0_396, %c0_397] : memref<2x128xf32, #tpu.memory_space<vmem>>, vector<2x128xf32>
    tpu.vector_store %arg9[%c0_396, %c0_397], %719 {strides = array<i32>} : memref<2x128xf32, #tpu.memory_space<vmem>>, vector<2x128xf32>,
    return
  }
}

</mosaic_0001>

<llo_original>
// kernel: simple_cnn_forward.1
$region0: #{simple_cnn_forward.1}
  #allocation0 [shape = 'u32[]', space=smem, size = 0x4, offset = 0x4, fixed_abs, tag = 'smem constant byte address 0x4 - core index']
  #allocation1 [shape = 'u32[144,128]{1,0:T(1,128)}', space=vmem, size = 0x12000, scoped, tag = 'internal scratch']
  #allocation2 [shape = 'f32[1568,32]{1,0:T(8,128)}', space=vmem, size = 0xc4000, scoped, tag = 'scratch operand']
  #allocation3 [shape = 'f32[552,32]{1,0:T(8,128)}', space=vmem, size = 0x45000, scoped, tag = 'scratch operand']
  #allocation4 [shape = 'bf16[512,288]{1,0:T(16,128)(2,1)}', space=vmem, size = 0x60000, scoped, tag = 'scratch operand']
  #allocation5 [shape = 'f32[512,64]{1,0:T(8,128)}', space=vmem, size = 0x40000, scoped, tag = 'scratch operand']
  #allocation6 [shape = 'f32[2,3136]{1,0:T(2,128)}', space=vmem, size = 0x6400, scoped, tag = 'scratch operand']
  #allocation7 [shape = 'bf16[3136,128]{1,0:T(16,128)(2,1)}', space=vmem, size = 0xc4000, scoped, tag = 'scratch operand']
  #allocation8 [shape = 's32[1]{0}', space=sflag, size = 0x4, scoped, tag = 'scratch operand']
  #allocation11 [shape = 's32[]', space=sflag, size = 0x4, offset = 0, fixed_abs, tag = 'sflag constant byte address 0x0 - dummy sync flag']
  %s0 = inlined_call_operand.vmem [shape: bf16[1568,16], index: 0, kind: input, shape index: {}]
  %s1 = inlined_call_operand.vmem [shape: bf16[16,32], index: 1, kind: input, shape index: {}]
  %s2 = inlined_call_operand.vmem [shape: f32[1,32], index: 2, kind: input, shape index: {}]
  %s3 = inlined_call_operand.vmem [shape: bf16[288,64], index: 3, kind: input, shape index: {}]
  %s4 = inlined_call_operand.vmem [shape: f32[1,64], index: 4, kind: input, shape index: {}]
  %s5 = inlined_call_operand.vmem [shape: bf16[3136,128], index: 5, kind: input, shape index: {}]
  %s6 = inlined_call_operand.vmem [shape: f32[1,128], index: 6, kind: input, shape index: {}]
  %s7 = inlined_call_operand.vmem [shape: bf16[128,128], index: 7, kind: input, shape index: {}]
  %s8 = inlined_call_operand.vmem [shape: f32[1,128], index: 8, kind: input, shape index: {}]
  %s9 = inlined_call_operand.hbm [shape: f32[2,128], index: 9, kind: output, shape index: {}]
  %s10 = sld [smem:[#allocation0]]
  $region76: #{simple_cnn_forward.1} parent=0
    _
  %s12 = ssub.s32 1, %s10
  %s13 = scalar_select 0, %s12, %s10
  $region1: #{simple_cnn_forward.1} parent=0
    #allocation9 [shape = 'u8[1024]{0}', space=vmem, size = 0x400, scoped, tag = 'output window, operand 0, single buffered']
    #allocation10 [shape = 's32[1]{0}', space=sflag, size = 0x4, scoped, tag = 'scoped memory for simple_cnn_forward.1']
    %14 = vsyncpa [#allocation10], 0
    // Predicated region
    $region2: #{simple_cnn_forward.1} parent=1 // pred_check
      _
    $region3: #{simple_cnn_forward.1} parent=1 // pred_check_branch
      %16 = sbr.rel (0) target = $region5
    $region4: #{simple_cnn_forward.1} parent=1 // pred_region
      _
    $region5: #{simple_cnn_forward.1} parent=1 // pred_fallthru
      _
    // Predicated region
    $region6: #{simple_cnn_forward.1} parent=1 // pred_check
      _
    $region7: #{simple_cnn_forward.1} parent=1 // pred_check_branch
      %18 = sbr.rel (0) target = $region9
    $region8: #{simple_cnn_forward.1} parent=1 // pred_region
      _
    $region9: #{simple_cnn_forward.1} parent=1 // pred_fallthru
      _
    // Predicated region
    $region10: #{simple_cnn_forward.1} parent=1 // pred_check
      _
    $region11: #{simple_cnn_forward.1} parent=1 // pred_check_branch
      %20 = sbr.rel (0) target = $region13
    $region12: #{simple_cnn_forward.1} parent=1 // pred_region
      _
    $region13: #{simple_cnn_forward.1} parent=1 // pred_fallthru
      _
    // Predicated region
    $region14: #{simple_cnn_forward.1} parent=1 // pred_check
      _
    $region15: #{simple_cnn_forward.1} parent=1 // pred_check_branch
      %22 = sbr.rel (0) target = $region17
    $region16: #{simple_cnn_forward.1} parent=1 // pred_region
      _
    $region17: #{simple_cnn_forward.1} parent=1 // pred_fallthru
      _
    // Predicated region
    $region18: #{simple_cnn_forward.1} parent=1 // pred_check
      _
    $region19: #{simple_cnn_forward.1} parent=1 // pred_check_branch
      %24 = sbr.rel (0) target = $region21
    $region20: #{simple_cnn_forward.1} parent=1 // pred_region
      _
    $region21: #{simple_cnn_forward.1} parent=1 // pred_fallthru
      _
    // Predicated region
    $region22: #{simple_cnn_forward.1} parent=1 // pred_check
      _
    $region23: #{simple_cnn_forward.1} parent=1 // pred_check_branch
      %26 = sbr.rel (0) target = $region25
    $region24: #{simple_cnn_forward.1} parent=1 // pred_region
      _
    $region25: #{simple_cnn_forward.1} parent=1 // pred_fallthru
      _
    // Predicated region
    $region26: #{simple_cnn_forward.1} parent=1 // pred_check
      _
    $region27: #{simple_cnn_forward.1} parent=1 // pred_check_branch
      %28 = sbr.rel (0) target = $region29
    $region28: #{simple_cnn_forward.1} parent=1 // pred_region
      _
    $region29: #{simple_cnn_forward.1} parent=1 // pred_fallthru
      _
    // Predicated region
    $region30: #{simple_cnn_forward.1} parent=1 // pred_check
      _
    $region31: #{simple_cnn_forward.1} parent=1 // pred_check_branch
      %30 = sbr.rel (0) target = $region33
    $region32: #{simple_cnn_forward.1} parent=1 // pred_region
      _
    $region33: #{simple_cnn_forward.1} parent=1 // pred_fallthru
      _
    %p33 = scmp.lt.u32.totalorder 1568, 8
    %p34 = pneg %p33
    // Predicated region
    $region34: #{simple_cnn_forward.1} parent=1 // pred_check
      _
    $region35: #{simple_cnn_forward.1} parent=1 // pred_check_branch
      %36 = sbr.rel (%p33) target = $region37
    $region36: #{simple_cnn_forward.1} parent=1 // pred_region
      %s51 = sand.u32 1568, 7
      %p52 = scmp.eq.s32.totalorder %s51, 0
      // Predicated region
      $region49: #{simple_cnn_forward.1} parent=36 // pred_check
        %p53 = pneg %p52
      $region50: #{simple_cnn_forward.1} parent=36 // pred_check_branch
        %55 = sbr.rel (%p53) target = $region52
      $region51: #{simple_cnn_forward.1} parent=36 // pred_region
        loop: start=0, step=1, limit=1
        $region53: #{simple_cnn_forward.1} parent=51 // loop_pre_header
          _
        $region54: #{simple_cnn_forward.1} parent=51 // loop_header
          %s57 = sphi 0, %s61
          %p58 = scmp.ge.s32.totalorder %s57, 1
          %s62 = sphi %s5, %s5
          %s63 = sphi [#allocation7], [#allocation7]
        $region55: #{simple_cnn_forward.1} parent=51 // loop_header_branch
          %60 = sbr.rel (%p58) target = $region59
        $region56: #{simple_cnn_forward.1} parent=51 // loop_body
          %v64 = vld [vmem:[%s62] sm:$0xff]
          %65 = vst [vmem:[%s63] sm:$0xff] %v64
          %v66 = vld [vmem:[%s62 + $0x8] sm:$0xff]
          %67 = vst [vmem:[%s63 + $0x8] sm:$0xff] %v66
          %v68 = vld [vmem:[%s62 + $0x10] sm:$0xff]
          %69 = vst [vmem:[%s63 + $0x10] sm:$0xff] %v68
          %v70 = vld [vmem:[%s62 + $0x18] sm:$0xff]
          %71 = vst [vmem:[%s63 + $0x18] sm:$0xff] %v70
          %v72 = vld [vmem:[%s62 + $0x20] sm:$0xff]
          %73 = vst [vmem:[%s63 + $0x20] sm:$0xff] %v72
          %v74 = vld [vmem:[%s62 + $0x28] sm:$0xff]
          %75 = vst [vmem:[%s63 + $0x28] sm:$0xff] %v74
          %v76 = vld [vmem:[%s62 + $0x30] sm:$0xff]
          %77 = vst [vmem:[%s63 + $0x30] sm:$0xff] %v76
          %v78 = vld [vmem:[%s62 + $0x38] sm:$0xff]
          %79 = vst [vmem:[%s63 + $0x38] sm:$0xff] %v78
          %v80 = vld [vmem:[%s62 + $0x40] sm:$0xff]
          %81 = vst [vmem:[%s63 + $0x40] sm:$0xff] %v80
          %v82 = vld [vmem:[%s62 + $0x48] sm:$0xff]
          %83 = vst [vmem:[%s63 + $0x48] sm:$0xff] %v82
          %v84 = vld [vmem:[%s62 + $0x50] sm:$0xff]
          %85 = vst [vmem:[%s63 + $0x50] sm:$0xff] %v84
          %v86 = vld [vmem:[%s62 + $0x58] sm:$0xff]
          %87 = vst [vmem:[%s63 + $0x58] sm:$0xff] %v86
          %v88 = vld [vmem:[%s62 + $0x60] sm:$0xff]
          %89 = vst [vmem:[%s63 + $0x60] sm:$0xff] %v88
          %v90 = vld [vmem:[%s62 + $0x68] sm:$0xff]
          %91 = vst [vmem:[%s63 + $0x68] sm:$0xff] %v90
          %v92 = vld [vmem:[%s62 + $0x70] sm:$0xff]
          %93 = vst [vmem:[%s63 + $0x70] sm:$0xff] %v92
          %v94 = vld [vmem:[%s62 + $0x78] sm:$0xff]
          %95 = vst [vmem:[%s63 + $0x78] sm:$0xff] %v94
          %v96 = vld [vmem:[%s62 + $0x80] sm:$0xff]
          %97 = vst [vmem:[%s63 + $0x80] sm:$0xff] %v96
          %v98 = vld [vmem:[%s62 + $0x88] sm:$0xff]
          %99 = vst [vmem:[%s63 + $0x88] sm:$0xff] %v98
          %v100 = vld [vmem:[%s62 + $0x90] sm:$0xff]
          %101 = vst [vmem:[%s63 + $0x90] sm:$0xff] %v100
          %v102 = vld [vmem:[%s62 + $0x98] sm:$0xff]
          %103 = vst [vmem:[%s63 + $0x98] sm:$0xff] %v102
          %v104 = vld [vmem:[%s62 + $0xa0] sm:$0xff]
          %105 = vst [vmem:[%s63 + $0xa0] sm:$0xff] %v104
          %v106 = vld [vmem:[%s62 + $0xa8] sm:$0xff]
          %107 = vst [vmem:[%s63 + $0xa8] sm:$0xff] %v106
          %v108 = vld [vmem:[%s62 + $0xb0] sm:$0xff]
          %109 = vst [vmem:[%s63 + $0xb0] sm:$0xff] %v108
          %v110 = vld [vmem:[%s62 + $0xb8] sm:$0xff]
          %111 = vst [vmem:[%s63 + $0xb8] sm:$0xff] %v110
          %v112 = vld [vmem:[%s62 + $0xc0] sm:$0xff]
          %113 = vst [vmem:[%s63 + $0xc0] sm:$0xff] %v112
          %v114 = vld [vmem:[%s62 + $0xc8] sm:$0xff]
          %115 = vst [vmem:[%s63 + $0xc8] sm:$0xff] %v114
          %v116 = vld [vmem:[%s62 + $0xd0] sm:$0xff]
          %117 = vst [vmem:[%s63 + $0xd0] sm:$0xff] %v116
          %v118 = vld [vmem:[%s62 + $0xd8] sm:$0xff]
          %119 = vst [vmem:[%s63 + $0xd8] sm:$0xff] %v118
          %v120 = vld [vmem:[%s62 + $0xe0] sm:$0xff]
          %121 = vst [vmem:[%s63 + $0xe0] sm:$0xff] %v120
          %v122 = vld [vmem:[%s62 + $0xe8] sm:$0xff]
          %123 = vst [vmem:[%s63 + $0xe8] sm:$0xff] %v122
          %v124 = vld [vmem:[%s62 + $0xf0] sm:$0xff]
          %125 = vst [vmem:[%s63 + $0xf0] sm:$0xff] %v124
          %v126 = vld [vmem:[%s62 + $0xf8] sm:$0xff]
          %127 = vst [vmem:[%s63 + $0xf8] sm:$0xff] %v126
          %v128 = vld [vmem:[%s62 + $0x100] sm:$0xff]
          %129 = vst [vmem:[%s63 + $0x100] sm:$0xff] %v128
          %v130 = vld [vmem:[%s62 + $0x108] sm:$0xff]
          %131 = vst [vmem:[%s63 + $0x108] sm:$0xff] %v130
          %v132 = vld [vmem:[%s62 + $0x110] sm:$0xff]
          %133 = vst [vmem:[%s63 + $0x110] sm:$0xff] %v132
          %v134 = vld [vmem:[%s62 + $0x118] sm:$0xff]
          %135 = vst [vmem:[%s63 + $0x118] sm:$0xff] %v134
          %v136 = vld [vmem:[%s62 + $0x120] sm:$0xff]
          %137 = vst [vmem:[%s63 + $0x120] sm:$0xff] %v136
          %v138 = vld [vmem:[%s62 + $0x128] sm:$0xff]
          %139 = vst [vmem:[%s63 + $0x128] sm:$0xff] %v138
          %v140 = vld [vmem:[%s62 + $0x130] sm:$0xff]
          %141 = vst [vmem:[%s63 + $0x130] sm:$0xff] %v140
          %v142 = vld [vmem:[%s62 + $0x138] sm:$0xff]
          %143 = vst [vmem:[%s63 + $0x138] sm:$0xff] %v142
          %v144 = vld [vmem:[%s62 + $0x140] sm:$0xff]
          %145 = vst [vmem:[%s63 + $0x140] sm:$0xff] %v144
          %v146 = vld [vmem:[%s62 + $0x148] sm:$0xff]
          %147 = vst [vmem:[%s63 + $0x148] sm:$0xff] %v146
          %v148 = vld [vmem:[%s62 + $0x150] sm:$0xff]
          %149 = vst [vmem:[%s63 + $0x150] sm:$0xff] %v148
          %v150 = vld [vmem:[%s62 + $0x158] sm:$0xff]
          %151 = vst [vmem:[%s63 + $0x158] sm:$0xff] %v150
          %v152 = vld [vmem:[%s62 + $0x160] sm:$0xff]
          %153 = vst [vmem:[%s63 + $0x160] sm:$0xff] %v152
          %v154 = vld [vmem:[%s62 + $0x168] sm:$0xff]
          %155 = vst [vmem:[%s63 + $0x168] sm:$0xff] %v154
          %v156 = vld [vmem:[%s62 + $0x170] sm:$0xff]
          %157 = vst [vmem:[%s63 + $0x170] sm:$0xff] %v156
          %v158 = vld [vmem:[%s62 + $0x178] sm:$0xff]
          %159 = vst [vmem:[%s63 + $0x178] sm:$0xff] %v158
          %v160 = vld [vmem:[%s62 + $0x180] sm:$0xff]
          %161 = vst [vmem:[%s63 + $0x180] sm:$0xff] %v160
          %v162 = vld [vmem:[%s62 + $0x188] sm:$0xff]
          %163 = vst [vmem:[%s63 + $0x188] sm:$0xff] %v162
          %v164 = vld [vmem:[%s62 + $0x190] sm:$0xff]
          %165 = vst [vmem:[%s63 + $0x190] sm:$0xff] %v164
          %v166 = vld [vmem:[%s62 + $0x198] sm:$0xff]
          %167 = vst [vmem:[%s63 + $0x198] sm:$0xff] %v166
          %v168 = vld [vmem:[%s62 + $0x1a0] sm:$0xff]
          %169 = vst [vmem:[%s63 + $0x1a0] sm:$0xff] %v168
          %v170 = vld [vmem:[%s62 + $0x1a8] sm:$0xff]
          %171 = vst [vmem:[%s63 + $0x1a8] sm:$0xff] %v170
          %v172 = vld [vmem:[%s62 + $0x1b0] sm:$0xff]
          %173 = vst [vmem:[%s63 + $0x1b0] sm:$0xff] %v172
          %v174 = vld [vmem:[%s62 + $0x1b8] sm:$0xff]
          %175 = vst [vmem:[%s63 + $0x1b8] sm:$0xff] %v174
          %v176 = vld [vmem:[%s62 + $0x1c0] sm:$0xff]
          %177 = vst [vmem:[%s63 + $0x1c0] sm:$0xff] %v176
          %v178 = vld [vmem:[%s62 + $0x1c8] sm:$0xff]
          %179 = vst [vmem:[%s63 + $0x1c8] sm:$0xff] %v178
          %v180 = vld [vmem:[%s62 + $0x1d0] sm:$0xff]
          %181 = vst [vmem:[%s63 + $0x1d0] sm:$0xff] %v180
          %v182 = vld [vmem:[%s62 + $0x1d8] sm:$0xff]
          %183 = vst [vmem:[%s63 + $0x1d8] sm:$0xff] %v182
          %v184 = vld [vmem:[%s62 + $0x1e0] sm:$0xff]
          %185 = vst [vmem:[%s63 + $0x1e0] sm:$0xff] %v184
          %v186 = vld [vmem:[%s62 + $0x1e8] sm:$0xff]
          %187 = vst [vmem:[%s63 + $0x1e8] sm:$0xff] %v186
          %v188 = vld [vmem:[%s62 + $0x1f0] sm:$0xff]
          %189 = vst [vmem:[%s63 + $0x1f0] sm:$0xff] %v188
          %v190 = vld [vmem:[%s62 + $0x1f8] sm:$0xff]
          %191 = vst [vmem:[%s63 + $0x1f8] sm:$0xff] %v190
          %v192 = vld [vmem:[%s62 + $0x200] sm:$0xff]
          %193 = vst [vmem:[%s63 + $0x200] sm:$0xff] %v192
          %v194 = vld [vmem:[%s62 + $0x208] sm:$0xff]
          %195 = vst [vmem:[%s63 + $0x208] sm:$0xff] %v194
          %v196 = vld [vmem:[%s62 + $0x210] sm:$0xff]
          %197 = vst [vmem:[%s63 + $0x210] sm:$0xff] %v196
          %v198 = vld [vmem:[%s62 + $0x218] sm:$0xff]
          %199 = vst [vmem:[%s63 + $0x218] sm:$0xff] %v198
          %v200 = vld [vmem:[%s62 + $0x220] sm:$0xff]
          %201 = vst [vmem:[%s63 + $0x220] sm:$0xff] %v200
          %v202 = vld [vmem:[%s62 + $0x228] sm:$0xff]
          %203 = vst [vmem:[%s63 + $0x228] sm:$0xff] %v202
          %v204 = vld [vmem:[%s62 + $0x230] sm:$0xff]
          %205 = vst [vmem:[%s63 + $0x230] sm:$0xff] %v204
          %v206 = vld [vmem:[%s62 + $0x238] sm:$0xff]
          %207 = vst [vmem:[%s63 + $0x238] sm:$0xff] %v206
          %v208 = vld [vmem:[%s62 + $0x240] sm:$0xff]
          %209 = vst [vmem:[%s63 + $0x240] sm:$0xff] %v208
          %v210 = vld [vmem:[%s62 + $0x248] sm:$0xff]
          %211 = vst [vmem:[%s63 + $0x248] sm:$0xff] %v210
          %v212 = vld [vmem:[%s62 + $0x250] sm:$0xff]
          %213 = vst [vmem:[%s63 + $0x250] sm:$0xff] %v212
          %v214 = vld [vmem:[%s62 + $0x258] sm:$0xff]
          %215 = vst [vmem:[%s63 + $0x258] sm:$0xff] %v214
          %v216 = vld [vmem:[%s62 + $0x260] sm:$0xff]
          %217 = vst [vmem:[%s63 + $0x260] sm:$0xff] %v216
          %v218 = vld [vmem:[%s62 + $0x268] sm:$0xff]
          %219 = vst [vmem:[%s63 + $0x268] sm:$0xff] %v218
          %v220 = vld [vmem:[%s62 + $0x270] sm:$0xff]
          %221 = vst [vmem:[%s63 + $0x270] sm:$0xff] %v220
          %v222 = vld [vmem:[%s62 + $0x278] sm:$0xff]
          %223 = vst [vmem:[%s63 + $0x278] sm:$0xff] %v222
          %v224 = vld [vmem:[%s62 + $0x280] sm:$0xff]
          %225 = vst [vmem:[%s63 + $0x280] sm:$0xff] %v224
          %v226 = vld [vmem:[%s62 + $0x288] sm:$0xff]
          %227 = vst [vmem:[%s63 + $0x288] sm:$0xff] %v226
          %v228 = vld [vmem:[%s62 + $0x290] sm:$0xff]
          %229 = vst [vmem:[%s63 + $0x290] sm:$0xff] %v228
          %v230 = vld [vmem:[%s62 + $0x298] sm:$0xff]
          %231 = vst [vmem:[%s63 + $0x298] sm:$0xff] %v230
          %v232 = vld [vmem:[%s62 + $0x2a0] sm:$0xff]
          %233 = vst [vmem:[%s63 + $0x2a0] sm:$0xff] %v232
          %v234 = vld [vmem:[%s62 + $0x2a8] sm:$0xff]
          %235 = vst [vmem:[%s63 + $0x2a8] sm:$0xff] %v234
          %v236 = vld [vmem:[%s62 + $0x2b0] sm:$0xff]
          %237 = vst [vmem:[%s63 + $0x2b0] sm:$0xff] %v236
          %v238 = vld [vmem:[%s62 + $0x2b8] sm:$0xff]
          %239 = vst [vmem:[%s63 + $0x2b8] sm:$0xff] %v238
          %v240 = vld [vmem:[%s62 + $0x2c0] sm:$0xff]
          %241 = vst [vmem:[%s63 + $0x2c0] sm:$0xff] %v240
          %v242 = vld [vmem:[%s62 + $0x2c8] sm:$0xff]
          %243 = vst [vmem:[%s63 + $0x2c8] sm:$0xff] %v242
          %v244 = vld [vmem:[%s62 + $0x2d0] sm:$0xff]
          %245 = vst [vmem:[%s63 + $0x2d0] sm:$0xff] %v244
          %v246 = vld [vmem:[%s62 + $0x2d8] sm:$0xff]
          %247 = vst [vmem:[%s63 + $0x2d8] sm:$0xff] %v246
          %v248 = vld [vmem:[%s62 + $0x2e0] sm:$0xff]
          %249 = vst [vmem:[%s63 + $0x2e0] sm:$0xff] %v248
          %v250 = vld [vmem:[%s62 + $0x2e8] sm:$0xff]
          %251 = vst [vmem:[%s63 + $0x2e8] sm:$0xff] %v250
          %v252 = vld [vmem:[%s62 + $0x2f0] sm:$0xff]
          %253 = vst [vmem:[%s63 + $0x2f0] sm:$0xff] %v252
          %v254 = vld [vmem:[%s62 + $0x2f8] sm:$0xff]
          %255 = vst [vmem:[%s63 + $0x2f8] sm:$0xff] %v254
          %v256 = vld [vmem:[%s62 + $0x300] sm:$0xff]
          %257 = vst [vmem:[%s63 + $0x300] sm:$0xff] %v256
          %v258 = vld [vmem:[%s62 + $0x308] sm:$0xff]
          %259 = vst [vmem:[%s63 + $0x308] sm:$0xff] %v258
          %v260 = vld [vmem:[%s62 + $0x310] sm:$0xff]
          %261 = vst [vmem:[%s63 + $0x310] sm:$0xff] %v260
          %v262 = vld [vmem:[%s62 + $0x318] sm:$0xff]
          %263 = vst [vmem:[%s63 + $0x318] sm:$0xff] %v262
          %v264 = vld [vmem:[%s62 + $0x320] sm:$0xff]
          %265 = vst [vmem:[%s63 + $0x320] sm:$0xff] %v264
          %v266 = vld [vmem:[%s62 + $0x328] sm:$0xff]
          %267 = vst [vmem:[%s63 + $0x328] sm:$0xff] %v266
          %v268 = vld [vmem:[%s62 + $0x330] sm:$0xff]
          %269 = vst [vmem:[%s63 + $0x330] sm:$0xff] %v268
          %v270 = vld [vmem:[%s62 + $0x338] sm:$0xff]
          %271 = vst [vmem:[%s63 + $0x338] sm:$0xff] %v270
          %v272 = vld [vmem:[%s62 + $0x340] sm:$0xff]
          %273 = vst [vmem:[%s63 + $0x340] sm:$0xff] %v272
          %v274 = vld [vmem:[%s62 + $0x348] sm:$0xff]
          %275 = vst [vmem:[%s63 + $0x348] sm:$0xff] %v274
          %v276 = vld [vmem:[%s62 + $0x350] sm:$0xff]
          %277 = vst [vmem:[%s63 + $0x350] sm:$0xff] %v276
          %v278 = vld [vmem:[%s62 + $0x358] sm:$0xff]
          %279 = vst [vmem:[%s63 + $0x358] sm:$0xff] %v278
          %v280 = vld [vmem:[%s62 + $0x360] sm:$0xff]
          %281 = vst [vmem:[%s63 + $0x360] sm:$0xff] %v280
          %v282 = vld [vmem:[%s62 + $0x368] sm:$0xff]
          %283 = vst [vmem:[%s63 + $0x368] sm:$0xff] %v282
          %v284 = vld [vmem:[%s62 + $0x370] sm:$0xff]
          %285 = vst [vmem:[%s63 + $0x370] sm:$0xff] %v284
          %v286 = vld [vmem:[%s62 + $0x378] sm:$0xff]
          %287 = vst [vmem:[%s63 + $0x378] sm:$0xff] %v286
          %v288 = vld [vmem:[%s62 + $0x380] sm:$0xff]
          %289 = vst [vmem:[%s63 + $0x380] sm:$0xff] %v288
          %v290 = vld [vmem:[%s62 + $0x388] sm:$0xff]
          %291 = vst [vmem:[%s63 + $0x388] sm:$0xff] %v290
          %v292 = vld [vmem:[%s62 + $0x390] sm:$0xff]
          %293 = vst [vmem:[%s63 + $0x390] sm:$0xff] %v292
          %v294 = vld [vmem:[%s62 + $0x398] sm:$0xff]
          %295 = vst [vmem:[%s63 + $0x398] sm:$0xff] %v294
          %v296 = vld [vmem:[%s62 + $0x3a0] sm:$0xff]
          %297 = vst [vmem:[%s63 + $0x3a0] sm:$0xff] %v296
          %v298 = vld [vmem:[%s62 + $0x3a8] sm:$0xff]
          %299 = vst [vmem:[%s63 + $0x3a8] sm:$0xff] %v298
          %v300 = vld [vmem:[%s62 + $0x3b0] sm:$0xff]
          %301 = vst [vmem:[%s63 + $0x3b0] sm:$0xff] %v300
          %v302 = vld [vmem:[%s62 + $0x3b8] sm:$0xff]
          %303 = vst [vmem:[%s63 + $0x3b8] sm:$0xff] %v302
          %v304 = vld [vmem:[%s62 + $0x3c0] sm:$0xff]
          %305 = vst [vmem:[%s63 + $0x3c0] sm:$0xff] %v304
          %v306 = vld [vmem:[%s62 + $0x3c8] sm:$0xff]
          %307 = vst [vmem:[%s63 + $0x3c8] sm:$0xff] %v306
          %v308 = vld [vmem:[%s62 + $0x3d0] sm:$0xff]
          %309 = vst [vmem:[%s63 + $0x3d0] sm:$0xff] %v308
          %v310 = vld [vmem:[%s62 + $0x3d8] sm:$0xff]
          %311 = vst [vmem:[%s63 + $0x3d8] sm:$0xff] %v310
          %v312 = vld [vmem:[%s62 + $0x3e0] sm:$0xff]
          %313 = vst [vmem:[%s63 + $0x3e0] sm:$0xff] %v312
          %v314 = vld [vmem:[%s62 + $0x3e8] sm:$0xff]
          %315 = vst [vmem:[%s63 + $0x3e8] sm:$0xff] %v314
          %v316 = vld [vmem:[%s62 + $0x3f0] sm:$0xff]
          %317 = vst [vmem:[%s63 + $0x3f0] sm:$0xff] %v316
          %v318 = vld [vmem:[%s62 + $0x3f8] sm:$0xff]
          %319 = vst [vmem:[%s63 + $0x3f8] sm:$0xff] %v318
          %v320 = vld [vmem:[%s62 + $0x400] sm:$0xff]
          %321 = vst [vmem:[%s63 + $0x400] sm:$0xff] %v320
          %v322 = vld [vmem:[%s62 + $0x408] sm:$0xff]
          %323 = vst [vmem:[%s63 + $0x408] sm:$0xff] %v322
          %v324 = vld [vmem:[%s62 + $0x410] sm:$0xff]
          %325 = vst [vmem:[%s63 + $0x410] sm:$0xff] %v324
          %v326 = vld [vmem:[%s62 + $0x418] sm:$0xff]
          %327 = vst [vmem:[%s63 + $0x418] sm:$0xff] %v326
          %v328 = vld [vmem:[%s62 + $0x420] sm:$0xff]
          %329 = vst [vmem:[%s63 + $0x420] sm:$0xff] %v328
          %v330 = vld [vmem:[%s62 + $0x428] sm:$0xff]
          %331 = vst [vmem:[%s63 + $0x428] sm:$0xff] %v330
          %v332 = vld [vmem:[%s62 + $0x430] sm:$0xff]
          %333 = vst [vmem:[%s63 + $0x430] sm:$0xff] %v332
          %v334 = vld [vmem:[%s62 + $0x438] sm:$0xff]
          %335 = vst [vmem:[%s63 + $0x438] sm:$0xff] %v334
          %v336 = vld [vmem:[%s62 + $0x440] sm:$0xff]
          %337 = vst [vmem:[%s63 + $0x440] sm:$0xff] %v336
          %v338 = vld [vmem:[%s62 + $0x448] sm:$0xff]
          %339 = vst [vmem:[%s63 + $0x448] sm:$0xff] %v338
          %v340 = vld [vmem:[%s62 + $0x450] sm:$0xff]
          %341 = vst [vmem:[%s63 + $0x450] sm:$0xff] %v340
          %v342 = vld [vmem:[%s62 + $0x458] sm:$0xff]
          %343 = vst [vmem:[%s63 + $0x458] sm:$0xff] %v342
          %v344 = vld [vmem:[%s62 + $0x460] sm:$0xff]
          %345 = vst [vmem:[%s63 + $0x460] sm:$0xff] %v344
          %v346 = vld [vmem:[%s62 + $0x468] sm:$0xff]
          %347 = vst [vmem:[%s63 + $0x468] sm:$0xff] %v346
          %v348 = vld [vmem:[%s62 + $0x470] sm:$0xff]
          %349 = vst [vmem:[%s63 + $0x470] sm:$0xff] %v348
          %v350 = vld [vmem:[%s62 + $0x478] sm:$0xff]
          %351 = vst [vmem:[%s63 + $0x478] sm:$0xff] %v350
          %v352 = vld [vmem:[%s62 + $0x480] sm:$0xff]
          %353 = vst [vmem:[%s63 + $0x480] sm:$0xff] %v352
          %v354 = vld [vmem:[%s62 + $0x488] sm:$0xff]
          %355 = vst [vmem:[%s63 + $0x488] sm:$0xff] %v354
          %v356 = vld [vmem:[%s62 + $0x490] sm:$0xff]
          %357 = vst [vmem:[%s63 + $0x490] sm:$0xff] %v356
          %v358 = vld [vmem:[%s62 + $0x498] sm:$0xff]
          %359 = vst [vmem:[%s63 + $0x498] sm:$0xff] %v358
          %v360 = vld [vmem:[%s62 + $0x4a0] sm:$0xff]
          %361 = vst [vmem:[%s63 + $0x4a0] sm:$0xff] %v360
          %v362 = vld [vmem:[%s62 + $0x4a8] sm:$0xff]
          %363 = vst [vmem:[%s63 + $0x4a8] sm:$0xff] %v362
          %v364 = vld [vmem:[%s62 + $0x4b0] sm:$0xff]
          %365 = vst [vmem:[%s63 + $0x4b0] sm:$0xff] %v364
          %v366 = vld [vmem:[%s62 + $0x4b8] sm:$0xff]
          %367 = vst [vmem:[%s63 + $0x4b8] sm:$0xff] %v366
          %v368 = vld [vmem:[%s62 + $0x4c0] sm:$0xff]
          %369 = vst [vmem:[%s63 + $0x4c0] sm:$0xff] %v368
          %v370 = vld [vmem:[%s62 + $0x4c8] sm:$0xff]
          %371 = vst [vmem:[%s63 + $0x4c8] sm:$0xff] %v370
          %v372 = vld [vmem:[%s62 + $0x4d0] sm:$0xff]
          %373 = vst [vmem:[%s63 + $0x4d0] sm:$0xff] %v372
          %v374 = vld [vmem:[%s62 + $0x4d8] sm:$0xff]
          %375 = vst [vmem:[%s63 + $0x4d8] sm:$0xff] %v374
          %v376 = vld [vmem:[%s62 + $0x4e0] sm:$0xff]
          %377 = vst [vmem:[%s63 + $0x4e0] sm:$0xff] %v376
          %v378 = vld [vmem:[%s62 + $0x4e8] sm:$0xff]
          %379 = vst [vmem:[%s63 + $0x4e8] sm:$0xff] %v378
          %v380 = vld [vmem:[%s62 + $0x4f0] sm:$0xff]
          %381 = vst [vmem:[%s63 + $0x4f0] sm:$0xff] %v380
          %v382 = vld [vmem:[%s62 + $0x4f8] sm:$0xff]
          %383 = vst [vmem:[%s63 + $0x4f8] sm:$0xff] %v382
          %v384 = vld [vmem:[%s62 + $0x500] sm:$0xff]
          %385 = vst [vmem:[%s63 + $0x500] sm:$0xff] %v384
          %v386 = vld [vmem:[%s62 + $0x508] sm:$0xff]
          %387 = vst [vmem:[%s63 + $0x508] sm:$0xff] %v386
          %v388 = vld [vmem:[%s62 + $0x510] sm:$0xff]
          %389 = vst [vmem:[%s63 + $0x510] sm:$0xff] %v388
          %v390 = vld [vmem:[%s62 + $0x518] sm:$0xff]
          %391 = vst [vmem:[%s63 + $0x518] sm:$0xff] %v390
          %v392 = vld [vmem:[%s62 + $0x520] sm:$0xff]
          %393 = vst [vmem:[%s63 + $0x520] sm:$0xff] %v392
          %v394 = vld [vmem:[%s62 + $0x528] sm:$0xff]
          %395 = vst [vmem:[%s63 + $0x528] sm:$0xff] %v394
          %v396 = vld [vmem:[%s62 + $0x530] sm:$0xff]
          %397 = vst [vmem:[%s63 + $0x530] sm:$0xff] %v396
          %v398 = vld [vmem:[%s62 + $0x538] sm:$0xff]
          %399 = vst [vmem:[%s63 + $0x538] sm:$0xff] %v398
          %v400 = vld [vmem:[%s62 + $0x540] sm:$0xff]
          %401 = vst [vmem:[%s63 + $0x540] sm:$0xff] %v400
          %v402 = vld [vmem:[%s62 + $0x548] sm:$0xff]
          %403 = vst [vmem:[%s63 + $0x548] sm:$0xff] %v402
          %v404 = vld [vmem:[%s62 + $0x550] sm:$0xff]
          %405 = vst [vmem:[%s63 + $0x550] sm:$0xff] %v404
          %v406 = vld [vmem:[%s62 + $0x558] sm:$0xff]
          %407 = vst [vmem:[%s63 + $0x558] sm:$0xff] %v406
          %v408 = vld [vmem:[%s62 + $0x560] sm:$0xff]
          %409 = vst [vmem:[%s63 + $0x560] sm:$0xff] %v408
          %v410 = vld [vmem:[%s62 + $0x568] sm:$0xff]
          %411 = vst [vmem:[%s63 + $0x568] sm:$0xff] %v410
          %v412 = vld [vmem:[%s62 + $0x570] sm:$0xff]
          %413 = vst [vmem:[%s63 + $0x570] sm:$0xff] %v412
          %v414 = vld [vmem:[%s62 + $0x578] sm:$0xff]
          %415 = vst [vmem:[%s63 + $0x578] sm:$0xff] %v414
          %v416 = vld [vmem:[%s62 + $0x580] sm:$0xff]
          %417 = vst [vmem:[%s63 + $0x580] sm:$0xff] %v416
          %v418 = vld [vmem:[%s62 + $0x588] sm:$0xff]
          %419 = vst [vmem:[%s63 + $0x588] sm:$0xff] %v418
          %v420 = vld [vmem:[%s62 + $0x590] sm:$0xff]
          %421 = vst [vmem:[%s63 + $0x590] sm:$0xff] %v420
          %v422 = vld [vmem:[%s62 + $0x598] sm:$0xff]
          %423 = vst [vmem:[%s63 + $0x598] sm:$0xff] %v422
          %v424 = vld [vmem:[%s62 + $0x5a0] sm:$0xff]
          %425 = vst [vmem:[%s63 + $0x5a0] sm:$0xff] %v424
          %v426 = vld [vmem:[%s62 + $0x5a8] sm:$0xff]
          %427 = vst [vmem:[%s63 + $0x5a8] sm:$0xff] %v426
          %v428 = vld [vmem:[%s62 + $0x5b0] sm:$0xff]
          %429 = vst [vmem:[%s63 + $0x5b0] sm:$0xff] %v428
          %v430 = vld [vmem:[%s62 + $0x5b8] sm:$0xff]
          %431 = vst [vmem:[%s63 + $0x5b8] sm:$0xff] %v430
          %v432 = vld [vmem:[%s62 + $0x5c0] sm:$0xff]
          %433 = vst [vmem:[%s63 + $0x5c0] sm:$0xff] %v432
          %v434 = vld [vmem:[%s62 + $0x5c8] sm:$0xff]
          %435 = vst [vmem:[%s63 + $0x5c8] sm:$0xff] %v434
          %v436 = vld [vmem:[%s62 + $0x5d0] sm:$0xff]
          %437 = vst [vmem:[%s63 + $0x5d0] sm:$0xff] %v436
          %v438 = vld [vmem:[%s62 + $0x5d8] sm:$0xff]
          %439 = vst [vmem:[%s63 + $0x5d8] sm:$0xff] %v438
          %v440 = vld [vmem:[%s62 + $0x5e0] sm:$0xff]
          %441 = vst [vmem:[%s63 + $0x5e0] sm:$0xff] %v440
          %v442 = vld [vmem:[%s62 + $0x5e8] sm:$0xff]
          %443 = vst [vmem:[%s63 + $0x5e8] sm:$0xff] %v442
          %v444 = vld [vmem:[%s62 + $0x5f0] sm:$0xff]
          %445 = vst [vmem:[%s63 + $0x5f0] sm:$0xff] %v444
          %v446 = vld [vmem:[%s62 + $0x5f8] sm:$0xff]
          %447 = vst [vmem:[%s63 + $0x5f8] sm:$0xff] %v446
          %v448 = vld [vmem:[%s62 + $0x600] sm:$0xff]
          %449 = vst [vmem:[%s63 + $0x600] sm:$0xff] %v448
          %v450 = vld [vmem:[%s62 + $0x608] sm:$0xff]
          %451 = vst [vmem:[%s63 + $0x608] sm:$0xff] %v450
          %v452 = vld [vmem:[%s62 + $0x610] sm:$0xff]
          %453 = vst [vmem:[%s63 + $0x610] sm:$0xff] %v452
          %v454 = vld [vmem:[%s62 + $0x618] sm:$0xff]
          %455 = vst [vmem:[%s63 + $0x618] sm:$0xff] %v454
        $region57: #{simple_cnn_forward.1} parent=51 // loop_footer
          %s61 = sadd.s32 1, %s57
        $region58: #{simple_cnn_forward.1} parent=51 // loop_footer_branch
          %56 = sbr.rel target = $region54
        $region59: #{simple_cnn_forward.1} parent=51 // loop_exit
          _
      $region52: #{simple_cnn_forward.1} parent=36 // pred_fallthru
        _
      %p456 = pneg %p52
      // Predicated region
      $region60: #{simple_cnn_forward.1} parent=36 // pred_check
        _
      $region61: #{simple_cnn_forward.1} parent=36 // pred_check_branch
        %458 = sbr.rel (%p52) target = $region63
      $region62: #{simple_cnn_forward.1} parent=36 // pred_region
        %s459 = sand.u32 1568, 7
      $region63: #{simple_cnn_forward.1} parent=36 // pred_fallthru
        _
    $region37: #{simple_cnn_forward.1} parent=1 // pred_fallthru
      _
    // Predicated region
    $region38: #{simple_cnn_forward.1} parent=1 // pred_check
      %p37 = pneg %p33
    $region39: #{simple_cnn_forward.1} parent=1 // pred_check_branch
      %39 = sbr.rel (%p37) target = $region41
    $region40: #{simple_cnn_forward.1} parent=1 // pred_region
      %s40 = sshllo.u32 0, 1568
      loop: start=0, step=1, limit=1
      $region42: #{simple_cnn_forward.1} parent=40 // loop_pre_header
        _
      $region43: #{simple_cnn_forward.1} parent=40 // loop_header
        %s42 = sphi 0, %s46
        %p43 = scmp.ge.s32.totalorder %s42, 1
        %s47 = sphi %s5, %s5
        %s48 = sphi [#allocation7], [#allocation7]
      $region44: #{simple_cnn_forward.1} parent=40 // loop_header_branch
        %45 = sbr.rel (%p43) target = $region48
      $region45: #{simple_cnn_forward.1} parent=40 // loop_body
        %v49 = vld [vmem:[%s47] sm:%s40]
        %50 = vst [vmem:[%s48] sm:%s40] %v49
      $region46: #{simple_cnn_forward.1} parent=40 // loop_footer
        %s46 = sadd.s32 1, %s42
      $region47: #{simple_cnn_forward.1} parent=40 // loop_footer_branch
        %41 = sbr.rel target = $region43
      $region48: #{simple_cnn_forward.1} parent=40 // loop_exit
        _
    $region41: #{simple_cnn_forward.1} parent=1 // pred_fallthru
      _
    // Predicated region
    $region64: #{simple_cnn_forward.1} parent=1 // pred_check
      _
    $region65: #{simple_cnn_forward.1} parent=1 // pred_check_branch
      %462 = sbr.rel (0) target = $region67
    $region66: #{simple_cnn_forward.1} parent=1 // pred_region
      %463 = vsyncadd [#allocation8], 25088
    $region67: #{simple_cnn_forward.1} parent=1 // pred_fallthru
      _
    %v464 = vld [vmem:[%s0] sm:$0xf]
    %v465 = vld [vmem:[%s0 + $0x4] sm:$0xf]
    %v466 = vld [vmem:[%s0 + $0x8] sm:$0xf]
    %v467 = vld [vmem:[%s0 + $0xc] sm:$0xf]
    %v468 = vld [vmem:[%s0 + $0x10] sm:$0xf]
    %v469 = vld [vmem:[%s0 + $0x14] sm:$0xf]
    %v470 = vld [vmem:[%s0 + $0x18] sm:$0xf]
    %v471 = vld [vmem:[%s0 + $0x1c] sm:$0xf]
    %v472 = vld [vmem:[%s0 + $0x20] sm:$0xf]
    %v473 = vld [vmem:[%s0 + $0x24] sm:$0xf]
    %v474 = vld [vmem:[%s0 + $0x28] sm:$0xf]
    %v475 = vld [vmem:[%s0 + $0x2c] sm:$0xf]
    %v476 = vld [vmem:[%s0 + $0x30] sm:$0xf]
    %v477 = vld [vmem:[%s0 + $0x34] sm:$0xf]
    %v478 = vld [vmem:[%s0 + $0x38] sm:$0xf]
    %v479 = vld [vmem:[%s0 + $0x3c] sm:$0xf]
    %v480 = vld [vmem:[%s0 + $0x40] sm:$0xf]
    %v481 = vld [vmem:[%s0 + $0x44] sm:$0xf]
    %v482 = vld [vmem:[%s0 + $0x48] sm:$0xf]
    %v483 = vld [vmem:[%s0 + $0x4c] sm:$0xf]
    %v484 = vld [vmem:[%s0 + $0x50] sm:$0xf]
    %v485 = vld [vmem:[%s0 + $0x54] sm:$0xf]
    %v486 = vld [vmem:[%s0 + $0x58] sm:$0xf]
    %v487 = vld [vmem:[%s0 + $0x5c] sm:$0xf]
    %v488 = vld [vmem:[%s0 + $0x60] sm:$0xf]
    %v489 = vld [vmem:[%s0 + $0x64] sm:$0xf]
    %v490 = vld [vmem:[%s0 + $0x68] sm:$0xf]
    %v491 = vld [vmem:[%s0 + $0x6c] sm:$0xf]
    %v492 = vld [vmem:[%s0 + $0x70] sm:$0xf]
    %v493 = vld [vmem:[%s0 + $0x74] sm:$0xf]
    %v494 = vld [vmem:[%s0 + $0x78] sm:$0xf]
    %v495 = vld [vmem:[%s0 + $0x7c] sm:$0xf]
    %v496 = vld [vmem:[%s0 + $0x80] sm:$0xf]
    %v497 = vld [vmem:[%s0 + $0x84] sm:$0xf]
    %v498 = vld [vmem:[%s0 + $0x88] sm:$0xf]
    %v499 = vld [vmem:[%s0 + $0x8c] sm:$0xf]
    %v500 = vld [vmem:[%s0 + $0x90] sm:$0xf]
    %v501 = vld [vmem:[%s0 + $0x94] sm:$0xf]
    %v502 = vld [vmem:[%s0 + $0x98] sm:$0xf]
    %v503 = vld [vmem:[%s0 + $0x9c] sm:$0xf]
    %v504 = vld [vmem:[%s0 + $0xa0] sm:$0xf]
    %v505 = vld [vmem:[%s0 + $0xa4] sm:$0xf]
    %v506 = vld [vmem:[%s0 + $0xa8] sm:$0xf]
    %v507 = vld [vmem:[%s0 + $0xac] sm:$0xf]
    %v508 = vld [vmem:[%s0 + $0xb0] sm:$0xf]
    %v509 = vld [vmem:[%s0 + $0xb4] sm:$0xf]
    %v510 = vld [vmem:[%s0 + $0xb8] sm:$0xf]
    %v511 = vld [vmem:[%s0 + $0xbc] sm:$0xf]
    %v512 = vld [vmem:[%s0 + $0xc0] sm:$0xf]
    %v513 = vld [vmem:[%s0 + $0xc4] sm:$0xf]
    %v514 = vld [vmem:[%s0 + $0xc8] sm:$0xf]
    %v515 = vld [vmem:[%s0 + $0xcc] sm:$0xf]
    %v516 = vld [vmem:[%s0 + $0xd0] sm:$0xf]
    %v517 = vld [vmem:[%s0 + $0xd4] sm:$0xf]
    %v518 = vld [vmem:[%s0 + $0xd8] sm:$0xf]
    %v519 = vld [vmem:[%s0 + $0xdc] sm:$0xf]
    %v520 = vld [vmem:[%s0 + $0xe0] sm:$0xf]
    %v521 = vld [vmem:[%s0 + $0xe4] sm:$0xf]
    %v522 = vld [vmem:[%s0 + $0xe8] sm:$0xf]
    %v523 = vld [vmem:[%s0 + $0xec] sm:$0xf]
    %v524 = vld [vmem:[%s0 + $0xf0] sm:$0xf]
    %v525 = vld [vmem:[%s0 + $0xf4] sm:$0xf]
    %v526 = vld [vmem:[%s0 + $0xf8] sm:$0xf]
    %v527 = vld [vmem:[%s0 + $0xfc] sm:$0xf]
    %v528 = vld [vmem:[%s0 + $0x100] sm:$0xf]
    %v529 = vld [vmem:[%s0 + $0x104] sm:$0xf]
    %v530 = vld [vmem:[%s0 + $0x108] sm:$0xf]
    %v531 = vld [vmem:[%s0 + $0x10c] sm:$0xf]
    %v532 = vld [vmem:[%s0 + $0x110] sm:$0xf]
    %v533 = vld [vmem:[%s0 + $0x114] sm:$0xf]
    %v534 = vld [vmem:[%s0 + $0x118] sm:$0xf]
    %v535 = vld [vmem:[%s0 + $0x11c] sm:$0xf]
    %v536 = vld [vmem:[%s0 + $0x120] sm:$0xf]
    %v537 = vld [vmem:[%s0 + $0x124] sm:$0xf]
    %v538 = vld [vmem:[%s0 + $0x128] sm:$0xf]
    %v539 = vld [vmem:[%s0 + $0x12c] sm:$0xf]
    %v540 = vld [vmem:[%s0 + $0x130] sm:$0xf]
    %v541 = vld [vmem:[%s0 + $0x134] sm:$0xf]
    %v542 = vld [vmem:[%s0 + $0x138] sm:$0xf]
    %v543 = vld [vmem:[%s0 + $0x13c] sm:$0xf]
    %v544 = vld [vmem:[%s0 + $0x140] sm:$0xf]
    %v545 = vld [vmem:[%s0 + $0x144] sm:$0xf]
    %v546 = vld [vmem:[%s0 + $0x148] sm:$0xf]
    %v547 = vld [vmem:[%s0 + $0x14c] sm:$0xf]
    %v548 = vld [vmem:[%s0 + $0x150] sm:$0xf]
    %v549 = vld [vmem:[%s0 + $0x154] sm:$0xf]
    %v550 = vld [vmem:[%s0 + $0x158] sm:$0xf]
    %v551 = vld [vmem:[%s0 + $0x15c] sm:$0xf]
    %v552 = vld [vmem:[%s0 + $0x160] sm:$0xf]
    %v553 = vld [vmem:[%s0 + $0x164] sm:$0xf]
    %v554 = vld [vmem:[%s0 + $0x168] sm:$0xf]
    %v555 = vld [vmem:[%s0 + $0x16c] sm:$0xf]
    %v556 = vld [vmem:[%s0 + $0x170] sm:$0xf]
    %v557 = vld [vmem:[%s0 + $0x174] sm:$0xf]
    %v558 = vld [vmem:[%s0 + $0x178] sm:$0xf]
    %v559 = vld [vmem:[%s0 + $0x17c] sm:$0xf]
    %v560 = vld [vmem:[%s0 + $0x180] sm:$0xf]
    %v561 = vld [vmem:[%s0 + $0x184] sm:$0xf]
    %v562 = vld [vmem:[%s0 + $0x188] sm:$0xf]
    %v563 = vld [vmem:[%s0 + $0x18c] sm:$0xf]
    %v564 = vld [vmem:[%s0 + $0x190] sm:$0xf]
    %v565 = vld [vmem:[%s0 + $0x194] sm:$0xf]
    %v566 = vld [vmem:[%s0 + $0x198] sm:$0xf]
    %v567 = vld [vmem:[%s0 + $0x19c] sm:$0xf]
    %v568 = vld [vmem:[%s0 + $0x1a0] sm:$0xf]
    %v569 = vld [vmem:[%s0 + $0x1a4] sm:$0xf]
    %v570 = vld [vmem:[%s0 + $0x1a8] sm:$0xf]
    %v571 = vld [vmem:[%s0 + $0x1ac] sm:$0xf]
    %v572 = vld [vmem:[%s0 + $0x1b0] sm:$0xf]
    %v573 = vld [vmem:[%s0 + $0x1b4] sm:$0xf]
    %v574 = vld [vmem:[%s0 + $0x1b8] sm:$0xf]
    %v575 = vld [vmem:[%s0 + $0x1bc] sm:$0xf]
    %v576 = vld [vmem:[%s0 + $0x1c0] sm:$0xf]
    %v577 = vld [vmem:[%s0 + $0x1c4] sm:$0xf]
    %v578 = vld [vmem:[%s0 + $0x1c8] sm:$0xf]
    %v579 = vld [vmem:[%s0 + $0x1cc] sm:$0xf]
    %v580 = vld [vmem:[%s0 + $0x1d0] sm:$0xf]
    %v581 = vld [vmem:[%s0 + $0x1d4] sm:$0xf]
    %v582 = vld [vmem:[%s0 + $0x1d8] sm:$0xf]
    %v583 = vld [vmem:[%s0 + $0x1dc] sm:$0xf]
    %v584 = vld [vmem:[%s0 + $0x1e0] sm:$0xf]
    %v585 = vld [vmem:[%s0 + $0x1e4] sm:$0xf]
    %v586 = vld [vmem:[%s0 + $0x1e8] sm:$0xf]
    %v587 = vld [vmem:[%s0 + $0x1ec] sm:$0xf]
    %v588 = vld [vmem:[%s0 + $0x1f0] sm:$0xf]
    %v589 = vld [vmem:[%s0 + $0x1f4] sm:$0xf]
    %v590 = vld [vmem:[%s0 + $0x1f8] sm:$0xf]
    %v591 = vld [vmem:[%s0 + $0x1fc] sm:$0xf]
    %v592 = vld [vmem:[%s0 + $0x200] sm:$0xf]
    %v593 = vld [vmem:[%s0 + $0x204] sm:$0xf]
    %v594 = vld [vmem:[%s0 + $0x208] sm:$0xf]
    %v595 = vld [vmem:[%s0 + $0x20c] sm:$0xf]
    %v596 = vld [vmem:[%s0 + $0x210] sm:$0xf]
    %v597 = vld [vmem:[%s0 + $0x214] sm:$0xf]
    %v598 = vld [vmem:[%s0 + $0x218] sm:$0xf]
    %v599 = vld [vmem:[%s0 + $0x21c] sm:$0xf]
    %v600 = vld [vmem:[%s0 + $0x220] sm:$0xf]
    %v601 = vld [vmem:[%s0 + $0x224] sm:$0xf]
    %v602 = vld [vmem:[%s0 + $0x228] sm:$0xf]
    %v603 = vld [vmem:[%s0 + $0x22c] sm:$0xf]
    %v604 = vld [vmem:[%s0 + $0x230] sm:$0xf]
    %v605 = vld [vmem:[%s0 + $0x234] sm:$0xf]
    %v606 = vld [vmem:[%s0 + $0x238] sm:$0xf]
    %v607 = vld [vmem:[%s0 + $0x23c] sm:$0xf]
    %v608 = vld [vmem:[%s0 + $0x240] sm:$0xf]
    %v609 = vld [vmem:[%s0 + $0x244] sm:$0xf]
    %v610 = vld [vmem:[%s0 + $0x248] sm:$0xf]
    %v611 = vld [vmem:[%s0 + $0x24c] sm:$0xf]
    %v612 = vld [vmem:[%s0 + $0x250] sm:$0xf]
    %v613 = vld [vmem:[%s0 + $0x254] sm:$0xf]
    %v614 = vld [vmem:[%s0 + $0x258] sm:$0xf]
    %v615 = vld [vmem:[%s0 + $0x25c] sm:$0xf]
    %v616 = vld [vmem:[%s0 + $0x260] sm:$0xf]
    %v617 = vld [vmem:[%s0 + $0x264] sm:$0xf]
    %v618 = vld [vmem:[%s0 + $0x268] sm:$0xf]
    %v619 = vld [vmem:[%s0 + $0x26c] sm:$0xf]
    %v620 = vld [vmem:[%s0 + $0x270] sm:$0xf]
    %v621 = vld [vmem:[%s0 + $0x274] sm:$0xf]
    %v622 = vld [vmem:[%s0 + $0x278] sm:$0xf]
    %v623 = vld [vmem:[%s0 + $0x27c] sm:$0xf]
    %v624 = vld [vmem:[%s0 + $0x280] sm:$0xf]
    %v625 = vld [vmem:[%s0 + $0x284] sm:$0xf]
    %v626 = vld [vmem:[%s0 + $0x288] sm:$0xf]
    %v627 = vld [vmem:[%s0 + $0x28c] sm:$0xf]
    %v628 = vld [vmem:[%s0 + $0x290] sm:$0xf]
    %v629 = vld [vmem:[%s0 + $0x294] sm:$0xf]
    %v630 = vld [vmem:[%s0 + $0x298] sm:$0xf]
    %v631 = vld [vmem:[%s0 + $0x29c] sm:$0xf]
    %v632 = vld [vmem:[%s0 + $0x2a0] sm:$0xf]
    %v633 = vld [vmem:[%s0 + $0x2a4] sm:$0xf]
    %v634 = vld [vmem:[%s0 + $0x2a8] sm:$0xf]
    %v635 = vld [vmem:[%s0 + $0x2ac] sm:$0xf]
    %v636 = vld [vmem:[%s0 + $0x2b0] sm:$0xf]
    %v637 = vld [vmem:[%s0 + $0x2b4] sm:$0xf]
    %v638 = vld [vmem:[%s0 + $0x2b8] sm:$0xf]
    %v639 = vld [vmem:[%s0 + $0x2bc] sm:$0xf]
    %v640 = vld [vmem:[%s0 + $0x2c0] sm:$0xf]
    %v641 = vld [vmem:[%s0 + $0x2c4] sm:$0xf]
    %v642 = vld [vmem:[%s0 + $0x2c8] sm:$0xf]
    %v643 = vld [vmem:[%s0 + $0x2cc] sm:$0xf]
    %v644 = vld [vmem:[%s0 + $0x2d0] sm:$0xf]
    %v645 = vld [vmem:[%s0 + $0x2d4] sm:$0xf]
    %v646 = vld [vmem:[%s0 + $0x2d8] sm:$0xf]
    %v647 = vld [vmem:[%s0 + $0x2dc] sm:$0xf]
    %v648 = vld [vmem:[%s0 + $0x2e0] sm:$0xf]
    %v649 = vld [vmem:[%s0 + $0x2e4] sm:$0xf]
    %v650 = vld [vmem:[%s0 + $0x2e8] sm:$0xf]
    %v651 = vld [vmem:[%s0 + $0x2ec] sm:$0xf]
    %v652 = vld [vmem:[%s0 + $0x2f0] sm:$0xf]
    %v653 = vld [vmem:[%s0 + $0x2f4] sm:$0xf]
    %v654 = vld [vmem:[%s0 + $0x2f8] sm:$0xf]
    %v655 = vld [vmem:[%s0 + $0x2fc] sm:$0xf]
    %v656 = vld [vmem:[%s0 + $0x300] sm:$0xf]
    %v657 = vld [vmem:[%s0 + $0x304] sm:$0xf]
    %v658 = vld [vmem:[%s0 + $0x308] sm:$0xf]
    %v659 = vld [vmem:[%s0 + $0x30c] sm:$0xf]
    %v660 = vld [vmem:[%s1] sm:$0xf]
    %v661 = vld [vmem:[%s1 + $0x4] sm:$0xf]
    %v662 = vld [vmem:[%s2] sm:$0x1]
    %v664 = vlaneseq
    %v665 = vshrl.u32 %v664, 7
    %v666 = vsub.s32 0, %v665
    %v667 = vrot.slane %v662, %v666
    %v865 = vunpack.c.l.b16 %v464
    %v866 = vunpack.c.l.b16 %v465
    %v867 = vunpack.c.l.b16 %v466
    %v868 = vunpack.c.l.b16 %v467
    %v869 = vunpack.c.l.b16 %v468
    %v870 = vunpack.c.l.b16 %v469
    %v871 = vunpack.c.l.b16 %v470
    %v872 = vunpack.c.l.b16 %v471
    %v873 = vunpack.c.l.b16 %v472
    %v874 = vunpack.c.l.b16 %v473
    %v875 = vunpack.c.l.b16 %v474
    %v876 = vunpack.c.l.b16 %v475
    %v877 = vunpack.c.l.b16 %v476
    %v878 = vunpack.c.l.b16 %v477
    %v879 = vunpack.c.l.b16 %v478
    %v880 = vunpack.c.l.b16 %v479
    %v881 = vunpack.c.l.b16 %v480
    %v882 = vunpack.c.l.b16 %v481
    %v883 = vunpack.c.l.b16 %v482
    %v884 = vunpack.c.l.b16 %v483
    %v885 = vunpack.c.l.b16 %v484
    %v886 = vunpack.c.l.b16 %v485
    %v887 = vunpack.c.l.b16 %v486
    %v888 = vunpack.c.l.b16 %v487
    %v889 = vunpack.c.l.b16 %v488
    %v890 = vunpack.c.l.b16 %v489
    %v891 = vunpack.c.l.b16 %v490
    %v892 = vunpack.c.l.b16 %v491
    %v893 = vunpack.c.l.b16 %v492
    %v894 = vunpack.c.l.b16 %v493
    %v895 = vunpack.c.l.b16 %v494
    %v896 = vunpack.c.l.b16 %v495
    %v897 = vunpack.c.l.b16 %v496
    %v898 = vunpack.c.l.b16 %v497
    %v899 = vunpack.c.l.b16 %v498
    %v900 = vunpack.c.l.b16 %v499
    %v901 = vunpack.c.l.b16 %v500
    %v902 = vunpack.c.l.b16 %v501
    %v903 = vunpack.c.l.b16 %v502
    %v904 = vunpack.c.l.b16 %v503
    %v905 = vunpack.c.l.b16 %v504
    %v906 = vunpack.c.l.b16 %v505
    %v907 = vunpack.c.l.b16 %v506
    %v908 = vunpack.c.l.b16 %v507
    %v909 = vunpack.c.l.b16 %v508
    %v910 = vunpack.c.l.b16 %v509
    %v911 = vunpack.c.l.b16 %v510
    %v912 = vunpack.c.l.b16 %v511
    %v913 = vunpack.c.l.b16 %v512
    %v914 = vunpack.c.l.b16 %v513
    %v915 = vunpack.c.l.b16 %v514
    %v916 = vunpack.c.l.b16 %v515
    %v917 = vunpack.c.l.b16 %v516
    %v918 = vunpack.c.l.b16 %v517
    %v919 = vunpack.c.l.b16 %v518
    %v920 = vunpack.c.l.b16 %v519
    %v921 = vunpack.c.l.b16 %v520
    %v922 = vunpack.c.l.b16 %v521
    %v923 = vunpack.c.l.b16 %v522
    %v924 = vunpack.c.l.b16 %v523
    %v925 = vunpack.c.l.b16 %v524
    %v926 = vunpack.c.l.b16 %v525
    %v927 = vunpack.c.l.b16 %v526
    %v928 = vunpack.c.l.b16 %v527
    %v929 = vunpack.c.l.b16 %v528
    %v930 = vunpack.c.l.b16 %v529
    %v931 = vunpack.c.l.b16 %v530
    %v932 = vunpack.c.l.b16 %v531
    %v933 = vunpack.c.l.b16 %v532
    %v934 = vunpack.c.l.b16 %v533
    %v935 = vunpack.c.l.b16 %v534
    %v936 = vunpack.c.l.b16 %v535
    %v937 = vunpack.c.l.b16 %v536
    %v938 = vunpack.c.l.b16 %v537
    %v939 = vunpack.c.l.b16 %v538
    %v940 = vunpack.c.l.b16 %v539
    %v941 = vunpack.c.l.b16 %v540
    %v942 = vunpack.c.l.b16 %v541
    %v943 = vunpack.c.l.b16 %v542
    %v944 = vunpack.c.l.b16 %v543
    %v945 = vunpack.c.l.b16 %v544
    %v946 = vunpack.c.l.b16 %v545
    %v947 = vunpack.c.l.b16 %v546
    %v948 = vunpack.c.l.b16 %v547
    %v949 = vunpack.c.l.b16 %v548
    %v950 = vunpack.c.l.b16 %v549
    %v951 = vunpack.c.l.b16 %v550
    %v952 = vunpack.c.l.b16 %v551
    %v953 = vunpack.c.l.b16 %v552
    %v954 = vunpack.c.l.b16 %v553
    %v955 = vunpack.c.l.b16 %v554
    %v956 = vunpack.c.l.b16 %v555
    %v957 = vunpack.c.l.b16 %v556
    %v958 = vunpack.c.l.b16 %v557
    %v959 = vunpack.c.l.b16 %v558
    %v960 = vunpack.c.l.b16 %v559
    %v961 = vunpack.c.l.b16 %v560
    %v962 = vunpack.c.l.b16 %v561
    %v963 = vunpack.c.l.b16 %v562
    %v964 = vunpack.c.l.b16 %v563
    %v965 = vunpack.c.l.b16 %v564
    %v966 = vunpack.c.l.b16 %v565
    %v967 = vunpack.c.l.b16 %v566
    %v968 = vunpack.c.l.b16 %v567
    %v969 = vunpack.c.l.b16 %v568
    %v970 = vunpack.c.l.b16 %v569
    %v971 = vunpack.c.l.b16 %v570
    %v972 = vunpack.c.l.b16 %v571
    %v973 = vunpack.c.l.b16 %v572
    %v974 = vunpack.c.l.b16 %v573
    %v975 = vunpack.c.l.b16 %v574
    %v976 = vunpack.c.l.b16 %v575
    %v977 = vunpack.c.l.b16 %v576
    %v978 = vunpack.c.l.b16 %v577
    %v979 = vunpack.c.l.b16 %v578
    %v980 = vunpack.c.l.b16 %v579
    %v981 = vunpack.c.l.b16 %v580
    %v982 = vunpack.c.l.b16 %v581
    %v983 = vunpack.c.l.b16 %v582
    %v984 = vunpack.c.l.b16 %v583
    %v985 = vunpack.c.l.b16 %v584
    %v986 = vunpack.c.l.b16 %v585
    %v987 = vunpack.c.l.b16 %v586
    %v988 = vunpack.c.l.b16 %v587
    %v989 = vunpack.c.l.b16 %v588
    %v990 = vunpack.c.l.b16 %v589
    %v991 = vunpack.c.l.b16 %v590
    %v992 = vunpack.c.l.b16 %v591
    %v993 = vunpack.c.l.b16 %v592
    %v994 = vunpack.c.l.b16 %v593
    %v995 = vunpack.c.l.b16 %v594
    %v996 = vunpack.c.l.b16 %v595
    %v997 = vunpack.c.l.b16 %v596
    %v998 = vunpack.c.l.b16 %v597
    %v999 = vunpack.c.l.b16 %v598
    %v1000 = vunpack.c.l.b16 %v599
    %v1001 = vunpack.c.l.b16 %v600
    %v1002 = vunpack.c.l.b16 %v601
    %v1003 = vunpack.c.l.b16 %v602
    %v1004 = vunpack.c.l.b16 %v603
    %v1005 = vunpack.c.l.b16 %v604
    %v1006 = vunpack.c.l.b16 %v605
    %v1007 = vunpack.c.l.b16 %v606
    %v1008 = vunpack.c.l.b16 %v607
    %v1009 = vunpack.c.l.b16 %v608
    %v1010 = vunpack.c.l.b16 %v609
    %v1011 = vunpack.c.l.b16 %v610
    %v1012 = vunpack.c.l.b16 %v611
    %v1013 = vunpack.c.l.b16 %v612
    %v1014 = vunpack.c.l.b16 %v613
    %v1015 = vunpack.c.l.b16 %v614
    %v1016 = vunpack.c.l.b16 %v615
    %v1017 = vunpack.c.l.b16 %v616
    %v1018 = vunpack.c.l.b16 %v617
    %v1019 = vunpack.c.l.b16 %v618
    %v1020 = vunpack.c.l.b16 %v619
    %v1021 = vunpack.c.l.b16 %v620
    %v1022 = vunpack.c.l.b16 %v621
    %v1023 = vunpack.c.l.b16 %v622
    %v1024 = vunpack.c.l.b16 %v623
    %v1025 = vunpack.c.l.b16 %v624
    %v1026 = vunpack.c.l.b16 %v625
    %v1027 = vunpack.c.l.b16 %v626
    %v1028 = vunpack.c.l.b16 %v627
    %v1029 = vunpack.c.l.b16 %v628
    %v1030 = vunpack.c.l.b16 %v629
    %v1031 = vunpack.c.l.b16 %v630
    %v1032 = vunpack.c.l.b16 %v631
    %v1033 = vunpack.c.l.b16 %v632
    %v1034 = vunpack.c.l.b16 %v633
    %v1035 = vunpack.c.l.b16 %v634
    %v1036 = vunpack.c.l.b16 %v635
    %v1037 = vunpack.c.l.b16 %v636
    %v1038 = vunpack.c.l.b16 %v637
    %v1039 = vunpack.c.l.b16 %v638
    %v1040 = vunpack.c.l.b16 %v639
    %v1041 = vunpack.c.l.b16 %v640
    %v1042 = vunpack.c.l.b16 %v641
    %v1043 = vunpack.c.l.b16 %v642
    %v1044 = vunpack.c.l.b16 %v643
    %v1045 = vunpack.c.l.b16 %v644
    %v1046 = vunpack.c.l.b16 %v645
    %v1047 = vunpack.c.l.b16 %v646
    %v1048 = vunpack.c.l.b16 %v647
    %v1049 = vunpack.c.l.b16 %v648
    %v1050 = vunpack.c.l.b16 %v649
    %v1051 = vunpack.c.l.b16 %v650
    %v1052 = vunpack.c.l.b16 %v651
    %v1053 = vunpack.c.l.b16 %v652
    %v1054 = vunpack.c.l.b16 %v653
    %v1055 = vunpack.c.l.b16 %v654
    %v1056 = vunpack.c.l.b16 %v655
    %v1057 = vunpack.c.l.b16 %v656
    %v1058 = vunpack.c.l.b16 %v657
    %v1059 = vunpack.c.l.b16 %v658
    %v1060 = vunpack.c.l.b16 %v659
    %v1061 = vpack.c.b16 %v866, %v865
    %v1062 = vpack.c.b16 %v868, %v867
    %v1063 = vpack.c.b16 %v870, %v869
    %v1064 = vpack.c.b16 %v872, %v871
    %v1065 = vpack.c.b16 %v874, %v873
    %v1066 = vpack.c.b16 %v876, %v875
    %v1067 = vpack.c.b16 %v878, %v877
    %v1068 = vpack.c.b16 %v880, %v879
    %v1069 = vpack.c.b16 %v882, %v881
    %v1070 = vpack.c.b16 %v884, %v883
    %v1071 = vpack.c.b16 %v886, %v885
    %v1072 = vpack.c.b16 %v888, %v887
    %v1073 = vpack.c.b16 %v890, %v889
    %v1074 = vpack.c.b16 %v892, %v891
    %v1075 = vpack.c.b16 %v894, %v893
    %v1076 = vpack.c.b16 %v896, %v895
    %v1077 = vpack.c.b16 %v898, %v897
    %v1078 = vpack.c.b16 %v900, %v899
    %v1079 = vpack.c.b16 %v902, %v901
    %v1080 = vpack.c.b16 %v904, %v903
    %v1081 = vpack.c.b16 %v906, %v905
    %v1082 = vpack.c.b16 %v908, %v907
    %v1083 = vpack.c.b16 %v910, %v909
    %v1084 = vpack.c.b16 %v912, %v911
    %v1085 = vpack.c.b16 %v914, %v913
    %v1086 = vpack.c.b16 %v916, %v915
    %v1087 = vpack.c.b16 %v918, %v917
    %v1088 = vpack.c.b16 %v920, %v919
    %v1089 = vpack.c.b16 %v922, %v921
    %v1090 = vpack.c.b16 %v924, %v923
    %v1091 = vpack.c.b16 %v926, %v925
    %v1092 = vpack.c.b16 %v928, %v927
    %v1093 = vpack.c.b16 %v930, %v929
    %v1094 = vpack.c.b16 %v932, %v931
    %v1095 = vpack.c.b16 %v934, %v933
    %v1096 = vpack.c.b16 %v936, %v935
    %v1097 = vpack.c.b16 %v938, %v937
    %v1098 = vpack.c.b16 %v940, %v939
    %v1099 = vpack.c.b16 %v942, %v941
    %v1100 = vpack.c.b16 %v944, %v943
    %v1101 = vpack.c.b16 %v946, %v945
    %v1102 = vpack.c.b16 %v948, %v947
    %v1103 = vpack.c.b16 %v950, %v949
    %v1104 = vpack.c.b16 %v952, %v951
    %v1105 = vpack.c.b16 %v954, %v953
    %v1106 = vpack.c.b16 %v956, %v955
    %v1107 = vpack.c.b16 %v958, %v957
    %v1108 = vpack.c.b16 %v960, %v959
    %v1109 = vpack.c.b16 %v962, %v961
    %v1110 = vpack.c.b16 %v964, %v963
    %v1111 = vpack.c.b16 %v966, %v965
    %v1112 = vpack.c.b16 %v968, %v967
    %v1113 = vpack.c.b16 %v970, %v969
    %v1114 = vpack.c.b16 %v972, %v971
    %v1115 = vpack.c.b16 %v974, %v973
    %v1116 = vpack.c.b16 %v976, %v975
    %v1117 = vpack.c.b16 %v978, %v977
    %v1118 = vpack.c.b16 %v980, %v979
    %v1119 = vpack.c.b16 %v982, %v981
    %v1120 = vpack.c.b16 %v984, %v983
    %v1121 = vpack.c.b16 %v986, %v985
    %v1122 = vpack.c.b16 %v988, %v987
    %v1123 = vpack.c.b16 %v990, %v989
    %v1124 = vpack.c.b16 %v992, %v991
    %v1125 = vpack.c.b16 %v994, %v993
    %v1126 = vpack.c.b16 %v996, %v995
    %v1127 = vpack.c.b16 %v998, %v997
    %v1128 = vpack.c.b16 %v1000, %v999
    %v1129 = vpack.c.b16 %v1002, %v1001
    %v1130 = vpack.c.b16 %v1004, %v1003
    %v1131 = vpack.c.b16 %v1006, %v1005
    %v1132 = vpack.c.b16 %v1008, %v1007
    %v1133 = vpack.c.b16 %v1010, %v1009
    %v1134 = vpack.c.b16 %v1012, %v1011
    %v1135 = vpack.c.b16 %v1014, %v1013
    %v1136 = vpack.c.b16 %v1016, %v1015
    %v1137 = vpack.c.b16 %v1018, %v1017
    %v1138 = vpack.c.b16 %v1020, %v1019
    %v1139 = vpack.c.b16 %v1022, %v1021
    %v1140 = vpack.c.b16 %v1024, %v1023
    %v1141 = vpack.c.b16 %v1026, %v1025
    %v1142 = vpack.c.b16 %v1028, %v1027
    %v1143 = vpack.c.b16 %v1030, %v1029
    %v1144 = vpack.c.b16 %v1032, %v1031
    %v1145 = vpack.c.b16 %v1034, %v1033
    %v1146 = vpack.c.b16 %v1036, %v1035
    %v1147 = vpack.c.b16 %v1038, %v1037
    %v1148 = vpack.c.b16 %v1040, %v1039
    %v1149 = vpack.c.b16 %v1042, %v1041
    %v1150 = vpack.c.b16 %v1044, %v1043
    %v1151 = vpack.c.b16 %v1046, %v1045
    %v1152 = vpack.c.b16 %v1048, %v1047
    %v1153 = vpack.c.b16 %v1050, %v1049
    %v1154 = vpack.c.b16 %v1052, %v1051
    %v1155 = vpack.c.b16 %v1054, %v1053
    %v1156 = vpack.c.b16 %v1056, %v1055
    %v1157 = vpack.c.b16 %v1058, %v1057
    %v1158 = vpack.c.b16 %v1060, %v1059
    %v1161 = vunpack.c.l.b16 %v660
    %v1162 = vunpack.c.l.b16 %v661
    %v1163 = vpack.c.b16 %v1162, %v1161
    %vm1165 = vcmask 130048
    %v1167 = vsel %vm1165, %v1061, 0
    %v1170 = vsel %vm1165, %v1062, 0
    %v1173 = vsel %vm1165, %v1063, 0
    %v1176 = vsel %vm1165, %v1064, 0
    %v1179 = vsel %vm1165, %v1065, 0
    %v1182 = vsel %vm1165, %v1066, 0
    %v1185 = vsel %vm1165, %v1067, 0
    %v1188 = vsel %vm1165, %v1068, 0
    %v1191 = vsel %vm1165, %v1069, 0
    %v1194 = vsel %vm1165, %v1070, 0
    %v1197 = vsel %vm1165, %v1071, 0
    %v1200 = vsel %vm1165, %v1072, 0
    %v1203 = vsel %vm1165, %v1073, 0
    %v1206 = vsel %vm1165, %v1074, 0
    %v1209 = vsel %vm1165, %v1075, 0
    %v1212 = vsel %vm1165, %v1076, 0
    %v1215 = vsel %vm1165, %v1077, 0
    %v1218 = vsel %vm1165, %v1078, 0
    %v1221 = vsel %vm1165, %v1079, 0
    %v1224 = vsel %vm1165, %v1080, 0
    %v1227 = vsel %vm1165, %v1081, 0
    %v1230 = vsel %vm1165, %v1082, 0
    %v1233 = vsel %vm1165, %v1083, 0
    %v1236 = vsel %vm1165, %v1084, 0
    %v1239 = vsel %vm1165, %v1085, 0
    %v1242 = vsel %vm1165, %v1086, 0
    %v1245 = vsel %vm1165, %v1087, 0
    %v1248 = vsel %vm1165, %v1088, 0
    %v1251 = vsel %vm1165, %v1089, 0
    %v1254 = vsel %vm1165, %v1090, 0
    %v1257 = vsel %vm1165, %v1091, 0
    %v1260 = vsel %vm1165, %v1092, 0
    %v1263 = vsel %vm1165, %v1093, 0
    %v1266 = vsel %vm1165, %v1094, 0
    %v1269 = vsel %vm1165, %v1095, 0
    %v1272 = vsel %vm1165, %v1096, 0
    %v1275 = vsel %vm1165, %v1097, 0
    %v1278 = vsel %vm1165, %v1098, 0
    %v1281 = vsel %vm1165, %v1099, 0
    %v1284 = vsel %vm1165, %v1100, 0
    %v1287 = vsel %vm1165, %v1101, 0
    %v1290 = vsel %vm1165, %v1102, 0
    %v1293 = vsel %vm1165, %v1103, 0
    %v1296 = vsel %vm1165, %v1104, 0
    %v1299 = vsel %vm1165, %v1105, 0
    %v1302 = vsel %vm1165, %v1106, 0
    %v1305 = vsel %vm1165, %v1107, 0
    %v1308 = vsel %vm1165, %v1108, 0
    %v1311 = vsel %vm1165, %v1109, 0
    %v1314 = vsel %vm1165, %v1110, 0
    %v1317 = vsel %vm1165, %v1111, 0
    %v1320 = vsel %vm1165, %v1112, 0
    %v1323 = vsel %vm1165, %v1113, 0
    %v1326 = vsel %vm1165, %v1114, 0
    %v1329 = vsel %vm1165, %v1115, 0
    %v1332 = vsel %vm1165, %v1116, 0
    %v1335 = vsel %vm1165, %v1117, 0
    %v1338 = vsel %vm1165, %v1118, 0
    %v1341 = vsel %vm1165, %v1119, 0
    %v1344 = vsel %vm1165, %v1120, 0
    %v1347 = vsel %vm1165, %v1121, 0
    %v1350 = vsel %vm1165, %v1122, 0
    %v1353 = vsel %vm1165, %v1123, 0
    %v1356 = vsel %vm1165, %v1124, 0
    %v1359 = vsel %vm1165, %v1125, 0
    %v1362 = vsel %vm1165, %v1126, 0
    %v1365 = vsel %vm1165, %v1127, 0
    %v1368 = vsel %vm1165, %v1128, 0
    %v1371 = vsel %vm1165, %v1129, 0
    %v1374 = vsel %vm1165, %v1130, 0
    %v1377 = vsel %vm1165, %v1131, 0
    %v1380 = vsel %vm1165, %v1132, 0
    %v1383 = vsel %vm1165, %v1133, 0
    %v1386 = vsel %vm1165, %v1134, 0
    %v1389 = vsel %vm1165, %v1135, 0
    %v1392 = vsel %vm1165, %v1136, 0
    %v1395 = vsel %vm1165, %v1137, 0
    %v1398 = vsel %vm1165, %v1138, 0
    %v1401 = vsel %vm1165, %v1139, 0
    %v1404 = vsel %vm1165, %v1140, 0
    %v1407 = vsel %vm1165, %v1141, 0
    %v1410 = vsel %vm1165, %v1142, 0
    %v1413 = vsel %vm1165, %v1143, 0
    %v1416 = vsel %vm1165, %v1144, 0
    %v1419 = vsel %vm1165, %v1145, 0
    %v1422 = vsel %vm1165, %v1146, 0
    %v1425 = vsel %vm1165, %v1147, 0
    %v1428 = vsel %vm1165, %v1148, 0
    %v1431 = vsel %vm1165, %v1149, 0
    %v1434 = vsel %vm1165, %v1150, 0
    %v1437 = vsel %vm1165, %v1151, 0
    %v1440 = vsel %vm1165, %v1152, 0
    %v1443 = vsel %vm1165, %v1153, 0
    %v1446 = vsel %vm1165, %v1154, 0
    %v1449 = vsel %vm1165, %v1155, 0
    %v1452 = vsel %vm1165, %v1156, 0
    %v1455 = vsel %vm1165, %v1157, 0
    %v1458 = vsel %vm1165, %v1158, 0
    %1460 = vmatprep.subr.bf16.mxu0 0
    %1461 = vmatpush1.bf16.msra.mxu0 %v1163
    %1462 = vmatprep.subr.bf16.mxu0 0
    %1463 = vmatpush1.bf16.msra.mxu0 0
    %1464 = vmatprep.subr.bf16.mxu0 0
    %1465 = vmatpush1.bf16.msra.mxu0 0
    %1466 = vmatprep.subr.bf16.mxu0 0
    %1467 = vmatpush1.bf16.msra.mxu0 0
    %1468 = vmatprep.subr.bf16.mxu0 0
    %1469 = vmatpush1.bf16.msra.mxu0 0
    %1470 = vmatprep.subr.bf16.mxu0 0
    %1471 = vmatpush1.bf16.msra.mxu0 0
    %1472 = vmatprep.subr.bf16.mxu0 0
    %1473 = vmatpush1.bf16.msra.mxu0 0
    %1474 = vmatprep.subr.bf16.mxu0 0
    %1475 = vmatpush1.bf16.msra.mxu0 0
    %1476 = vmatprep.subr.bf16.mxu0 0
    %1477 = vmatpush1.bf16.msra.mxu0 0
    %1478 = vmatprep.subr.bf16.mxu0 0
    %1479 = vmatpush1.bf16.msra.mxu0 0
    %1480 = vmatprep.subr.bf16.mxu0 0
    %1481 = vmatpush1.bf16.msra.mxu0 0
    %1482 = vmatprep.subr.bf16.mxu0 0
    %1483 = vmatpush1.bf16.msra.mxu0 0
    %1484 = vmatprep.subr.bf16.mxu0 0
    %1485 = vmatpush1.bf16.msra.mxu0 0
    %1486 = vmatprep.subr.bf16.mxu0 0
    %1487 = vmatpush1.bf16.msra.mxu0 0
    %1488 = vmatprep.subr.bf16.mxu0 0
    %1489 = vmatpush1.bf16.msra.mxu0 0
    %1490 = vmatprep.subr.bf16.mxu0 0
    %1491 = vmatpush1.bf16.msra.mxu0 0
    %1492 = vmatprep.mubr.bf16.mxu0 0
    %1493 = vmatmul.mubr.bf16.gmra.mrb[0].mxu0 %v1167
    %v1494 = vpop.f32.mrb[0].mxu0
    %v1495 = vadd.f32 %v667, %v1494
    %v1496 = vpop.f32.mrb[0].mxu0
    %v1497 = vpop.f32.mrb[0].mxu0
    %v1498 = vadd.f32 %v667, %v1497
    %v1499 = vpop.f32.mrb[0].mxu0
    %1500 = vmatprep.mubr.bf16.mxu0 0
    %1501 = vmatmul.mubr.bf16.gmra.mrb[0].mxu0 %v1170
    %v1502 = vpop.f32.mrb[0].mxu0
    %v1503 = vadd.f32 %v667, %v1502
    %v1504 = vpop.f32.mrb[0].mxu0
    %v1505 = vpop.f32.mrb[0].mxu0
    %v1506 = vadd.f32 %v667, %v1505
    %v1507 = vpop.f32.mrb[0].mxu0
    %1508 = vmatprep.mubr.bf16.mxu0 0
    %1509 = vmatmul.mubr.bf16.gmra.mrb[0].mxu0 %v1173
    %v1510 = vpop.f32.mrb[0].mxu0
    %v1511 = vadd.f32 %v667, %v1510
    %v1512 = vpop.f32.mrb[0].mxu0
    %v1513 = vpop.f32.mrb[0].mxu0
    %v1514 = vadd.f32 %v667, %v1513
    %v1515 = vpop.f32.mrb[0].mxu0
    %1516 = vmatprep.mubr.bf16.mxu0 0
    %1517 = vmatmul.mubr.bf16.gmra.mrb[0].mxu0 %v1176
    %v1518 = vpop.f32.mrb[0].mxu0
    %v1519 = vadd.f32 %v667, %v1518
    %v1520 = vpop.f32.mrb[0].mxu0
    %v1521 = vpop.f32.mrb[0].mxu0
    %v1522 = vadd.f32 %v667, %v1521
    %v1523 = vpop.f32.mrb[0].mxu0
    %1524 = vmatprep.mubr.bf16.mxu0 0
    %1525 = vmatmul.mubr.bf16.gmra.mrb[0].mxu0 %v1179
    %v1526 = vpop.f32.mrb[0].mxu0
    %v1527 = vadd.f32 %v667, %v1526
    %v1528 = vpop.f32.mrb[0].mxu0
    %v1529 = vpop.f32.mrb[0].mxu0
    %v1530 = vadd.f32 %v667, %v1529
    %v1531 = vpop.f32.mrb[0].mxu0
    %1532 = vmatprep.mubr.bf16.mxu0 0
    %1533 = vmatmul.mubr.bf16.gmra.mrb[0].mxu0 %v1182
    %v1534 = vpop.f32.mrb[0].mxu0
    %v1535 = vadd.f32 %v667, %v1534
    %v1536 = vpop.f32.mrb[0].mxu0
    %v1537 = vpop.f32.mrb[0].mxu0
    %v1538 = vadd.f32 %v667, %v1537
    %v1539 = vpop.f32.mrb[0].mxu0
    %1540 = vmatprep.mubr.bf16.mxu0 0
    %1541 = vmatmul.mubr.bf16.gmra.mrb[0].mxu0 %v1185
    %v1542 = vpop.f32.mrb[0].mxu0
    %v1543 = vadd.f32 %v667, %v1542
    %v1544 = vpop.f32.mrb[0].mxu0
    %v1545 = vpop.f32.mrb[0].mxu0
    %v1546 = vadd.f32 %v667, %v1545
    %v1547 = vpop.f32.mrb[0].mxu0
    %1548 = vmatprep.mubr.bf16.mxu0 0
    %1549 = vmatmul.mubr.bf16.gmra.mrb[0].mxu0 %v1188
    %v1550 = vpop.f32.mrb[0].mxu0
    %v1551 = vadd.f32 %v667, %v1550
    %v1552 = vpop.f32.mrb[0].mxu0
    %v1553 = vpop.f32.mrb[0].mxu0
    %v1554 = vadd.f32 %v667, %v1553
    %v1555 = vpop.f32.mrb[0].mxu0
    %1556 = vmatprep.mubr.bf16.mxu0 0
    %1557 = vmatmul.mubr.bf16.gmra.mrb[0].mxu0 %v1191
    %v1558 = vpop.f32.mrb[0].mxu0
    %v1559 = vadd.f32 %v667, %v1558
    %v1560 = vpop.f32.mrb[0].mxu0
    %v1561 = vpop.f32.mrb[0].mxu0
    %v1562 = vadd.f32 %v667, %v1561
    %v1563 = vpop.f32.mrb[0].mxu0
    %1564 = vmatprep.mubr.bf16.mxu0 0
    %1565 = vmatmul.mubr.bf16.gmra.mrb[0].mxu0 %v1194
    %v1566 = vpop.f32.mrb[0].mxu0
    %v1567 = vadd.f32 %v667, %v1566
    %v1568 = vpop.f32.mrb[0].mxu0
    %v1569 = vpop.f32.mrb[0].mxu0
    %v1570 = vadd.f32 %v667, %v1569
    %v1571 = vpop.f32.mrb[0].mxu0
    %1572 = vmatprep.mubr.bf16.mxu0 0
    %1573 = vmatmul.mubr.bf16.gmra.mrb[0].mxu0 %v1197
    %v1574 = vpop.f32.mrb[0].mxu0
    %v1575 = vadd.f32 %v667, %v1574
    %v1576 = vpop.f32.mrb[0].mxu0
    %v1577 = vpop.f32.mrb[0].mxu0
    %v1578 = vadd.f32 %v667, %v1577
    %v1579 = vpop.f32.mrb[0].mxu0
    %1580 = vmatprep.mubr.bf16.mxu0 0
    %1581 = vmatmul.mubr.bf16.gmra.mrb[0].mxu0 %v1200
    %v1582 = vpop.f32.mrb[0].mxu0
    %v1583 = vadd.f32 %v667, %v1582
    %v1584 = vpop.f32.mrb[0].mxu0
    %v1585 = vpop.f32.mrb[0].mxu0
    %v1586 = vadd.f32 %v667, %v1585
    %v1587 = vpop.f32.mrb[0].mxu0
    %1588 = vmatprep.mubr.bf16.mxu0 0
    %1589 = vmatmul.mubr.bf16.gmra.mrb[0].mxu0 %v1203
    %v1590 = vpop.f32.mrb[0].mxu0
    %v1591 = vadd.f32 %v667, %v1590
    %v1592 = vpop.f32.mrb[0].mxu0
    %v1593 = vpop.f32.mrb[0].mxu0
    %v1594 = vadd.f32 %v667, %v1593
    %v1595 = vpop.f32.mrb[0].mxu0
    %1596 = vmatprep.mubr.bf16.mxu0 0
    %1597 = vmatmul.mubr.bf16.gmra.mrb[0].mxu0 %v1206
    %v1598 = vpop.f32.mrb[0].mxu0
    %v1599 = vadd.f32 %v667, %v1598
    %v1600 = vpop.f32.mrb[0].mxu0
    %v1601 = vpop.f32.mrb[0].mxu0
    %v1602 = vadd.f32 %v667, %v1601
    %v1603 = vpop.f32.mrb[0].mxu0
    %1604 = vmatprep.mubr.bf16.mxu0 0
    %1605 = vmatmul.mubr.bf16.gmra.mrb[0].mxu0 %v1209
    %v1606 = vpop.f32.mrb[0].mxu0
    %v1607 = vadd.f32 %v667, %v1606
    %v1608 = vpop.f32.mrb[0].mxu0
    %v1609 = vpop.f32.mrb[0].mxu0
    %v1610 = vadd.f32 %v667, %v1609
    %v1611 = vpop.f32.mrb[0].mxu0
    %1612 = vmatprep.mubr.bf16.mxu0 0
    %1613 = vmatmul.mubr.bf16.gmra.mrb[0].mxu0 %v1212
    %v1614 = vpop.f32.mrb[0].mxu0
    %v1615 = vadd.f32 %v667, %v1614
    %v1616 = vpop.f32.mrb[0].mxu0
    %v1617 = vpop.f32.mrb[0].mxu0
    %v1618 = vadd.f32 %v667, %v1617
    %v1619 = vpop.f32.mrb[0].mxu0
    %1620 = vmatprep.mubr.bf16.mxu0 0
    %1621 = vmatmul.mubr.bf16.gmra.mrb[0].mxu0 %v1215
    %v1622 = vpop.f32.mrb[0].mxu0
    %v1623 = vadd.f32 %v667, %v1622
    %v1624 = vpop.f32.mrb[0].mxu0
    %v1625 = vpop.f32.mrb[0].mxu0
    %v1626 = vadd.f32 %v667, %v1625
    %v1627 = vpop.f32.mrb[0].mxu0
    %1628 = vmatprep.mubr.bf16.mxu0 0
    %1629 = vmatmul.mubr.bf16.gmra.mrb[0].mxu0 %v1218
    %v1630 = vpop.f32.mrb[0].mxu0
    %v1631 = vadd.f32 %v667, %v1630
    %v1632 = vpop.f32.mrb[0].mxu0
    %v1633 = vpop.f32.mrb[0].mxu0
    %v1634 = vadd.f32 %v667, %v1633
    %v1635 = vpop.f32.mrb[0].mxu0
    %1636 = vmatprep.mubr.bf16.mxu0 0
    %1637 = vmatmul.mubr.bf16.gmra.mrb[0].mxu0 %v1221
    %v1638 = vpop.f32.mrb[0].mxu0
    %v1639 = vadd.f32 %v667, %v1638
    %v1640 = vpop.f32.mrb[0].mxu0
    %v1641 = vpop.f32.mrb[0].mxu0
    %v1642 = vadd.f32 %v667, %v1641
    %v1643 = vpop.f32.mrb[0].mxu0
    %1644 = vmatprep.mubr.bf16.mxu0 0
    %1645 = vmatmul.mubr.bf16.gmra.mrb[0].mxu0 %v1224
    %v1646 = vpop.f32.mrb[0].mxu0
    %v1647 = vadd.f32 %v667, %v1646
    %v1648 = vpop.f32.mrb[0].mxu0
    %v1649 = vpop.f32.mrb[0].mxu0
    %v1650 = vadd.f32 %v667, %v1649
    %v1651 = vpop.f32.mrb[0].mxu0
    %1652 = vmatprep.mubr.bf16.mxu0 0
    %1653 = vmatmul.mubr.bf16.gmra.mrb[0].mxu0 %v1227
    %v1654 = vpop.f32.mrb[0].mxu0
    %v1655 = vadd.f32 %v667, %v1654
    %v1656 = vpop.f32.mrb[0].mxu0
    %v1657 = vpop.f32.mrb[0].mxu0
    %v1658 = vadd.f32 %v667, %v1657
    %v1659 = vpop.f32.mrb[0].mxu0
    %1660 = vmatprep.mubr.bf16.mxu0 0
    %1661 = vmatmul.mubr.bf16.gmra.mrb[0].mxu0 %v1230
    %v1662 = vpop.f32.mrb[0].mxu0
    %v1663 = vadd.f32 %v667, %v1662
    %v1664 = vpop.f32.mrb[0].mxu0
    %v1665 = vpop.f32.mrb[0].mxu0
    %v1666 = vadd.f32 %v667, %v1665
    %v1667 = vpop.f32.mrb[0].mxu0
    %1668 = vmatprep.mubr.bf16.mxu0 0
    %1669 = vmatmul.mubr.bf16.gmra.mrb[0].mxu0 %v1233
    %v1670 = vpop.f32.mrb[0].mxu0
    %v1671 = vadd.f32 %v667, %v1670
    %v1672 = vpop.f32.mrb[0].mxu0
    %v1673 = vpop.f32.mrb[0].mxu0
    %v1674 = vadd.f32 %v667, %v1673
    %v1675 = vpop.f32.mrb[0].mxu0
    %1676 = vmatprep.mubr.bf16.mxu0 0
    %1677 = vmatmul.mubr.bf16.gmra.mrb[0].mxu0 %v1236
    %v1678 = vpop.f32.mrb[0].mxu0
    %v1679 = vadd.f32 %v667, %v1678
    %v1680 = vpop.f32.mrb[0].mxu0
    %v1681 = vpop.f32.mrb[0].mxu0
    %v1682 = vadd.f32 %v667, %v1681
    %v1683 = vpop.f32.mrb[0].mxu0
    %1684 = vmatprep.mubr.bf16.mxu0 0
    %1685 = vmatmul.mubr.bf16.gmra.mrb[0].mxu0 %v1239
    %v1686 = vpop.f32.mrb[0].mxu0
    %v1687 = vadd.f32 %v667, %v1686
    %v1688 = vpop.f32.mrb[0].mxu0
    %v1689 = vpop.f32.mrb[0].mxu0
    %v1690 = vadd.f32 %v667, %v1689
    %v1691 = vpop.f32.mrb[0].mxu0
    %1692 = vmatprep.mubr.bf16.mxu0 0
    %1693 = vmatmul.mubr.bf16.gmra.mrb[0].mxu0 %v1242
    %v1694 = vpop.f32.mrb[0].mxu0
    %v1695 = vadd.f32 %v667, %v1694
    %v1696 = vpop.f32.mrb[0].mxu0
    %v1697 = vpop.f32.mrb[0].mxu0
    %v1698 = vadd.f32 %v667, %v1697
    %v1699 = vpop.f32.mrb[0].mxu0
    %1700 = vmatprep.mubr.bf16.mxu0 0
    %1701 = vmatmul.mubr.bf16.gmra.mrb[0].mxu0 %v1245
    %v1702 = vpop.f32.mrb[0].mxu0
    %v1703 = vadd.f32 %v667, %v1702
    %v1704 = vpop.f32.mrb[0].mxu0
    %v1705 = vpop.f32.mrb[0].mxu0
    %v1706 = vadd.f32 %v667, %v1705
    %v1707 = vpop.f32.mrb[0].mxu0
    %1708 = vmatprep.mubr.bf16.mxu0 0
    %1709 = vmatmul.mubr.bf16.gmra.mrb[0].mxu0 %v1248
    %v1710 = vpop.f32.mrb[0].mxu0
    %v1711 = vadd.f32 %v667, %v1710
    %v1712 = vpop.f32.mrb[0].mxu0
    %v1713 = vpop.f32.mrb[0].mxu0
    %v1714 = vadd.f32 %v667, %v1713
    %v1715 = vpop.f32.mrb[0].mxu0
    %1716 = vmatprep.mubr.bf16.mxu0 0
    %1717 = vmatmul.mubr.bf16.gmra.mrb[0].mxu0 %v1251
    %v1718 = vpop.f32.mrb[0].mxu0
    %v1719 = vadd.f32 %v667, %v1718
    %v1720 = vpop.f32.mrb[0].mxu0
    %v1721 = vpop.f32.mrb[0].mxu0
    %v1722 = vadd.f32 %v667, %v1721
    %v1723 = vpop.f32.mrb[0].mxu0
    %1724 = vmatprep.mubr.bf16.mxu0 0
    %1725 = vmatmul.mubr.bf16.gmra.mrb[0].mxu0 %v1254
    %v1726 = vpop.f32.mrb[0].mxu0
    %v1727 = vadd.f32 %v667, %v1726
    %v1728 = vpop.f32.mrb[0].mxu0
    %v1729 = vpop.f32.mrb[0].mxu0
    %v1730 = vadd.f32 %v667, %v1729
    %v1731 = vpop.f32.mrb[0].mxu0
    %1732 = vmatprep.mubr.bf16.mxu0 0
    %1733 = vmatmul.mubr.bf16.gmra.mrb[0].mxu0 %v1257
    %v1734 = vpop.f32.mrb[0].mxu0
    %v1735 = vadd.f32 %v667, %v1734
    %v1736 = vpop.f32.mrb[0].mxu0
    %v1737 = vpop.f32.mrb[0].mxu0
    %v1738 = vadd.f32 %v667, %v1737
    %v1739 = vpop.f32.mrb[0].mxu0
    %1740 = vmatprep.mubr.bf16.mxu0 0
    %1741 = vmatmul.mubr.bf16.gmra.mrb[0].mxu0 %v1260
    %v1742 = vpop.f32.mrb[0].mxu0
    %v1743 = vadd.f32 %v667, %v1742
    %v1744 = vpop.f32.mrb[0].mxu0
    %v1745 = vpop.f32.mrb[0].mxu0
    %v1746 = vadd.f32 %v667, %v1745
    %v1747 = vpop.f32.mrb[0].mxu0
    %1748 = vmatprep.mubr.bf16.mxu0 0
    %1749 = vmatmul.mubr.bf16.gmra.mrb[0].mxu0 %v1263
    %v1750 = vpop.f32.mrb[0].mxu0
    %v1751 = vadd.f32 %v667, %v1750
    %v1752 = vpop.f32.mrb[0].mxu0
    %v1753 = vpop.f32.mrb[0].mxu0
    %v1754 = vadd.f32 %v667, %v1753
    %v1755 = vpop.f32.mrb[0].mxu0
    %1756 = vmatprep.mubr.bf16.mxu0 0
    %1757 = vmatmul.mubr.bf16.gmra.mrb[0].mxu0 %v1266
    %v1758 = vpop.f32.mrb[0].mxu0
    %v1759 = vadd.f32 %v667, %v1758
    %v1760 = vpop.f32.mrb[0].mxu0
    %v1761 = vpop.f32.mrb[0].mxu0
    %v1762 = vadd.f32 %v667, %v1761
    %v1763 = vpop.f32.mrb[0].mxu0
    %1764 = vmatprep.mubr.bf16.mxu0 0
    %1765 = vmatmul.mubr.bf16.gmra.mrb[0].mxu0 %v1269
    %v1766 = vpop.f32.mrb[0].mxu0
    %v1767 = vadd.f32 %v667, %v1766
    %v1768 = vpop.f32.mrb[0].mxu0
    %v1769 = vpop.f32.mrb[0].mxu0
    %v1770 = vadd.f32 %v667, %v1769
    %v1771 = vpop.f32.mrb[0].mxu0
    %1772 = vmatprep.mubr.bf16.mxu0 0
    %1773 = vmatmul.mubr.bf16.gmra.mrb[0].mxu0 %v1272
    %v1774 = vpop.f32.mrb[0].mxu0
    %v1775 = vadd.f32 %v667, %v1774
    %v1776 = vpop.f32.mrb[0].mxu0
    %v1777 = vpop.f32.mrb[0].mxu0
    %v1778 = vadd.f32 %v667, %v1777
    %v1779 = vpop.f32.mrb[0].mxu0
    %1780 = vmatprep.mubr.bf16.mxu0 0
    %1781 = vmatmul.mubr.bf16.gmra.mrb[0].mxu0 %v1275
    %v1782 = vpop.f32.mrb[0].mxu0
    %v1783 = vadd.f32 %v667, %v1782
    %v1784 = vpop.f32.mrb[0].mxu0
    %v1785 = vpop.f32.mrb[0].mxu0
    %v1786 = vadd.f32 %v667, %v1785
    %v1787 = vpop.f32.mrb[0].mxu0
    %1788 = vmatprep.mubr.bf16.mxu0 0
    %1789 = vmatmul.mubr.bf16.gmra.mrb[0].mxu0 %v1278
    %v1790 = vpop.f32.mrb[0].mxu0
    %v1791 = vadd.f32 %v667, %v1790
    %v1792 = vpop.f32.mrb[0].mxu0
    %v1793 = vpop.f32.mrb[0].mxu0
    %v1794 = vadd.f32 %v667, %v1793
    %v1795 = vpop.f32.mrb[0].mxu0
    %1796 = vmatprep.mubr.bf16.mxu0 0
    %1797 = vmatmul.mubr.bf16.gmra.mrb[0].mxu0 %v1281
    %v1798 = vpop.f32.mrb[0].mxu0
    %v1799 = vadd.f32 %v667, %v1798
    %v1800 = vpop.f32.mrb[0].mxu0
    %v1801 = vpop.f32.mrb[0].mxu0
    %v1802 = vadd.f32 %v667, %v1801
    %v1803 = vpop.f32.mrb[0].mxu0
    %1804 = vmatprep.mubr.bf16.mxu0 0
    %1805 = vmatmul.mubr.bf16.gmra.mrb[0].mxu0 %v1284
    %v1806 = vpop.f32.mrb[0].mxu0
    %v1807 = vadd.f32 %v667, %v1806
    %v1808 = vpop.f32.mrb[0].mxu0
    %v1809 = vpop.f32.mrb[0].mxu0
    %v1810 = vadd.f32 %v667, %v1809
    %v1811 = vpop.f32.mrb[0].mxu0
    %1812 = vmatprep.mubr.bf16.mxu0 0
    %1813 = vmatmul.mubr.bf16.gmra.mrb[0].mxu0 %v1287
    %v1814 = vpop.f32.mrb[0].mxu0
    %v1815 = vadd.f32 %v667, %v1814
    %v1816 = vpop.f32.mrb[0].mxu0
    %v1817 = vpop.f32.mrb[0].mxu0
    %v1818 = vadd.f32 %v667, %v1817
    %v1819 = vpop.f32.mrb[0].mxu0
    %1820 = vmatprep.mubr.bf16.mxu0 0
    %1821 = vmatmul.mubr.bf16.gmra.mrb[0].mxu0 %v1290
    %v1822 = vpop.f32.mrb[0].mxu0
    %v1823 = vadd.f32 %v667, %v1822
    %v1824 = vpop.f32.mrb[0].mxu0
    %v1825 = vpop.f32.mrb[0].mxu0
    %v1826 = vadd.f32 %v667, %v1825
    %v1827 = vpop.f32.mrb[0].mxu0
    %1828 = vmatprep.mubr.bf16.mxu0 0
    %1829 = vmatmul.mubr.bf16.gmra.mrb[0].mxu0 %v1293
    %v1830 = vpop.f32.mrb[0].mxu0
    %v1831 = vadd.f32 %v667, %v1830
    %v1832 = vpop.f32.mrb[0].mxu0
    %v1833 = vpop.f32.mrb[0].mxu0
    %v1834 = vadd.f32 %v667, %v1833
    %v1835 = vpop.f32.mrb[0].mxu0
    %1836 = vmatprep.mubr.bf16.mxu0 0
    %1837 = vmatmul.mubr.bf16.gmra.mrb[0].mxu0 %v1296
    %v1838 = vpop.f32.mrb[0].mxu0
    %v1839 = vadd.f32 %v667, %v1838
    %v1840 = vpop.f32.mrb[0].mxu0
    %v1841 = vpop.f32.mrb[0].mxu0
    %v1842 = vadd.f32 %v667, %v1841
    %v1843 = vpop.f32.mrb[0].mxu0
    %1844 = vmatprep.mubr.bf16.mxu0 0
    %1845 = vmatmul.mubr.bf16.gmra.mrb[0].mxu0 %v1299
    %v1846 = vpop.f32.mrb[0].mxu0
    %v1847 = vadd.f32 %v667, %v1846
    %v1848 = vpop.f32.mrb[0].mxu0
    %v1849 = vpop.f32.mrb[0].mxu0
    %v1850 = vadd.f32 %v667, %v1849
    %v1851 = vpop.f32.mrb[0].mxu0
    %1852 = vmatprep.mubr.bf16.mxu0 0
    %1853 = vmatmul.mubr.bf16.gmra.mrb[0].mxu0 %v1302
    %v1854 = vpop.f32.mrb[0].mxu0
    %v1855 = vadd.f32 %v667, %v1854
    %v1856 = vpop.f32.mrb[0].mxu0
    %v1857 = vpop.f32.mrb[0].mxu0
    %v1858 = vadd.f32 %v667, %v1857
    %v1859 = vpop.f32.mrb[0].mxu0
    %1860 = vmatprep.mubr.bf16.mxu0 0
    %1861 = vmatmul.mubr.bf16.gmra.mrb[0].mxu0 %v1305
    %v1862 = vpop.f32.mrb[0].mxu0
    %v1863 = vadd.f32 %v667, %v1862
    %v1864 = vpop.f32.mrb[0].mxu0
    %v1865 = vpop.f32.mrb[0].mxu0
    %v1866 = vadd.f32 %v667, %v1865
    %v1867 = vpop.f32.mrb[0].mxu0
    %1868 = vmatprep.mubr.bf16.mxu0 0
    %1869 = vmatmul.mubr.bf16.gmra.mrb[0].mxu0 %v1308
    %v1870 = vpop.f32.mrb[0].mxu0
    %v1871 = vadd.f32 %v667, %v1870
    %v1872 = vpop.f32.mrb[0].mxu0
    %v1873 = vpop.f32.mrb[0].mxu0
    %v1874 = vadd.f32 %v667, %v1873
    %v1875 = vpop.f32.mrb[0].mxu0
    %1876 = vmatprep.mubr.bf16.mxu0 0
    %1877 = vmatmul.mubr.bf16.gmra.mrb[0].mxu0 %v1311
    %v1878 = vpop.f32.mrb[0].mxu0
    %v1879 = vadd.f32 %v667, %v1878
    %v1880 = vpop.f32.mrb[0].mxu0
    %v1881 = vpop.f32.mrb[0].mxu0
    %v1882 = vadd.f32 %v667, %v1881
    %v1883 = vpop.f32.mrb[0].mxu0
    %1884 = vmatprep.mubr.bf16.mxu0 0
    %1885 = vmatmul.mubr.bf16.gmra.mrb[0].mxu0 %v1314
    %v1886 = vpop.f32.mrb[0].mxu0
    %v1887 = vadd.f32 %v667, %v1886
    %v1888 = vpop.f32.mrb[0].mxu0
    %v1889 = vpop.f32.mrb[0].mxu0
    %v1890 = vadd.f32 %v667, %v1889
    %v1891 = vpop.f32.mrb[0].mxu0
    %1892 = vmatprep.mubr.bf16.mxu0 0
    %1893 = vmatmul.mubr.bf16.gmra.mrb[0].mxu0 %v1317
    %v1894 = vpop.f32.mrb[0].mxu0
    %v1895 = vadd.f32 %v667, %v1894
    %v1896 = vpop.f32.mrb[0].mxu0
    %v1897 = vpop.f32.mrb[0].mxu0
    %v1898 = vadd.f32 %v667, %v1897
    %v1899 = vpop.f32.mrb[0].mxu0
    %1900 = vmatprep.mubr.bf16.mxu0 0
    %1901 = vmatmul.mubr.bf16.gmra.mrb[0].mxu0 %v1320
    %v1902 = vpop.f32.mrb[0].mxu0
    %v1903 = vadd.f32 %v667, %v1902
    %v1904 = vpop.f32.mrb[0].mxu0
    %v1905 = vpop.f32.mrb[0].mxu0
    %v1906 = vadd.f32 %v667, %v1905
    %v1907 = vpop.f32.mrb[0].mxu0
    %1908 = vmatprep.mubr.bf16.mxu0 0
    %1909 = vmatmul.mubr.bf16.gmra.mrb[0].mxu0 %v1323
    %v1910 = vpop.f32.mrb[0].mxu0
    %v1911 = vadd.f32 %v667, %v1910
    %v1912 = vpop.f32.mrb[0].mxu0
    %v1913 = vpop.f32.mrb[0].mxu0
    %v1914 = vadd.f32 %v667, %v1913
    %v1915 = vpop.f32.mrb[0].mxu0
    %1916 = vmatprep.mubr.bf16.mxu0 0
    %1917 = vmatmul.mubr.bf16.gmra.mrb[0].mxu0 %v1326
    %v1918 = vpop.f32.mrb[0].mxu0
    %v1919 = vadd.f32 %v667, %v1918
    %v1920 = vpop.f32.mrb[0].mxu0
    %v1921 = vpop.f32.mrb[0].mxu0
    %v1922 = vadd.f32 %v667, %v1921
    %v1923 = vpop.f32.mrb[0].mxu0
    %1924 = vmatprep.mubr.bf16.mxu0 0
    %1925 = vmatmul.mubr.bf16.gmra.mrb[0].mxu0 %v1329
    %v1926 = vpop.f32.mrb[0].mxu0
    %v1927 = vadd.f32 %v667, %v1926
    %v1928 = vpop.f32.mrb[0].mxu0
    %v1929 = vpop.f32.mrb[0].mxu0
    %v1930 = vadd.f32 %v667, %v1929
    %v1931 = vpop.f32.mrb[0].mxu0
    %1932 = vmatprep.mubr.bf16.mxu0 0
    %1933 = vmatmul.mubr.bf16.gmra.mrb[0].mxu0 %v1332
    %v1934 = vpop.f32.mrb[0].mxu0
    %v1935 = vadd.f32 %v667, %v1934
    %v1936 = vpop.f32.mrb[0].mxu0
    %v1937 = vpop.f32.mrb[0].mxu0
    %v1938 = vadd.f32 %v667, %v1937
    %v1939 = vpop.f32.mrb[0].mxu0
    %1940 = vmatprep.mubr.bf16.mxu0 0
    %1941 = vmatmul.mubr.bf16.gmra.mrb[0].mxu0 %v1335
    %v1942 = vpop.f32.mrb[0].mxu0
    %v1943 = vadd.f32 %v667, %v1942
    %v1944 = vpop.f32.mrb[0].mxu0
    %v1945 = vpop.f32.mrb[0].mxu0
    %v1946 = vadd.f32 %v667, %v1945
    %v1947 = vpop.f32.mrb[0].mxu0
    %1948 = vmatprep.mubr.bf16.mxu0 0
    %1949 = vmatmul.mubr.bf16.gmra.mrb[0].mxu0 %v1338
    %v1950 = vpop.f32.mrb[0].mxu0
    %v1951 = vadd.f32 %v667, %v1950
    %v1952 = vpop.f32.mrb[0].mxu0
    %v1953 = vpop.f32.mrb[0].mxu0
    %v1954 = vadd.f32 %v667, %v1953
    %v1955 = vpop.f32.mrb[0].mxu0
    %1956 = vmatprep.mubr.bf16.mxu0 0
    %1957 = vmatmul.mubr.bf16.gmra.mrb[0].mxu0 %v1341
    %v1958 = vpop.f32.mrb[0].mxu0
    %v1959 = vadd.f32 %v667, %v1958
    %v1960 = vpop.f32.mrb[0].mxu0
    %v1961 = vpop.f32.mrb[0].mxu0
    %v1962 = vadd.f32 %v667, %v1961
    %v1963 = vpop.f32.mrb[0].mxu0
    %1964 = vmatprep.mubr.bf16.mxu0 0
    %1965 = vmatmul.mubr.bf16.gmra.mrb[0].mxu0 %v1344
    %v1966 = vpop.f32.mrb[0].mxu0
    %v1967 = vadd.f32 %v667, %v1966
    %v1968 = vpop.f32.mrb[0].mxu0
    %v1969 = vpop.f32.mrb[0].mxu0
    %v1970 = vadd.f32 %v667, %v1969
    %v1971 = vpop.f32.mrb[0].mxu0
    %1972 = vmatprep.mubr.bf16.mxu0 0
    %1973 = vmatmul.mubr.bf16.gmra.mrb[0].mxu0 %v1347
    %v1974 = vpop.f32.mrb[0].mxu0
    %v1975 = vadd.f32 %v667, %v1974
    %v1976 = vpop.f32.mrb[0].mxu0
    %v1977 = vpop.f32.mrb[0].mxu0
    %v1978 = vadd.f32 %v667, %v1977
    %v1979 = vpop.f32.mrb[0].mxu0
    %1980 = vmatprep.mubr.bf16.mxu0 0
    %1981 = vmatmul.mubr.bf16.gmra.mrb[0].mxu0 %v1350
    %v1982 = vpop.f32.mrb[0].mxu0
    %v1983 = vadd.f32 %v667, %v1982
    %v1984 = vpop.f32.mrb[0].mxu0
    %v1985 = vpop.f32.mrb[0].mxu0
    %v1986 = vadd.f32 %v667, %v1985
    %v1987 = vpop.f32.mrb[0].mxu0
    %1988 = vmatprep.mubr.bf16.mxu0 0
    %1989 = vmatmul.mubr.bf16.gmra.mrb[0].mxu0 %v1353
    %v1990 = vpop.f32.mrb[0].mxu0
    %v1991 = vadd.f32 %v667, %v1990
    %v1992 = vpop.f32.mrb[0].mxu0
    %v1993 = vpop.f32.mrb[0].mxu0
    %v1994 = vadd.f32 %v667, %v1993
    %v1995 = vpop.f32.mrb[0].mxu0
    %1996 = vmatprep.mubr.bf16.mxu0 0
    %1997 = vmatmul.mubr.bf16.gmra.mrb[0].mxu0 %v1356
    %v1998 = vpop.f32.mrb[0].mxu0
    %v1999 = vadd.f32 %v667, %v1998
    %v2000 = vpop.f32.mrb[0].mxu0
    %v2001 = vpop.f32.mrb[0].mxu0
    %v2002 = vadd.f32 %v667, %v2001
    %v2003 = vpop.f32.mrb[0].mxu0
    %2004 = vmatprep.mubr.bf16.mxu0 0
    %2005 = vmatmul.mubr.bf16.gmra.mrb[0].mxu0 %v1359
    %v2006 = vpop.f32.mrb[0].mxu0
    %v2007 = vadd.f32 %v667, %v2006
    %v2008 = vpop.f32.mrb[0].mxu0
    %v2009 = vpop.f32.mrb[0].mxu0
    %v2010 = vadd.f32 %v667, %v2009
    %v2011 = vpop.f32.mrb[0].mxu0
    %2012 = vmatprep.mubr.bf16.mxu0 0
    %2013 = vmatmul.mubr.bf16.gmra.mrb[0].mxu0 %v1362
    %v2014 = vpop.f32.mrb[0].mxu0
    %v2015 = vadd.f32 %v667, %v2014
    %v2016 = vpop.f32.mrb[0].mxu0
    %v2017 = vpop.f32.mrb[0].mxu0
    %v2018 = vadd.f32 %v667, %v2017
    %v2019 = vpop.f32.mrb[0].mxu0
    %2020 = vmatprep.mubr.bf16.mxu0 0
    %2021 = vmatmul.mubr.bf16.gmra.mrb[0].mxu0 %v1365
    %v2022 = vpop.f32.mrb[0].mxu0
    %v2023 = vadd.f32 %v667, %v2022
    %v2024 = vpop.f32.mrb[0].mxu0
    %v2025 = vpop.f32.mrb[0].mxu0
    %v2026 = vadd.f32 %v667, %v2025
    %v2027 = vpop.f32.mrb[0].mxu0
    %2028 = vmatprep.mubr.bf16.mxu0 0
    %2029 = vmatmul.mubr.bf16.gmra.mrb[0].mxu0 %v1368
    %v2030 = vpop.f32.mrb[0].mxu0
    %v2031 = vadd.f32 %v667, %v2030
    %v2032 = vpop.f32.mrb[0].mxu0
    %v2033 = vpop.f32.mrb[0].mxu0
    %v2034 = vadd.f32 %v667, %v2033
    %v2035 = vpop.f32.mrb[0].mxu0
    %2036 = vmatprep.mubr.bf16.mxu0 0
    %2037 = vmatmul.mubr.bf16.gmra.mrb[0].mxu0 %v1371
    %v2038 = vpop.f32.mrb[0].mxu0
    %v2039 = vadd.f32 %v667, %v2038
    %v2040 = vpop.f32.mrb[0].mxu0
    %v2041 = vpop.f32.mrb[0].mxu0
    %v2042 = vadd.f32 %v667, %v2041
    %v2043 = vpop.f32.mrb[0].mxu0
    %2044 = vmatprep.mubr.bf16.mxu0 0
    %2045 = vmatmul.mubr.bf16.gmra.mrb[0].mxu0 %v1374
    %v2046 = vpop.f32.mrb[0].mxu0
    %v2047 = vadd.f32 %v667, %v2046
    %v2048 = vpop.f32.mrb[0].mxu0
    %v2049 = vpop.f32.mrb[0].mxu0
    %v2050 = vadd.f32 %v667, %v2049
    %v2051 = vpop.f32.mrb[0].mxu0
    %2052 = vmatprep.mubr.bf16.mxu0 0
    %2053 = vmatmul.mubr.bf16.gmra.mrb[0].mxu0 %v1377
    %v2054 = vpop.f32.mrb[0].mxu0
    %v2055 = vadd.f32 %v667, %v2054
    %v2056 = vpop.f32.mrb[0].mxu0
    %v2057 = vpop.f32.mrb[0].mxu0
    %v2058 = vadd.f32 %v667, %v2057
    %v2059 = vpop.f32.mrb[0].mxu0
    %2060 = vmatprep.mubr.bf16.mxu0 0
    %2061 = vmatmul.mubr.bf16.gmra.mrb[0].mxu0 %v1380
    %v2062 = vpop.f32.mrb[0].mxu0
    %v2063 = vadd.f32 %v667, %v2062
    %v2064 = vpop.f32.mrb[0].mxu0
    %v2065 = vpop.f32.mrb[0].mxu0
    %v2066 = vadd.f32 %v667, %v2065
    %v2067 = vpop.f32.mrb[0].mxu0
    %2068 = vmatprep.mubr.bf16.mxu0 0
    %2069 = vmatmul.mubr.bf16.gmra.mrb[0].mxu0 %v1383
    %v2070 = vpop.f32.mrb[0].mxu0
    %v2071 = vadd.f32 %v667, %v2070
    %v2072 = vpop.f32.mrb[0].mxu0
    %v2073 = vpop.f32.mrb[0].mxu0
    %v2074 = vadd.f32 %v667, %v2073
    %v2075 = vpop.f32.mrb[0].mxu0
    %2076 = vmatprep.mubr.bf16.mxu0 0
    %2077 = vmatmul.mubr.bf16.gmra.mrb[0].mxu0 %v1386
    %v2078 = vpop.f32.mrb[0].mxu0
    %v2079 = vadd.f32 %v667, %v2078
    %v2080 = vpop.f32.mrb[0].mxu0
    %v2081 = vpop.f32.mrb[0].mxu0
    %v2082 = vadd.f32 %v667, %v2081
    %v2083 = vpop.f32.mrb[0].mxu0
    %2084 = vmatprep.mubr.bf16.mxu0 0
    %2085 = vmatmul.mubr.bf16.gmra.mrb[0].mxu0 %v1389
    %v2086 = vpop.f32.mrb[0].mxu0
    %v2087 = vadd.f32 %v667, %v2086
    %v2088 = vpop.f32.mrb[0].mxu0
    %v2089 = vpop.f32.mrb[0].mxu0
    %v2090 = vadd.f32 %v667, %v2089
    %v2091 = vpop.f32.mrb[0].mxu0
    %2092 = vmatprep.mubr.bf16.mxu0 0
    %2093 = vmatmul.mubr.bf16.gmra.mrb[0].mxu0 %v1392
    %v2094 = vpop.f32.mrb[0].mxu0
    %v2095 = vadd.f32 %v667, %v2094
    %v2096 = vpop.f32.mrb[0].mxu0
    %v2097 = vpop.f32.mrb[0].mxu0
    %v2098 = vadd.f32 %v667, %v2097
    %v2099 = vpop.f32.mrb[0].mxu0
    %2100 = vmatprep.mubr.bf16.mxu0 0
    %2101 = vmatmul.mubr.bf16.gmra.mrb[0].mxu0 %v1395
    %v2102 = vpop.f32.mrb[0].mxu0
    %v2103 = vadd.f32 %v667, %v2102
    %v2104 = vpop.f32.mrb[0].mxu0
    %v2105 = vpop.f32.mrb[0].mxu0
    %v2106 = vadd.f32 %v667, %v2105
    %v2107 = vpop.f32.mrb[0].mxu0
    %2108 = vmatprep.mubr.bf16.mxu0 0
    %2109 = vmatmul.mubr.bf16.gmra.mrb[0].mxu0 %v1398
    %v2110 = vpop.f32.mrb[0].mxu0
    %v2111 = vadd.f32 %v667, %v2110
    %v2112 = vpop.f32.mrb[0].mxu0
    %v2113 = vpop.f32.mrb[0].mxu0
    %v2114 = vadd.f32 %v667, %v2113
    %v2115 = vpop.f32.mrb[0].mxu0
    %2116 = vmatprep.mubr.bf16.mxu0 0
    %2117 = vmatmul.mubr.bf16.gmra.mrb[0].mxu0 %v1401
    %v2118 = vpop.f32.mrb[0].mxu0
    %v2119 = vadd.f32 %v667, %v2118
    %v2120 = vpop.f32.mrb[0].mxu0
    %v2121 = vpop.f32.mrb[0].mxu0
    %v2122 = vadd.f32 %v667, %v2121
    %v2123 = vpop.f32.mrb[0].mxu0
    %2124 = vmatprep.mubr.bf16.mxu0 0
    %2125 = vmatmul.mubr.bf16.gmra.mrb[0].mxu0 %v1404
    %v2126 = vpop.f32.mrb[0].mxu0
    %v2127 = vadd.f32 %v667, %v2126
    %v2128 = vpop.f32.mrb[0].mxu0
    %v2129 = vpop.f32.mrb[0].mxu0
    %v2130 = vadd.f32 %v667, %v2129
    %v2131 = vpop.f32.mrb[0].mxu0
    %2132 = vmatprep.mubr.bf16.mxu0 0
    %2133 = vmatmul.mubr.bf16.gmra.mrb[0].mxu0 %v1407
    %v2134 = vpop.f32.mrb[0].mxu0
    %v2135 = vadd.f32 %v667, %v2134
    %v2136 = vpop.f32.mrb[0].mxu0
    %v2137 = vpop.f32.mrb[0].mxu0
    %v2138 = vadd.f32 %v667, %v2137
    %v2139 = vpop.f32.mrb[0].mxu0
    %2140 = vmatprep.mubr.bf16.mxu0 0
    %2141 = vmatmul.mubr.bf16.gmra.mrb[0].mxu0 %v1410
    %v2142 = vpop.f32.mrb[0].mxu0
    %v2143 = vadd.f32 %v667, %v2142
    %v2144 = vpop.f32.mrb[0].mxu0
    %v2145 = vpop.f32.mrb[0].mxu0
    %v2146 = vadd.f32 %v667, %v2145
    %v2147 = vpop.f32.mrb[0].mxu0
    %2148 = vmatprep.mubr.bf16.mxu0 0
    %2149 = vmatmul.mubr.bf16.gmra.mrb[0].mxu0 %v1413
    %v2150 = vpop.f32.mrb[0].mxu0
    %v2151 = vadd.f32 %v667, %v2150
    %v2152 = vpop.f32.mrb[0].mxu0
    %v2153 = vpop.f32.mrb[0].mxu0
    %v2154 = vadd.f32 %v667, %v2153
    %v2155 = vpop.f32.mrb[0].mxu0
    %2156 = vmatprep.mubr.bf16.mxu0 0
    %2157 = vmatmul.mubr.bf16.gmra.mrb[0].mxu0 %v1416
    %v2158 = vpop.f32.mrb[0].mxu0
    %v2159 = vadd.f32 %v667, %v2158
    %v2160 = vpop.f32.mrb[0].mxu0
    %v2161 = vpop.f32.mrb[0].mxu0
    %v2162 = vadd.f32 %v667, %v2161
    %v2163 = vpop.f32.mrb[0].mxu0
    %2164 = vmatprep.mubr.bf16.mxu0 0
    %2165 = vmatmul.mubr.bf16.gmra.mrb[0].mxu0 %v1419
    %v2166 = vpop.f32.mrb[0].mxu0
    %v2167 = vadd.f32 %v667, %v2166
    %v2168 = vpop.f32.mrb[0].mxu0
    %v2169 = vpop.f32.mrb[0].mxu0
    %v2170 = vadd.f32 %v667, %v2169
    %v2171 = vpop.f32.mrb[0].mxu0
    %2172 = vmatprep.mubr.bf16.mxu0 0
    %2173 = vmatmul.mubr.bf16.gmra.mrb[0].mxu0 %v1422
    %v2174 = vpop.f32.mrb[0].mxu0
    %v2175 = vadd.f32 %v667, %v2174
    %v2176 = vpop.f32.mrb[0].mxu0
    %v2177 = vpop.f32.mrb[0].mxu0
    %v2178 = vadd.f32 %v667, %v2177
    %v2179 = vpop.f32.mrb[0].mxu0
    %2180 = vmatprep.mubr.bf16.mxu0 0
    %2181 = vmatmul.mubr.bf16.gmra.mrb[0].mxu0 %v1425
    %v2182 = vpop.f32.mrb[0].mxu0
    %v2183 = vadd.f32 %v667, %v2182
    %v2184 = vpop.f32.mrb[0].mxu0
    %v2185 = vpop.f32.mrb[0].mxu0
    %v2186 = vadd.f32 %v667, %v2185
    %v2187 = vpop.f32.mrb[0].mxu0
    %2188 = vmatprep.mubr.bf16.mxu0 0
    %2189 = vmatmul.mubr.bf16.gmra.mrb[0].mxu0 %v1428
    %v2190 = vpop.f32.mrb[0].mxu0
    %v2191 = vadd.f32 %v667, %v2190
    %v2192 = vpop.f32.mrb[0].mxu0
    %v2193 = vpop.f32.mrb[0].mxu0
    %v2194 = vadd.f32 %v667, %v2193
    %v2195 = vpop.f32.mrb[0].mxu0
    %2196 = vmatprep.mubr.bf16.mxu0 0
    %2197 = vmatmul.mubr.bf16.gmra.mrb[0].mxu0 %v1431
    %v2198 = vpop.f32.mrb[0].mxu0
    %v2199 = vadd.f32 %v667, %v2198
    %v2200 = vpop.f32.mrb[0].mxu0
    %v2201 = vpop.f32.mrb[0].mxu0
    %v2202 = vadd.f32 %v667, %v2201
    %v2203 = vpop.f32.mrb[0].mxu0
    %2204 = vmatprep.mubr.bf16.mxu0 0
    %2205 = vmatmul.mubr.bf16.gmra.mrb[0].mxu0 %v1434
    %v2206 = vpop.f32.mrb[0].mxu0
    %v2207 = vadd.f32 %v667, %v2206
    %v2208 = vpop.f32.mrb[0].mxu0
    %v2209 = vpop.f32.mrb[0].mxu0
    %v2210 = vadd.f32 %v667, %v2209
    %v2211 = vpop.f32.mrb[0].mxu0
    %2212 = vmatprep.mubr.bf16.mxu0 0
    %2213 = vmatmul.mubr.bf16.gmra.mrb[0].mxu0 %v1437
    %v2214 = vpop.f32.mrb[0].mxu0
    %v2215 = vadd.f32 %v667, %v2214
    %v2216 = vpop.f32.mrb[0].mxu0
    %v2217 = vpop.f32.mrb[0].mxu0
    %v2218 = vadd.f32 %v667, %v2217
    %v2219 = vpop.f32.mrb[0].mxu0
    %2220 = vmatprep.mubr.bf16.mxu0 0
    %2221 = vmatmul.mubr.bf16.gmra.mrb[0].mxu0 %v1440
    %v2222 = vpop.f32.mrb[0].mxu0
    %v2223 = vadd.f32 %v667, %v2222
    %v2224 = vpop.f32.mrb[0].mxu0
    %v2225 = vpop.f32.mrb[0].mxu0
    %v2226 = vadd.f32 %v667, %v2225
    %v2227 = vpop.f32.mrb[0].mxu0
    %2228 = vmatprep.mubr.bf16.mxu0 0
    %2229 = vmatmul.mubr.bf16.gmra.mrb[0].mxu0 %v1443
    %v2230 = vpop.f32.mrb[0].mxu0
    %v2231 = vadd.f32 %v667, %v2230
    %v2232 = vpop.f32.mrb[0].mxu0
    %v2233 = vpop.f32.mrb[0].mxu0
    %v2234 = vadd.f32 %v667, %v2233
    %v2235 = vpop.f32.mrb[0].mxu0
    %2236 = vmatprep.mubr.bf16.mxu0 0
    %2237 = vmatmul.mubr.bf16.gmra.mrb[0].mxu0 %v1446
    %v2238 = vpop.f32.mrb[0].mxu0
    %v2239 = vadd.f32 %v667, %v2238
    %v2240 = vpop.f32.mrb[0].mxu0
    %v2241 = vpop.f32.mrb[0].mxu0
    %v2242 = vadd.f32 %v667, %v2241
    %v2243 = vpop.f32.mrb[0].mxu0
    %2244 = vmatprep.mubr.bf16.mxu0 0
    %2245 = vmatmul.mubr.bf16.gmra.mrb[0].mxu0 %v1449
    %v2246 = vpop.f32.mrb[0].mxu0
    %v2247 = vadd.f32 %v667, %v2246
    %v2248 = vpop.f32.mrb[0].mxu0
    %v2249 = vpop.f32.mrb[0].mxu0
    %v2250 = vadd.f32 %v667, %v2249
    %v2251 = vpop.f32.mrb[0].mxu0
    %2252 = vmatprep.mubr.bf16.mxu0 0
    %2253 = vmatmul.mubr.bf16.gmra.mrb[0].mxu0 %v1452
    %v2254 = vpop.f32.mrb[0].mxu0
    %v2255 = vadd.f32 %v667, %v2254
    %v2256 = vpop.f32.mrb[0].mxu0
    %v2257 = vpop.f32.mrb[0].mxu0
    %v2258 = vadd.f32 %v667, %v2257
    %v2259 = vpop.f32.mrb[0].mxu0
    %2260 = vmatprep.mubr.bf16.mxu0 0
    %2261 = vmatmul.mubr.bf16.gmra.mrb[0].mxu0 %v1455
    %v2262 = vpop.f32.mrb[0].mxu0
    %v2263 = vadd.f32 %v667, %v2262
    %v2264 = vpop.f32.mrb[0].mxu0
    %v2265 = vpop.f32.mrb[0].mxu0
    %v2266 = vadd.f32 %v667, %v2265
    %v2267 = vpop.f32.mrb[0].mxu0
    %2268 = vmatprep.mubr.bf16.mxu0 0
    %2269 = vmatmul.mubr.bf16.gmra.mrb[0].mxu0 %v1458
    %v2270 = vpop.f32.mrb[0].mxu0
    %v2271 = vadd.f32 %v667, %v2270
    %v2272 = vpop.f32.mrb[0].mxu0
    %v2273 = vpop.f32.mrb[0].mxu0
    %v2274 = vadd.f32 %v667, %v2273
    %v2275 = vpop.f32.mrb[0].mxu0
    %2276 = vdwg.mxu0
    %v2277 = vmax.f32 %v1495, 0.0
    %v2278 = vmax.f32 %v1498, 0.0
    %v2279 = vmax.f32 %v1503, 0.0
    %v2280 = vmax.f32 %v1506, 0.0
    %v2281 = vmax.f32 %v1511, 0.0
    %v2282 = vmax.f32 %v1514, 0.0
    %v2283 = vmax.f32 %v1519, 0.0
    %v2284 = vmax.f32 %v1522, 0.0
    %v2285 = vmax.f32 %v1527, 0.0
    %v2286 = vmax.f32 %v1530, 0.0
    %v2287 = vmax.f32 %v1535, 0.0
    %v2288 = vmax.f32 %v1538, 0.0
    %v2289 = vmax.f32 %v1543, 0.0
    %v2290 = vmax.f32 %v1546, 0.0
    %v2291 = vmax.f32 %v1551, 0.0
    %v2292 = vmax.f32 %v1554, 0.0
    %v2293 = vmax.f32 %v1559, 0.0
    %v2294 = vmax.f32 %v1562, 0.0
    %v2295 = vmax.f32 %v1567, 0.0
    %v2296 = vmax.f32 %v1570, 0.0
    %v2297 = vmax.f32 %v1575, 0.0
    %v2298 = vmax.f32 %v1578, 0.0
    %v2299 = vmax.f32 %v1583, 0.0
    %v2300 = vmax.f32 %v1586, 0.0
    %v2301 = vmax.f32 %v1591, 0.0
    %v2302 = vmax.f32 %v1594, 0.0
    %v2303 = vmax.f32 %v1599, 0.0
    %v2304 = vmax.f32 %v1602, 0.0
    %v2305 = vmax.f32 %v1607, 0.0
    %v2306 = vmax.f32 %v1610, 0.0
    %v2307 = vmax.f32 %v1615, 0.0
    %v2308 = vmax.f32 %v1618, 0.0
    %v2309 = vmax.f32 %v1623, 0.0
    %v2310 = vmax.f32 %v1626, 0.0
    %v2311 = vmax.f32 %v1631, 0.0
    %v2312 = vmax.f32 %v1634, 0.0
    %v2313 = vmax.f32 %v1639, 0.0
    %v2314 = vmax.f32 %v1642, 0.0
    %v2315 = vmax.f32 %v1647, 0.0
    %v2316 = vmax.f32 %v1650, 0.0
    %v2317 = vmax.f32 %v1655, 0.0
    %v2318 = vmax.f32 %v1658, 0.0
    %v2319 = vmax.f32 %v1663, 0.0
    %v2320 = vmax.f32 %v1666, 0.0
    %v2321 = vmax.f32 %v1671, 0.0
    %v2322 = vmax.f32 %v1674, 0.0
    %v2323 = vmax.f32 %v1679, 0.0
    %v2324 = vmax.f32 %v1682, 0.0
    %v2325 = vmax.f32 %v1687, 0.0
    %v2326 = vmax.f32 %v1690, 0.0
    %v2327 = vmax.f32 %v1695, 0.0
    %v2328 = vmax.f32 %v1698, 0.0
    %v2329 = vmax.f32 %v1703, 0.0
    %v2330 = vmax.f32 %v1706, 0.0
    %v2331 = vmax.f32 %v1711, 0.0
    %v2332 = vmax.f32 %v1714, 0.0
    %v2333 = vmax.f32 %v1719, 0.0
    %v2334 = vmax.f32 %v1722, 0.0
    %v2335 = vmax.f32 %v1727, 0.0
    %v2336 = vmax.f32 %v1730, 0.0
    %v2337 = vmax.f32 %v1735, 0.0
    %v2338 = vmax.f32 %v1738, 0.0
    %v2339 = vmax.f32 %v1743, 0.0
    %v2340 = vmax.f32 %v1746, 0.0
    %v2341 = vmax.f32 %v1751, 0.0
    %v2342 = vmax.f32 %v1754, 0.0
    %v2343 = vmax.f32 %v1759, 0.0
    %v2344 = vmax.f32 %v1762, 0.0
    %v2345 = vmax.f32 %v1767, 0.0
    %v2346 = vmax.f32 %v1770, 0.0
    %v2347 = vmax.f32 %v1775, 0.0
    %v2348 = vmax.f32 %v1778, 0.0
    %v2349 = vmax.f32 %v1783, 0.0
    %v2350 = vmax.f32 %v1786, 0.0
    %v2351 = vmax.f32 %v1791, 0.0
    %v2352 = vmax.f32 %v1794, 0.0
    %v2353 = vmax.f32 %v1799, 0.0
    %v2354 = vmax.f32 %v1802, 0.0
    %v2355 = vmax.f32 %v1807, 0.0
    %v2356 = vmax.f32 %v1810, 0.0
    %v2357 = vmax.f32 %v1815, 0.0
    %v2358 = vmax.f32 %v1818, 0.0
    %v2359 = vmax.f32 %v1823, 0.0
    %v2360 = vmax.f32 %v1826, 0.0
    %v2361 = vmax.f32 %v1831, 0.0
    %v2362 = vmax.f32 %v1834, 0.0
    %v2363 = vmax.f32 %v1839, 0.0
    %v2364 = vmax.f32 %v1842, 0.0
    %v2365 = vmax.f32 %v1847, 0.0
    %v2366 = vmax.f32 %v1850, 0.0
    %v2367 = vmax.f32 %v1855, 0.0
    %v2368 = vmax.f32 %v1858, 0.0
    %v2369 = vmax.f32 %v1863, 0.0
    %v2370 = vmax.f32 %v1866, 0.0
    %v2371 = vmax.f32 %v1871, 0.0
    %v2372 = vmax.f32 %v1874, 0.0
    %v2373 = vmax.f32 %v1879, 0.0
    %v2374 = vmax.f32 %v1882, 0.0
    %v2375 = vmax.f32 %v1887, 0.0
    %v2376 = vmax.f32 %v1890, 0.0
    %v2377 = vmax.f32 %v1895, 0.0
    %v2378 = vmax.f32 %v1898, 0.0
    %v2379 = vmax.f32 %v1903, 0.0
    %v2380 = vmax.f32 %v1906, 0.0
    %v2381 = vmax.f32 %v1911, 0.0
    %v2382 = vmax.f32 %v1914, 0.0
    %v2383 = vmax.f32 %v1919, 0.0
    %v2384 = vmax.f32 %v1922, 0.0
    %v2385 = vmax.f32 %v1927, 0.0
    %v2386 = vmax.f32 %v1930, 0.0
    %v2387 = vmax.f32 %v1935, 0.0
    %v2388 = vmax.f32 %v1938, 0.0
    %v2389 = vmax.f32 %v1943, 0.0
    %v2390 = vmax.f32 %v1946, 0.0
    %v2391 = vmax.f32 %v1951, 0.0
    %v2392 = vmax.f32 %v1954, 0.0
    %v2393 = vmax.f32 %v1959, 0.0
    %v2394 = vmax.f32 %v1962, 0.0
    %v2395 = vmax.f32 %v1967, 0.0
    %v2396 = vmax.f32 %v1970, 0.0
    %v2397 = vmax.f32 %v1975, 0.0
    %v2398 = vmax.f32 %v1978, 0.0
    %v2399 = vmax.f32 %v1983, 0.0
    %v2400 = vmax.f32 %v1986, 0.0
    %v2401 = vmax.f32 %v1991, 0.0
    %v2402 = vmax.f32 %v1994, 0.0
    %v2403 = vmax.f32 %v1999, 0.0
    %v2404 = vmax.f32 %v2002, 0.0
    %v2405 = vmax.f32 %v2007, 0.0
    %v2406 = vmax.f32 %v2010, 0.0
    %v2407 = vmax.f32 %v2015, 0.0
    %v2408 = vmax.f32 %v2018, 0.0
    %v2409 = vmax.f32 %v2023, 0.0
    %v2410 = vmax.f32 %v2026, 0.0
    %v2411 = vmax.f32 %v2031, 0.0
    %v2412 = vmax.f32 %v2034, 0.0
    %v2413 = vmax.f32 %v2039, 0.0
    %v2414 = vmax.f32 %v2042, 0.0
    %v2415 = vmax.f32 %v2047, 0.0
    %v2416 = vmax.f32 %v2050, 0.0
    %v2417 = vmax.f32 %v2055, 0.0
    %v2418 = vmax.f32 %v2058, 0.0
    %v2419 = vmax.f32 %v2063, 0.0
    %v2420 = vmax.f32 %v2066, 0.0
    %v2421 = vmax.f32 %v2071, 0.0
    %v2422 = vmax.f32 %v2074, 0.0
    %v2423 = vmax.f32 %v2079, 0.0
    %v2424 = vmax.f32 %v2082, 0.0
    %v2425 = vmax.f32 %v2087, 0.0
    %v2426 = vmax.f32 %v2090, 0.0
    %v2427 = vmax.f32 %v2095, 0.0
    %v2428 = vmax.f32 %v2098, 0.0
    %v2429 = vmax.f32 %v2103, 0.0
    %v2430 = vmax.f32 %v2106, 0.0
    %v2431 = vmax.f32 %v2111, 0.0
    %v2432 = vmax.f32 %v2114, 0.0
    %v2433 = vmax.f32 %v2119, 0.0
    %v2434 = vmax.f32 %v2122, 0.0
    %v2435 = vmax.f32 %v2127, 0.0
    %v2436 = vmax.f32 %v2130, 0.0
    %v2437 = vmax.f32 %v2135, 0.0
    %v2438 = vmax.f32 %v2138, 0.0
    %v2439 = vmax.f32 %v2143, 0.0
    %v2440 = vmax.f32 %v2146, 0.0
    %v2441 = vmax.f32 %v2151, 0.0
    %v2442 = vmax.f32 %v2154, 0.0
    %v2443 = vmax.f32 %v2159, 0.0
    %v2444 = vmax.f32 %v2162, 0.0
    %v2445 = vmax.f32 %v2167, 0.0
    %v2446 = vmax.f32 %v2170, 0.0
    %v2447 = vmax.f32 %v2175, 0.0
    %v2448 = vmax.f32 %v2178, 0.0
    %v2449 = vmax.f32 %v2183, 0.0
    %v2450 = vmax.f32 %v2186, 0.0
    %v2451 = vmax.f32 %v2191, 0.0
    %v2452 = vmax.f32 %v2194, 0.0
    %v2453 = vmax.f32 %v2199, 0.0
    %v2454 = vmax.f32 %v2202, 0.0
    %v2455 = vmax.f32 %v2207, 0.0
    %v2456 = vmax.f32 %v2210, 0.0
    %v2457 = vmax.f32 %v2215, 0.0
    %v2458 = vmax.f32 %v2218, 0.0
    %v2459 = vmax.f32 %v2223, 0.0
    %v2460 = vmax.f32 %v2226, 0.0
    %v2461 = vmax.f32 %v2231, 0.0
    %v2462 = vmax.f32 %v2234, 0.0
    %v2463 = vmax.f32 %v2239, 0.0
    %v2464 = vmax.f32 %v2242, 0.0
    %v2465 = vmax.f32 %v2247, 0.0
    %v2466 = vmax.f32 %v2250, 0.0
    %v2467 = vmax.f32 %v2255, 0.0
    %v2468 = vmax.f32 %v2258, 0.0
    %v2469 = vmax.f32 %v2263, 0.0
    %v2470 = vmax.f32 %v2266, 0.0
    %v2471 = vmax.f32 %v2271, 0.0
    %v2472 = vmax.f32 %v2274, 0.0
    %vm2473 = vcmask 261120
    %2474 = vst.msk [vmem:[#allocation2] sm:$0xff] %vm2473, %v2277
    %2475 = vst.msk [vmem:[#allocation2 + $0x8] sm:$0xff] %vm2473, %v2278
    %2476 = vst.msk [vmem:[#allocation2 + $0x10] sm:$0xff] %vm2473, %v2279
    %2477 = vst.msk [vmem:[#allocation2 + $0x18] sm:$0xff] %vm2473, %v2280
    %2478 = vst.msk [vmem:[#allocation2 + $0x20] sm:$0xff] %vm2473, %v2281
    %2479 = vst.msk [vmem:[#allocation2 + $0x28] sm:$0xff] %vm2473, %v2282
    %2480 = vst.msk [vmem:[#allocation2 + $0x30] sm:$0xff] %vm2473, %v2283
    %2481 = vst.msk [vmem:[#allocation2 + $0x38] sm:$0xff] %vm2473, %v2284
    %2482 = vst.msk [vmem:[#allocation2 + $0x40] sm:$0xff] %vm2473, %v2285
    %2483 = vst.msk [vmem:[#allocation2 + $0x48] sm:$0xff] %vm2473, %v2286
    %2484 = vst.msk [vmem:[#allocation2 + $0x50] sm:$0xff] %vm2473, %v2287
    %2485 = vst.msk [vmem:[#allocation2 + $0x58] sm:$0xff] %vm2473, %v2288
    %2486 = vst.msk [vmem:[#allocation2 + $0x60] sm:$0xff] %vm2473, %v2289
    %2487 = vst.msk [vmem:[#allocation2 + $0x68] sm:$0xff] %vm2473, %v2290
    %2488 = vst.msk [vmem:[#allocation2 + $0x70] sm:$0xff] %vm2473, %v2291
    %2489 = vst.msk [vmem:[#allocation2 + $0x78] sm:$0xff] %vm2473, %v2292
    %2490 = vst.msk [vmem:[#allocation2 + $0x80] sm:$0xff] %vm2473, %v2293
    %2491 = vst.msk [vmem:[#allocation2 + $0x88] sm:$0xff] %vm2473, %v2294
    %2492 = vst.msk [vmem:[#allocation2 + $0x90] sm:$0xff] %vm2473, %v2295
    %2493 = vst.msk [vmem:[#allocation2 + $0x98] sm:$0xff] %vm2473, %v2296
    %2494 = vst.msk [vmem:[#allocation2 + $0xa0] sm:$0xff] %vm2473, %v2297
    %2495 = vst.msk [vmem:[#allocation2 + $0xa8] sm:$0xff] %vm2473, %v2298
    %2496 = vst.msk [vmem:[#allocation2 + $0xb0] sm:$0xff] %vm2473, %v2299
    %2497 = vst.msk [vmem:[#allocation2 + $0xb8] sm:$0xff] %vm2473, %v2300
    %2498 = vst.msk [vmem:[#allocation2 + $0xc0] sm:$0xff] %vm2473, %v2301
    %2499 = vst.msk [vmem:[#allocation2 + $0xc8] sm:$0xff] %vm2473, %v2302
    %2500 = vst.msk [vmem:[#allocation2 + $0xd0] sm:$0xff] %vm2473, %v2303
    %2501 = vst.msk [vmem:[#allocation2 + $0xd8] sm:$0xff] %vm2473, %v2304
    %2502 = vst.msk [vmem:[#allocation2 + $0xe0] sm:$0xff] %vm2473, %v2305
    %2503 = vst.msk [vmem:[#allocation2 + $0xe8] sm:$0xff] %vm2473, %v2306
    %2504 = vst.msk [vmem:[#allocation2 + $0xf0] sm:$0xff] %vm2473, %v2307
    %2505 = vst.msk [vmem:[#allocation2 + $0xf8] sm:$0xff] %vm2473, %v2308
    %2506 = vst.msk [vmem:[#allocation2 + $0x100] sm:$0xff] %vm2473, %v2309
    %2507 = vst.msk [vmem:[#allocation2 + $0x108] sm:$0xff] %vm2473, %v2310
    %2508 = vst.msk [vmem:[#allocation2 + $0x110] sm:$0xff] %vm2473, %v2311
    %2509 = vst.msk [vmem:[#allocation2 + $0x118] sm:$0xff] %vm2473, %v2312
    %2510 = vst.msk [vmem:[#allocation2 + $0x120] sm:$0xff] %vm2473, %v2313
    %2511 = vst.msk [vmem:[#allocation2 + $0x128] sm:$0xff] %vm2473, %v2314
    %2512 = vst.msk [vmem:[#allocation2 + $0x130] sm:$0xff] %vm2473, %v2315
    %2513 = vst.msk [vmem:[#allocation2 + $0x138] sm:$0xff] %vm2473, %v2316
    %2514 = vst.msk [vmem:[#allocation2 + $0x140] sm:$0xff] %vm2473, %v2317
    %2515 = vst.msk [vmem:[#allocation2 + $0x148] sm:$0xff] %vm2473, %v2318
    %2516 = vst.msk [vmem:[#allocation2 + $0x150] sm:$0xff] %vm2473, %v2319
    %2517 = vst.msk [vmem:[#allocation2 + $0x158] sm:$0xff] %vm2473, %v2320
    %2518 = vst.msk [vmem:[#allocation2 + $0x160] sm:$0xff] %vm2473, %v2321
    %2519 = vst.msk [vmem:[#allocation2 + $0x168] sm:$0xff] %vm2473, %v2322
    %2520 = vst.msk [vmem:[#allocation2 + $0x170] sm:$0xff] %vm2473, %v2323
    %2521 = vst.msk [vmem:[#allocation2 + $0x178] sm:$0xff] %vm2473, %v2324
    %2522 = vst.msk [vmem:[#allocation2 + $0x180] sm:$0xff] %vm2473, %v2325
    %2523 = vst.msk [vmem:[#allocation2 + $0x188] sm:$0xff] %vm2473, %v2326
    %2524 = vst.msk [vmem:[#allocation2 + $0x190] sm:$0xff] %vm2473, %v2327
    %2525 = vst.msk [vmem:[#allocation2 + $0x198] sm:$0xff] %vm2473, %v2328
    %2526 = vst.msk [vmem:[#allocation2 + $0x1a0] sm:$0xff] %vm2473, %v2329
    %2527 = vst.msk [vmem:[#allocation2 + $0x1a8] sm:$0xff] %vm2473, %v2330
    %2528 = vst.msk [vmem:[#allocation2 + $0x1b0] sm:$0xff] %vm2473, %v2331
    %2529 = vst.msk [vmem:[#allocation2 + $0x1b8] sm:$0xff] %vm2473, %v2332
    %2530 = vst.msk [vmem:[#allocation2 + $0x1c0] sm:$0xff] %vm2473, %v2333
    %2531 = vst.msk [vmem:[#allocation2 + $0x1c8] sm:$0xff] %vm2473, %v2334
    %2532 = vst.msk [vmem:[#allocation2 + $0x1d0] sm:$0xff] %vm2473, %v2335
    %2533 = vst.msk [vmem:[#allocation2 + $0x1d8] sm:$0xff] %vm2473, %v2336
    %2534 = vst.msk [vmem:[#allocation2 + $0x1e0] sm:$0xff] %vm2473, %v2337
    %2535 = vst.msk [vmem:[#allocation2 + $0x1e8] sm:$0xff] %vm2473, %v2338
    %2536 = vst.msk [vmem:[#allocation2 + $0x1f0] sm:$0xff] %vm2473, %v2339
    %2537 = vst.msk [vmem:[#allocation2 + $0x1f8] sm:$0xff] %vm2473, %v2340
    %2538 = vst.msk [vmem:[#allocation2 + $0x200] sm:$0xff] %vm2473, %v2341
    %2539 = vst.msk [vmem:[#allocation2 + $0x208] sm:$0xff] %vm2473, %v2342
    %2540 = vst.msk [vmem:[#allocation2 + $0x210] sm:$0xff] %vm2473, %v2343
    %2541 = vst.msk [vmem:[#allocation2 + $0x218] sm:$0xff] %vm2473, %v2344
    %2542 = vst.msk [vmem:[#allocation2 + $0x220] sm:$0xff] %vm2473, %v2345
    %2543 = vst.msk [vmem:[#allocation2 + $0x228] sm:$0xff] %vm2473, %v2346
    %2544 = vst.msk [vmem:[#allocation2 + $0x230] sm:$0xff] %vm2473, %v2347
    %2545 = vst.msk [vmem:[#allocation2 + $0x238] sm:$0xff] %vm2473, %v2348
    %2546 = vst.msk [vmem:[#allocation2 + $0x240] sm:$0xff] %vm2473, %v2349
    %2547 = vst.msk [vmem:[#allocation2 + $0x248] sm:$0xff] %vm2473, %v2350
    %2548 = vst.msk [vmem:[#allocation2 + $0x250] sm:$0xff] %vm2473, %v2351
    %2549 = vst.msk [vmem:[#allocation2 + $0x258] sm:$0xff] %vm2473, %v2352
    %2550 = vst.msk [vmem:[#allocation2 + $0x260] sm:$0xff] %vm2473, %v2353
    %2551 = vst.msk [vmem:[#allocation2 + $0x268] sm:$0xff] %vm2473, %v2354
    %2552 = vst.msk [vmem:[#allocation2 + $0x270] sm:$0xff] %vm2473, %v2355
    %2553 = vst.msk [vmem:[#allocation2 + $0x278] sm:$0xff] %vm2473, %v2356
    %2554 = vst.msk [vmem:[#allocation2 + $0x280] sm:$0xff] %vm2473, %v2357
    %2555 = vst.msk [vmem:[#allocation2 + $0x288] sm:$0xff] %vm2473, %v2358
    %2556 = vst.msk [vmem:[#allocation2 + $0x290] sm:$0xff] %vm2473, %v2359
    %2557 = vst.msk [vmem:[#allocation2 + $0x298] sm:$0xff] %vm2473, %v2360
    %2558 = vst.msk [vmem:[#allocation2 + $0x2a0] sm:$0xff] %vm2473, %v2361
    %2559 = vst.msk [vmem:[#allocation2 + $0x2a8] sm:$0xff] %vm2473, %v2362
    %2560 = vst.msk [vmem:[#allocation2 + $0x2b0] sm:$0xff] %vm2473, %v2363
    %2561 = vst.msk [vmem:[#allocation2 + $0x2b8] sm:$0xff] %vm2473, %v2364
    %2562 = vst.msk [vmem:[#allocation2 + $0x2c0] sm:$0xff] %vm2473, %v2365
    %2563 = vst.msk [vmem:[#allocation2 + $0x2c8] sm:$0xff] %vm2473, %v2366
    %2564 = vst.msk [vmem:[#allocation2 + $0x2d0] sm:$0xff] %vm2473, %v2367
    %2565 = vst.msk [vmem:[#allocation2 + $0x2d8] sm:$0xff] %vm2473, %v2368
    %2566 = vst.msk [vmem:[#allocation2 + $0x2e0] sm:$0xff] %vm2473, %v2369
    %2567 = vst.msk [vmem:[#allocation2 + $0x2e8] sm:$0xff] %vm2473, %v2370
    %2568 = vst.msk [vmem:[#allocation2 + $0x2f0] sm:$0xff] %vm2473, %v2371
    %2569 = vst.msk [vmem:[#allocation2 + $0x2f8] sm:$0xff] %vm2473, %v2372
    %2570 = vst.msk [vmem:[#allocation2 + $0x300] sm:$0xff] %vm2473, %v2373
    %2571 = vst.msk [vmem:[#allocation2 + $0x308] sm:$0xff] %vm2473, %v2374
    %2572 = vst.msk [vmem:[#allocation2 + $0x310] sm:$0xff] %vm2473, %v2375
    %2573 = vst.msk [vmem:[#allocation2 + $0x318] sm:$0xff] %vm2473, %v2376
    %2574 = vst.msk [vmem:[#allocation2 + $0x320] sm:$0xff] %vm2473, %v2377
    %2575 = vst.msk [vmem:[#allocation2 + $0x328] sm:$0xff] %vm2473, %v2378
    %2576 = vst.msk [vmem:[#allocation2 + $0x330] sm:$0xff] %vm2473, %v2379
    %2577 = vst.msk [vmem:[#allocation2 + $0x338] sm:$0xff] %vm2473, %v2380
    %2578 = vst.msk [vmem:[#allocation2 + $0x340] sm:$0xff] %vm2473, %v2381
    %2579 = vst.msk [vmem:[#allocation2 + $0x348] sm:$0xff] %vm2473, %v2382
    %2580 = vst.msk [vmem:[#allocation2 + $0x350] sm:$0xff] %vm2473, %v2383
    %2581 = vst.msk [vmem:[#allocation2 + $0x358] sm:$0xff] %vm2473, %v2384
    %2582 = vst.msk [vmem:[#allocation2 + $0x360] sm:$0xff] %vm2473, %v2385
    %2583 = vst.msk [vmem:[#allocation2 + $0x368] sm:$0xff] %vm2473, %v2386
    %2584 = vst.msk [vmem:[#allocation2 + $0x370] sm:$0xff] %vm2473, %v2387
    %2585 = vst.msk [vmem:[#allocation2 + $0x378] sm:$0xff] %vm2473, %v2388
    %2586 = vst.msk [vmem:[#allocation2 + $0x380] sm:$0xff] %vm2473, %v2389
    %2587 = vst.msk [vmem:[#allocation2 + $0x388] sm:$0xff] %vm2473, %v2390
    %2588 = vst.msk [vmem:[#allocation2 + $0x390] sm:$0xff] %vm2473, %v2391
    %2589 = vst.msk [vmem:[#allocation2 + $0x398] sm:$0xff] %vm2473, %v2392
    %2590 = vst.msk [vmem:[#allocation2 + $0x3a0] sm:$0xff] %vm2473, %v2393
    %2591 = vst.msk [vmem:[#allocation2 + $0x3a8] sm:$0xff] %vm2473, %v2394
    %2592 = vst.msk [vmem:[#allocation2 + $0x3b0] sm:$0xff] %vm2473, %v2395
    %2593 = vst.msk [vmem:[#allocation2 + $0x3b8] sm:$0xff] %vm2473, %v2396
    %2594 = vst.msk [vmem:[#allocation2 + $0x3c0] sm:$0xff] %vm2473, %v2397
    %2595 = vst.msk [vmem:[#allocation2 + $0x3c8] sm:$0xff] %vm2473, %v2398
    %2596 = vst.msk [vmem:[#allocation2 + $0x3d0] sm:$0xff] %vm2473, %v2399
    %2597 = vst.msk [vmem:[#allocation2 + $0x3d8] sm:$0xff] %vm2473, %v2400
    %2598 = vst.msk [vmem:[#allocation2 + $0x3e0] sm:$0xff] %vm2473, %v2401
    %2599 = vst.msk [vmem:[#allocation2 + $0x3e8] sm:$0xff] %vm2473, %v2402
    %2600 = vst.msk [vmem:[#allocation2 + $0x3f0] sm:$0xff] %vm2473, %v2403
    %2601 = vst.msk [vmem:[#allocation2 + $0x3f8] sm:$0xff] %vm2473, %v2404
    %2602 = vst.msk [vmem:[#allocation2 + $0x400] sm:$0xff] %vm2473, %v2405
    %2603 = vst.msk [vmem:[#allocation2 + $0x408] sm:$0xff] %vm2473, %v2406
    %2604 = vst.msk [vmem:[#allocation2 + $0x410] sm:$0xff] %vm2473, %v2407
    %2605 = vst.msk [vmem:[#allocation2 + $0x418] sm:$0xff] %vm2473, %v2408
    %2606 = vst.msk [vmem:[#allocation2 + $0x420] sm:$0xff] %vm2473, %v2409
    %2607 = vst.msk [vmem:[#allocation2 + $0x428] sm:$0xff] %vm2473, %v2410
    %2608 = vst.msk [vmem:[#allocation2 + $0x430] sm:$0xff] %vm2473, %v2411
    %2609 = vst.msk [vmem:[#allocation2 + $0x438] sm:$0xff] %vm2473, %v2412
    %2610 = vst.msk [vmem:[#allocation2 + $0x440] sm:$0xff] %vm2473, %v2413
    %2611 = vst.msk [vmem:[#allocation2 + $0x448] sm:$0xff] %vm2473, %v2414
    %2612 = vst.msk [vmem:[#allocation2 + $0x450] sm:$0xff] %vm2473, %v2415
    %2613 = vst.msk [vmem:[#allocation2 + $0x458] sm:$0xff] %vm2473, %v2416
    %2614 = vst.msk [vmem:[#allocation2 + $0x460] sm:$0xff] %vm2473, %v2417
    %2615 = vst.msk [vmem:[#allocation2 + $0x468] sm:$0xff] %vm2473, %v2418
    %2616 = vst.msk [vmem:[#allocation2 + $0x470] sm:$0xff] %vm2473, %v2419
    %2617 = vst.msk [vmem:[#allocation2 + $0x478] sm:$0xff] %vm2473, %v2420
    %2618 = vst.msk [vmem:[#allocation2 + $0x480] sm:$0xff] %vm2473, %v2421
    %2619 = vst.msk [vmem:[#allocation2 + $0x488] sm:$0xff] %vm2473, %v2422
    %2620 = vst.msk [vmem:[#allocation2 + $0x490] sm:$0xff] %vm2473, %v2423
    %2621 = vst.msk [vmem:[#allocation2 + $0x498] sm:$0xff] %vm2473, %v2424
    %2622 = vst.msk [vmem:[#allocation2 + $0x4a0] sm:$0xff] %vm2473, %v2425
    %2623 = vst.msk [vmem:[#allocation2 + $0x4a8] sm:$0xff] %vm2473, %v2426
    %2624 = vst.msk [vmem:[#allocation2 + $0x4b0] sm:$0xff] %vm2473, %v2427
    %2625 = vst.msk [vmem:[#allocation2 + $0x4b8] sm:$0xff] %vm2473, %v2428
    %2626 = vst.msk [vmem:[#allocation2 + $0x4c0] sm:$0xff] %vm2473, %v2429
    %2627 = vst.msk [vmem:[#allocation2 + $0x4c8] sm:$0xff] %vm2473, %v2430
    %2628 = vst.msk [vmem:[#allocation2 + $0x4d0] sm:$0xff] %vm2473, %v2431
    %2629 = vst.msk [vmem:[#allocation2 + $0x4d8] sm:$0xff] %vm2473, %v2432
    %2630 = vst.msk [vmem:[#allocation2 + $0x4e0] sm:$0xff] %vm2473, %v2433
    %2631 = vst.msk [vmem:[#allocation2 + $0x4e8] sm:$0xff] %vm2473, %v2434
    %2632 = vst.msk [vmem:[#allocation2 + $0x4f0] sm:$0xff] %vm2473, %v2435
    %2633 = vst.msk [vmem:[#allocation2 + $0x4f8] sm:$0xff] %vm2473, %v2436
    %2634 = vst.msk [vmem:[#allocation2 + $0x500] sm:$0xff] %vm2473, %v2437
    %2635 = vst.msk [vmem:[#allocation2 + $0x508] sm:$0xff] %vm2473, %v2438
    %2636 = vst.msk [vmem:[#allocation2 + $0x510] sm:$0xff] %vm2473, %v2439
    %2637 = vst.msk [vmem:[#allocation2 + $0x518] sm:$0xff] %vm2473, %v2440
    %2638 = vst.msk [vmem:[#allocation2 + $0x520] sm:$0xff] %vm2473, %v2441
    %2639 = vst.msk [vmem:[#allocation2 + $0x528] sm:$0xff] %vm2473, %v2442
    %2640 = vst.msk [vmem:[#allocation2 + $0x530] sm:$0xff] %vm2473, %v2443
    %2641 = vst.msk [vmem:[#allocation2 + $0x538] sm:$0xff] %vm2473, %v2444
    %2642 = vst.msk [vmem:[#allocation2 + $0x540] sm:$0xff] %vm2473, %v2445
    %2643 = vst.msk [vmem:[#allocation2 + $0x548] sm:$0xff] %vm2473, %v2446
    %2644 = vst.msk [vmem:[#allocation2 + $0x550] sm:$0xff] %vm2473, %v2447
    %2645 = vst.msk [vmem:[#allocation2 + $0x558] sm:$0xff] %vm2473, %v2448
    %2646 = vst.msk [vmem:[#allocation2 + $0x560] sm:$0xff] %vm2473, %v2449
    %2647 = vst.msk [vmem:[#allocation2 + $0x568] sm:$0xff] %vm2473, %v2450
    %2648 = vst.msk [vmem:[#allocation2 + $0x570] sm:$0xff] %vm2473, %v2451
    %2649 = vst.msk [vmem:[#allocation2 + $0x578] sm:$0xff] %vm2473, %v2452
    %2650 = vst.msk [vmem:[#allocation2 + $0x580] sm:$0xff] %vm2473, %v2453
    %2651 = vst.msk [vmem:[#allocation2 + $0x588] sm:$0xff] %vm2473, %v2454
    %2652 = vst.msk [vmem:[#allocation2 + $0x590] sm:$0xff] %vm2473, %v2455
    %2653 = vst.msk [vmem:[#allocation2 + $0x598] sm:$0xff] %vm2473, %v2456
    %2654 = vst.msk [vmem:[#allocation2 + $0x5a0] sm:$0xff] %vm2473, %v2457
    %2655 = vst.msk [vmem:[#allocation2 + $0x5a8] sm:$0xff] %vm2473, %v2458
    %2656 = vst.msk [vmem:[#allocation2 + $0x5b0] sm:$0xff] %vm2473, %v2459
    %2657 = vst.msk [vmem:[#allocation2 + $0x5b8] sm:$0xff] %vm2473, %v2460
    %2658 = vst.msk [vmem:[#allocation2 + $0x5c0] sm:$0xff] %vm2473, %v2461
    %2659 = vst.msk [vmem:[#allocation2 + $0x5c8] sm:$0xff] %vm2473, %v2462
    %2660 = vst.msk [vmem:[#allocation2 + $0x5d0] sm:$0xff] %vm2473, %v2463
    %2661 = vst.msk [vmem:[#allocation2 + $0x5d8] sm:$0xff] %vm2473, %v2464
    %2662 = vst.msk [vmem:[#allocation2 + $0x5e0] sm:$0xff] %vm2473, %v2465
    %2663 = vst.msk [vmem:[#allocation2 + $0x5e8] sm:$0xff] %vm2473, %v2466
    %2664 = vst.msk [vmem:[#allocation2 + $0x5f0] sm:$0xff] %vm2473, %v2467
    %2665 = vst.msk [vmem:[#allocation2 + $0x5f8] sm:$0xff] %vm2473, %v2468
    %2666 = vst.msk [vmem:[#allocation2 + $0x600] sm:$0xff] %vm2473, %v2469
    %2667 = vst.msk [vmem:[#allocation2 + $0x608] sm:$0xff] %vm2473, %v2470
    %2668 = vst.msk [vmem:[#allocation2 + $0x610] sm:$0xff] %vm2473, %v2471
    %2669 = vst.msk [vmem:[#allocation2 + $0x618] sm:$0xff] %vm2473, %v2472
    %2670 = vst.msk [vmem:[#allocation3] sm:$0xff] %vm2473, 0.0
    %2671 = vst.msk [vmem:[#allocation3 + $0x8] sm:$0xff] %vm2473, 0.0
    %2672 = vst.msk [vmem:[#allocation3 + $0x10] sm:$0xff] %vm2473, 0.0
    %2673 = vst.msk [vmem:[#allocation3 + $0x18] sm:$0xff] %vm2473, 0.0
    %2674 = vst.msk [vmem:[#allocation3 + $0x20] sm:$0xff] %vm2473, 0.0
    %2675 = vst.msk [vmem:[#allocation3 + $0x28] sm:$0xff] %vm2473, 0.0
    %2676 = vst.msk [vmem:[#allocation3 + $0x30] sm:$0xff] %vm2473, 0.0
    %2677 = vst.msk [vmem:[#allocation3 + $0x38] sm:$0xff] %vm2473, 0.0
    %2678 = vst.msk [vmem:[#allocation3 + $0x40] sm:$0xff] %vm2473, 0.0
    %2679 = vst.msk [vmem:[#allocation3 + $0x48] sm:$0xff] %vm2473, 0.0
    %2680 = vst.msk [vmem:[#allocation3 + $0x50] sm:$0xff] %vm2473, 0.0
    %2681 = vst.msk [vmem:[#allocation3 + $0x58] sm:$0xff] %vm2473, 0.0
    %2682 = vst.msk [vmem:[#allocation3 + $0x60] sm:$0xff] %vm2473, 0.0
    %2683 = vst.msk [vmem:[#allocation3 + $0x68] sm:$0xff] %vm2473, 0.0
    %2684 = vst.msk [vmem:[#allocation3 + $0x70] sm:$0xff] %vm2473, 0.0
    %2685 = vst.msk [vmem:[#allocation3 + $0x78] sm:$0xff] %vm2473, 0.0
    %2686 = vst.msk [vmem:[#allocation3 + $0x80] sm:$0xff] %vm2473, 0.0
    %2687 = vst.msk [vmem:[#allocation3 + $0x88] sm:$0xff] %vm2473, 0.0
    %2688 = vst.msk [vmem:[#allocation3 + $0x90] sm:$0xff] %vm2473, 0.0
    %2689 = vst.msk [vmem:[#allocation3 + $0x98] sm:$0xff] %vm2473, 0.0
    %2690 = vst.msk [vmem:[#allocation3 + $0xa0] sm:$0xff] %vm2473, 0.0
    %2691 = vst.msk [vmem:[#allocation3 + $0xa8] sm:$0xff] %vm2473, 0.0
    %2692 = vst.msk [vmem:[#allocation3 + $0xb0] sm:$0xff] %vm2473, 0.0
    %2693 = vst.msk [vmem:[#allocation3 + $0xb8] sm:$0xff] %vm2473, 0.0
    %2694 = vst.msk [vmem:[#allocation3 + $0xc0] sm:$0xff] %vm2473, 0.0
    %2695 = vst.msk [vmem:[#allocation3 + $0xc8] sm:$0xff] %vm2473, 0.0
    %2696 = vst.msk [vmem:[#allocation3 + $0xd0] sm:$0xff] %vm2473, 0.0
    %2697 = vst.msk [vmem:[#allocation3 + $0xd8] sm:$0xff] %vm2473, 0.0
    %2698 = vst.msk [vmem:[#allocation3 + $0xe0] sm:$0xff] %vm2473, 0.0
    %2699 = vst.msk [vmem:[#allocation3 + $0xe8] sm:$0xff] %vm2473, 0.0
    %2700 = vst.msk [vmem:[#allocation3 + $0xf0] sm:$0xff] %vm2473, 0.0
    %2701 = vst.msk [vmem:[#allocation3 + $0xf8] sm:$0xff] %vm2473, 0.0
    %2702 = vst.msk [vmem:[#allocation3 + $0x100] sm:$0xff] %vm2473, 0.0
    %2703 = vst.msk [vmem:[#allocation3 + $0x108] sm:$0xff] %vm2473, 0.0
    %2704 = vst.msk [vmem:[#allocation3 + $0x110] sm:$0xff] %vm2473, 0.0
    %2705 = vst.msk [vmem:[#allocation3 + $0x118] sm:$0xff] %vm2473, 0.0
    %2706 = vst.msk [vmem:[#allocation3 + $0x120] sm:$0xff] %vm2473, 0.0
    %2707 = vst.msk [vmem:[#allocation3 + $0x128] sm:$0xff] %vm2473, 0.0
    %2708 = vst.msk [vmem:[#allocation3 + $0x130] sm:$0xff] %vm2473, 0.0
    %2709 = vst.msk [vmem:[#allocation3 + $0x138] sm:$0xff] %vm2473, 0.0
    %2710 = vst.msk [vmem:[#allocation3 + $0x140] sm:$0xff] %vm2473, 0.0
    %2711 = vst.msk [vmem:[#allocation3 + $0x148] sm:$0xff] %vm2473, 0.0
    %2712 = vst.msk [vmem:[#allocation3 + $0x150] sm:$0xff] %vm2473, 0.0
    %2713 = vst.msk [vmem:[#allocation3 + $0x158] sm:$0xff] %vm2473, 0.0
    %2714 = vst.msk [vmem:[#allocation3 + $0x160] sm:$0xff] %vm2473, 0.0
    %2715 = vst.msk [vmem:[#allocation3 + $0x168] sm:$0xff] %vm2473, 0.0
    %2716 = vst.msk [vmem:[#allocation3 + $0x170] sm:$0xff] %vm2473, 0.0
    %2717 = vst.msk [vmem:[#allocation3 + $0x178] sm:$0xff] %vm2473, 0.0
    %2718 = vst.msk [vmem:[#allocation3 + $0x180] sm:$0xff] %vm2473, 0.0
    %2719 = vst.msk [vmem:[#allocation3 + $0x188] sm:$0xff] %vm2473, 0.0
    %2720 = vst.msk [vmem:[#allocation3 + $0x190] sm:$0xff] %vm2473, 0.0
    %2721 = vst.msk [vmem:[#allocation3 + $0x198] sm:$0xff] %vm2473, 0.0
    %2722 = vst.msk [vmem:[#allocation3 + $0x1a0] sm:$0xff] %vm2473, 0.0
    %2723 = vst.msk [vmem:[#allocation3 + $0x1a8] sm:$0xff] %vm2473, 0.0
    %2724 = vst.msk [vmem:[#allocation3 + $0x1b0] sm:$0xff] %vm2473, 0.0
    %2725 = vst.msk [vmem:[#allocation3 + $0x1b8] sm:$0xff] %vm2473, 0.0
    %2726 = vst.msk [vmem:[#allocation3 + $0x1c0] sm:$0xff] %vm2473, 0.0
    %2727 = vst.msk [vmem:[#allocation3 + $0x1c8] sm:$0xff] %vm2473, 0.0
    %2728 = vst.msk [vmem:[#allocation3 + $0x1d0] sm:$0xff] %vm2473, 0.0
    %2729 = vst.msk [vmem:[#allocation3 + $0x1d8] sm:$0xff] %vm2473, 0.0
    %2730 = vst.msk [vmem:[#allocation3 + $0x1e0] sm:$0xff] %vm2473, 0.0
    %2731 = vst.msk [vmem:[#allocation3 + $0x1e8] sm:$0xff] %vm2473, 0.0
    %2732 = vst.msk [vmem:[#allocation3 + $0x1f0] sm:$0xff] %vm2473, 0.0
    %2733 = vst.msk [vmem:[#allocation3 + $0x1f8] sm:$0xff] %vm2473, 0.0
    %2734 = vst.msk [vmem:[#allocation3 + $0x200] sm:$0xff] %vm2473, 0.0
    %2735 = vst.msk [vmem:[#allocation3 + $0x208] sm:$0xff] %vm2473, 0.0
    %2736 = vst.msk [vmem:[#allocation3 + $0x210] sm:$0xff] %vm2473, 0.0
    %2737 = vst.msk [vmem:[#allocation3 + $0x218] sm:$0xff] %vm2473, 0.0
    %2738 = vst.msk [vmem:[#allocation3 + $0x220] sm:$0xff] %vm2473, 0.0
    %v2739 = vld [vmem:[#allocation2] sm:$0xff]
    %v2740 = vld [vmem:[#allocation2 + $0x8] sm:$0x3f]
    %v2741 = vld [vmem:[#allocation2 + $0xe] sm:$0xff]
    %v2742 = vld [vmem:[#allocation2 + $0x16] sm:$0x3f]
    %v2743 = vmax.f32 %v2739, %v2741
    %v2744 = vmax.f32 %v2740, %v2742
    %v2745 = vld [vmem:[#allocation2 + $0x1c] sm:$0xff]
    %v2746 = vld [vmem:[#allocation2 + $0x24] sm:$0x3f]
    %v2747 = vld [vmem:[#allocation2 + $0x2a] sm:$0xff]
    %v2748 = vld [vmem:[#allocation2 + $0x32] sm:$0x3f]
    %v2749 = vmax.f32 %v2745, %v2747
    %v2750 = vmax.f32 %v2746, %v2748
    %v2751 = vmax.f32 %v2743, %v2749
    %v2752 = vmax.f32 %v2744, %v2750
    %2753 = vst.msk [vmem:[#allocation3 + $0x11] sm:$0xff] %vm2473, %v2751
    %vm2754 = vcmask 259072
    %2755 = vst.msk [vmem:[#allocation3 + $0x19] sm:$0x3f] %vm2754, %v2752
    %v2756 = vld [vmem:[#allocation2 + $0x38] sm:$0xff]
    %v2757 = vld [vmem:[#allocation2 + $0x40] sm:$0x3f]
    %v2758 = vld [vmem:[#allocation2 + $0x46] sm:$0xff]
    %v2759 = vld [vmem:[#allocation2 + $0x4e] sm:$0x3f]
    %v2760 = vmax.f32 %v2756, %v2758
    %v2761 = vmax.f32 %v2757, %v2759
    %v2762 = vld [vmem:[#allocation2 + $0x54] sm:$0xff]
    %v2763 = vld [vmem:[#allocation2 + $0x5c] sm:$0x3f]
    %v2764 = vld [vmem:[#allocation2 + $0x62] sm:$0xff]
    %v2765 = vld [vmem:[#allocation2 + $0x6a] sm:$0x3f]
    %v2766 = vmax.f32 %v2762, %v2764
    %v2767 = vmax.f32 %v2763, %v2765
    %v2768 = vmax.f32 %v2760, %v2766
    %v2769 = vmax.f32 %v2761, %v2767
    %2770 = vst.msk [vmem:[#allocation3 + $0x21] sm:$0xff] %vm2473, %v2768
    %2771 = vst.msk [vmem:[#allocation3 + $0x29] sm:$0x3f] %vm2754, %v2769
    %v2772 = vld [vmem:[#allocation2 + $0x70] sm:$0xff]
    %v2773 = vld [vmem:[#allocation2 + $0x78] sm:$0x3f]
    %v2774 = vld [vmem:[#allocation2 + $0x7e] sm:$0xff]
    %v2775 = vld [vmem:[#allocation2 + $0x86] sm:$0x3f]
    %v2776 = vmax.f32 %v2772, %v2774
    %v2777 = vmax.f32 %v2773, %v2775
    %v2778 = vld [vmem:[#allocation2 + $0x8c] sm:$0xff]
    %v2779 = vld [vmem:[#allocation2 + $0x94] sm:$0x3f]
    %v2780 = vld [vmem:[#allocation2 + $0x9a] sm:$0xff]
    %v2781 = vld [vmem:[#allocation2 + $0xa2] sm:$0x3f]
    %v2782 = vmax.f32 %v2778, %v2780
    %v2783 = vmax.f32 %v2779, %v2781
    %v2784 = vmax.f32 %v2776, %v2782
    %v2785 = vmax.f32 %v2777, %v2783
    %2786 = vst.msk [vmem:[#allocation3 + $0x31] sm:$0xff] %vm2473, %v2784
    %2787 = vst.msk [vmem:[#allocation3 + $0x39] sm:$0x3f] %vm2754, %v2785
    %v2788 = vld [vmem:[#allocation2 + $0xa8] sm:$0xff]
    %v2789 = vld [vmem:[#allocation2 + $0xb0] sm:$0x3f]
    %v2790 = vld [vmem:[#allocation2 + $0xb6] sm:$0xff]
    %v2791 = vld [vmem:[#allocation2 + $0xbe] sm:$0x3f]
    %v2792 = vmax.f32 %v2788, %v2790
    %v2793 = vmax.f32 %v2789, %v2791
    %v2794 = vld [vmem:[#allocation2 + $0xc4] sm:$0xff]
    %v2795 = vld [vmem:[#allocation2 + $0xcc] sm:$0x3f]
    %v2796 = vld [vmem:[#allocation2 + $0xd2] sm:$0xff]
    %v2797 = vld [vmem:[#allocation2 + $0xda] sm:$0x3f]
    %v2798 = vmax.f32 %v2794, %v2796
    %v2799 = vmax.f32 %v2795, %v2797
    %v2800 = vmax.f32 %v2792, %v2798
    %v2801 = vmax.f32 %v2793, %v2799
    %2802 = vst.msk [vmem:[#allocation3 + $0x41] sm:$0xff] %vm2473, %v2800
    %2803 = vst.msk [vmem:[#allocation3 + $0x49] sm:$0x3f] %vm2754, %v2801
    %v2804 = vld [vmem:[#allocation2 + $0xe0] sm:$0xff]
    %v2805 = vld [vmem:[#allocation2 + $0xe8] sm:$0x3f]
    %v2806 = vld [vmem:[#allocation2 + $0xee] sm:$0xff]
    %v2807 = vld [vmem:[#allocation2 + $0xf6] sm:$0x3f]
    %v2808 = vmax.f32 %v2804, %v2806
    %v2809 = vmax.f32 %v2805, %v2807
    %v2810 = vld [vmem:[#allocation2 + $0xfc] sm:$0xff]
    %v2811 = vld [vmem:[#allocation2 + $0x104] sm:$0x3f]
    %v2812 = vld [vmem:[#allocation2 + $0x10a] sm:$0xff]
    %v2813 = vld [vmem:[#allocation2 + $0x112] sm:$0x3f]
    %v2814 = vmax.f32 %v2810, %v2812
    %v2815 = vmax.f32 %v2811, %v2813
    %v2816 = vmax.f32 %v2808, %v2814
    %v2817 = vmax.f32 %v2809, %v2815
    %2818 = vst.msk [vmem:[#allocation3 + $0x51] sm:$0xff] %vm2473, %v2816
    %2819 = vst.msk [vmem:[#allocation3 + $0x59] sm:$0x3f] %vm2754, %v2817
    %v2820 = vld [vmem:[#allocation2 + $0x118] sm:$0xff]
    %v2821 = vld [vmem:[#allocation2 + $0x120] sm:$0x3f]
    %v2822 = vld [vmem:[#allocation2 + $0x126] sm:$0xff]
    %v2823 = vld [vmem:[#allocation2 + $0x12e] sm:$0x3f]
    %v2824 = vmax.f32 %v2820, %v2822
    %v2825 = vmax.f32 %v2821, %v2823
    %v2826 = vld [vmem:[#allocation2 + $0x134] sm:$0xff]
    %v2827 = vld [vmem:[#allocation2 + $0x13c] sm:$0x3f]
    %v2828 = vld [vmem:[#allocation2 + $0x142] sm:$0xff]
    %v2829 = vld [vmem:[#allocation2 + $0x14a] sm:$0x3f]
    %v2830 = vmax.f32 %v2826, %v2828
    %v2831 = vmax.f32 %v2827, %v2829
    %v2832 = vmax.f32 %v2824, %v2830
    %v2833 = vmax.f32 %v2825, %v2831
    %2834 = vst.msk [vmem:[#allocation3 + $0x61] sm:$0xff] %vm2473, %v2832
    %2835 = vst.msk [vmem:[#allocation3 + $0x69] sm:$0x3f] %vm2754, %v2833
    %v2836 = vld [vmem:[#allocation2 + $0x150] sm:$0xff]
    %v2837 = vld [vmem:[#allocation2 + $0x158] sm:$0x3f]
    %v2838 = vld [vmem:[#allocation2 + $0x15e] sm:$0xff]
    %v2839 = vld [vmem:[#allocation2 + $0x166] sm:$0x3f]
    %v2840 = vmax.f32 %v2836, %v2838
    %v2841 = vmax.f32 %v2837, %v2839
    %v2842 = vld [vmem:[#allocation2 + $0x16c] sm:$0xff]
    %v2843 = vld [vmem:[#allocation2 + $0x174] sm:$0x3f]
    %v2844 = vld [vmem:[#allocation2 + $0x17a] sm:$0xff]
    %v2845 = vld [vmem:[#allocation2 + $0x182] sm:$0x3f]
    %v2846 = vmax.f32 %v2842, %v2844
    %v2847 = vmax.f32 %v2843, %v2845
    %v2848 = vmax.f32 %v2840, %v2846
    %v2849 = vmax.f32 %v2841, %v2847
    %2850 = vst.msk [vmem:[#allocation3 + $0x71] sm:$0xff] %vm2473, %v2848
    %2851 = vst.msk [vmem:[#allocation3 + $0x79] sm:$0x3f] %vm2754, %v2849
    %v2852 = vld [vmem:[#allocation2 + $0x188] sm:$0xff]
    %v2853 = vld [vmem:[#allocation2 + $0x190] sm:$0x3f]
    %v2854 = vld [vmem:[#allocation2 + $0x196] sm:$0xff]
    %v2855 = vld [vmem:[#allocation2 + $0x19e] sm:$0x3f]
    %v2856 = vmax.f32 %v2852, %v2854
    %v2857 = vmax.f32 %v2853, %v2855
    %v2858 = vld [vmem:[#allocation2 + $0x1a4] sm:$0xff]
    %v2859 = vld [vmem:[#allocation2 + $0x1ac] sm:$0x3f]
    %v2860 = vld [vmem:[#allocation2 + $0x1b2] sm:$0xff]
    %v2861 = vld [vmem:[#allocation2 + $0x1ba] sm:$0x3f]
    %v2862 = vmax.f32 %v2858, %v2860
    %v2863 = vmax.f32 %v2859, %v2861
    %v2864 = vmax.f32 %v2856, %v2862
    %v2865 = vmax.f32 %v2857, %v2863
    %2866 = vst.msk [vmem:[#allocation3 + $0x81] sm:$0xff] %vm2473, %v2864
    %2867 = vst.msk [vmem:[#allocation3 + $0x89] sm:$0x3f] %vm2754, %v2865
    %v2868 = vld [vmem:[#allocation2 + $0x1c0] sm:$0xff]
    %v2869 = vld [vmem:[#allocation2 + $0x1c8] sm:$0x3f]
    %v2870 = vld [vmem:[#allocation2 + $0x1ce] sm:$0xff]
    %v2871 = vld [vmem:[#allocation2 + $0x1d6] sm:$0x3f]
    %v2872 = vmax.f32 %v2868, %v2870
    %v2873 = vmax.f32 %v2869, %v2871
    %v2874 = vld [vmem:[#allocation2 + $0x1dc] sm:$0xff]
    %v2875 = vld [vmem:[#allocation2 + $0x1e4] sm:$0x3f]
    %v2876 = vld [vmem:[#allocation2 + $0x1ea] sm:$0xff]
    %v2877 = vld [vmem:[#allocation2 + $0x1f2] sm:$0x3f]
    %v2878 = vmax.f32 %v2874, %v2876
    %v2879 = vmax.f32 %v2875, %v2877
    %v2880 = vmax.f32 %v2872, %v2878
    %v2881 = vmax.f32 %v2873, %v2879
    %2882 = vst.msk [vmem:[#allocation3 + $0x91] sm:$0xff] %vm2473, %v2880
    %2883 = vst.msk [vmem:[#allocation3 + $0x99] sm:$0x3f] %vm2754, %v2881
    %v2884 = vld [vmem:[#allocation2 + $0x1f8] sm:$0xff]
    %v2885 = vld [vmem:[#allocation2 + $0x200] sm:$0x3f]
    %v2886 = vld [vmem:[#allocation2 + $0x206] sm:$0xff]
    %v2887 = vld [vmem:[#allocation2 + $0x20e] sm:$0x3f]
    %v2888 = vmax.f32 %v2884, %v2886
    %v2889 = vmax.f32 %v2885, %v2887
    %v2890 = vld [vmem:[#allocation2 + $0x214] sm:$0xff]
    %v2891 = vld [vmem:[#allocation2 + $0x21c] sm:$0x3f]
    %v2892 = vld [vmem:[#allocation2 + $0x222] sm:$0xff]
    %v2893 = vld [vmem:[#allocation2 + $0x22a] sm:$0x3f]
    %v2894 = vmax.f32 %v2890, %v2892
    %v2895 = vmax.f32 %v2891, %v2893
    %v2896 = vmax.f32 %v2888, %v2894
    %v2897 = vmax.f32 %v2889, %v2895
    %2898 = vst.msk [vmem:[#allocation3 + $0xa1] sm:$0xff] %vm2473, %v2896
    %2899 = vst.msk [vmem:[#allocation3 + $0xa9] sm:$0x3f] %vm2754, %v2897
    %v2900 = vld [vmem:[#allocation2 + $0x230] sm:$0xff]
    %v2901 = vld [vmem:[#allocation2 + $0x238] sm:$0x3f]
    %v2902 = vld [vmem:[#allocation2 + $0x23e] sm:$0xff]
    %v2903 = vld [vmem:[#allocation2 + $0x246] sm:$0x3f]
    %v2904 = vmax.f32 %v2900, %v2902
    %v2905 = vmax.f32 %v2901, %v2903
    %v2906 = vld [vmem:[#allocation2 + $0x24c] sm:$0xff]
    %v2907 = vld [vmem:[#allocation2 + $0x254] sm:$0x3f]
    %v2908 = vld [vmem:[#allocation2 + $0x25a] sm:$0xff]
    %v2909 = vld [vmem:[#allocation2 + $0x262] sm:$0x3f]
    %v2910 = vmax.f32 %v2906, %v2908
    %v2911 = vmax.f32 %v2907, %v2909
    %v2912 = vmax.f32 %v2904, %v2910
    %v2913 = vmax.f32 %v2905, %v2911
    %2914 = vst.msk [vmem:[#allocation3 + $0xb1] sm:$0xff] %vm2473, %v2912
    %2915 = vst.msk [vmem:[#allocation3 + $0xb9] sm:$0x3f] %vm2754, %v2913
    %v2916 = vld [vmem:[#allocation2 + $0x268] sm:$0xff]
    %v2917 = vld [vmem:[#allocation2 + $0x270] sm:$0x3f]
    %v2918 = vld [vmem:[#allocation2 + $0x276] sm:$0xff]
    %v2919 = vld [vmem:[#allocation2 + $0x27e] sm:$0x3f]
    %v2920 = vmax.f32 %v2916, %v2918
    %v2921 = vmax.f32 %v2917, %v2919
    %v2922 = vld [vmem:[#allocation2 + $0x284] sm:$0xff]
    %v2923 = vld [vmem:[#allocation2 + $0x28c] sm:$0x3f]
    %v2924 = vld [vmem:[#allocation2 + $0x292] sm:$0xff]
    %v2925 = vld [vmem:[#allocation2 + $0x29a] sm:$0x3f]
    %v2926 = vmax.f32 %v2922, %v2924
    %v2927 = vmax.f32 %v2923, %v2925
    %v2928 = vmax.f32 %v2920, %v2926
    %v2929 = vmax.f32 %v2921, %v2927
    %2930 = vst.msk [vmem:[#allocation3 + $0xc1] sm:$0xff] %vm2473, %v2928
    %2931 = vst.msk [vmem:[#allocation3 + $0xc9] sm:$0x3f] %vm2754, %v2929
    %v2932 = vld [vmem:[#allocation2 + $0x2a0] sm:$0xff]
    %v2933 = vld [vmem:[#allocation2 + $0x2a8] sm:$0x3f]
    %v2934 = vld [vmem:[#allocation2 + $0x2ae] sm:$0xff]
    %v2935 = vld [vmem:[#allocation2 + $0x2b6] sm:$0x3f]
    %v2936 = vmax.f32 %v2932, %v2934
    %v2937 = vmax.f32 %v2933, %v2935
    %v2938 = vld [vmem:[#allocation2 + $0x2bc] sm:$0xff]
    %v2939 = vld [vmem:[#allocation2 + $0x2c4] sm:$0x3f]
    %v2940 = vld [vmem:[#allocation2 + $0x2ca] sm:$0xff]
    %v2941 = vld [vmem:[#allocation2 + $0x2d2] sm:$0x3f]
    %v2942 = vmax.f32 %v2938, %v2940
    %v2943 = vmax.f32 %v2939, %v2941
    %v2944 = vmax.f32 %v2936, %v2942
    %v2945 = vmax.f32 %v2937, %v2943
    %2946 = vst.msk [vmem:[#allocation3 + $0xd1] sm:$0xff] %vm2473, %v2944
    %2947 = vst.msk [vmem:[#allocation3 + $0xd9] sm:$0x3f] %vm2754, %v2945
    %v2948 = vld [vmem:[#allocation2 + $0x2d8] sm:$0xff]
    %v2949 = vld [vmem:[#allocation2 + $0x2e0] sm:$0x3f]
    %v2950 = vld [vmem:[#allocation2 + $0x2e6] sm:$0xff]
    %v2951 = vld [vmem:[#allocation2 + $0x2ee] sm:$0x3f]
    %v2952 = vmax.f32 %v2948, %v2950
    %v2953 = vmax.f32 %v2949, %v2951
    %v2954 = vld [vmem:[#allocation2 + $0x2f4] sm:$0xff]
    %v2955 = vld [vmem:[#allocation2 + $0x2fc] sm:$0x3f]
    %v2956 = vld [vmem:[#allocation2 + $0x302] sm:$0xff]
    %v2957 = vld [vmem:[#allocation2 + $0x30a] sm:$0x3f]
    %v2958 = vmax.f32 %v2954, %v2956
    %v2959 = vmax.f32 %v2955, %v2957
    %v2960 = vmax.f32 %v2952, %v2958
    %v2961 = vmax.f32 %v2953, %v2959
    %2962 = vst.msk [vmem:[#allocation3 + $0xe1] sm:$0xff] %vm2473, %v2960
    %2963 = vst.msk [vmem:[#allocation3 + $0xe9] sm:$0x3f] %vm2754, %v2961
    %v2964 = vld [vmem:[#allocation2 + $0x310] sm:$0xff]
    %v2965 = vld [vmem:[#allocation2 + $0x318] sm:$0x3f]
    %v2966 = vld [vmem:[#allocation2 + $0x31e] sm:$0xff]
    %v2967 = vld [vmem:[#allocation2 + $0x326] sm:$0x3f]
    %v2968 = vmax.f32 %v2964, %v2966
    %v2969 = vmax.f32 %v2965, %v2967
    %v2970 = vld [vmem:[#allocation2 + $0x32c] sm:$0xff]
    %v2971 = vld [vmem:[#allocation2 + $0x334] sm:$0x3f]
    %v2972 = vld [vmem:[#allocation2 + $0x33a] sm:$0xff]
    %v2973 = vld [vmem:[#allocation2 + $0x342] sm:$0x3f]
    %v2974 = vmax.f32 %v2970, %v2972
    %v2975 = vmax.f32 %v2971, %v2973
    %v2976 = vmax.f32 %v2968, %v2974
    %v2977 = vmax.f32 %v2969, %v2975
    %2978 = vst.msk [vmem:[#allocation3 + $0x111] sm:$0xff] %vm2473, %v2976
    %2979 = vst.msk [vmem:[#allocation3 + $0x119] sm:$0x3f] %vm2754, %v2977
    %v2980 = vld [vmem:[#allocation2 + $0x348] sm:$0xff]
    %v2981 = vld [vmem:[#allocation2 + $0x350] sm:$0x3f]
    %v2982 = vld [vmem:[#allocation2 + $0x356] sm:$0xff]
    %v2983 = vld [vmem:[#allocation2 + $0x35e] sm:$0x3f]
    %v2984 = vmax.f32 %v2980, %v2982
    %v2985 = vmax.f32 %v2981, %v2983
    %v2986 = vld [vmem:[#allocation2 + $0x364] sm:$0xff]
    %v2987 = vld [vmem:[#allocation2 + $0x36c] sm:$0x3f]
    %v2988 = vld [vmem:[#allocation2 + $0x372] sm:$0xff]
    %v2989 = vld [vmem:[#allocation2 + $0x37a] sm:$0x3f]
    %v2990 = vmax.f32 %v2986, %v2988
    %v2991 = vmax.f32 %v2987, %v2989
    %v2992 = vmax.f32 %v2984, %v2990
    %v2993 = vmax.f32 %v2985, %v2991
    %2994 = vst.msk [vmem:[#allocation3 + $0x121] sm:$0xff] %vm2473, %v2992
    %2995 = vst.msk [vmem:[#allocation3 + $0x129] sm:$0x3f] %vm2754, %v2993
    %v2996 = vld [vmem:[#allocation2 + $0x380] sm:$0xff]
    %v2997 = vld [vmem:[#allocation2 + $0x388] sm:$0x3f]
    %v2998 = vld [vmem:[#allocation2 + $0x38e] sm:$0xff]
    %v2999 = vld [vmem:[#allocation2 + $0x396] sm:$0x3f]
    %v3000 = vmax.f32 %v2996, %v2998
    %v3001 = vmax.f32 %v2997, %v2999
    %v3002 = vld [vmem:[#allocation2 + $0x39c] sm:$0xff]
    %v3003 = vld [vmem:[#allocation2 + $0x3a4] sm:$0x3f]
    %v3004 = vld [vmem:[#allocation2 + $0x3aa] sm:$0xff]
    %v3005 = vld [vmem:[#allocation2 + $0x3b2] sm:$0x3f]
    %v3006 = vmax.f32 %v3002, %v3004
    %v3007 = vmax.f32 %v3003, %v3005
    %v3008 = vmax.f32 %v3000, %v3006
    %v3009 = vmax.f32 %v3001, %v3007
    %3010 = vst.msk [vmem:[#allocation3 + $0x131] sm:$0xff] %vm2473, %v3008
    %3011 = vst.msk [vmem:[#allocation3 + $0x139] sm:$0x3f] %vm2754, %v3009
    %v3012 = vld [vmem:[#allocation2 + $0x3b8] sm:$0xff]
    %v3013 = vld [vmem:[#allocation2 + $0x3c0] sm:$0x3f]
    %v3014 = vld [vmem:[#allocation2 + $0x3c6] sm:$0xff]
    %v3015 = vld [vmem:[#allocation2 + $0x3ce] sm:$0x3f]
    %v3016 = vmax.f32 %v3012, %v3014
    %v3017 = vmax.f32 %v3013, %v3015
    %v3018 = vld [vmem:[#allocation2 + $0x3d4] sm:$0xff]
    %v3019 = vld [vmem:[#allocation2 + $0x3dc] sm:$0x3f]
    %v3020 = vld [vmem:[#allocation2 + $0x3e2] sm:$0xff]
    %v3021 = vld [vmem:[#allocation2 + $0x3ea] sm:$0x3f]
    %v3022 = vmax.f32 %v3018, %v3020
    %v3023 = vmax.f32 %v3019, %v3021
    %v3024 = vmax.f32 %v3016, %v3022
    %v3025 = vmax.f32 %v3017, %v3023
    %3026 = vst.msk [vmem:[#allocation3 + $0x141] sm:$0xff] %vm2473, %v3024
    %3027 = vst.msk [vmem:[#allocation3 + $0x149] sm:$0x3f] %vm2754, %v3025
    %v3028 = vld [vmem:[#allocation2 + $0x3f0] sm:$0xff]
    %v3029 = vld [vmem:[#allocation2 + $0x3f8] sm:$0x3f]
    %v3030 = vld [vmem:[#allocation2 + $0x3fe] sm:$0xff]
    %v3031 = vld [vmem:[#allocation2 + $0x406] sm:$0x3f]
    %v3032 = vmax.f32 %v3028, %v3030
    %v3033 = vmax.f32 %v3029, %v3031
    %v3034 = vld [vmem:[#allocation2 + $0x40c] sm:$0xff]
    %v3035 = vld [vmem:[#allocation2 + $0x414] sm:$0x3f]
    %v3036 = vld [vmem:[#allocation2 + $0x41a] sm:$0xff]
    %v3037 = vld [vmem:[#allocation2 + $0x422] sm:$0x3f]
    %v3038 = vmax.f32 %v3034, %v3036
    %v3039 = vmax.f32 %v3035, %v3037
    %v3040 = vmax.f32 %v3032, %v3038
    %v3041 = vmax.f32 %v3033, %v3039
    %3042 = vst.msk [vmem:[#allocation3 + $0x151] sm:$0xff] %vm2473, %v3040
    %3043 = vst.msk [vmem:[#allocation3 + $0x159] sm:$0x3f] %vm2754, %v3041
    %v3044 = vld [vmem:[#allocation2 + $0x428] sm:$0xff]
    %v3045 = vld [vmem:[#allocation2 + $0x430] sm:$0x3f]
    %v3046 = vld [vmem:[#allocation2 + $0x436] sm:$0xff]
    %v3047 = vld [vmem:[#allocation2 + $0x43e] sm:$0x3f]
    %v3048 = vmax.f32 %v3044, %v3046
    %v3049 = vmax.f32 %v3045, %v3047
    %v3050 = vld [vmem:[#allocation2 + $0x444] sm:$0xff]
    %v3051 = vld [vmem:[#allocation2 + $0x44c] sm:$0x3f]
    %v3052 = vld [vmem:[#allocation2 + $0x452] sm:$0xff]
    %v3053 = vld [vmem:[#allocation2 + $0x45a] sm:$0x3f]
    %v3054 = vmax.f32 %v3050, %v3052
    %v3055 = vmax.f32 %v3051, %v3053
    %v3056 = vmax.f32 %v3048, %v3054
    %v3057 = vmax.f32 %v3049, %v3055
    %3058 = vst.msk [vmem:[#allocation3 + $0x161] sm:$0xff] %vm2473, %v3056
    %3059 = vst.msk [vmem:[#allocation3 + $0x169] sm:$0x3f] %vm2754, %v3057
    %v3060 = vld [vmem:[#allocation2 + $0x460] sm:$0xff]
    %v3061 = vld [vmem:[#allocation2 + $0x468] sm:$0x3f]
    %v3062 = vld [vmem:[#allocation2 + $0x46e] sm:$0xff]
    %v3063 = vld [vmem:[#allocation2 + $0x476] sm:$0x3f]
    %v3064 = vmax.f32 %v3060, %v3062
    %v3065 = vmax.f32 %v3061, %v3063
    %v3066 = vld [vmem:[#allocation2 + $0x47c] sm:$0xff]
    %v3067 = vld [vmem:[#allocation2 + $0x484] sm:$0x3f]
    %v3068 = vld [vmem:[#allocation2 + $0x48a] sm:$0xff]
    %v3069 = vld [vmem:[#allocation2 + $0x492] sm:$0x3f]
    %v3070 = vmax.f32 %v3066, %v3068
    %v3071 = vmax.f32 %v3067, %v3069
    %v3072 = vmax.f32 %v3064, %v3070
    %v3073 = vmax.f32 %v3065, %v3071
    %3074 = vst.msk [vmem:[#allocation3 + $0x171] sm:$0xff] %vm2473, %v3072
    %3075 = vst.msk [vmem:[#allocation3 + $0x179] sm:$0x3f] %vm2754, %v3073
    %v3076 = vld [vmem:[#allocation2 + $0x498] sm:$0xff]
    %v3077 = vld [vmem:[#allocation2 + $0x4a0] sm:$0x3f]
    %v3078 = vld [vmem:[#allocation2 + $0x4a6] sm:$0xff]
    %v3079 = vld [vmem:[#allocation2 + $0x4ae] sm:$0x3f]
    %v3080 = vmax.f32 %v3076, %v3078
    %v3081 = vmax.f32 %v3077, %v3079
    %v3082 = vld [vmem:[#allocation2 + $0x4b4] sm:$0xff]
    %v3083 = vld [vmem:[#allocation2 + $0x4bc] sm:$0x3f]
    %v3084 = vld [vmem:[#allocation2 + $0x4c2] sm:$0xff]
    %v3085 = vld [vmem:[#allocation2 + $0x4ca] sm:$0x3f]
    %v3086 = vmax.f32 %v3082, %v3084
    %v3087 = vmax.f32 %v3083, %v3085
    %v3088 = vmax.f32 %v3080, %v3086
    %v3089 = vmax.f32 %v3081, %v3087
    %3090 = vst.msk [vmem:[#allocation3 + $0x181] sm:$0xff] %vm2473, %v3088
    %3091 = vst.msk [vmem:[#allocation3 + $0x189] sm:$0x3f] %vm2754, %v3089
    %v3092 = vld [vmem:[#allocation2 + $0x4d0] sm:$0xff]
    %v3093 = vld [vmem:[#allocation2 + $0x4d8] sm:$0x3f]
    %v3094 = vld [vmem:[#allocation2 + $0x4de] sm:$0xff]
    %v3095 = vld [vmem:[#allocation2 + $0x4e6] sm:$0x3f]
    %v3096 = vmax.f32 %v3092, %v3094
    %v3097 = vmax.f32 %v3093, %v3095
    %v3098 = vld [vmem:[#allocation2 + $0x4ec] sm:$0xff]
    %v3099 = vld [vmem:[#allocation2 + $0x4f4] sm:$0x3f]
    %v3100 = vld [vmem:[#allocation2 + $0x4fa] sm:$0xff]
    %v3101 = vld [vmem:[#allocation2 + $0x502] sm:$0x3f]
    %v3102 = vmax.f32 %v3098, %v3100
    %v3103 = vmax.f32 %v3099, %v3101
    %v3104 = vmax.f32 %v3096, %v3102
    %v3105 = vmax.f32 %v3097, %v3103
    %3106 = vst.msk [vmem:[#allocation3 + $0x191] sm:$0xff] %vm2473, %v3104
    %3107 = vst.msk [vmem:[#allocation3 + $0x199] sm:$0x3f] %vm2754, %v3105
    %v3108 = vld [vmem:[#allocation2 + $0x508] sm:$0xff]
    %v3109 = vld [vmem:[#allocation2 + $0x510] sm:$0x3f]
    %v3110 = vld [vmem:[#allocation2 + $0x516] sm:$0xff]
    %v3111 = vld [vmem:[#allocation2 + $0x51e] sm:$0x3f]
    %v3112 = vmax.f32 %v3108, %v3110
    %v3113 = vmax.f32 %v3109, %v3111
    %v3114 = vld [vmem:[#allocation2 + $0x524] sm:$0xff]
    %v3115 = vld [vmem:[#allocation2 + $0x52c] sm:$0x3f]
    %v3116 = vld [vmem:[#allocation2 + $0x532] sm:$0xff]
    %v3117 = vld [vmem:[#allocation2 + $0x53a] sm:$0x3f]
    %v3118 = vmax.f32 %v3114, %v3116
    %v3119 = vmax.f32 %v3115, %v3117
    %v3120 = vmax.f32 %v3112, %v3118
    %v3121 = vmax.f32 %v3113, %v3119
    %3122 = vst.msk [vmem:[#allocation3 + $0x1a1] sm:$0xff] %vm2473, %v3120
    %3123 = vst.msk [vmem:[#allocation3 + $0x1a9] sm:$0x3f] %vm2754, %v3121
    %v3124 = vld [vmem:[#allocation2 + $0x540] sm:$0xff]
    %v3125 = vld [vmem:[#allocation2 + $0x548] sm:$0x3f]
    %v3126 = vld [vmem:[#allocation2 + $0x54e] sm:$0xff]
    %v3127 = vld [vmem:[#allocation2 + $0x556] sm:$0x3f]
    %v3128 = vmax.f32 %v3124, %v3126
    %v3129 = vmax.f32 %v3125, %v3127
    %v3130 = vld [vmem:[#allocation2 + $0x55c] sm:$0xff]
    %v3131 = vld [vmem:[#allocation2 + $0x564] sm:$0x3f]
    %v3132 = vld [vmem:[#allocation2 + $0x56a] sm:$0xff]
    %v3133 = vld [vmem:[#allocation2 + $0x572] sm:$0x3f]
    %v3134 = vmax.f32 %v3130, %v3132
    %v3135 = vmax.f32 %v3131, %v3133
    %v3136 = vmax.f32 %v3128, %v3134
    %v3137 = vmax.f32 %v3129, %v3135
    %3138 = vst.msk [vmem:[#allocation3 + $0x1b1] sm:$0xff] %vm2473, %v3136
    %3139 = vst.msk [vmem:[#allocation3 + $0x1b9] sm:$0x3f] %vm2754, %v3137
    %v3140 = vld [vmem:[#allocation2 + $0x578] sm:$0xff]
    %v3141 = vld [vmem:[#allocation2 + $0x580] sm:$0x3f]
    %v3142 = vld [vmem:[#allocation2 + $0x586] sm:$0xff]
    %v3143 = vld [vmem:[#allocation2 + $0x58e] sm:$0x3f]
    %v3144 = vmax.f32 %v3140, %v3142
    %v3145 = vmax.f32 %v3141, %v3143
    %v3146 = vld [vmem:[#allocation2 + $0x594] sm:$0xff]
    %v3147 = vld [vmem:[#allocation2 + $0x59c] sm:$0x3f]
    %v3148 = vld [vmem:[#allocation2 + $0x5a2] sm:$0xff]
    %v3149 = vld [vmem:[#allocation2 + $0x5aa] sm:$0x3f]
    %v3150 = vmax.f32 %v3146, %v3148
    %v3151 = vmax.f32 %v3147, %v3149
    %v3152 = vmax.f32 %v3144, %v3150
    %v3153 = vmax.f32 %v3145, %v3151
    %3154 = vst.msk [vmem:[#allocation3 + $0x1c1] sm:$0xff] %vm2473, %v3152
    %3155 = vst.msk [vmem:[#allocation3 + $0x1c9] sm:$0x3f] %vm2754, %v3153
    %v3156 = vld [vmem:[#allocation2 + $0x5b0] sm:$0xff]
    %v3157 = vld [vmem:[#allocation2 + $0x5b8] sm:$0x3f]
    %v3158 = vld [vmem:[#allocation2 + $0x5be] sm:$0xff]
    %v3159 = vld [vmem:[#allocation2 + $0x5c6] sm:$0x3f]
    %v3160 = vmax.f32 %v3156, %v3158
    %v3161 = vmax.f32 %v3157, %v3159
    %v3162 = vld [vmem:[#allocation2 + $0x5cc] sm:$0xff]
    %v3163 = vld [vmem:[#allocation2 + $0x5d4] sm:$0x3f]
    %v3164 = vld [vmem:[#allocation2 + $0x5da] sm:$0xff]
    %v3165 = vld [vmem:[#allocation2 + $0x5e2] sm:$0x3f]
    %v3166 = vmax.f32 %v3162, %v3164
    %v3167 = vmax.f32 %v3163, %v3165
    %v3168 = vmax.f32 %v3160, %v3166
    %v3169 = vmax.f32 %v3161, %v3167
    %3170 = vst.msk [vmem:[#allocation3 + $0x1d1] sm:$0xff] %vm2473, %v3168
    %3171 = vst.msk [vmem:[#allocation3 + $0x1d9] sm:$0x3f] %vm2754, %v3169
    %v3172 = vld [vmem:[#allocation2 + $0x5e8] sm:$0xff]
    %v3173 = vld [vmem:[#allocation2 + $0x5f0] sm:$0x3f]
    %v3174 = vld [vmem:[#allocation2 + $0x5f6] sm:$0xff]
    %v3175 = vld [vmem:[#allocation2 + $0x5fe] sm:$0x3f]
    %v3176 = vmax.f32 %v3172, %v3174
    %v3177 = vmax.f32 %v3173, %v3175
    %v3178 = vld [vmem:[#allocation2 + $0x604] sm:$0xff]
    %v3179 = vld [vmem:[#allocation2 + $0x60c] sm:$0x3f]
    %v3180 = vld [vmem:[#allocation2 + $0x612] sm:$0xff]
    %v3181 = vld [vmem:[#allocation2 + $0x61a] sm:$0x3f]
    %v3182 = vmax.f32 %v3178, %v3180
    %v3183 = vmax.f32 %v3179, %v3181
    %v3184 = vmax.f32 %v3176, %v3182
    %v3185 = vmax.f32 %v3177, %v3183
    %3186 = vst.msk [vmem:[#allocation3 + $0x1e1] sm:$0xff] %vm2473, %v3184
    %3187 = vst.msk [vmem:[#allocation3 + $0x1e9] sm:$0x3f] %vm2754, %v3185
    %v3188 = vld [vmem:[#allocation3] sm:$0xff]
    %v3189 = vld [vmem:[#allocation3 + $0x8] sm:$0xff]
    %v3190 = vld [vmem:[#allocation3 + $0x10] sm:$0xff]
    %v3191 = vld [vmem:[#allocation3 + $0x18] sm:$0xff]
    %v3192 = vld [vmem:[#allocation3 + $0x20] sm:$0xff]
    %v3193 = vld [vmem:[#allocation3 + $0x28] sm:$0xff]
    %v3194 = vld [vmem:[#allocation3 + $0x30] sm:$0xff]
    %v3195 = vld [vmem:[#allocation3 + $0x38] sm:$0xff]
    %v3196 = vld [vmem:[#allocation3 + $0x40] sm:$0xff]
    %v3197 = vld [vmem:[#allocation3 + $0x48] sm:$0xff]
    %v3198 = vld [vmem:[#allocation3 + $0x50] sm:$0xff]
    %v3199 = vld [vmem:[#allocation3 + $0x58] sm:$0xff]
    %v3200 = vld [vmem:[#allocation3 + $0x60] sm:$0xff]
    %v3201 = vld [vmem:[#allocation3 + $0x68] sm:$0xff]
    %v3202 = vld [vmem:[#allocation3 + $0x70] sm:$0xff]
    %v3203 = vld [vmem:[#allocation3 + $0x78] sm:$0xff]
    %v3204 = vld [vmem:[#allocation3 + $0x80] sm:$0xff]
    %v3205 = vld [vmem:[#allocation3 + $0x88] sm:$0xff]
    %v3206 = vld [vmem:[#allocation3 + $0x90] sm:$0xff]
    %v3207 = vld [vmem:[#allocation3 + $0x98] sm:$0xff]
    %v3208 = vld [vmem:[#allocation3 + $0xa0] sm:$0xff]
    %v3209 = vld [vmem:[#allocation3 + $0xa8] sm:$0xff]
    %v3210 = vld [vmem:[#allocation3 + $0xb0] sm:$0xff]
    %v3211 = vld [vmem:[#allocation3 + $0xb8] sm:$0xff]
    %v3212 = vld [vmem:[#allocation3 + $0xc0] sm:$0xff]
    %v3213 = vld [vmem:[#allocation3 + $0xc8] sm:$0xff]
    %v3214 = vld [vmem:[#allocation3 + $0xd0] sm:$0xff]
    %v3215 = vld [vmem:[#allocation3 + $0xd8] sm:$0xff]
    %v3216 = vld [vmem:[#allocation3 + $0xe0] sm:$0xff]
    %v3217 = vld [vmem:[#allocation3 + $0xe8] sm:$0xff]
    %v3218 = vld [vmem:[#allocation3 + $0xf0] sm:$0xff]
    %v3219 = vld [vmem:[#allocation3 + $0xf8] sm:$0xff]
    %v3220 = vld [vmem:[#allocation3 + $0x100] sm:$0xff]
    %v3221 = vld [vmem:[#allocation3 + $0x108] sm:$0xff]
    %v3222 = vld [vmem:[#allocation3 + $0x110] sm:$0xff]
    %v3223 = vld [vmem:[#allocation3 + $0x118] sm:$0xff]
    %v3224 = vld [vmem:[#allocation3 + $0x120] sm:$0xff]
    %v3225 = vld [vmem:[#allocation3 + $0x128] sm:$0xff]
    %v3226 = vld [vmem:[#allocation3 + $0x130] sm:$0xff]
    %v3227 = vld [vmem:[#allocation3 + $0x138] sm:$0xff]
    %v3228 = vld [vmem:[#allocation3 + $0x140] sm:$0xff]
    %v3229 = vld [vmem:[#allocation3 + $0x148] sm:$0xff]
    %v3230 = vld [vmem:[#allocation3 + $0x150] sm:$0xff]
    %v3231 = vld [vmem:[#allocation3 + $0x158] sm:$0xff]
    %v3232 = vld [vmem:[#allocation3 + $0x160] sm:$0xff]
    %v3233 = vld [vmem:[#allocation3 + $0x168] sm:$0xff]
    %v3234 = vld [vmem:[#allocation3 + $0x170] sm:$0xff]
    %v3235 = vld [vmem:[#allocation3 + $0x178] sm:$0xff]
    %v3236 = vld [vmem:[#allocation3 + $0x180] sm:$0xff]
    %v3237 = vld [vmem:[#allocation3 + $0x188] sm:$0xff]
    %v3238 = vld [vmem:[#allocation3 + $0x190] sm:$0xff]
    %v3239 = vld [vmem:[#allocation3 + $0x198] sm:$0xff]
    %v3240 = vld [vmem:[#allocation3 + $0x1a0] sm:$0xff]
    %v3241 = vld [vmem:[#allocation3 + $0x1a8] sm:$0xff]
    %v3242 = vld [vmem:[#allocation3 + $0x1b0] sm:$0xff]
    %v3243 = vld [vmem:[#allocation3 + $0x1b8] sm:$0xff]
    %v3244 = vld [vmem:[#allocation3 + $0x1c0] sm:$0xff]
    %v3245 = vld [vmem:[#allocation3 + $0x1c8] sm:$0xff]
    %v3246 = vld [vmem:[#allocation3 + $0x1d0] sm:$0xff]
    %v3247 = vld [vmem:[#allocation3 + $0x1d8] sm:$0xff]
    %v3248 = vld [vmem:[#allocation3 + $0x1e0] sm:$0xff]
    %v3249 = vld [vmem:[#allocation3 + $0x1e8] sm:$0xff]
    %v3250 = vld [vmem:[#allocation3 + $0x1f0] sm:$0xff]
    %v3251 = vld [vmem:[#allocation3 + $0x1f8] sm:$0xff]
    %v3252 = vpack.c.bf16 %v3189, %v3188
    %v3253 = vpack.c.bf16 %v3191, %v3190
    %v3254 = vpack.c.bf16 %v3193, %v3192
    %v3255 = vpack.c.bf16 %v3195, %v3194
    %v3256 = vpack.c.bf16 %v3197, %v3196
    %v3257 = vpack.c.bf16 %v3199, %v3198
    %v3258 = vpack.c.bf16 %v3201, %v3200
    %v3259 = vpack.c.bf16 %v3203, %v3202
    %v3260 = vpack.c.bf16 %v3205, %v3204
    %v3261 = vpack.c.bf16 %v3207, %v3206
    %v3262 = vpack.c.bf16 %v3209, %v3208
    %v3263 = vpack.c.bf16 %v3211, %v3210
    %v3264 = vpack.c.bf16 %v3213, %v3212
    %v3265 = vpack.c.bf16 %v3215, %v3214
    %v3266 = vpack.c.bf16 %v3217, %v3216
    %v3267 = vpack.c.bf16 %v3219, %v3218
    %v3268 = vpack.c.bf16 %v3221, %v3220
    %v3269 = vpack.c.bf16 %v3223, %v3222
    %v3270 = vpack.c.bf16 %v3225, %v3224
    %v3271 = vpack.c.bf16 %v3227, %v3226
    %v3272 = vpack.c.bf16 %v3229, %v3228
    %v3273 = vpack.c.bf16 %v3231, %v3230
    %v3274 = vpack.c.bf16 %v3233, %v3232
    %v3275 = vpack.c.bf16 %v3235, %v3234
    %v3276 = vpack.c.bf16 %v3237, %v3236
    %v3277 = vpack.c.bf16 %v3239, %v3238
    %v3278 = vpack.c.bf16 %v3241, %v3240
    %v3279 = vpack.c.bf16 %v3243, %v3242
    %v3280 = vpack.c.bf16 %v3245, %v3244
    %v3281 = vpack.c.bf16 %v3247, %v3246
    %v3282 = vpack.c.bf16 %v3249, %v3248
    %v3283 = vpack.c.bf16 %v3251, %v3250
    %3284 = vst.msk [vmem:[#allocation4] sm:$0xff] %vm2473, %v3252
    %3285 = vst.msk [vmem:[#allocation4 + $0x18] sm:$0xff] %vm2473, %v3253
    %3286 = vst.msk [vmem:[#allocation4 + $0x30] sm:$0xff] %vm2473, %v3254
    %3287 = vst.msk [vmem:[#allocation4 + $0x48] sm:$0xff] %vm2473, %v3255
    %3288 = vst.msk [vmem:[#allocation4 + $0x60] sm:$0xff] %vm2473, %v3256
    %3289 = vst.msk [vmem:[#allocation4 + $0x78] sm:$0xff] %vm2473, %v3257
    %3290 = vst.msk [vmem:[#allocation4 + $0x90] sm:$0xff] %vm2473, %v3258
    %3291 = vst.msk [vmem:[#allocation4 + $0xa8] sm:$0xff] %vm2473, %v3259
    %3292 = vst.msk [vmem:[#allocation4 + $0xc0] sm:$0xff] %vm2473, %v3260
    %3293 = vst.msk [vmem:[#allocation4 + $0xd8] sm:$0xff] %vm2473, %v3261
    %3294 = vst.msk [vmem:[#allocation4 + $0xf0] sm:$0xff] %vm2473, %v3262
    %3295 = vst.msk [vmem:[#allocation4 + $0x108] sm:$0xff] %vm2473, %v3263
    %3296 = vst.msk [vmem:[#allocation4 + $0x120] sm:$0xff] %vm2473, %v3264
    %3297 = vst.msk [vmem:[#allocation4 + $0x138] sm:$0xff] %vm2473, %v3265
    %3298 = vst.msk [vmem:[#allocation4 + $0x150] sm:$0xff] %vm2473, %v3266
    %3299 = vst.msk [vmem:[#allocation4 + $0x168] sm:$0xff] %vm2473, %v3267
    %3300 = vst.msk [vmem:[#allocation4 + $0x180] sm:$0xff] %vm2473, %v3268
    %3301 = vst.msk [vmem:[#allocation4 + $0x198] sm:$0xff] %vm2473, %v3269
    %3302 = vst.msk [vmem:[#allocation4 + $0x1b0] sm:$0xff] %vm2473, %v3270
    %3303 = vst.msk [vmem:[#allocation4 + $0x1c8] sm:$0xff] %vm2473, %v3271
    %3304 = vst.msk [vmem:[#allocation4 + $0x1e0] sm:$0xff] %vm2473, %v3272
    %3305 = vst.msk [vmem:[#allocation4 + $0x1f8] sm:$0xff] %vm2473, %v3273
    %3306 = vst.msk [vmem:[#allocation4 + $0x210] sm:$0xff] %vm2473, %v3274
    %3307 = vst.msk [vmem:[#allocation4 + $0x228] sm:$0xff] %vm2473, %v3275
    %3308 = vst.msk [vmem:[#allocation4 + $0x240] sm:$0xff] %vm2473, %v3276
    %3309 = vst.msk [vmem:[#allocation4 + $0x258] sm:$0xff] %vm2473, %v3277
    %3310 = vst.msk [vmem:[#allocation4 + $0x270] sm:$0xff] %vm2473, %v3278
    %3311 = vst.msk [vmem:[#allocation4 + $0x288] sm:$0xff] %vm2473, %v3279
    %3312 = vst.msk [vmem:[#allocation4 + $0x2a0] sm:$0xff] %vm2473, %v3280
    %3313 = vst.msk [vmem:[#allocation4 + $0x2b8] sm:$0xff] %vm2473, %v3281
    %3314 = vst.msk [vmem:[#allocation4 + $0x2d0] sm:$0xff] %vm2473, %v3282
    %3315 = vst.msk [vmem:[#allocation4 + $0x2e8] sm:$0xff] %vm2473, %v3283
    %v3316 = vld [vmem:[#allocation3 + $0x1] sm:$0xff]
    %v3317 = vld [vmem:[#allocation3 + $0x9] sm:$0xff]
    %v3318 = vld [vmem:[#allocation3 + $0x11] sm:$0xff]
    %v3319 = vld [vmem:[#allocation3 + $0x19] sm:$0xff]
    %v3320 = vld [vmem:[#allocation3 + $0x21] sm:$0xff]
    %v3321 = vld [vmem:[#allocation3 + $0x29] sm:$0xff]
    %v3322 = vld [vmem:[#allocation3 + $0x31] sm:$0xff]
    %v3323 = vld [vmem:[#allocation3 + $0x39] sm:$0xff]
    %v3324 = vld [vmem:[#allocation3 + $0x41] sm:$0xff]
    %v3325 = vld [vmem:[#allocation3 + $0x49] sm:$0xff]
    %v3326 = vld [vmem:[#allocation3 + $0x51] sm:$0xff]
    %v3327 = vld [vmem:[#allocation3 + $0x59] sm:$0xff]
    %v3328 = vld [vmem:[#allocation3 + $0x61] sm:$0xff]
    %v3329 = vld [vmem:[#allocation3 + $0x69] sm:$0xff]
    %v3330 = vld [vmem:[#allocation3 + $0x71] sm:$0xff]
    %v3331 = vld [vmem:[#allocation3 + $0x79] sm:$0xff]
    %v3332 = vld [vmem:[#allocation3 + $0x81] sm:$0xff]
    %v3333 = vld [vmem:[#allocation3 + $0x89] sm:$0xff]
    %v3334 = vld [vmem:[#allocation3 + $0x91] sm:$0xff]
    %v3335 = vld [vmem:[#allocation3 + $0x99] sm:$0xff]
    %v3336 = vld [vmem:[#allocation3 + $0xa1] sm:$0xff]
    %v3337 = vld [vmem:[#allocation3 + $0xa9] sm:$0xff]
    %v3338 = vld [vmem:[#allocation3 + $0xb1] sm:$0xff]
    %v3339 = vld [vmem:[#allocation3 + $0xb9] sm:$0xff]
    %v3340 = vld [vmem:[#allocation3 + $0xc1] sm:$0xff]
    %v3341 = vld [vmem:[#allocation3 + $0xc9] sm:$0xff]
    %v3342 = vld [vmem:[#allocation3 + $0xd1] sm:$0xff]
    %v3343 = vld [vmem:[#allocation3 + $0xd9] sm:$0xff]
    %v3344 = vld [vmem:[#allocation3 + $0xe1] sm:$0xff]
    %v3345 = vld [vmem:[#allocation3 + $0xe9] sm:$0xff]
    %v3346 = vld [vmem:[#allocation3 + $0xf1] sm:$0xff]
    %v3347 = vld [vmem:[#allocation3 + $0xf9] sm:$0xff]
    %v3348 = vld [vmem:[#allocation3 + $0x101] sm:$0xff]
    %v3349 = vld [vmem:[#allocation3 + $0x109] sm:$0xff]
    %v3350 = vld [vmem:[#allocation3 + $0x111] sm:$0xff]
    %v3351 = vld [vmem:[#allocation3 + $0x119] sm:$0xff]
    %v3352 = vld [vmem:[#allocation3 + $0x121] sm:$0xff]
    %v3353 = vld [vmem:[#allocation3 + $0x129] sm:$0xff]
    %v3354 = vld [vmem:[#allocation3 + $0x131] sm:$0xff]
    %v3355 = vld [vmem:[#allocation3 + $0x139] sm:$0xff]
    %v3356 = vld [vmem:[#allocation3 + $0x141] sm:$0xff]
    %v3357 = vld [vmem:[#allocation3 + $0x149] sm:$0xff]
    %v3358 = vld [vmem:[#allocation3 + $0x151] sm:$0xff]
    %v3359 = vld [vmem:[#allocation3 + $0x159] sm:$0xff]
    %v3360 = vld [vmem:[#allocation3 + $0x161] sm:$0xff]
    %v3361 = vld [vmem:[#allocation3 + $0x169] sm:$0xff]
    %v3362 = vld [vmem:[#allocation3 + $0x171] sm:$0xff]
    %v3363 = vld [vmem:[#allocation3 + $0x179] sm:$0xff]
    %v3364 = vld [vmem:[#allocation3 + $0x181] sm:$0xff]
    %v3365 = vld [vmem:[#allocation3 + $0x189] sm:$0xff]
    %v3366 = vld [vmem:[#allocation3 + $0x191] sm:$0xff]
    %v3367 = vld [vmem:[#allocation3 + $0x199] sm:$0xff]
    %v3368 = vld [vmem:[#allocation3 + $0x1a1] sm:$0xff]
    %v3369 = vld [vmem:[#allocation3 + $0x1a9] sm:$0xff]
    %v3370 = vld [vmem:[#allocation3 + $0x1b1] sm:$0xff]
    %v3371 = vld [vmem:[#allocation3 + $0x1b9] sm:$0xff]
    %v3372 = vld [vmem:[#allocation3 + $0x1c1] sm:$0xff]
    %v3373 = vld [vmem:[#allocation3 + $0x1c9] sm:$0xff]
    %v3374 = vld [vmem:[#allocation3 + $0x1d1] sm:$0xff]
    %v3375 = vld [vmem:[#allocation3 + $0x1d9] sm:$0xff]
    %v3376 = vld [vmem:[#allocation3 + $0x1e1] sm:$0xff]
    %v3377 = vld [vmem:[#allocation3 + $0x1e9] sm:$0xff]
    %v3378 = vld [vmem:[#allocation3 + $0x1f1] sm:$0xff]
    %v3379 = vld [vmem:[#allocation3 + $0x1f9] sm:$0xff]
    %v3380 = vpack.c.bf16 %v3317, %v3316
    %v3381 = vpack.c.bf16 %v3319, %v3318
    %v3382 = vpack.c.bf16 %v3321, %v3320
    %v3383 = vpack.c.bf16 %v3323, %v3322
    %v3384 = vpack.c.bf16 %v3325, %v3324
    %v3385 = vpack.c.bf16 %v3327, %v3326
    %v3386 = vpack.c.bf16 %v3329, %v3328
    %v3387 = vpack.c.bf16 %v3331, %v3330
    %v3388 = vpack.c.bf16 %v3333, %v3332
    %v3389 = vpack.c.bf16 %v3335, %v3334
    %v3390 = vpack.c.bf16 %v3337, %v3336
    %v3391 = vpack.c.bf16 %v3339, %v3338
    %v3392 = vpack.c.bf16 %v3341, %v3340
    %v3393 = vpack.c.bf16 %v3343, %v3342
    %v3394 = vpack.c.bf16 %v3345, %v3344
    %v3395 = vpack.c.bf16 %v3347, %v3346
    %v3396 = vpack.c.bf16 %v3349, %v3348
    %v3397 = vpack.c.bf16 %v3351, %v3350
    %v3398 = vpack.c.bf16 %v3353, %v3352
    %v3399 = vpack.c.bf16 %v3355, %v3354
    %v3400 = vpack.c.bf16 %v3357, %v3356
    %v3401 = vpack.c.bf16 %v3359, %v3358
    %v3402 = vpack.c.bf16 %v3361, %v3360
    %v3403 = vpack.c.bf16 %v3363, %v3362
    %v3404 = vpack.c.bf16 %v3365, %v3364
    %v3405 = vpack.c.bf16 %v3367, %v3366
    %v3406 = vpack.c.bf16 %v3369, %v3368
    %v3407 = vpack.c.bf16 %v3371, %v3370
    %v3408 = vpack.c.bf16 %v3373, %v3372
    %v3409 = vpack.c.bf16 %v3375, %v3374
    %v3410 = vpack.c.bf16 %v3377, %v3376
    %v3411 = vpack.c.bf16 %v3379, %v3378
    %3444 = vrot.lane.b32.xlu0 %v3380, 32
    %v3445 = vpop.permute.xlu0 %3444
    %3446 = vrot.lane.b32.xlu0 %v3381, 32
    %v3447 = vpop.permute.xlu0 %3446
    %3448 = vrot.lane.b32.xlu0 %v3382, 32
    %v3449 = vpop.permute.xlu0 %3448
    %3450 = vrot.lane.b32.xlu0 %v3383, 32
    %v3451 = vpop.permute.xlu0 %3450
    %3452 = vrot.lane.b32.xlu0 %v3384, 32
    %v3453 = vpop.permute.xlu0 %3452
    %3454 = vrot.lane.b32.xlu0 %v3385, 32
    %v3455 = vpop.permute.xlu0 %3454
    %3456 = vrot.lane.b32.xlu0 %v3386, 32
    %v3457 = vpop.permute.xlu0 %3456
    %3458 = vrot.lane.b32.xlu0 %v3387, 32
    %v3459 = vpop.permute.xlu0 %3458
    %3460 = vrot.lane.b32.xlu0 %v3388, 32
    %v3461 = vpop.permute.xlu0 %3460
    %3462 = vrot.lane.b32.xlu0 %v3389, 32
    %v3463 = vpop.permute.xlu0 %3462
    %3464 = vrot.lane.b32.xlu0 %v3390, 32
    %v3465 = vpop.permute.xlu0 %3464
    %3466 = vrot.lane.b32.xlu0 %v3391, 32
    %v3467 = vpop.permute.xlu0 %3466
    %3468 = vrot.lane.b32.xlu0 %v3392, 32
    %v3469 = vpop.permute.xlu0 %3468
    %3470 = vrot.lane.b32.xlu0 %v3393, 32
    %v3471 = vpop.permute.xlu0 %3470
    %3472 = vrot.lane.b32.xlu0 %v3394, 32
    %v3473 = vpop.permute.xlu0 %3472
    %3474 = vrot.lane.b32.xlu0 %v3395, 32
    %v3475 = vpop.permute.xlu0 %3474
    %3476 = vrot.lane.b32.xlu0 %v3396, 32
    %v3477 = vpop.permute.xlu0 %3476
    %3478 = vrot.lane.b32.xlu0 %v3397, 32
    %v3479 = vpop.permute.xlu0 %3478
    %3480 = vrot.lane.b32.xlu0 %v3398, 32
    %v3481 = vpop.permute.xlu0 %3480
    %3482 = vrot.lane.b32.xlu0 %v3399, 32
    %v3483 = vpop.permute.xlu0 %3482
    %3484 = vrot.lane.b32.xlu0 %v3400, 32
    %v3485 = vpop.permute.xlu0 %3484
    %3486 = vrot.lane.b32.xlu0 %v3401, 32
    %v3487 = vpop.permute.xlu0 %3486
    %3488 = vrot.lane.b32.xlu0 %v3402, 32
    %v3489 = vpop.permute.xlu0 %3488
    %3490 = vrot.lane.b32.xlu0 %v3403, 32
    %v3491 = vpop.permute.xlu0 %3490
    %3492 = vrot.lane.b32.xlu0 %v3404, 32
    %v3493 = vpop.permute.xlu0 %3492
    %3494 = vrot.lane.b32.xlu0 %v3405, 32
    %v3495 = vpop.permute.xlu0 %3494
    %3496 = vrot.lane.b32.xlu0 %v3406, 32
    %v3497 = vpop.permute.xlu0 %3496
    %3498 = vrot.lane.b32.xlu0 %v3407, 32
    %v3499 = vpop.permute.xlu0 %3498
    %3500 = vrot.lane.b32.xlu0 %v3408, 32
    %v3501 = vpop.permute.xlu0 %3500
    %3502 = vrot.lane.b32.xlu0 %v3409, 32
    %v3503 = vpop.permute.xlu0 %3502
    %3504 = vrot.lane.b32.xlu0 %v3410, 32
    %v3505 = vpop.permute.xlu0 %3504
    %3506 = vrot.lane.b32.xlu0 %v3411, 32
    %v3507 = vpop.permute.xlu0 %3506
    %vm3540 = vcmask 523520
    %3541 = vst.msk [vmem:[#allocation4] sm:$0xff] %vm3540, %v3445
    %3542 = vst.msk [vmem:[#allocation4 + $0x18] sm:$0xff] %vm3540, %v3447
    %3543 = vst.msk [vmem:[#allocation4 + $0x30] sm:$0xff] %vm3540, %v3449
    %3544 = vst.msk [vmem:[#allocation4 + $0x48] sm:$0xff] %vm3540, %v3451
    %3545 = vst.msk [vmem:[#allocation4 + $0x60] sm:$0xff] %vm3540, %v3453
    %3546 = vst.msk [vmem:[#allocation4 + $0x78] sm:$0xff] %vm3540, %v3455
    %3547 = vst.msk [vmem:[#allocation4 + $0x90] sm:$0xff] %vm3540, %v3457
    %3548 = vst.msk [vmem:[#allocation4 + $0xa8] sm:$0xff] %vm3540, %v3459
    %3549 = vst.msk [vmem:[#allocation4 + $0xc0] sm:$0xff] %vm3540, %v3461
    %3550 = vst.msk [vmem:[#allocation4 + $0xd8] sm:$0xff] %vm3540, %v3463
    %3551 = vst.msk [vmem:[#allocation4 + $0xf0] sm:$0xff] %vm3540, %v3465
    %3552 = vst.msk [vmem:[#allocation4 + $0x108] sm:$0xff] %vm3540, %v3467
    %3553 = vst.msk [vmem:[#allocation4 + $0x120] sm:$0xff] %vm3540, %v3469
    %3554 = vst.msk [vmem:[#allocation4 + $0x138] sm:$0xff] %vm3540, %v3471
    %3555 = vst.msk [vmem:[#allocation4 + $0x150] sm:$0xff] %vm3540, %v3473
    %3556 = vst.msk [vmem:[#allocation4 + $0x168] sm:$0xff] %vm3540, %v3475
    %3557 = vst.msk [vmem:[#allocation4 + $0x180] sm:$0xff] %vm3540, %v3477
    %3558 = vst.msk [vmem:[#allocation4 + $0x198] sm:$0xff] %vm3540, %v3479
    %3559 = vst.msk [vmem:[#allocation4 + $0x1b0] sm:$0xff] %vm3540, %v3481
    %3560 = vst.msk [vmem:[#allocation4 + $0x1c8] sm:$0xff] %vm3540, %v3483
    %3561 = vst.msk [vmem:[#allocation4 + $0x1e0] sm:$0xff] %vm3540, %v3485
    %3562 = vst.msk [vmem:[#allocation4 + $0x1f8] sm:$0xff] %vm3540, %v3487
    %3563 = vst.msk [vmem:[#allocation4 + $0x210] sm:$0xff] %vm3540, %v3489
    %3564 = vst.msk [vmem:[#allocation4 + $0x228] sm:$0xff] %vm3540, %v3491
    %3565 = vst.msk [vmem:[#allocation4 + $0x240] sm:$0xff] %vm3540, %v3493
    %3566 = vst.msk [vmem:[#allocation4 + $0x258] sm:$0xff] %vm3540, %v3495
    %3567 = vst.msk [vmem:[#allocation4 + $0x270] sm:$0xff] %vm3540, %v3497
    %3568 = vst.msk [vmem:[#allocation4 + $0x288] sm:$0xff] %vm3540, %v3499
    %3569 = vst.msk [vmem:[#allocation4 + $0x2a0] sm:$0xff] %vm3540, %v3501
    %3570 = vst.msk [vmem:[#allocation4 + $0x2b8] sm:$0xff] %vm3540, %v3503
    %3571 = vst.msk [vmem:[#allocation4 + $0x2d0] sm:$0xff] %vm3540, %v3505
    %3572 = vst.msk [vmem:[#allocation4 + $0x2e8] sm:$0xff] %vm3540, %v3507
    %v3573 = vld [vmem:[#allocation3 + $0x2] sm:$0xff]
    %v3574 = vld [vmem:[#allocation3 + $0xa] sm:$0xff]
    %v3575 = vld [vmem:[#allocation3 + $0x12] sm:$0xff]
    %v3576 = vld [vmem:[#allocation3 + $0x1a] sm:$0xff]
    %v3577 = vld [vmem:[#allocation3 + $0x22] sm:$0xff]
    %v3578 = vld [vmem:[#allocation3 + $0x2a] sm:$0xff]
    %v3579 = vld [vmem:[#allocation3 + $0x32] sm:$0xff]
    %v3580 = vld [vmem:[#allocation3 + $0x3a] sm:$0xff]
    %v3581 = vld [vmem:[#allocation3 + $0x42] sm:$0xff]
    %v3582 = vld [vmem:[#allocation3 + $0x4a] sm:$0xff]
    %v3583 = vld [vmem:[#allocation3 + $0x52] sm:$0xff]
    %v3584 = vld [vmem:[#allocation3 + $0x5a] sm:$0xff]
    %v3585 = vld [vmem:[#allocation3 + $0x62] sm:$0xff]
    %v3586 = vld [vmem:[#allocation3 + $0x6a] sm:$0xff]
    %v3587 = vld [vmem:[#allocation3 + $0x72] sm:$0xff]
    %v3588 = vld [vmem:[#allocation3 + $0x7a] sm:$0xff]
    %v3589 = vld [vmem:[#allocation3 + $0x82] sm:$0xff]
    %v3590 = vld [vmem:[#allocation3 + $0x8a] sm:$0xff]
    %v3591 = vld [vmem:[#allocation3 + $0x92] sm:$0xff]
    %v3592 = vld [vmem:[#allocation3 + $0x9a] sm:$0xff]
    %v3593 = vld [vmem:[#allocation3 + $0xa2] sm:$0xff]
    %v3594 = vld [vmem:[#allocation3 + $0xaa] sm:$0xff]
    %v3595 = vld [vmem:[#allocation3 + $0xb2] sm:$0xff]
    %v3596 = vld [vmem:[#allocation3 + $0xba] sm:$0xff]
    %v3597 = vld [vmem:[#allocation3 + $0xc2] sm:$0xff]
    %v3598 = vld [vmem:[#allocation3 + $0xca] sm:$0xff]
    %v3599 = vld [vmem:[#allocation3 + $0xd2] sm:$0xff]
    %v3600 = vld [vmem:[#allocation3 + $0xda] sm:$0xff]
    %v3601 = vld [vmem:[#allocation3 + $0xe2] sm:$0xff]
    %v3602 = vld [vmem:[#allocation3 + $0xea] sm:$0xff]
    %v3603 = vld [vmem:[#allocation3 + $0xf2] sm:$0xff]
    %v3604 = vld [vmem:[#allocation3 + $0xfa] sm:$0xff]
    %v3605 = vld [vmem:[#allocation3 + $0x102] sm:$0xff]
    %v3606 = vld [vmem:[#allocation3 + $0x10a] sm:$0xff]
    %v3607 = vld [vmem:[#allocation3 + $0x112] sm:$0xff]
    %v3608 = vld [vmem:[#allocation3 + $0x11a] sm:$0xff]
    %v3609 = vld [vmem:[#allocation3 + $0x122] sm:$0xff]
    %v3610 = vld [vmem:[#allocation3 + $0x12a] sm:$0xff]
    %v3611 = vld [vmem:[#allocation3 + $0x132] sm:$0xff]
    %v3612 = vld [vmem:[#allocation3 + $0x13a] sm:$0xff]
    %v3613 = vld [vmem:[#allocation3 + $0x142] sm:$0xff]
    %v3614 = vld [vmem:[#allocation3 + $0x14a] sm:$0xff]
    %v3615 = vld [vmem:[#allocation3 + $0x152] sm:$0xff]
    %v3616 = vld [vmem:[#allocation3 + $0x15a] sm:$0xff]
    %v3617 = vld [vmem:[#allocation3 + $0x162] sm:$0xff]
    %v3618 = vld [vmem:[#allocation3 + $0x16a] sm:$0xff]
    %v3619 = vld [vmem:[#allocation3 + $0x172] sm:$0xff]
    %v3620 = vld [vmem:[#allocation3 + $0x17a] sm:$0xff]
    %v3621 = vld [vmem:[#allocation3 + $0x182] sm:$0xff]
    %v3622 = vld [vmem:[#allocation3 + $0x18a] sm:$0xff]
    %v3623 = vld [vmem:[#allocation3 + $0x192] sm:$0xff]
    %v3624 = vld [vmem:[#allocation3 + $0x19a] sm:$0xff]
    %v3625 = vld [vmem:[#allocation3 + $0x1a2] sm:$0xff]
    %v3626 = vld [vmem:[#allocation3 + $0x1aa] sm:$0xff]
    %v3627 = vld [vmem:[#allocation3 + $0x1b2] sm:$0xff]
    %v3628 = vld [vmem:[#allocation3 + $0x1ba] sm:$0xff]
    %v3629 = vld [vmem:[#allocation3 + $0x1c2] sm:$0xff]
    %v3630 = vld [vmem:[#allocation3 + $0x1ca] sm:$0xff]
    %v3631 = vld [vmem:[#allocation3 + $0x1d2] sm:$0xff]
    %v3632 = vld [vmem:[#allocation3 + $0x1da] sm:$0xff]
    %v3633 = vld [vmem:[#allocation3 + $0x1e2] sm:$0xff]
    %v3634 = vld [vmem:[#allocation3 + $0x1ea] sm:$0xff]
    %v3635 = vld [vmem:[#allocation3 + $0x1f2] sm:$0xff]
    %v3636 = vld [vmem:[#allocation3 + $0x1fa] sm:$0xff]
    %v3637 = vpack.c.bf16 %v3574, %v3573
    %v3638 = vpack.c.bf16 %v3576, %v3575
    %v3639 = vpack.c.bf16 %v3578, %v3577
    %v3640 = vpack.c.bf16 %v3580, %v3579
    %v3641 = vpack.c.bf16 %v3582, %v3581
    %v3642 = vpack.c.bf16 %v3584, %v3583
    %v3643 = vpack.c.bf16 %v3586, %v3585
    %v3644 = vpack.c.bf16 %v3588, %v3587
    %v3645 = vpack.c.bf16 %v3590, %v3589
    %v3646 = vpack.c.bf16 %v3592, %v3591
    %v3647 = vpack.c.bf16 %v3594, %v3593
    %v3648 = vpack.c.bf16 %v3596, %v3595
    %v3649 = vpack.c.bf16 %v3598, %v3597
    %v3650 = vpack.c.bf16 %v3600, %v3599
    %v3651 = vpack.c.bf16 %v3602, %v3601
    %v3652 = vpack.c.bf16 %v3604, %v3603
    %v3653 = vpack.c.bf16 %v3606, %v3605
    %v3654 = vpack.c.bf16 %v3608, %v3607
    %v3655 = vpack.c.bf16 %v3610, %v3609
    %v3656 = vpack.c.bf16 %v3612, %v3611
    %v3657 = vpack.c.bf16 %v3614, %v3613
    %v3658 = vpack.c.bf16 %v3616, %v3615
    %v3659 = vpack.c.bf16 %v3618, %v3617
    %v3660 = vpack.c.bf16 %v3620, %v3619
    %v3661 = vpack.c.bf16 %v3622, %v3621
    %v3662 = vpack.c.bf16 %v3624, %v3623
    %v3663 = vpack.c.bf16 %v3626, %v3625
    %v3664 = vpack.c.bf16 %v3628, %v3627
    %v3665 = vpack.c.bf16 %v3630, %v3629
    %v3666 = vpack.c.bf16 %v3632, %v3631
    %v3667 = vpack.c.bf16 %v3634, %v3633
    %v3668 = vpack.c.bf16 %v3636, %v3635
    %3701 = vrot.lane.b32.xlu0 %v3637, 64
    %v3702 = vpop.permute.xlu0 %3701
    %3703 = vrot.lane.b32.xlu0 %v3638, 64
    %v3704 = vpop.permute.xlu0 %3703
    %3705 = vrot.lane.b32.xlu0 %v3639, 64
    %v3706 = vpop.permute.xlu0 %3705
    %3707 = vrot.lane.b32.xlu0 %v3640, 64
    %v3708 = vpop.permute.xlu0 %3707
    %3709 = vrot.lane.b32.xlu0 %v3641, 64
    %v3710 = vpop.permute.xlu0 %3709
    %3711 = vrot.lane.b32.xlu0 %v3642, 64
    %v3712 = vpop.permute.xlu0 %3711
    %3713 = vrot.lane.b32.xlu0 %v3643, 64
    %v3714 = vpop.permute.xlu0 %3713
    %3715 = vrot.lane.b32.xlu0 %v3644, 64
    %v3716 = vpop.permute.xlu0 %3715
    %3717 = vrot.lane.b32.xlu0 %v3645, 64
    %v3718 = vpop.permute.xlu0 %3717
    %3719 = vrot.lane.b32.xlu0 %v3646, 64
    %v3720 = vpop.permute.xlu0 %3719
    %3721 = vrot.lane.b32.xlu0 %v3647, 64
    %v3722 = vpop.permute.xlu0 %3721
    %3723 = vrot.lane.b32.xlu0 %v3648, 64
    %v3724 = vpop.permute.xlu0 %3723
    %3725 = vrot.lane.b32.xlu0 %v3649, 64
    %v3726 = vpop.permute.xlu0 %3725
    %3727 = vrot.lane.b32.xlu0 %v3650, 64
    %v3728 = vpop.permute.xlu0 %3727
    %3729 = vrot.lane.b32.xlu0 %v3651, 64
    %v3730 = vpop.permute.xlu0 %3729
    %3731 = vrot.lane.b32.xlu0 %v3652, 64
    %v3732 = vpop.permute.xlu0 %3731
    %3733 = vrot.lane.b32.xlu0 %v3653, 64
    %v3734 = vpop.permute.xlu0 %3733
    %3735 = vrot.lane.b32.xlu0 %v3654, 64
    %v3736 = vpop.permute.xlu0 %3735
    %3737 = vrot.lane.b32.xlu0 %v3655, 64
    %v3738 = vpop.permute.xlu0 %3737
    %3739 = vrot.lane.b32.xlu0 %v3656, 64
    %v3740 = vpop.permute.xlu0 %3739
    %3741 = vrot.lane.b32.xlu0 %v3657, 64
    %v3742 = vpop.permute.xlu0 %3741
    %3743 = vrot.lane.b32.xlu0 %v3658, 64
    %v3744 = vpop.permute.xlu0 %3743
    %3745 = vrot.lane.b32.xlu0 %v3659, 64
    %v3746 = vpop.permute.xlu0 %3745
    %3747 = vrot.lane.b32.xlu0 %v3660, 64
    %v3748 = vpop.permute.xlu0 %3747
    %3749 = vrot.lane.b32.xlu0 %v3661, 64
    %v3750 = vpop.permute.xlu0 %3749
    %3751 = vrot.lane.b32.xlu0 %v3662, 64
    %v3752 = vpop.permute.xlu0 %3751
    %3753 = vrot.lane.b32.xlu0 %v3663, 64
    %v3754 = vpop.permute.xlu0 %3753
    %3755 = vrot.lane.b32.xlu0 %v3664, 64
    %v3756 = vpop.permute.xlu0 %3755
    %3757 = vrot.lane.b32.xlu0 %v3665, 64
    %v3758 = vpop.permute.xlu0 %3757
    %3759 = vrot.lane.b32.xlu0 %v3666, 64
    %v3760 = vpop.permute.xlu0 %3759
    %3761 = vrot.lane.b32.xlu0 %v3667, 64
    %v3762 = vpop.permute.xlu0 %3761
    %3763 = vrot.lane.b32.xlu0 %v3668, 64
    %v3764 = vpop.permute.xlu0 %3763
    %vm3797 = vcmask 785920
    %3798 = vst.msk [vmem:[#allocation4] sm:$0xff] %vm3797, %v3702
    %3799 = vst.msk [vmem:[#allocation4 + $0x18] sm:$0xff] %vm3797, %v3704
    %3800 = vst.msk [vmem:[#allocation4 + $0x30] sm:$0xff] %vm3797, %v3706
    %3801 = vst.msk [vmem:[#allocation4 + $0x48] sm:$0xff] %vm3797, %v3708
    %3802 = vst.msk [vmem:[#allocation4 + $0x60] sm:$0xff] %vm3797, %v3710
    %3803 = vst.msk [vmem:[#allocation4 + $0x78] sm:$0xff] %vm3797, %v3712
    %3804 = vst.msk [vmem:[#allocation4 + $0x90] sm:$0xff] %vm3797, %v3714
    %3805 = vst.msk [vmem:[#allocation4 + $0xa8] sm:$0xff] %vm3797, %v3716
    %3806 = vst.msk [vmem:[#allocation4 + $0xc0] sm:$0xff] %vm3797, %v3718
    %3807 = vst.msk [vmem:[#allocation4 + $0xd8] sm:$0xff] %vm3797, %v3720
    %3808 = vst.msk [vmem:[#allocation4 + $0xf0] sm:$0xff] %vm3797, %v3722
    %3809 = vst.msk [vmem:[#allocation4 + $0x108] sm:$0xff] %vm3797, %v3724
    %3810 = vst.msk [vmem:[#allocation4 + $0x120] sm:$0xff] %vm3797, %v3726
    %3811 = vst.msk [vmem:[#allocation4 + $0x138] sm:$0xff] %vm3797, %v3728
    %3812 = vst.msk [vmem:[#allocation4 + $0x150] sm:$0xff] %vm3797, %v3730
    %3813 = vst.msk [vmem:[#allocation4 + $0x168] sm:$0xff] %vm3797, %v3732
    %3814 = vst.msk [vmem:[#allocation4 + $0x180] sm:$0xff] %vm3797, %v3734
    %3815 = vst.msk [vmem:[#allocation4 + $0x198] sm:$0xff] %vm3797, %v3736
    %3816 = vst.msk [vmem:[#allocation4 + $0x1b0] sm:$0xff] %vm3797, %v3738
    %3817 = vst.msk [vmem:[#allocation4 + $0x1c8] sm:$0xff] %vm3797, %v3740
    %3818 = vst.msk [vmem:[#allocation4 + $0x1e0] sm:$0xff] %vm3797, %v3742
    %3819 = vst.msk [vmem:[#allocation4 + $0x1f8] sm:$0xff] %vm3797, %v3744
    %3820 = vst.msk [vmem:[#allocation4 + $0x210] sm:$0xff] %vm3797, %v3746
    %3821 = vst.msk [vmem:[#allocation4 + $0x228] sm:$0xff] %vm3797, %v3748
    %3822 = vst.msk [vmem:[#allocation4 + $0x240] sm:$0xff] %vm3797, %v3750
    %3823 = vst.msk [vmem:[#allocation4 + $0x258] sm:$0xff] %vm3797, %v3752
    %3824 = vst.msk [vmem:[#allocation4 + $0x270] sm:$0xff] %vm3797, %v3754
    %3825 = vst.msk [vmem:[#allocation4 + $0x288] sm:$0xff] %vm3797, %v3756
    %3826 = vst.msk [vmem:[#allocation4 + $0x2a0] sm:$0xff] %vm3797, %v3758
    %3827 = vst.msk [vmem:[#allocation4 + $0x2b8] sm:$0xff] %vm3797, %v3760
    %3828 = vst.msk [vmem:[#allocation4 + $0x2d0] sm:$0xff] %vm3797, %v3762
    %3829 = vst.msk [vmem:[#allocation4 + $0x2e8] sm:$0xff] %vm3797, %v3764
    %v3830 = vld [vmem:[#allocation3 + $0x10] sm:$0xff]
    %v3831 = vld [vmem:[#allocation3 + $0x18] sm:$0xff]
    %v3832 = vld [vmem:[#allocation3 + $0x20] sm:$0xff]
    %v3833 = vld [vmem:[#allocation3 + $0x28] sm:$0xff]
    %v3834 = vld [vmem:[#allocation3 + $0x30] sm:$0xff]
    %v3835 = vld [vmem:[#allocation3 + $0x38] sm:$0xff]
    %v3836 = vld [vmem:[#allocation3 + $0x40] sm:$0xff]
    %v3837 = vld [vmem:[#allocation3 + $0x48] sm:$0xff]
    %v3838 = vld [vmem:[#allocation3 + $0x50] sm:$0xff]
    %v3839 = vld [vmem:[#allocation3 + $0x58] sm:$0xff]
    %v3840 = vld [vmem:[#allocation3 + $0x60] sm:$0xff]
    %v3841 = vld [vmem:[#allocation3 + $0x68] sm:$0xff]
    %v3842 = vld [vmem:[#allocation3 + $0x70] sm:$0xff]
    %v3843 = vld [vmem:[#allocation3 + $0x78] sm:$0xff]
    %v3844 = vld [vmem:[#allocation3 + $0x80] sm:$0xff]
    %v3845 = vld [vmem:[#allocation3 + $0x88] sm:$0xff]
    %v3846 = vld [vmem:[#allocation3 + $0x90] sm:$0xff]
    %v3847 = vld [vmem:[#allocation3 + $0x98] sm:$0xff]
    %v3848 = vld [vmem:[#allocation3 + $0xa0] sm:$0xff]
    %v3849 = vld [vmem:[#allocation3 + $0xa8] sm:$0xff]
    %v3850 = vld [vmem:[#allocation3 + $0xb0] sm:$0xff]
    %v3851 = vld [vmem:[#allocation3 + $0xb8] sm:$0xff]
    %v3852 = vld [vmem:[#allocation3 + $0xc0] sm:$0xff]
    %v3853 = vld [vmem:[#allocation3 + $0xc8] sm:$0xff]
    %v3854 = vld [vmem:[#allocation3 + $0xd0] sm:$0xff]
    %v3855 = vld [vmem:[#allocation3 + $0xd8] sm:$0xff]
    %v3856 = vld [vmem:[#allocation3 + $0xe0] sm:$0xff]
    %v3857 = vld [vmem:[#allocation3 + $0xe8] sm:$0xff]
    %v3858 = vld [vmem:[#allocation3 + $0xf0] sm:$0xff]
    %v3859 = vld [vmem:[#allocation3 + $0xf8] sm:$0xff]
    %v3860 = vld [vmem:[#allocation3 + $0x100] sm:$0xff]
    %v3861 = vld [vmem:[#allocation3 + $0x108] sm:$0xff]
    %v3862 = vld [vmem:[#allocation3 + $0x110] sm:$0xff]
    %v3863 = vld [vmem:[#allocation3 + $0x118] sm:$0xff]
    %v3864 = vld [vmem:[#allocation3 + $0x120] sm:$0xff]
    %v3865 = vld [vmem:[#allocation3 + $0x128] sm:$0xff]
    %v3866 = vld [vmem:[#allocation3 + $0x130] sm:$0xff]
    %v3867 = vld [vmem:[#allocation3 + $0x138] sm:$0xff]
    %v3868 = vld [vmem:[#allocation3 + $0x140] sm:$0xff]
    %v3869 = vld [vmem:[#allocation3 + $0x148] sm:$0xff]
    %v3870 = vld [vmem:[#allocation3 + $0x150] sm:$0xff]
    %v3871 = vld [vmem:[#allocation3 + $0x158] sm:$0xff]
    %v3872 = vld [vmem:[#allocation3 + $0x160] sm:$0xff]
    %v3873 = vld [vmem:[#allocation3 + $0x168] sm:$0xff]
    %v3874 = vld [vmem:[#allocation3 + $0x170] sm:$0xff]
    %v3875 = vld [vmem:[#allocation3 + $0x178] sm:$0xff]
    %v3876 = vld [vmem:[#allocation3 + $0x180] sm:$0xff]
    %v3877 = vld [vmem:[#allocation3 + $0x188] sm:$0xff]
    %v3878 = vld [vmem:[#allocation3 + $0x190] sm:$0xff]
    %v3879 = vld [vmem:[#allocation3 + $0x198] sm:$0xff]
    %v3880 = vld [vmem:[#allocation3 + $0x1a0] sm:$0xff]
    %v3881 = vld [vmem:[#allocation3 + $0x1a8] sm:$0xff]
    %v3882 = vld [vmem:[#allocation3 + $0x1b0] sm:$0xff]
    %v3883 = vld [vmem:[#allocation3 + $0x1b8] sm:$0xff]
    %v3884 = vld [vmem:[#allocation3 + $0x1c0] sm:$0xff]
    %v3885 = vld [vmem:[#allocation3 + $0x1c8] sm:$0xff]
    %v3886 = vld [vmem:[#allocation3 + $0x1d0] sm:$0xff]
    %v3887 = vld [vmem:[#allocation3 + $0x1d8] sm:$0xff]
    %v3888 = vld [vmem:[#allocation3 + $0x1e0] sm:$0xff]
    %v3889 = vld [vmem:[#allocation3 + $0x1e8] sm:$0xff]
    %v3890 = vld [vmem:[#allocation3 + $0x1f0] sm:$0xff]
    %v3891 = vld [vmem:[#allocation3 + $0x1f8] sm:$0xff]
    %v3892 = vld [vmem:[#allocation3 + $0x200] sm:$0xff]
    %v3893 = vld [vmem:[#allocation3 + $0x208] sm:$0xff]
    %v3894 = vpack.c.bf16 %v3831, %v3830
    %v3895 = vpack.c.bf16 %v3833, %v3832
    %v3896 = vpack.c.bf16 %v3835, %v3834
    %v3897 = vpack.c.bf16 %v3837, %v3836
    %v3898 = vpack.c.bf16 %v3839, %v3838
    %v3899 = vpack.c.bf16 %v3841, %v3840
    %v3900 = vpack.c.bf16 %v3843, %v3842
    %v3901 = vpack.c.bf16 %v3845, %v3844
    %v3902 = vpack.c.bf16 %v3847, %v3846
    %v3903 = vpack.c.bf16 %v3849, %v3848
    %v3904 = vpack.c.bf16 %v3851, %v3850
    %v3905 = vpack.c.bf16 %v3853, %v3852
    %v3906 = vpack.c.bf16 %v3855, %v3854
    %v3907 = vpack.c.bf16 %v3857, %v3856
    %v3908 = vpack.c.bf16 %v3859, %v3858
    %v3909 = vpack.c.bf16 %v3861, %v3860
    %v3910 = vpack.c.bf16 %v3863, %v3862
    %v3911 = vpack.c.bf16 %v3865, %v3864
    %v3912 = vpack.c.bf16 %v3867, %v3866
    %v3913 = vpack.c.bf16 %v3869, %v3868
    %v3914 = vpack.c.bf16 %v3871, %v3870
    %v3915 = vpack.c.bf16 %v3873, %v3872
    %v3916 = vpack.c.bf16 %v3875, %v3874
    %v3917 = vpack.c.bf16 %v3877, %v3876
    %v3918 = vpack.c.bf16 %v3879, %v3878
    %v3919 = vpack.c.bf16 %v3881, %v3880
    %v3920 = vpack.c.bf16 %v3883, %v3882
    %v3921 = vpack.c.bf16 %v3885, %v3884
    %v3922 = vpack.c.bf16 %v3887, %v3886
    %v3923 = vpack.c.bf16 %v3889, %v3888
    %v3924 = vpack.c.bf16 %v3891, %v3890
    %v3925 = vpack.c.bf16 %v3893, %v3892
    %3958 = vrot.lane.b32.xlu0 %v3894, 96
    %v3959 = vpop.permute.xlu0 %3958
    %3960 = vrot.lane.b32.xlu0 %v3895, 96
    %v3961 = vpop.permute.xlu0 %3960
    %3962 = vrot.lane.b32.xlu0 %v3896, 96
    %v3963 = vpop.permute.xlu0 %3962
    %3964 = vrot.lane.b32.xlu0 %v3897, 96
    %v3965 = vpop.permute.xlu0 %3964
    %3966 = vrot.lane.b32.xlu0 %v3898, 96
    %v3967 = vpop.permute.xlu0 %3966
    %3968 = vrot.lane.b32.xlu0 %v3899, 96
    %v3969 = vpop.permute.xlu0 %3968
    %3970 = vrot.lane.b32.xlu0 %v3900, 96
    %v3971 = vpop.permute.xlu0 %3970
    %3972 = vrot.lane.b32.xlu0 %v3901, 96
    %v3973 = vpop.permute.xlu0 %3972
    %3974 = vrot.lane.b32.xlu0 %v3902, 96
    %v3975 = vpop.permute.xlu0 %3974
    %3976 = vrot.lane.b32.xlu0 %v3903, 96
    %v3977 = vpop.permute.xlu0 %3976
    %3978 = vrot.lane.b32.xlu0 %v3904, 96
    %v3979 = vpop.permute.xlu0 %3978
    %3980 = vrot.lane.b32.xlu0 %v3905, 96
    %v3981 = vpop.permute.xlu0 %3980
    %3982 = vrot.lane.b32.xlu0 %v3906, 96
    %v3983 = vpop.permute.xlu0 %3982
    %3984 = vrot.lane.b32.xlu0 %v3907, 96
    %v3985 = vpop.permute.xlu0 %3984
    %3986 = vrot.lane.b32.xlu0 %v3908, 96
    %v3987 = vpop.permute.xlu0 %3986
    %3988 = vrot.lane.b32.xlu0 %v3909, 96
    %v3989 = vpop.permute.xlu0 %3988
    %3990 = vrot.lane.b32.xlu0 %v3910, 96
    %v3991 = vpop.permute.xlu0 %3990
    %3992 = vrot.lane.b32.xlu0 %v3911, 96
    %v3993 = vpop.permute.xlu0 %3992
    %3994 = vrot.lane.b32.xlu0 %v3912, 96
    %v3995 = vpop.permute.xlu0 %3994
    %3996 = vrot.lane.b32.xlu0 %v3913, 96
    %v3997 = vpop.permute.xlu0 %3996
    %3998 = vrot.lane.b32.xlu0 %v3914, 96
    %v3999 = vpop.permute.xlu0 %3998
    %4000 = vrot.lane.b32.xlu0 %v3915, 96
    %v4001 = vpop.permute.xlu0 %4000
    %4002 = vrot.lane.b32.xlu0 %v3916, 96
    %v4003 = vpop.permute.xlu0 %4002
    %4004 = vrot.lane.b32.xlu0 %v3917, 96
    %v4005 = vpop.permute.xlu0 %4004
    %4006 = vrot.lane.b32.xlu0 %v3918, 96
    %v4007 = vpop.permute.xlu0 %4006
    %4008 = vrot.lane.b32.xlu0 %v3919, 96
    %v4009 = vpop.permute.xlu0 %4008
    %4010 = vrot.lane.b32.xlu0 %v3920, 96
    %v4011 = vpop.permute.xlu0 %4010
    %4012 = vrot.lane.b32.xlu0 %v3921, 96
    %v4013 = vpop.permute.xlu0 %4012
    %4014 = vrot.lane.b32.xlu0 %v3922, 96
    %v4015 = vpop.permute.xlu0 %4014
    %4016 = vrot.lane.b32.xlu0 %v3923, 96
    %v4017 = vpop.permute.xlu0 %4016
    %4018 = vrot.lane.b32.xlu0 %v3924, 96
    %v4019 = vpop.permute.xlu0 %4018
    %4020 = vrot.lane.b32.xlu0 %v3925, 96
    %v4021 = vpop.permute.xlu0 %4020
    %vm4054 = vcmask 1048320
    %4055 = vst.msk [vmem:[#allocation4] sm:$0xff] %vm4054, %v3959
    %4056 = vst.msk [vmem:[#allocation4 + $0x18] sm:$0xff] %vm4054, %v3961
    %4057 = vst.msk [vmem:[#allocation4 + $0x30] sm:$0xff] %vm4054, %v3963
    %4058 = vst.msk [vmem:[#allocation4 + $0x48] sm:$0xff] %vm4054, %v3965
    %4059 = vst.msk [vmem:[#allocation4 + $0x60] sm:$0xff] %vm4054, %v3967
    %4060 = vst.msk [vmem:[#allocation4 + $0x78] sm:$0xff] %vm4054, %v3969
    %4061 = vst.msk [vmem:[#allocation4 + $0x90] sm:$0xff] %vm4054, %v3971
    %4062 = vst.msk [vmem:[#allocation4 + $0xa8] sm:$0xff] %vm4054, %v3973
    %4063 = vst.msk [vmem:[#allocation4 + $0xc0] sm:$0xff] %vm4054, %v3975
    %4064 = vst.msk [vmem:[#allocation4 + $0xd8] sm:$0xff] %vm4054, %v3977
    %4065 = vst.msk [vmem:[#allocation4 + $0xf0] sm:$0xff] %vm4054, %v3979
    %4066 = vst.msk [vmem:[#allocation4 + $0x108] sm:$0xff] %vm4054, %v3981
    %4067 = vst.msk [vmem:[#allocation4 + $0x120] sm:$0xff] %vm4054, %v3983
    %4068 = vst.msk [vmem:[#allocation4 + $0x138] sm:$0xff] %vm4054, %v3985
    %4069 = vst.msk [vmem:[#allocation4 + $0x150] sm:$0xff] %vm4054, %v3987
    %4070 = vst.msk [vmem:[#allocation4 + $0x168] sm:$0xff] %vm4054, %v3989
    %4071 = vst.msk [vmem:[#allocation4 + $0x180] sm:$0xff] %vm4054, %v3991
    %4072 = vst.msk [vmem:[#allocation4 + $0x198] sm:$0xff] %vm4054, %v3993
    %4073 = vst.msk [vmem:[#allocation4 + $0x1b0] sm:$0xff] %vm4054, %v3995
    %4074 = vst.msk [vmem:[#allocation4 + $0x1c8] sm:$0xff] %vm4054, %v3997
    %4075 = vst.msk [vmem:[#allocation4 + $0x1e0] sm:$0xff] %vm4054, %v3999
    %4076 = vst.msk [vmem:[#allocation4 + $0x1f8] sm:$0xff] %vm4054, %v4001
    %4077 = vst.msk [vmem:[#allocation4 + $0x210] sm:$0xff] %vm4054, %v4003
    %4078 = vst.msk [vmem:[#allocation4 + $0x228] sm:$0xff] %vm4054, %v4005
    %4079 = vst.msk [vmem:[#allocation4 + $0x240] sm:$0xff] %vm4054, %v4007
    %4080 = vst.msk [vmem:[#allocation4 + $0x258] sm:$0xff] %vm4054, %v4009
    %4081 = vst.msk [vmem:[#allocation4 + $0x270] sm:$0xff] %vm4054, %v4011
    %4082 = vst.msk [vmem:[#allocation4 + $0x288] sm:$0xff] %vm4054, %v4013
    %4083 = vst.msk [vmem:[#allocation4 + $0x2a0] sm:$0xff] %vm4054, %v4015
    %4084 = vst.msk [vmem:[#allocation4 + $0x2b8] sm:$0xff] %vm4054, %v4017
    %4085 = vst.msk [vmem:[#allocation4 + $0x2d0] sm:$0xff] %vm4054, %v4019
    %4086 = vst.msk [vmem:[#allocation4 + $0x2e8] sm:$0xff] %vm4054, %v4021
    %v4087 = vld [vmem:[#allocation3 + $0x11] sm:$0xff]
    %v4088 = vld [vmem:[#allocation3 + $0x19] sm:$0xff]
    %v4089 = vld [vmem:[#allocation3 + $0x21] sm:$0xff]
    %v4090 = vld [vmem:[#allocation3 + $0x29] sm:$0xff]
    %v4091 = vld [vmem:[#allocation3 + $0x31] sm:$0xff]
    %v4092 = vld [vmem:[#allocation3 + $0x39] sm:$0xff]
    %v4093 = vld [vmem:[#allocation3 + $0x41] sm:$0xff]
    %v4094 = vld [vmem:[#allocation3 + $0x49] sm:$0xff]
    %v4095 = vld [vmem:[#allocation3 + $0x51] sm:$0xff]
    %v4096 = vld [vmem:[#allocation3 + $0x59] sm:$0xff]
    %v4097 = vld [vmem:[#allocation3 + $0x61] sm:$0xff]
    %v4098 = vld [vmem:[#allocation3 + $0x69] sm:$0xff]
    %v4099 = vld [vmem:[#allocation3 + $0x71] sm:$0xff]
    %v4100 = vld [vmem:[#allocation3 + $0x79] sm:$0xff]
    %v4101 = vld [vmem:[#allocation3 + $0x81] sm:$0xff]
    %v4102 = vld [vmem:[#allocation3 + $0x89] sm:$0xff]
    %v4103 = vld [vmem:[#allocation3 + $0x91] sm:$0xff]
    %v4104 = vld [vmem:[#allocation3 + $0x99] sm:$0xff]
    %v4105 = vld [vmem:[#allocation3 + $0xa1] sm:$0xff]
    %v4106 = vld [vmem:[#allocation3 + $0xa9] sm:$0xff]
    %v4107 = vld [vmem:[#allocation3 + $0xb1] sm:$0xff]
    %v4108 = vld [vmem:[#allocation3 + $0xb9] sm:$0xff]
    %v4109 = vld [vmem:[#allocation3 + $0xc1] sm:$0xff]
    %v4110 = vld [vmem:[#allocation3 + $0xc9] sm:$0xff]
    %v4111 = vld [vmem:[#allocation3 + $0xd1] sm:$0xff]
    %v4112 = vld [vmem:[#allocation3 + $0xd9] sm:$0xff]
    %v4113 = vld [vmem:[#allocation3 + $0xe1] sm:$0xff]
    %v4114 = vld [vmem:[#allocation3 + $0xe9] sm:$0xff]
    %v4115 = vld [vmem:[#allocation3 + $0xf1] sm:$0xff]
    %v4116 = vld [vmem:[#allocation3 + $0xf9] sm:$0xff]
    %v4117 = vld [vmem:[#allocation3 + $0x101] sm:$0xff]
    %v4118 = vld [vmem:[#allocation3 + $0x109] sm:$0xff]
    %v4119 = vld [vmem:[#allocation3 + $0x111] sm:$0xff]
    %v4120 = vld [vmem:[#allocation3 + $0x119] sm:$0xff]
    %v4121 = vld [vmem:[#allocation3 + $0x121] sm:$0xff]
    %v4122 = vld [vmem:[#allocation3 + $0x129] sm:$0xff]
    %v4123 = vld [vmem:[#allocation3 + $0x131] sm:$0xff]
    %v4124 = vld [vmem:[#allocation3 + $0x139] sm:$0xff]
    %v4125 = vld [vmem:[#allocation3 + $0x141] sm:$0xff]
    %v4126 = vld [vmem:[#allocation3 + $0x149] sm:$0xff]
    %v4127 = vld [vmem:[#allocation3 + $0x151] sm:$0xff]
    %v4128 = vld [vmem:[#allocation3 + $0x159] sm:$0xff]
    %v4129 = vld [vmem:[#allocation3 + $0x161] sm:$0xff]
    %v4130 = vld [vmem:[#allocation3 + $0x169] sm:$0xff]
    %v4131 = vld [vmem:[#allocation3 + $0x171] sm:$0xff]
    %v4132 = vld [vmem:[#allocation3 + $0x179] sm:$0xff]
    %v4133 = vld [vmem:[#allocation3 + $0x181] sm:$0xff]
    %v4134 = vld [vmem:[#allocation3 + $0x189] sm:$0xff]
    %v4135 = vld [vmem:[#allocation3 + $0x191] sm:$0xff]
    %v4136 = vld [vmem:[#allocation3 + $0x199] sm:$0xff]
    %v4137 = vld [vmem:[#allocation3 + $0x1a1] sm:$0xff]
    %v4138 = vld [vmem:[#allocation3 + $0x1a9] sm:$0xff]
    %v4139 = vld [vmem:[#allocation3 + $0x1b1] sm:$0xff]
    %v4140 = vld [vmem:[#allocation3 + $0x1b9] sm:$0xff]
    %v4141 = vld [vmem:[#allocation3 + $0x1c1] sm:$0xff]
    %v4142 = vld [vmem:[#allocation3 + $0x1c9] sm:$0xff]
    %v4143 = vld [vmem:[#allocation3 + $0x1d1] sm:$0xff]
    %v4144 = vld [vmem:[#allocation3 + $0x1d9] sm:$0xff]
    %v4145 = vld [vmem:[#allocation3 + $0x1e1] sm:$0xff]
    %v4146 = vld [vmem:[#allocation3 + $0x1e9] sm:$0xff]
    %v4147 = vld [vmem:[#allocation3 + $0x1f1] sm:$0xff]
    %v4148 = vld [vmem:[#allocation3 + $0x1f9] sm:$0xff]
    %v4149 = vld [vmem:[#allocation3 + $0x201] sm:$0xff]
    %v4150 = vld [vmem:[#allocation3 + $0x209] sm:$0xff]
    %v4151 = vpack.c.bf16 %v4088, %v4087
    %v4152 = vpack.c.bf16 %v4090, %v4089
    %v4153 = vpack.c.bf16 %v4092, %v4091
    %v4154 = vpack.c.bf16 %v4094, %v4093
    %v4155 = vpack.c.bf16 %v4096, %v4095
    %v4156 = vpack.c.bf16 %v4098, %v4097
    %v4157 = vpack.c.bf16 %v4100, %v4099
    %v4158 = vpack.c.bf16 %v4102, %v4101
    %v4159 = vpack.c.bf16 %v4104, %v4103
    %v4160 = vpack.c.bf16 %v4106, %v4105
    %v4161 = vpack.c.bf16 %v4108, %v4107
    %v4162 = vpack.c.bf16 %v4110, %v4109
    %v4163 = vpack.c.bf16 %v4112, %v4111
    %v4164 = vpack.c.bf16 %v4114, %v4113
    %v4165 = vpack.c.bf16 %v4116, %v4115
    %v4166 = vpack.c.bf16 %v4118, %v4117
    %v4167 = vpack.c.bf16 %v4120, %v4119
    %v4168 = vpack.c.bf16 %v4122, %v4121
    %v4169 = vpack.c.bf16 %v4124, %v4123
    %v4170 = vpack.c.bf16 %v4126, %v4125
    %v4171 = vpack.c.bf16 %v4128, %v4127
    %v4172 = vpack.c.bf16 %v4130, %v4129
    %v4173 = vpack.c.bf16 %v4132, %v4131
    %v4174 = vpack.c.bf16 %v4134, %v4133
    %v4175 = vpack.c.bf16 %v4136, %v4135
    %v4176 = vpack.c.bf16 %v4138, %v4137
    %v4177 = vpack.c.bf16 %v4140, %v4139
    %v4178 = vpack.c.bf16 %v4142, %v4141
    %v4179 = vpack.c.bf16 %v4144, %v4143
    %v4180 = vpack.c.bf16 %v4146, %v4145
    %v4181 = vpack.c.bf16 %v4148, %v4147
    %v4182 = vpack.c.bf16 %v4150, %v4149
    %4183 = vst.msk [vmem:[#allocation4 + $0x8] sm:$0xff] %vm2473, %v4151
    %4184 = vst.msk [vmem:[#allocation4 + $0x20] sm:$0xff] %vm2473, %v4152
    %4185 = vst.msk [vmem:[#allocation4 + $0x38] sm:$0xff] %vm2473, %v4153
    %4186 = vst.msk [vmem:[#allocation4 + $0x50] sm:$0xff] %vm2473, %v4154
    %4187 = vst.msk [vmem:[#allocation4 + $0x68] sm:$0xff] %vm2473, %v4155
    %4188 = vst.msk [vmem:[#allocation4 + $0x80] sm:$0xff] %vm2473, %v4156
    %4189 = vst.msk [vmem:[#allocation4 + $0x98] sm:$0xff] %vm2473, %v4157
    %4190 = vst.msk [vmem:[#allocation4 + $0xb0] sm:$0xff] %vm2473, %v4158
    %4191 = vst.msk [vmem:[#allocation4 + $0xc8] sm:$0xff] %vm2473, %v4159
    %4192 = vst.msk [vmem:[#allocation4 + $0xe0] sm:$0xff] %vm2473, %v4160
    %4193 = vst.msk [vmem:[#allocation4 + $0xf8] sm:$0xff] %vm2473, %v4161
    %4194 = vst.msk [vmem:[#allocation4 + $0x110] sm:$0xff] %vm2473, %v4162
    %4195 = vst.msk [vmem:[#allocation4 + $0x128] sm:$0xff] %vm2473, %v4163
    %4196 = vst.msk [vmem:[#allocation4 + $0x140] sm:$0xff] %vm2473, %v4164
    %4197 = vst.msk [vmem:[#allocation4 + $0x158] sm:$0xff] %vm2473, %v4165
    %4198 = vst.msk [vmem:[#allocation4 + $0x170] sm:$0xff] %vm2473, %v4166
    %4199 = vst.msk [vmem:[#allocation4 + $0x188] sm:$0xff] %vm2473, %v4167
    %4200 = vst.msk [vmem:[#allocation4 + $0x1a0] sm:$0xff] %vm2473, %v4168
    %4201 = vst.msk [vmem:[#allocation4 + $0x1b8] sm:$0xff] %vm2473, %v4169
    %4202 = vst.msk [vmem:[#allocation4 + $0x1d0] sm:$0xff] %vm2473, %v4170
    %4203 = vst.msk [vmem:[#allocation4 + $0x1e8] sm:$0xff] %vm2473, %v4171
    %4204 = vst.msk [vmem:[#allocation4 + $0x200] sm:$0xff] %vm2473, %v4172
    %4205 = vst.msk [vmem:[#allocation4 + $0x218] sm:$0xff] %vm2473, %v4173
    %4206 = vst.msk [vmem:[#allocation4 + $0x230] sm:$0xff] %vm2473, %v4174
    %4207 = vst.msk [vmem:[#allocation4 + $0x248] sm:$0xff] %vm2473, %v4175
    %4208 = vst.msk [vmem:[#allocation4 + $0x260] sm:$0xff] %vm2473, %v4176
    %4209 = vst.msk [vmem:[#allocation4 + $0x278] sm:$0xff] %vm2473, %v4177
    %4210 = vst.msk [vmem:[#allocation4 + $0x290] sm:$0xff] %vm2473, %v4178
    %4211 = vst.msk [vmem:[#allocation4 + $0x2a8] sm:$0xff] %vm2473, %v4179
    %4212 = vst.msk [vmem:[#allocation4 + $0x2c0] sm:$0xff] %vm2473, %v4180
    %4213 = vst.msk [vmem:[#allocation4 + $0x2d8] sm:$0xff] %vm2473, %v4181
    %4214 = vst.msk [vmem:[#allocation4 + $0x2f0] sm:$0xff] %vm2473, %v4182
    %v4215 = vld [vmem:[#allocation3 + $0x12] sm:$0xff]
    %v4216 = vld [vmem:[#allocation3 + $0x1a] sm:$0xff]
    %v4217 = vld [vmem:[#allocation3 + $0x22] sm:$0xff]
    %v4218 = vld [vmem:[#allocation3 + $0x2a] sm:$0xff]
    %v4219 = vld [vmem:[#allocation3 + $0x32] sm:$0xff]
    %v4220 = vld [vmem:[#allocation3 + $0x3a] sm:$0xff]
    %v4221 = vld [vmem:[#allocation3 + $0x42] sm:$0xff]
    %v4222 = vld [vmem:[#allocation3 + $0x4a] sm:$0xff]
    %v4223 = vld [vmem:[#allocation3 + $0x52] sm:$0xff]
    %v4224 = vld [vmem:[#allocation3 + $0x5a] sm:$0xff]
    %v4225 = vld [vmem:[#allocation3 + $0x62] sm:$0xff]
    %v4226 = vld [vmem:[#allocation3 + $0x6a] sm:$0xff]
    %v4227 = vld [vmem:[#allocation3 + $0x72] sm:$0xff]
    %v4228 = vld [vmem:[#allocation3 + $0x7a] sm:$0xff]
    %v4229 = vld [vmem:[#allocation3 + $0x82] sm:$0xff]
    %v4230 = vld [vmem:[#allocation3 + $0x8a] sm:$0xff]
    %v4231 = vld [vmem:[#allocation3 + $0x92] sm:$0xff]
    %v4232 = vld [vmem:[#allocation3 + $0x9a] sm:$0xff]
    %v4233 = vld [vmem:[#allocation3 + $0xa2] sm:$0xff]
    %v4234 = vld [vmem:[#allocation3 + $0xaa] sm:$0xff]
    %v4235 = vld [vmem:[#allocation3 + $0xb2] sm:$0xff]
    %v4236 = vld [vmem:[#allocation3 + $0xba] sm:$0xff]
    %v4237 = vld [vmem:[#allocation3 + $0xc2] sm:$0xff]
    %v4238 = vld [vmem:[#allocation3 + $0xca] sm:$0xff]
    %v4239 = vld [vmem:[#allocation3 + $0xd2] sm:$0xff]
    %v4240 = vld [vmem:[#allocation3 + $0xda] sm:$0xff]
    %v4241 = vld [vmem:[#allocation3 + $0xe2] sm:$0xff]
    %v4242 = vld [vmem:[#allocation3 + $0xea] sm:$0xff]
    %v4243 = vld [vmem:[#allocation3 + $0xf2] sm:$0xff]
    %v4244 = vld [vmem:[#allocation3 + $0xfa] sm:$0xff]
    %v4245 = vld [vmem:[#allocation3 + $0x102] sm:$0xff]
    %v4246 = vld [vmem:[#allocation3 + $0x10a] sm:$0xff]
    %v4247 = vld [vmem:[#allocation3 + $0x112] sm:$0xff]
    %v4248 = vld [vmem:[#allocation3 + $0x11a] sm:$0xff]
    %v4249 = vld [vmem:[#allocation3 + $0x122] sm:$0xff]
    %v4250 = vld [vmem:[#allocation3 + $0x12a] sm:$0xff]
    %v4251 = vld [vmem:[#allocation3 + $0x132] sm:$0xff]
    %v4252 = vld [vmem:[#allocation3 + $0x13a] sm:$0xff]
    %v4253 = vld [vmem:[#allocation3 + $0x142] sm:$0xff]
    %v4254 = vld [vmem:[#allocation3 + $0x14a] sm:$0xff]
    %v4255 = vld [vmem:[#allocation3 + $0x152] sm:$0xff]
    %v4256 = vld [vmem:[#allocation3 + $0x15a] sm:$0xff]
    %v4257 = vld [vmem:[#allocation3 + $0x162] sm:$0xff]
    %v4258 = vld [vmem:[#allocation3 + $0x16a] sm:$0xff]
    %v4259 = vld [vmem:[#allocation3 + $0x172] sm:$0xff]
    %v4260 = vld [vmem:[#allocation3 + $0x17a] sm:$0xff]
    %v4261 = vld [vmem:[#allocation3 + $0x182] sm:$0xff]
    %v4262 = vld [vmem:[#allocation3 + $0x18a] sm:$0xff]
    %v4263 = vld [vmem:[#allocation3 + $0x192] sm:$0xff]
    %v4264 = vld [vmem:[#allocation3 + $0x19a] sm:$0xff]
    %v4265 = vld [vmem:[#allocation3 + $0x1a2] sm:$0xff]
    %v4266 = vld [vmem:[#allocation3 + $0x1aa] sm:$0xff]
    %v4267 = vld [vmem:[#allocation3 + $0x1b2] sm:$0xff]
    %v4268 = vld [vmem:[#allocation3 + $0x1ba] sm:$0xff]
    %v4269 = vld [vmem:[#allocation3 + $0x1c2] sm:$0xff]
    %v4270 = vld [vmem:[#allocation3 + $0x1ca] sm:$0xff]
    %v4271 = vld [vmem:[#allocation3 + $0x1d2] sm:$0xff]
    %v4272 = vld [vmem:[#allocation3 + $0x1da] sm:$0xff]
    %v4273 = vld [vmem:[#allocation3 + $0x1e2] sm:$0xff]
    %v4274 = vld [vmem:[#allocation3 + $0x1ea] sm:$0xff]
    %v4275 = vld [vmem:[#allocation3 + $0x1f2] sm:$0xff]
    %v4276 = vld [vmem:[#allocation3 + $0x1fa] sm:$0xff]
    %v4277 = vld [vmem:[#allocation3 + $0x202] sm:$0xff]
    %v4278 = vld [vmem:[#allocation3 + $0x20a] sm:$0xff]
    %v4279 = vpack.c.bf16 %v4216, %v4215
    %v4280 = vpack.c.bf16 %v4218, %v4217
    %v4281 = vpack.c.bf16 %v4220, %v4219
    %v4282 = vpack.c.bf16 %v4222, %v4221
    %v4283 = vpack.c.bf16 %v4224, %v4223
    %v4284 = vpack.c.bf16 %v4226, %v4225
    %v4285 = vpack.c.bf16 %v4228, %v4227
    %v4286 = vpack.c.bf16 %v4230, %v4229
    %v4287 = vpack.c.bf16 %v4232, %v4231
    %v4288 = vpack.c.bf16 %v4234, %v4233
    %v4289 = vpack.c.bf16 %v4236, %v4235
    %v4290 = vpack.c.bf16 %v4238, %v4237
    %v4291 = vpack.c.bf16 %v4240, %v4239
    %v4292 = vpack.c.bf16 %v4242, %v4241
    %v4293 = vpack.c.bf16 %v4244, %v4243
    %v4294 = vpack.c.bf16 %v4246, %v4245
    %v4295 = vpack.c.bf16 %v4248, %v4247
    %v4296 = vpack.c.bf16 %v4250, %v4249
    %v4297 = vpack.c.bf16 %v4252, %v4251
    %v4298 = vpack.c.bf16 %v4254, %v4253
    %v4299 = vpack.c.bf16 %v4256, %v4255
    %v4300 = vpack.c.bf16 %v4258, %v4257
    %v4301 = vpack.c.bf16 %v4260, %v4259
    %v4302 = vpack.c.bf16 %v4262, %v4261
    %v4303 = vpack.c.bf16 %v4264, %v4263
    %v4304 = vpack.c.bf16 %v4266, %v4265
    %v4305 = vpack.c.bf16 %v4268, %v4267
    %v4306 = vpack.c.bf16 %v4270, %v4269
    %v4307 = vpack.c.bf16 %v4272, %v4271
    %v4308 = vpack.c.bf16 %v4274, %v4273
    %v4309 = vpack.c.bf16 %v4276, %v4275
    %v4310 = vpack.c.bf16 %v4278, %v4277
    %4343 = vrot.lane.b32.xlu0 %v4279, 32
    %v4344 = vpop.permute.xlu0 %4343
    %4345 = vrot.lane.b32.xlu0 %v4280, 32
    %v4346 = vpop.permute.xlu0 %4345
    %4347 = vrot.lane.b32.xlu0 %v4281, 32
    %v4348 = vpop.permute.xlu0 %4347
    %4349 = vrot.lane.b32.xlu0 %v4282, 32
    %v4350 = vpop.permute.xlu0 %4349
    %4351 = vrot.lane.b32.xlu0 %v4283, 32
    %v4352 = vpop.permute.xlu0 %4351
    %4353 = vrot.lane.b32.xlu0 %v4284, 32
    %v4354 = vpop.permute.xlu0 %4353
    %4355 = vrot.lane.b32.xlu0 %v4285, 32
    %v4356 = vpop.permute.xlu0 %4355
    %4357 = vrot.lane.b32.xlu0 %v4286, 32
    %v4358 = vpop.permute.xlu0 %4357
    %4359 = vrot.lane.b32.xlu0 %v4287, 32
    %v4360 = vpop.permute.xlu0 %4359
    %4361 = vrot.lane.b32.xlu0 %v4288, 32
    %v4362 = vpop.permute.xlu0 %4361
    %4363 = vrot.lane.b32.xlu0 %v4289, 32
    %v4364 = vpop.permute.xlu0 %4363
    %4365 = vrot.lane.b32.xlu0 %v4290, 32
    %v4366 = vpop.permute.xlu0 %4365
    %4367 = vrot.lane.b32.xlu0 %v4291, 32
    %v4368 = vpop.permute.xlu0 %4367
    %4369 = vrot.lane.b32.xlu0 %v4292, 32
    %v4370 = vpop.permute.xlu0 %4369
    %4371 = vrot.lane.b32.xlu0 %v4293, 32
    %v4372 = vpop.permute.xlu0 %4371
    %4373 = vrot.lane.b32.xlu0 %v4294, 32
    %v4374 = vpop.permute.xlu0 %4373
    %4375 = vrot.lane.b32.xlu0 %v4295, 32
    %v4376 = vpop.permute.xlu0 %4375
    %4377 = vrot.lane.b32.xlu0 %v4296, 32
    %v4378 = vpop.permute.xlu0 %4377
    %4379 = vrot.lane.b32.xlu0 %v4297, 32
    %v4380 = vpop.permute.xlu0 %4379
    %4381 = vrot.lane.b32.xlu0 %v4298, 32
    %v4382 = vpop.permute.xlu0 %4381
    %4383 = vrot.lane.b32.xlu0 %v4299, 32
    %v4384 = vpop.permute.xlu0 %4383
    %4385 = vrot.lane.b32.xlu0 %v4300, 32
    %v4386 = vpop.permute.xlu0 %4385
    %4387 = vrot.lane.b32.xlu0 %v4301, 32
    %v4388 = vpop.permute.xlu0 %4387
    %4389 = vrot.lane.b32.xlu0 %v4302, 32
    %v4390 = vpop.permute.xlu0 %4389
    %4391 = vrot.lane.b32.xlu0 %v4303, 32
    %v4392 = vpop.permute.xlu0 %4391
    %4393 = vrot.lane.b32.xlu0 %v4304, 32
    %v4394 = vpop.permute.xlu0 %4393
    %4395 = vrot.lane.b32.xlu0 %v4305, 32
    %v4396 = vpop.permute.xlu0 %4395
    %4397 = vrot.lane.b32.xlu0 %v4306, 32
    %v4398 = vpop.permute.xlu0 %4397
    %4399 = vrot.lane.b32.xlu0 %v4307, 32
    %v4400 = vpop.permute.xlu0 %4399
    %4401 = vrot.lane.b32.xlu0 %v4308, 32
    %v4402 = vpop.permute.xlu0 %4401
    %4403 = vrot.lane.b32.xlu0 %v4309, 32
    %v4404 = vpop.permute.xlu0 %4403
    %4405 = vrot.lane.b32.xlu0 %v4310, 32
    %v4406 = vpop.permute.xlu0 %4405
    %4439 = vst.msk [vmem:[#allocation4 + $0x8] sm:$0xff] %vm3540, %v4344
    %4440 = vst.msk [vmem:[#allocation4 + $0x20] sm:$0xff] %vm3540, %v4346
    %4441 = vst.msk [vmem:[#allocation4 + $0x38] sm:$0xff] %vm3540, %v4348
    %4442 = vst.msk [vmem:[#allocation4 + $0x50] sm:$0xff] %vm3540, %v4350
    %4443 = vst.msk [vmem:[#allocation4 + $0x68] sm:$0xff] %vm3540, %v4352
    %4444 = vst.msk [vmem:[#allocation4 + $0x80] sm:$0xff] %vm3540, %v4354
    %4445 = vst.msk [vmem:[#allocation4 + $0x98] sm:$0xff] %vm3540, %v4356
    %4446 = vst.msk [vmem:[#allocation4 + $0xb0] sm:$0xff] %vm3540, %v4358
    %4447 = vst.msk [vmem:[#allocation4 + $0xc8] sm:$0xff] %vm3540, %v4360
    %4448 = vst.msk [vmem:[#allocation4 + $0xe0] sm:$0xff] %vm3540, %v4362
    %4449 = vst.msk [vmem:[#allocation4 + $0xf8] sm:$0xff] %vm3540, %v4364
    %4450 = vst.msk [vmem:[#allocation4 + $0x110] sm:$0xff] %vm3540, %v4366
    %4451 = vst.msk [vmem:[#allocation4 + $0x128] sm:$0xff] %vm3540, %v4368
    %4452 = vst.msk [vmem:[#allocation4 + $0x140] sm:$0xff] %vm3540, %v4370
    %4453 = vst.msk [vmem:[#allocation4 + $0x158] sm:$0xff] %vm3540, %v4372
    %4454 = vst.msk [vmem:[#allocation4 + $0x170] sm:$0xff] %vm3540, %v4374
    %4455 = vst.msk [vmem:[#allocation4 + $0x188] sm:$0xff] %vm3540, %v4376
    %4456 = vst.msk [vmem:[#allocation4 + $0x1a0] sm:$0xff] %vm3540, %v4378
    %4457 = vst.msk [vmem:[#allocation4 + $0x1b8] sm:$0xff] %vm3540, %v4380
    %4458 = vst.msk [vmem:[#allocation4 + $0x1d0] sm:$0xff] %vm3540, %v4382
    %4459 = vst.msk [vmem:[#allocation4 + $0x1e8] sm:$0xff] %vm3540, %v4384
    %4460 = vst.msk [vmem:[#allocation4 + $0x200] sm:$0xff] %vm3540, %v4386
    %4461 = vst.msk [vmem:[#allocation4 + $0x218] sm:$0xff] %vm3540, %v4388
    %4462 = vst.msk [vmem:[#allocation4 + $0x230] sm:$0xff] %vm3540, %v4390
    %4463 = vst.msk [vmem:[#allocation4 + $0x248] sm:$0xff] %vm3540, %v4392
    %4464 = vst.msk [vmem:[#allocation4 + $0x260] sm:$0xff] %vm3540, %v4394
    %4465 = vst.msk [vmem:[#allocation4 + $0x278] sm:$0xff] %vm3540, %v4396
    %4466 = vst.msk [vmem:[#allocation4 + $0x290] sm:$0xff] %vm3540, %v4398
    %4467 = vst.msk [vmem:[#allocation4 + $0x2a8] sm:$0xff] %vm3540, %v4400
    %4468 = vst.msk [vmem:[#allocation4 + $0x2c0] sm:$0xff] %vm3540, %v4402
    %4469 = vst.msk [vmem:[#allocation4 + $0x2d8] sm:$0xff] %vm3540, %v4404
    %4470 = vst.msk [vmem:[#allocation4 + $0x2f0] sm:$0xff] %vm3540, %v4406
    %v4471 = vld [vmem:[#allocation3 + $0x20] sm:$0xff]
    %v4472 = vld [vmem:[#allocation3 + $0x28] sm:$0xff]
    %v4473 = vld [vmem:[#allocation3 + $0x30] sm:$0xff]
    %v4474 = vld [vmem:[#allocation3 + $0x38] sm:$0xff]
    %v4475 = vld [vmem:[#allocation3 + $0x40] sm:$0xff]
    %v4476 = vld [vmem:[#allocation3 + $0x48] sm:$0xff]
    %v4477 = vld [vmem:[#allocation3 + $0x50] sm:$0xff]
    %v4478 = vld [vmem:[#allocation3 + $0x58] sm:$0xff]
    %v4479 = vld [vmem:[#allocation3 + $0x60] sm:$0xff]
    %v4480 = vld [vmem:[#allocation3 + $0x68] sm:$0xff]
    %v4481 = vld [vmem:[#allocation3 + $0x70] sm:$0xff]
    %v4482 = vld [vmem:[#allocation3 + $0x78] sm:$0xff]
    %v4483 = vld [vmem:[#allocation3 + $0x80] sm:$0xff]
    %v4484 = vld [vmem:[#allocation3 + $0x88] sm:$0xff]
    %v4485 = vld [vmem:[#allocation3 + $0x90] sm:$0xff]
    %v4486 = vld [vmem:[#allocation3 + $0x98] sm:$0xff]
    %v4487 = vld [vmem:[#allocation3 + $0xa0] sm:$0xff]
    %v4488 = vld [vmem:[#allocation3 + $0xa8] sm:$0xff]
    %v4489 = vld [vmem:[#allocation3 + $0xb0] sm:$0xff]
    %v4490 = vld [vmem:[#allocation3 + $0xb8] sm:$0xff]
    %v4491 = vld [vmem:[#allocation3 + $0xc0] sm:$0xff]
    %v4492 = vld [vmem:[#allocation3 + $0xc8] sm:$0xff]
    %v4493 = vld [vmem:[#allocation3 + $0xd0] sm:$0xff]
    %v4494 = vld [vmem:[#allocation3 + $0xd8] sm:$0xff]
    %v4495 = vld [vmem:[#allocation3 + $0xe0] sm:$0xff]
    %v4496 = vld [vmem:[#allocation3 + $0xe8] sm:$0xff]
    %v4497 = vld [vmem:[#allocation3 + $0xf0] sm:$0xff]
    %v4498 = vld [vmem:[#allocation3 + $0xf8] sm:$0xff]
    %v4499 = vld [vmem:[#allocation3 + $0x100] sm:$0xff]
    %v4500 = vld [vmem:[#allocation3 + $0x108] sm:$0xff]
    %v4501 = vld [vmem:[#allocation3 + $0x110] sm:$0xff]
    %v4502 = vld [vmem:[#allocation3 + $0x118] sm:$0xff]
    %v4503 = vld [vmem:[#allocation3 + $0x120] sm:$0xff]
    %v4504 = vld [vmem:[#allocation3 + $0x128] sm:$0xff]
    %v4505 = vld [vmem:[#allocation3 + $0x130] sm:$0xff]
    %v4506 = vld [vmem:[#allocation3 + $0x138] sm:$0xff]
    %v4507 = vld [vmem:[#allocation3 + $0x140] sm:$0xff]
    %v4508 = vld [vmem:[#allocation3 + $0x148] sm:$0xff]
    %v4509 = vld [vmem:[#allocation3 + $0x150] sm:$0xff]
    %v4510 = vld [vmem:[#allocation3 + $0x158] sm:$0xff]
    %v4511 = vld [vmem:[#allocation3 + $0x160] sm:$0xff]
    %v4512 = vld [vmem:[#allocation3 + $0x168] sm:$0xff]
    %v4513 = vld [vmem:[#allocation3 + $0x170] sm:$0xff]
    %v4514 = vld [vmem:[#allocation3 + $0x178] sm:$0xff]
    %v4515 = vld [vmem:[#allocation3 + $0x180] sm:$0xff]
    %v4516 = vld [vmem:[#allocation3 + $0x188] sm:$0xff]
    %v4517 = vld [vmem:[#allocation3 + $0x190] sm:$0xff]
    %v4518 = vld [vmem:[#allocation3 + $0x198] sm:$0xff]
    %v4519 = vld [vmem:[#allocation3 + $0x1a0] sm:$0xff]
    %v4520 = vld [vmem:[#allocation3 + $0x1a8] sm:$0xff]
    %v4521 = vld [vmem:[#allocation3 + $0x1b0] sm:$0xff]
    %v4522 = vld [vmem:[#allocation3 + $0x1b8] sm:$0xff]
    %v4523 = vld [vmem:[#allocation3 + $0x1c0] sm:$0xff]
    %v4524 = vld [vmem:[#allocation3 + $0x1c8] sm:$0xff]
    %v4525 = vld [vmem:[#allocation3 + $0x1d0] sm:$0xff]
    %v4526 = vld [vmem:[#allocation3 + $0x1d8] sm:$0xff]
    %v4527 = vld [vmem:[#allocation3 + $0x1e0] sm:$0xff]
    %v4528 = vld [vmem:[#allocation3 + $0x1e8] sm:$0xff]
    %v4529 = vld [vmem:[#allocation3 + $0x1f0] sm:$0xff]
    %v4530 = vld [vmem:[#allocation3 + $0x1f8] sm:$0xff]
    %v4531 = vld [vmem:[#allocation3 + $0x200] sm:$0xff]
    %v4532 = vld [vmem:[#allocation3 + $0x208] sm:$0xff]
    %v4533 = vld [vmem:[#allocation3 + $0x210] sm:$0xff]
    %v4534 = vld [vmem:[#allocation3 + $0x218] sm:$0xff]
    %v4535 = vpack.c.bf16 %v4472, %v4471
    %v4536 = vpack.c.bf16 %v4474, %v4473
    %v4537 = vpack.c.bf16 %v4476, %v4475
    %v4538 = vpack.c.bf16 %v4478, %v4477
    %v4539 = vpack.c.bf16 %v4480, %v4479
    %v4540 = vpack.c.bf16 %v4482, %v4481
    %v4541 = vpack.c.bf16 %v4484, %v4483
    %v4542 = vpack.c.bf16 %v4486, %v4485
    %v4543 = vpack.c.bf16 %v4488, %v4487
    %v4544 = vpack.c.bf16 %v4490, %v4489
    %v4545 = vpack.c.bf16 %v4492, %v4491
    %v4546 = vpack.c.bf16 %v4494, %v4493
    %v4547 = vpack.c.bf16 %v4496, %v4495
    %v4548 = vpack.c.bf16 %v4498, %v4497
    %v4549 = vpack.c.bf16 %v4500, %v4499
    %v4550 = vpack.c.bf16 %v4502, %v4501
    %v4551 = vpack.c.bf16 %v4504, %v4503
    %v4552 = vpack.c.bf16 %v4506, %v4505
    %v4553 = vpack.c.bf16 %v4508, %v4507
    %v4554 = vpack.c.bf16 %v4510, %v4509
    %v4555 = vpack.c.bf16 %v4512, %v4511
    %v4556 = vpack.c.bf16 %v4514, %v4513
    %v4557 = vpack.c.bf16 %v4516, %v4515
    %v4558 = vpack.c.bf16 %v4518, %v4517
    %v4559 = vpack.c.bf16 %v4520, %v4519
    %v4560 = vpack.c.bf16 %v4522, %v4521
    %v4561 = vpack.c.bf16 %v4524, %v4523
    %v4562 = vpack.c.bf16 %v4526, %v4525
    %v4563 = vpack.c.bf16 %v4528, %v4527
    %v4564 = vpack.c.bf16 %v4530, %v4529
    %v4565 = vpack.c.bf16 %v4532, %v4531
    %v4566 = vpack.c.bf16 %v4534, %v4533
    %4599 = vrot.lane.b32.xlu0 %v4535, 64
    %v4600 = vpop.permute.xlu0 %4599
    %4601 = vrot.lane.b32.xlu0 %v4536, 64
    %v4602 = vpop.permute.xlu0 %4601
    %4603 = vrot.lane.b32.xlu0 %v4537, 64
    %v4604 = vpop.permute.xlu0 %4603
    %4605 = vrot.lane.b32.xlu0 %v4538, 64
    %v4606 = vpop.permute.xlu0 %4605
    %4607 = vrot.lane.b32.xlu0 %v4539, 64
    %v4608 = vpop.permute.xlu0 %4607
    %4609 = vrot.lane.b32.xlu0 %v4540, 64
    %v4610 = vpop.permute.xlu0 %4609
    %4611 = vrot.lane.b32.xlu0 %v4541, 64
    %v4612 = vpop.permute.xlu0 %4611
    %4613 = vrot.lane.b32.xlu0 %v4542, 64
    %v4614 = vpop.permute.xlu0 %4613
    %4615 = vrot.lane.b32.xlu0 %v4543, 64
    %v4616 = vpop.permute.xlu0 %4615
    %4617 = vrot.lane.b32.xlu0 %v4544, 64
    %v4618 = vpop.permute.xlu0 %4617
    %4619 = vrot.lane.b32.xlu0 %v4545, 64
    %v4620 = vpop.permute.xlu0 %4619
    %4621 = vrot.lane.b32.xlu0 %v4546, 64
    %v4622 = vpop.permute.xlu0 %4621
    %4623 = vrot.lane.b32.xlu0 %v4547, 64
    %v4624 = vpop.permute.xlu0 %4623
    %4625 = vrot.lane.b32.xlu0 %v4548, 64
    %v4626 = vpop.permute.xlu0 %4625
    %4627 = vrot.lane.b32.xlu0 %v4549, 64
    %v4628 = vpop.permute.xlu0 %4627
    %4629 = vrot.lane.b32.xlu0 %v4550, 64
    %v4630 = vpop.permute.xlu0 %4629
    %4631 = vrot.lane.b32.xlu0 %v4551, 64
    %v4632 = vpop.permute.xlu0 %4631
    %4633 = vrot.lane.b32.xlu0 %v4552, 64
    %v4634 = vpop.permute.xlu0 %4633
    %4635 = vrot.lane.b32.xlu0 %v4553, 64
    %v4636 = vpop.permute.xlu0 %4635
    %4637 = vrot.lane.b32.xlu0 %v4554, 64
    %v4638 = vpop.permute.xlu0 %4637
    %4639 = vrot.lane.b32.xlu0 %v4555, 64
    %v4640 = vpop.permute.xlu0 %4639
    %4641 = vrot.lane.b32.xlu0 %v4556, 64
    %v4642 = vpop.permute.xlu0 %4641
    %4643 = vrot.lane.b32.xlu0 %v4557, 64
    %v4644 = vpop.permute.xlu0 %4643
    %4645 = vrot.lane.b32.xlu0 %v4558, 64
    %v4646 = vpop.permute.xlu0 %4645
    %4647 = vrot.lane.b32.xlu0 %v4559, 64
    %v4648 = vpop.permute.xlu0 %4647
    %4649 = vrot.lane.b32.xlu0 %v4560, 64
    %v4650 = vpop.permute.xlu0 %4649
    %4651 = vrot.lane.b32.xlu0 %v4561, 64
    %v4652 = vpop.permute.xlu0 %4651
    %4653 = vrot.lane.b32.xlu0 %v4562, 64
    %v4654 = vpop.permute.xlu0 %4653
    %4655 = vrot.lane.b32.xlu0 %v4563, 64
    %v4656 = vpop.permute.xlu0 %4655
    %4657 = vrot.lane.b32.xlu0 %v4564, 64
    %v4658 = vpop.permute.xlu0 %4657
    %4659 = vrot.lane.b32.xlu0 %v4565, 64
    %v4660 = vpop.permute.xlu0 %4659
    %4661 = vrot.lane.b32.xlu0 %v4566, 64
    %v4662 = vpop.permute.xlu0 %4661
    %4695 = vst.msk [vmem:[#allocation4 + $0x8] sm:$0xff] %vm3797, %v4600
    %4696 = vst.msk [vmem:[#allocation4 + $0x20] sm:$0xff] %vm3797, %v4602
    %4697 = vst.msk [vmem:[#allocation4 + $0x38] sm:$0xff] %vm3797, %v4604
    %4698 = vst.msk [vmem:[#allocation4 + $0x50] sm:$0xff] %vm3797, %v4606
    %4699 = vst.msk [vmem:[#allocation4 + $0x68] sm:$0xff] %vm3797, %v4608
    %4700 = vst.msk [vmem:[#allocation4 + $0x80] sm:$0xff] %vm3797, %v4610
    %4701 = vst.msk [vmem:[#allocation4 + $0x98] sm:$0xff] %vm3797, %v4612
    %4702 = vst.msk [vmem:[#allocation4 + $0xb0] sm:$0xff] %vm3797, %v4614
    %4703 = vst.msk [vmem:[#allocation4 + $0xc8] sm:$0xff] %vm3797, %v4616
    %4704 = vst.msk [vmem:[#allocation4 + $0xe0] sm:$0xff] %vm3797, %v4618
    %4705 = vst.msk [vmem:[#allocation4 + $0xf8] sm:$0xff] %vm3797, %v4620
    %4706 = vst.msk [vmem:[#allocation4 + $0x110] sm:$0xff] %vm3797, %v4622
    %4707 = vst.msk [vmem:[#allocation4 + $0x128] sm:$0xff] %vm3797, %v4624
    %4708 = vst.msk [vmem:[#allocation4 + $0x140] sm:$0xff] %vm3797, %v4626
    %4709 = vst.msk [vmem:[#allocation4 + $0x158] sm:$0xff] %vm3797, %v4628
    %4710 = vst.msk [vmem:[#allocation4 + $0x170] sm:$0xff] %vm3797, %v4630
    %4711 = vst.msk [vmem:[#allocation4 + $0x188] sm:$0xff] %vm3797, %v4632
    %4712 = vst.msk [vmem:[#allocation4 + $0x1a0] sm:$0xff] %vm3797, %v4634
    %4713 = vst.msk [vmem:[#allocation4 + $0x1b8] sm:$0xff] %vm3797, %v4636
    %4714 = vst.msk [vmem:[#allocation4 + $0x1d0] sm:$0xff] %vm3797, %v4638
    %4715 = vst.msk [vmem:[#allocation4 + $0x1e8] sm:$0xff] %vm3797, %v4640
    %4716 = vst.msk [vmem:[#allocation4 + $0x200] sm:$0xff] %vm3797, %v4642
    %4717 = vst.msk [vmem:[#allocation4 + $0x218] sm:$0xff] %vm3797, %v4644
    %4718 = vst.msk [vmem:[#allocation4 + $0x230] sm:$0xff] %vm3797, %v4646
    %4719 = vst.msk [vmem:[#allocation4 + $0x248] sm:$0xff] %vm3797, %v4648
    %4720 = vst.msk [vmem:[#allocation4 + $0x260] sm:$0xff] %vm3797, %v4650
    %4721 = vst.msk [vmem:[#allocation4 + $0x278] sm:$0xff] %vm3797, %v4652
    %4722 = vst.msk [vmem:[#allocation4 + $0x290] sm:$0xff] %vm3797, %v4654
    %4723 = vst.msk [vmem:[#allocation4 + $0x2a8] sm:$0xff] %vm3797, %v4656
    %4724 = vst.msk [vmem:[#allocation4 + $0x2c0] sm:$0xff] %vm3797, %v4658
    %4725 = vst.msk [vmem:[#allocation4 + $0x2d8] sm:$0xff] %vm3797, %v4660
    %4726 = vst.msk [vmem:[#allocation4 + $0x2f0] sm:$0xff] %vm3797, %v4662
    %v4727 = vld [vmem:[#allocation3 + $0x21] sm:$0xff]
    %v4728 = vld [vmem:[#allocation3 + $0x29] sm:$0xff]
    %v4729 = vld [vmem:[#allocation3 + $0x31] sm:$0xff]
    %v4730 = vld [vmem:[#allocation3 + $0x39] sm:$0xff]
    %v4731 = vld [vmem:[#allocation3 + $0x41] sm:$0xff]
    %v4732 = vld [vmem:[#allocation3 + $0x49] sm:$0xff]
    %v4733 = vld [vmem:[#allocation3 + $0x51] sm:$0xff]
    %v4734 = vld [vmem:[#allocation3 + $0x59] sm:$0xff]
    %v4735 = vld [vmem:[#allocation3 + $0x61] sm:$0xff]
    %v4736 = vld [vmem:[#allocation3 + $0x69] sm:$0xff]
    %v4737 = vld [vmem:[#allocation3 + $0x71] sm:$0xff]
    %v4738 = vld [vmem:[#allocation3 + $0x79] sm:$0xff]
    %v4739 = vld [vmem:[#allocation3 + $0x81] sm:$0xff]
    %v4740 = vld [vmem:[#allocation3 + $0x89] sm:$0xff]
    %v4741 = vld [vmem:[#allocation3 + $0x91] sm:$0xff]
    %v4742 = vld [vmem:[#allocation3 + $0x99] sm:$0xff]
    %v4743 = vld [vmem:[#allocation3 + $0xa1] sm:$0xff]
    %v4744 = vld [vmem:[#allocation3 + $0xa9] sm:$0xff]
    %v4745 = vld [vmem:[#allocation3 + $0xb1] sm:$0xff]
    %v4746 = vld [vmem:[#allocation3 + $0xb9] sm:$0xff]
    %v4747 = vld [vmem:[#allocation3 + $0xc1] sm:$0xff]
    %v4748 = vld [vmem:[#allocation3 + $0xc9] sm:$0xff]
    %v4749 = vld [vmem:[#allocation3 + $0xd1] sm:$0xff]
    %v4750 = vld [vmem:[#allocation3 + $0xd9] sm:$0xff]
    %v4751 = vld [vmem:[#allocation3 + $0xe1] sm:$0xff]
    %v4752 = vld [vmem:[#allocation3 + $0xe9] sm:$0xff]
    %v4753 = vld [vmem:[#allocation3 + $0xf1] sm:$0xff]
    %v4754 = vld [vmem:[#allocation3 + $0xf9] sm:$0xff]
    %v4755 = vld [vmem:[#allocation3 + $0x101] sm:$0xff]
    %v4756 = vld [vmem:[#allocation3 + $0x109] sm:$0xff]
    %v4757 = vld [vmem:[#allocation3 + $0x111] sm:$0xff]
    %v4758 = vld [vmem:[#allocation3 + $0x119] sm:$0xff]
    %v4759 = vld [vmem:[#allocation3 + $0x121] sm:$0xff]
    %v4760 = vld [vmem:[#allocation3 + $0x129] sm:$0xff]
    %v4761 = vld [vmem:[#allocation3 + $0x131] sm:$0xff]
    %v4762 = vld [vmem:[#allocation3 + $0x139] sm:$0xff]
    %v4763 = vld [vmem:[#allocation3 + $0x141] sm:$0xff]
    %v4764 = vld [vmem:[#allocation3 + $0x149] sm:$0xff]
    %v4765 = vld [vmem:[#allocation3 + $0x151] sm:$0xff]
    %v4766 = vld [vmem:[#allocation3 + $0x159] sm:$0xff]
    %v4767 = vld [vmem:[#allocation3 + $0x161] sm:$0xff]
    %v4768 = vld [vmem:[#allocation3 + $0x169] sm:$0xff]
    %v4769 = vld [vmem:[#allocation3 + $0x171] sm:$0xff]
    %v4770 = vld [vmem:[#allocation3 + $0x179] sm:$0xff]
    %v4771 = vld [vmem:[#allocation3 + $0x181] sm:$0xff]
    %v4772 = vld [vmem:[#allocation3 + $0x189] sm:$0xff]
    %v4773 = vld [vmem:[#allocation3 + $0x191] sm:$0xff]
    %v4774 = vld [vmem:[#allocation3 + $0x199] sm:$0xff]
    %v4775 = vld [vmem:[#allocation3 + $0x1a1] sm:$0xff]
    %v4776 = vld [vmem:[#allocation3 + $0x1a9] sm:$0xff]
    %v4777 = vld [vmem:[#allocation3 + $0x1b1] sm:$0xff]
    %v4778 = vld [vmem:[#allocation3 + $0x1b9] sm:$0xff]
    %v4779 = vld [vmem:[#allocation3 + $0x1c1] sm:$0xff]
    %v4780 = vld [vmem:[#allocation3 + $0x1c9] sm:$0xff]
    %v4781 = vld [vmem:[#allocation3 + $0x1d1] sm:$0xff]
    %v4782 = vld [vmem:[#allocation3 + $0x1d9] sm:$0xff]
    %v4783 = vld [vmem:[#allocation3 + $0x1e1] sm:$0xff]
    %v4784 = vld [vmem:[#allocation3 + $0x1e9] sm:$0xff]
    %v4785 = vld [vmem:[#allocation3 + $0x1f1] sm:$0xff]
    %v4786 = vld [vmem:[#allocation3 + $0x1f9] sm:$0xff]
    %v4787 = vld [vmem:[#allocation3 + $0x201] sm:$0xff]
    %v4788 = vld [vmem:[#allocation3 + $0x209] sm:$0xff]
    %v4789 = vld [vmem:[#allocation3 + $0x211] sm:$0xff]
    %v4790 = vld [vmem:[#allocation3 + $0x219] sm:$0xff]
    %v4791 = vpack.c.bf16 %v4728, %v4727
    %v4792 = vpack.c.bf16 %v4730, %v4729
    %v4793 = vpack.c.bf16 %v4732, %v4731
    %v4794 = vpack.c.bf16 %v4734, %v4733
    %v4795 = vpack.c.bf16 %v4736, %v4735
    %v4796 = vpack.c.bf16 %v4738, %v4737
    %v4797 = vpack.c.bf16 %v4740, %v4739
    %v4798 = vpack.c.bf16 %v4742, %v4741
    %v4799 = vpack.c.bf16 %v4744, %v4743
    %v4800 = vpack.c.bf16 %v4746, %v4745
    %v4801 = vpack.c.bf16 %v4748, %v4747
    %v4802 = vpack.c.bf16 %v4750, %v4749
    %v4803 = vpack.c.bf16 %v4752, %v4751
    %v4804 = vpack.c.bf16 %v4754, %v4753
    %v4805 = vpack.c.bf16 %v4756, %v4755
    %v4806 = vpack.c.bf16 %v4758, %v4757
    %v4807 = vpack.c.bf16 %v4760, %v4759
    %v4808 = vpack.c.bf16 %v4762, %v4761
    %v4809 = vpack.c.bf16 %v4764, %v4763
    %v4810 = vpack.c.bf16 %v4766, %v4765
    %v4811 = vpack.c.bf16 %v4768, %v4767
    %v4812 = vpack.c.bf16 %v4770, %v4769
    %v4813 = vpack.c.bf16 %v4772, %v4771
    %v4814 = vpack.c.bf16 %v4774, %v4773
    %v4815 = vpack.c.bf16 %v4776, %v4775
    %v4816 = vpack.c.bf16 %v4778, %v4777
    %v4817 = vpack.c.bf16 %v4780, %v4779
    %v4818 = vpack.c.bf16 %v4782, %v4781
    %v4819 = vpack.c.bf16 %v4784, %v4783
    %v4820 = vpack.c.bf16 %v4786, %v4785
    %v4821 = vpack.c.bf16 %v4788, %v4787
    %v4822 = vpack.c.bf16 %v4790, %v4789
    %4855 = vrot.lane.b32.xlu0 %v4791, 96
    %v4856 = vpop.permute.xlu0 %4855
    %4857 = vrot.lane.b32.xlu0 %v4792, 96
    %v4858 = vpop.permute.xlu0 %4857
    %4859 = vrot.lane.b32.xlu0 %v4793, 96
    %v4860 = vpop.permute.xlu0 %4859
    %4861 = vrot.lane.b32.xlu0 %v4794, 96
    %v4862 = vpop.permute.xlu0 %4861
    %4863 = vrot.lane.b32.xlu0 %v4795, 96
    %v4864 = vpop.permute.xlu0 %4863
    %4865 = vrot.lane.b32.xlu0 %v4796, 96
    %v4866 = vpop.permute.xlu0 %4865
    %4867 = vrot.lane.b32.xlu0 %v4797, 96
    %v4868 = vpop.permute.xlu0 %4867
    %4869 = vrot.lane.b32.xlu0 %v4798, 96
    %v4870 = vpop.permute.xlu0 %4869
    %4871 = vrot.lane.b32.xlu0 %v4799, 96
    %v4872 = vpop.permute.xlu0 %4871
    %4873 = vrot.lane.b32.xlu0 %v4800, 96
    %v4874 = vpop.permute.xlu0 %4873
    %4875 = vrot.lane.b32.xlu0 %v4801, 96
    %v4876 = vpop.permute.xlu0 %4875
    %4877 = vrot.lane.b32.xlu0 %v4802, 96
    %v4878 = vpop.permute.xlu0 %4877
    %4879 = vrot.lane.b32.xlu0 %v4803, 96
    %v4880 = vpop.permute.xlu0 %4879
    %4881 = vrot.lane.b32.xlu0 %v4804, 96
    %v4882 = vpop.permute.xlu0 %4881
    %4883 = vrot.lane.b32.xlu0 %v4805, 96
    %v4884 = vpop.permute.xlu0 %4883
    %4885 = vrot.lane.b32.xlu0 %v4806, 96
    %v4886 = vpop.permute.xlu0 %4885
    %4887 = vrot.lane.b32.xlu0 %v4807, 96
    %v4888 = vpop.permute.xlu0 %4887
    %4889 = vrot.lane.b32.xlu0 %v4808, 96
    %v4890 = vpop.permute.xlu0 %4889
    %4891 = vrot.lane.b32.xlu0 %v4809, 96
    %v4892 = vpop.permute.xlu0 %4891
    %4893 = vrot.lane.b32.xlu0 %v4810, 96
    %v4894 = vpop.permute.xlu0 %4893
    %4895 = vrot.lane.b32.xlu0 %v4811, 96
    %v4896 = vpop.permute.xlu0 %4895
    %4897 = vrot.lane.b32.xlu0 %v4812, 96
    %v4898 = vpop.permute.xlu0 %4897
    %4899 = vrot.lane.b32.xlu0 %v4813, 96
    %v4900 = vpop.permute.xlu0 %4899
    %4901 = vrot.lane.b32.xlu0 %v4814, 96
    %v4902 = vpop.permute.xlu0 %4901
    %4903 = vrot.lane.b32.xlu0 %v4815, 96
    %v4904 = vpop.permute.xlu0 %4903
    %4905 = vrot.lane.b32.xlu0 %v4816, 96
    %v4906 = vpop.permute.xlu0 %4905
    %4907 = vrot.lane.b32.xlu0 %v4817, 96
    %v4908 = vpop.permute.xlu0 %4907
    %4909 = vrot.lane.b32.xlu0 %v4818, 96
    %v4910 = vpop.permute.xlu0 %4909
    %4911 = vrot.lane.b32.xlu0 %v4819, 96
    %v4912 = vpop.permute.xlu0 %4911
    %4913 = vrot.lane.b32.xlu0 %v4820, 96
    %v4914 = vpop.permute.xlu0 %4913
    %4915 = vrot.lane.b32.xlu0 %v4821, 96
    %v4916 = vpop.permute.xlu0 %4915
    %4917 = vrot.lane.b32.xlu0 %v4822, 96
    %v4918 = vpop.permute.xlu0 %4917
    %4951 = vst.msk [vmem:[#allocation4 + $0x8] sm:$0xff] %vm4054, %v4856
    %4952 = vst.msk [vmem:[#allocation4 + $0x20] sm:$0xff] %vm4054, %v4858
    %4953 = vst.msk [vmem:[#allocation4 + $0x38] sm:$0xff] %vm4054, %v4860
    %4954 = vst.msk [vmem:[#allocation4 + $0x50] sm:$0xff] %vm4054, %v4862
    %4955 = vst.msk [vmem:[#allocation4 + $0x68] sm:$0xff] %vm4054, %v4864
    %4956 = vst.msk [vmem:[#allocation4 + $0x80] sm:$0xff] %vm4054, %v4866
    %4957 = vst.msk [vmem:[#allocation4 + $0x98] sm:$0xff] %vm4054, %v4868
    %4958 = vst.msk [vmem:[#allocation4 + $0xb0] sm:$0xff] %vm4054, %v4870
    %4959 = vst.msk [vmem:[#allocation4 + $0xc8] sm:$0xff] %vm4054, %v4872
    %4960 = vst.msk [vmem:[#allocation4 + $0xe0] sm:$0xff] %vm4054, %v4874
    %4961 = vst.msk [vmem:[#allocation4 + $0xf8] sm:$0xff] %vm4054, %v4876
    %4962 = vst.msk [vmem:[#allocation4 + $0x110] sm:$0xff] %vm4054, %v4878
    %4963 = vst.msk [vmem:[#allocation4 + $0x128] sm:$0xff] %vm4054, %v4880
    %4964 = vst.msk [vmem:[#allocation4 + $0x140] sm:$0xff] %vm4054, %v4882
    %4965 = vst.msk [vmem:[#allocation4 + $0x158] sm:$0xff] %vm4054, %v4884
    %4966 = vst.msk [vmem:[#allocation4 + $0x170] sm:$0xff] %vm4054, %v4886
    %4967 = vst.msk [vmem:[#allocation4 + $0x188] sm:$0xff] %vm4054, %v4888
    %4968 = vst.msk [vmem:[#allocation4 + $0x1a0] sm:$0xff] %vm4054, %v4890
    %4969 = vst.msk [vmem:[#allocation4 + $0x1b8] sm:$0xff] %vm4054, %v4892
    %4970 = vst.msk [vmem:[#allocation4 + $0x1d0] sm:$0xff] %vm4054, %v4894
    %4971 = vst.msk [vmem:[#allocation4 + $0x1e8] sm:$0xff] %vm4054, %v4896
    %4972 = vst.msk [vmem:[#allocation4 + $0x200] sm:$0xff] %vm4054, %v4898
    %4973 = vst.msk [vmem:[#allocation4 + $0x218] sm:$0xff] %vm4054, %v4900
    %4974 = vst.msk [vmem:[#allocation4 + $0x230] sm:$0xff] %vm4054, %v4902
    %4975 = vst.msk [vmem:[#allocation4 + $0x248] sm:$0xff] %vm4054, %v4904
    %4976 = vst.msk [vmem:[#allocation4 + $0x260] sm:$0xff] %vm4054, %v4906
    %4977 = vst.msk [vmem:[#allocation4 + $0x278] sm:$0xff] %vm4054, %v4908
    %4978 = vst.msk [vmem:[#allocation4 + $0x290] sm:$0xff] %vm4054, %v4910
    %4979 = vst.msk [vmem:[#allocation4 + $0x2a8] sm:$0xff] %vm4054, %v4912
    %4980 = vst.msk [vmem:[#allocation4 + $0x2c0] sm:$0xff] %vm4054, %v4914
    %4981 = vst.msk [vmem:[#allocation4 + $0x2d8] sm:$0xff] %vm4054, %v4916
    %4982 = vst.msk [vmem:[#allocation4 + $0x2f0] sm:$0xff] %vm4054, %v4918
    %v4983 = vld [vmem:[#allocation3 + $0x22] sm:$0xff]
    %v4984 = vld [vmem:[#allocation3 + $0x2a] sm:$0xff]
    %v4985 = vld [vmem:[#allocation3 + $0x32] sm:$0xff]
    %v4986 = vld [vmem:[#allocation3 + $0x3a] sm:$0xff]
    %v4987 = vld [vmem:[#allocation3 + $0x42] sm:$0xff]
    %v4988 = vld [vmem:[#allocation3 + $0x4a] sm:$0xff]
    %v4989 = vld [vmem:[#allocation3 + $0x52] sm:$0xff]
    %v4990 = vld [vmem:[#allocation3 + $0x5a] sm:$0xff]
    %v4991 = vld [vmem:[#allocation3 + $0x62] sm:$0xff]
    %v4992 = vld [vmem:[#allocation3 + $0x6a] sm:$0xff]
    %v4993 = vld [vmem:[#allocation3 + $0x72] sm:$0xff]
    %v4994 = vld [vmem:[#allocation3 + $0x7a] sm:$0xff]
    %v4995 = vld [vmem:[#allocation3 + $0x82] sm:$0xff]
    %v4996 = vld [vmem:[#allocation3 + $0x8a] sm:$0xff]
    %v4997 = vld [vmem:[#allocation3 + $0x92] sm:$0xff]
    %v4998 = vld [vmem:[#allocation3 + $0x9a] sm:$0xff]
    %v4999 = vld [vmem:[#allocation3 + $0xa2] sm:$0xff]
    %v5000 = vld [vmem:[#allocation3 + $0xaa] sm:$0xff]
    %v5001 = vld [vmem:[#allocation3 + $0xb2] sm:$0xff]
    %v5002 = vld [vmem:[#allocation3 + $0xba] sm:$0xff]
    %v5003 = vld [vmem:[#allocation3 + $0xc2] sm:$0xff]
    %v5004 = vld [vmem:[#allocation3 + $0xca] sm:$0xff]
    %v5005 = vld [vmem:[#allocation3 + $0xd2] sm:$0xff]
    %v5006 = vld [vmem:[#allocation3 + $0xda] sm:$0xff]
    %v5007 = vld [vmem:[#allocation3 + $0xe2] sm:$0xff]
    %v5008 = vld [vmem:[#allocation3 + $0xea] sm:$0xff]
    %v5009 = vld [vmem:[#allocation3 + $0xf2] sm:$0xff]
    %v5010 = vld [vmem:[#allocation3 + $0xfa] sm:$0xff]
    %v5011 = vld [vmem:[#allocation3 + $0x102] sm:$0xff]
    %v5012 = vld [vmem:[#allocation3 + $0x10a] sm:$0xff]
    %v5013 = vld [vmem:[#allocation3 + $0x112] sm:$0xff]
    %v5014 = vld [vmem:[#allocation3 + $0x11a] sm:$0xff]
    %v5015 = vld [vmem:[#allocation3 + $0x122] sm:$0xff]
    %v5016 = vld [vmem:[#allocation3 + $0x12a] sm:$0xff]
    %v5017 = vld [vmem:[#allocation3 + $0x132] sm:$0xff]
    %v5018 = vld [vmem:[#allocation3 + $0x13a] sm:$0xff]
    %v5019 = vld [vmem:[#allocation3 + $0x142] sm:$0xff]
    %v5020 = vld [vmem:[#allocation3 + $0x14a] sm:$0xff]
    %v5021 = vld [vmem:[#allocation3 + $0x152] sm:$0xff]
    %v5022 = vld [vmem:[#allocation3 + $0x15a] sm:$0xff]
    %v5023 = vld [vmem:[#allocation3 + $0x162] sm:$0xff]
    %v5024 = vld [vmem:[#allocation3 + $0x16a] sm:$0xff]
    %v5025 = vld [vmem:[#allocation3 + $0x172] sm:$0xff]
    %v5026 = vld [vmem:[#allocation3 + $0x17a] sm:$0xff]
    %v5027 = vld [vmem:[#allocation3 + $0x182] sm:$0xff]
    %v5028 = vld [vmem:[#allocation3 + $0x18a] sm:$0xff]
    %v5029 = vld [vmem:[#allocation3 + $0x192] sm:$0xff]
    %v5030 = vld [vmem:[#allocation3 + $0x19a] sm:$0xff]
    %v5031 = vld [vmem:[#allocation3 + $0x1a2] sm:$0xff]
    %v5032 = vld [vmem:[#allocation3 + $0x1aa] sm:$0xff]
    %v5033 = vld [vmem:[#allocation3 + $0x1b2] sm:$0xff]
    %v5034 = vld [vmem:[#allocation3 + $0x1ba] sm:$0xff]
    %v5035 = vld [vmem:[#allocation3 + $0x1c2] sm:$0xff]
    %v5036 = vld [vmem:[#allocation3 + $0x1ca] sm:$0xff]
    %v5037 = vld [vmem:[#allocation3 + $0x1d2] sm:$0xff]
    %v5038 = vld [vmem:[#allocation3 + $0x1da] sm:$0xff]
    %v5039 = vld [vmem:[#allocation3 + $0x1e2] sm:$0xff]
    %v5040 = vld [vmem:[#allocation3 + $0x1ea] sm:$0xff]
    %v5041 = vld [vmem:[#allocation3 + $0x1f2] sm:$0xff]
    %v5042 = vld [vmem:[#allocation3 + $0x1fa] sm:$0xff]
    %v5043 = vld [vmem:[#allocation3 + $0x202] sm:$0xff]
    %v5044 = vld [vmem:[#allocation3 + $0x20a] sm:$0xff]
    %v5045 = vld [vmem:[#allocation3 + $0x212] sm:$0xff]
    %v5046 = vld [vmem:[#allocation3 + $0x21a] sm:$0xff]
    %v5047 = vpack.c.bf16 %v4984, %v4983
    %v5048 = vpack.c.bf16 %v4986, %v4985
    %v5049 = vpack.c.bf16 %v4988, %v4987
    %v5050 = vpack.c.bf16 %v4990, %v4989
    %v5051 = vpack.c.bf16 %v4992, %v4991
    %v5052 = vpack.c.bf16 %v4994, %v4993
    %v5053 = vpack.c.bf16 %v4996, %v4995
    %v5054 = vpack.c.bf16 %v4998, %v4997
    %v5055 = vpack.c.bf16 %v5000, %v4999
    %v5056 = vpack.c.bf16 %v5002, %v5001
    %v5057 = vpack.c.bf16 %v5004, %v5003
    %v5058 = vpack.c.bf16 %v5006, %v5005
    %v5059 = vpack.c.bf16 %v5008, %v5007
    %v5060 = vpack.c.bf16 %v5010, %v5009
    %v5061 = vpack.c.bf16 %v5012, %v5011
    %v5062 = vpack.c.bf16 %v5014, %v5013
    %v5063 = vpack.c.bf16 %v5016, %v5015
    %v5064 = vpack.c.bf16 %v5018, %v5017
    %v5065 = vpack.c.bf16 %v5020, %v5019
    %v5066 = vpack.c.bf16 %v5022, %v5021
    %v5067 = vpack.c.bf16 %v5024, %v5023
    %v5068 = vpack.c.bf16 %v5026, %v5025
    %v5069 = vpack.c.bf16 %v5028, %v5027
    %v5070 = vpack.c.bf16 %v5030, %v5029
    %v5071 = vpack.c.bf16 %v5032, %v5031
    %v5072 = vpack.c.bf16 %v5034, %v5033
    %v5073 = vpack.c.bf16 %v5036, %v5035
    %v5074 = vpack.c.bf16 %v5038, %v5037
    %v5075 = vpack.c.bf16 %v5040, %v5039
    %v5076 = vpack.c.bf16 %v5042, %v5041
    %v5077 = vpack.c.bf16 %v5044, %v5043
    %v5078 = vpack.c.bf16 %v5046, %v5045
    %5079 = vst.msk [vmem:[#allocation4 + $0x10] sm:$0xff] %vm2473, %v5047
    %5080 = vst.msk [vmem:[#allocation4 + $0x28] sm:$0xff] %vm2473, %v5048
    %5081 = vst.msk [vmem:[#allocation4 + $0x40] sm:$0xff] %vm2473, %v5049
    %5082 = vst.msk [vmem:[#allocation4 + $0x58] sm:$0xff] %vm2473, %v5050
    %5083 = vst.msk [vmem:[#allocation4 + $0x70] sm:$0xff] %vm2473, %v5051
    %5084 = vst.msk [vmem:[#allocation4 + $0x88] sm:$0xff] %vm2473, %v5052
    %5085 = vst.msk [vmem:[#allocation4 + $0xa0] sm:$0xff] %vm2473, %v5053
    %5086 = vst.msk [vmem:[#allocation4 + $0xb8] sm:$0xff] %vm2473, %v5054
    %5087 = vst.msk [vmem:[#allocation4 + $0xd0] sm:$0xff] %vm2473, %v5055
    %5088 = vst.msk [vmem:[#allocation4 + $0xe8] sm:$0xff] %vm2473, %v5056
    %5089 = vst.msk [vmem:[#allocation4 + $0x100] sm:$0xff] %vm2473, %v5057
    %5090 = vst.msk [vmem:[#allocation4 + $0x118] sm:$0xff] %vm2473, %v5058
    %5091 = vst.msk [vmem:[#allocation4 + $0x130] sm:$0xff] %vm2473, %v5059
    %5092 = vst.msk [vmem:[#allocation4 + $0x148] sm:$0xff] %vm2473, %v5060
    %5093 = vst.msk [vmem:[#allocation4 + $0x160] sm:$0xff] %vm2473, %v5061
    %5094 = vst.msk [vmem:[#allocation4 + $0x178] sm:$0xff] %vm2473, %v5062
    %5095 = vst.msk [vmem:[#allocation4 + $0x190] sm:$0xff] %vm2473, %v5063
    %5096 = vst.msk [vmem:[#allocation4 + $0x1a8] sm:$0xff] %vm2473, %v5064
    %5097 = vst.msk [vmem:[#allocation4 + $0x1c0] sm:$0xff] %vm2473, %v5065
    %5098 = vst.msk [vmem:[#allocation4 + $0x1d8] sm:$0xff] %vm2473, %v5066
    %5099 = vst.msk [vmem:[#allocation4 + $0x1f0] sm:$0xff] %vm2473, %v5067
    %5100 = vst.msk [vmem:[#allocation4 + $0x208] sm:$0xff] %vm2473, %v5068
    %5101 = vst.msk [vmem:[#allocation4 + $0x220] sm:$0xff] %vm2473, %v5069
    %5102 = vst.msk [vmem:[#allocation4 + $0x238] sm:$0xff] %vm2473, %v5070
    %5103 = vst.msk [vmem:[#allocation4 + $0x250] sm:$0xff] %vm2473, %v5071
    %5104 = vst.msk [vmem:[#allocation4 + $0x268] sm:$0xff] %vm2473, %v5072
    %5105 = vst.msk [vmem:[#allocation4 + $0x280] sm:$0xff] %vm2473, %v5073
    %5106 = vst.msk [vmem:[#allocation4 + $0x298] sm:$0xff] %vm2473, %v5074
    %5107 = vst.msk [vmem:[#allocation4 + $0x2b0] sm:$0xff] %vm2473, %v5075
    %5108 = vst.msk [vmem:[#allocation4 + $0x2c8] sm:$0xff] %vm2473, %v5076
    %5109 = vst.msk [vmem:[#allocation4 + $0x2e0] sm:$0xff] %vm2473, %v5077
    %5110 = vst.msk [vmem:[#allocation4 + $0x2f8] sm:$0xff] %vm2473, %v5078
    %v5111 = vld [vmem:[#allocation4] sm:$0xff]
    %v5112 = vld [vmem:[#allocation4 + $0x8] sm:$0xff]
    %v5113 = vld [vmem:[#allocation4 + $0x10] sm:$0xff]
    %v5114 = vld [vmem:[#allocation4 + $0x18] sm:$0xff]
    %v5115 = vld [vmem:[#allocation4 + $0x20] sm:$0xff]
    %v5116 = vld [vmem:[#allocation4 + $0x28] sm:$0xff]
    %v5117 = vld [vmem:[#allocation4 + $0x30] sm:$0xff]
    %v5118 = vld [vmem:[#allocation4 + $0x38] sm:$0xff]
    %v5119 = vld [vmem:[#allocation4 + $0x40] sm:$0xff]
    %v5120 = vld [vmem:[#allocation4 + $0x48] sm:$0xff]
    %v5121 = vld [vmem:[#allocation4 + $0x50] sm:$0xff]
    %v5122 = vld [vmem:[#allocation4 + $0x58] sm:$0xff]
    %v5123 = vld [vmem:[#allocation4 + $0x60] sm:$0xff]
    %v5124 = vld [vmem:[#allocation4 + $0x68] sm:$0xff]
    %v5125 = vld [vmem:[#allocation4 + $0x70] sm:$0xff]
    %v5126 = vld [vmem:[#allocation4 + $0x78] sm:$0xff]
    %v5127 = vld [vmem:[#allocation4 + $0x80] sm:$0xff]
    %v5128 = vld [vmem:[#allocation4 + $0x88] sm:$0xff]
    %v5129 = vld [vmem:[#allocation4 + $0x90] sm:$0xff]
    %v5130 = vld [vmem:[#allocation4 + $0x98] sm:$0xff]
    %v5131 = vld [vmem:[#allocation4 + $0xa0] sm:$0xff]
    %v5132 = vld [vmem:[#allocation4 + $0xa8] sm:$0xff]
    %v5133 = vld [vmem:[#allocation4 + $0xb0] sm:$0xff]
    %v5134 = vld [vmem:[#allocation4 + $0xb8] sm:$0xff]
    %v5135 = vld [vmem:[#allocation4 + $0xc0] sm:$0xff]
    %v5136 = vld [vmem:[#allocation4 + $0xc8] sm:$0xff]
    %v5137 = vld [vmem:[#allocation4 + $0xd0] sm:$0xff]
    %v5138 = vld [vmem:[#allocation4 + $0xd8] sm:$0xff]
    %v5139 = vld [vmem:[#allocation4 + $0xe0] sm:$0xff]
    %v5140 = vld [vmem:[#allocation4 + $0xe8] sm:$0xff]
    %v5141 = vld [vmem:[#allocation4 + $0xf0] sm:$0xff]
    %v5142 = vld [vmem:[#allocation4 + $0xf8] sm:$0xff]
    %v5143 = vld [vmem:[#allocation4 + $0x100] sm:$0xff]
    %v5144 = vld [vmem:[#allocation4 + $0x108] sm:$0xff]
    %v5145 = vld [vmem:[#allocation4 + $0x110] sm:$0xff]
    %v5146 = vld [vmem:[#allocation4 + $0x118] sm:$0xff]
    %v5147 = vld [vmem:[#allocation4 + $0x120] sm:$0xff]
    %v5148 = vld [vmem:[#allocation4 + $0x128] sm:$0xff]
    %v5149 = vld [vmem:[#allocation4 + $0x130] sm:$0xff]
    %v5150 = vld [vmem:[#allocation4 + $0x138] sm:$0xff]
    %v5151 = vld [vmem:[#allocation4 + $0x140] sm:$0xff]
    %v5152 = vld [vmem:[#allocation4 + $0x148] sm:$0xff]
    %v5153 = vld [vmem:[#allocation4 + $0x150] sm:$0xff]
    %v5154 = vld [vmem:[#allocation4 + $0x158] sm:$0xff]
    %v5155 = vld [vmem:[#allocation4 + $0x160] sm:$0xff]
    %v5156 = vld [vmem:[#allocation4 + $0x168] sm:$0xff]
    %v5157 = vld [vmem:[#allocation4 + $0x170] sm:$0xff]
    %v5158 = vld [vmem:[#allocation4 + $0x178] sm:$0xff]
    %v5159 = vld [vmem:[#allocation4 + $0x180] sm:$0xff]
    %v5160 = vld [vmem:[#allocation4 + $0x188] sm:$0xff]
    %v5161 = vld [vmem:[#allocation4 + $0x190] sm:$0xff]
    %v5162 = vld [vmem:[#allocation4 + $0x198] sm:$0xff]
    %v5163 = vld [vmem:[#allocation4 + $0x1a0] sm:$0xff]
    %v5164 = vld [vmem:[#allocation4 + $0x1a8] sm:$0xff]
    %v5165 = vld [vmem:[#allocation4 + $0x1b0] sm:$0xff]
    %v5166 = vld [vmem:[#allocation4 + $0x1b8] sm:$0xff]
    %v5167 = vld [vmem:[#allocation4 + $0x1c0] sm:$0xff]
    %v5168 = vld [vmem:[#allocation4 + $0x1c8] sm:$0xff]
    %v5169 = vld [vmem:[#allocation4 + $0x1d0] sm:$0xff]
    %v5170 = vld [vmem:[#allocation4 + $0x1d8] sm:$0xff]
    %v5171 = vld [vmem:[#allocation4 + $0x1e0] sm:$0xff]
    %v5172 = vld [vmem:[#allocation4 + $0x1e8] sm:$0xff]
    %v5173 = vld [vmem:[#allocation4 + $0x1f0] sm:$0xff]
    %v5174 = vld [vmem:[#allocation4 + $0x1f8] sm:$0xff]
    %v5175 = vld [vmem:[#allocation4 + $0x200] sm:$0xff]
    %v5176 = vld [vmem:[#allocation4 + $0x208] sm:$0xff]
    %v5177 = vld [vmem:[#allocation4 + $0x210] sm:$0xff]
    %v5178 = vld [vmem:[#allocation4 + $0x218] sm:$0xff]
    %v5179 = vld [vmem:[#allocation4 + $0x220] sm:$0xff]
    %v5180 = vld [vmem:[#allocation4 + $0x228] sm:$0xff]
    %v5181 = vld [vmem:[#allocation4 + $0x230] sm:$0xff]
    %v5182 = vld [vmem:[#allocation4 + $0x238] sm:$0xff]
    %v5183 = vld [vmem:[#allocation4 + $0x240] sm:$0xff]
    %v5184 = vld [vmem:[#allocation4 + $0x248] sm:$0xff]
    %v5185 = vld [vmem:[#allocation4 + $0x250] sm:$0xff]
    %v5186 = vld [vmem:[#allocation4 + $0x258] sm:$0xff]
    %v5187 = vld [vmem:[#allocation4 + $0x260] sm:$0xff]
    %v5188 = vld [vmem:[#allocation4 + $0x268] sm:$0xff]
    %v5189 = vld [vmem:[#allocation4 + $0x270] sm:$0xff]
    %v5190 = vld [vmem:[#allocation4 + $0x278] sm:$0xff]
    %v5191 = vld [vmem:[#allocation4 + $0x280] sm:$0xff]
    %v5192 = vld [vmem:[#allocation4 + $0x288] sm:$0xff]
    %v5193 = vld [vmem:[#allocation4 + $0x290] sm:$0xff]
    %v5194 = vld [vmem:[#allocation4 + $0x298] sm:$0xff]
    %v5195 = vld [vmem:[#allocation4 + $0x2a0] sm:$0xff]
    %v5196 = vld [vmem:[#allocation4 + $0x2a8] sm:$0xff]
    %v5197 = vld [vmem:[#allocation4 + $0x2b0] sm:$0xff]
    %v5198 = vld [vmem:[#allocation4 + $0x2b8] sm:$0xff]
    %v5199 = vld [vmem:[#allocation4 + $0x2c0] sm:$0xff]
    %v5200 = vld [vmem:[#allocation4 + $0x2c8] sm:$0xff]
    %v5201 = vld [vmem:[#allocation4 + $0x2d0] sm:$0xff]
    %v5202 = vld [vmem:[#allocation4 + $0x2d8] sm:$0xff]
    %v5203 = vld [vmem:[#allocation4 + $0x2e0] sm:$0xff]
    %v5204 = vld [vmem:[#allocation4 + $0x2e8] sm:$0xff]
    %v5205 = vld [vmem:[#allocation4 + $0x2f0] sm:$0xff]
    %v5206 = vld [vmem:[#allocation4 + $0x2f8] sm:$0xff]
    %v5207 = vld [vmem:[%s3] sm:$0xf]
    %v5208 = vld [vmem:[%s3 + $0x4] sm:$0xf]
    %v5209 = vld [vmem:[%s3 + $0x8] sm:$0xf]
    %v5210 = vld [vmem:[%s3 + $0xc] sm:$0xf]
    %v5211 = vld [vmem:[%s3 + $0x10] sm:$0xf]
    %v5212 = vld [vmem:[%s3 + $0x14] sm:$0xf]
    %v5213 = vld [vmem:[%s3 + $0x18] sm:$0xf]
    %v5214 = vld [vmem:[%s3 + $0x1c] sm:$0xf]
    %v5215 = vld [vmem:[%s3 + $0x20] sm:$0xf]
    %v5216 = vld [vmem:[%s3 + $0x24] sm:$0xf]
    %v5217 = vld [vmem:[%s3 + $0x28] sm:$0xf]
    %v5218 = vld [vmem:[%s3 + $0x2c] sm:$0xf]
    %v5219 = vld [vmem:[%s3 + $0x30] sm:$0xf]
    %v5220 = vld [vmem:[%s3 + $0x34] sm:$0xf]
    %v5221 = vld [vmem:[%s3 + $0x38] sm:$0xf]
    %v5222 = vld [vmem:[%s3 + $0x3c] sm:$0xf]
    %v5223 = vld [vmem:[%s3 + $0x40] sm:$0xf]
    %v5224 = vld [vmem:[%s3 + $0x44] sm:$0xf]
    %v5225 = vld [vmem:[%s3 + $0x48] sm:$0xf]
    %v5226 = vld [vmem:[%s3 + $0x4c] sm:$0xf]
    %v5227 = vld [vmem:[%s3 + $0x50] sm:$0xf]
    %v5228 = vld [vmem:[%s3 + $0x54] sm:$0xf]
    %v5229 = vld [vmem:[%s3 + $0x58] sm:$0xf]
    %v5230 = vld [vmem:[%s3 + $0x5c] sm:$0xf]
    %v5231 = vld [vmem:[%s3 + $0x60] sm:$0xf]
    %v5232 = vld [vmem:[%s3 + $0x64] sm:$0xf]
    %v5233 = vld [vmem:[%s3 + $0x68] sm:$0xf]
    %v5234 = vld [vmem:[%s3 + $0x6c] sm:$0xf]
    %v5235 = vld [vmem:[%s3 + $0x70] sm:$0xf]
    %v5236 = vld [vmem:[%s3 + $0x74] sm:$0xf]
    %v5237 = vld [vmem:[%s3 + $0x78] sm:$0xf]
    %v5238 = vld [vmem:[%s3 + $0x7c] sm:$0xf]
    %v5239 = vld [vmem:[%s3 + $0x80] sm:$0xf]
    %v5240 = vld [vmem:[%s3 + $0x84] sm:$0xf]
    %v5241 = vld [vmem:[%s3 + $0x88] sm:$0xf]
    %v5242 = vld [vmem:[%s3 + $0x8c] sm:$0xf]
    %v5243 = vld [vmem:[%s4] sm:$0x1]
    %v5245 = vlaneseq
    %v5246 = vshrl.u32 %v5245, 7
    %v5247 = vsub.s32 0, %v5246
    %v5248 = vrot.slane %v5243, %v5247
    %v5286 = vunpack.c.l.b16 %v5207
    %v5287 = vunpack.c.l.b16 %v5208
    %v5288 = vunpack.c.l.b16 %v5209
    %v5289 = vunpack.c.l.b16 %v5210
    %v5290 = vunpack.c.l.b16 %v5211
    %v5291 = vunpack.c.l.b16 %v5212
    %v5292 = vunpack.c.l.b16 %v5213
    %v5293 = vunpack.c.l.b16 %v5214
    %v5294 = vunpack.c.l.b16 %v5215
    %v5295 = vunpack.c.l.b16 %v5216
    %v5296 = vunpack.c.l.b16 %v5217
    %v5297 = vunpack.c.l.b16 %v5218
    %v5298 = vunpack.c.l.b16 %v5219
    %v5299 = vunpack.c.l.b16 %v5220
    %v5300 = vunpack.c.l.b16 %v5221
    %v5301 = vunpack.c.l.b16 %v5222
    %v5302 = vunpack.c.l.b16 %v5223
    %v5303 = vunpack.c.l.b16 %v5224
    %v5304 = vunpack.c.l.b16 %v5225
    %v5305 = vunpack.c.l.b16 %v5226
    %v5306 = vunpack.c.l.b16 %v5227
    %v5307 = vunpack.c.l.b16 %v5228
    %v5308 = vunpack.c.l.b16 %v5229
    %v5309 = vunpack.c.l.b16 %v5230
    %v5310 = vunpack.c.l.b16 %v5231
    %v5311 = vunpack.c.l.b16 %v5232
    %v5312 = vunpack.c.l.b16 %v5233
    %v5313 = vunpack.c.l.b16 %v5234
    %v5314 = vunpack.c.l.b16 %v5235
    %v5315 = vunpack.c.l.b16 %v5236
    %v5316 = vunpack.c.l.b16 %v5237
    %v5317 = vunpack.c.l.b16 %v5238
    %v5318 = vunpack.c.l.b16 %v5239
    %v5319 = vunpack.c.l.b16 %v5240
    %v5320 = vunpack.c.l.b16 %v5241
    %v5321 = vunpack.c.l.b16 %v5242
    %v5322 = vpack.c.b16 %v5287, %v5286
    %v5323 = vpack.c.b16 %v5289, %v5288
    %v5324 = vpack.c.b16 %v5291, %v5290
    %v5325 = vpack.c.b16 %v5293, %v5292
    %v5326 = vpack.c.b16 %v5295, %v5294
    %v5327 = vpack.c.b16 %v5297, %v5296
    %v5328 = vpack.c.b16 %v5299, %v5298
    %v5329 = vpack.c.b16 %v5301, %v5300
    %v5330 = vpack.c.b16 %v5303, %v5302
    %v5331 = vpack.c.b16 %v5305, %v5304
    %v5332 = vpack.c.b16 %v5307, %v5306
    %v5333 = vpack.c.b16 %v5309, %v5308
    %v5334 = vpack.c.b16 %v5311, %v5310
    %v5335 = vpack.c.b16 %v5313, %v5312
    %v5336 = vpack.c.b16 %v5315, %v5314
    %v5337 = vpack.c.b16 %v5317, %v5316
    %v5338 = vpack.c.b16 %v5319, %v5318
    %v5339 = vpack.c.b16 %v5321, %v5320
    %v5359 = vsel %vm2473, %v5113, 0
    %v5362 = vsel %vm2473, %v5116, 0
    %v5365 = vsel %vm2473, %v5119, 0
    %v5368 = vsel %vm2473, %v5122, 0
    %v5371 = vsel %vm2473, %v5125, 0
    %v5374 = vsel %vm2473, %v5128, 0
    %v5377 = vsel %vm2473, %v5131, 0
    %v5380 = vsel %vm2473, %v5134, 0
    %v5383 = vsel %vm2473, %v5137, 0
    %v5386 = vsel %vm2473, %v5140, 0
    %v5389 = vsel %vm2473, %v5143, 0
    %v5392 = vsel %vm2473, %v5146, 0
    %v5395 = vsel %vm2473, %v5149, 0
    %v5398 = vsel %vm2473, %v5152, 0
    %v5401 = vsel %vm2473, %v5155, 0
    %v5404 = vsel %vm2473, %v5158, 0
    %v5407 = vsel %vm2473, %v5161, 0
    %v5410 = vsel %vm2473, %v5164, 0
    %v5413 = vsel %vm2473, %v5167, 0
    %v5416 = vsel %vm2473, %v5170, 0
    %v5419 = vsel %vm2473, %v5173, 0
    %v5422 = vsel %vm2473, %v5176, 0
    %v5425 = vsel %vm2473, %v5179, 0
    %v5428 = vsel %vm2473, %v5182, 0
    %v5431 = vsel %vm2473, %v5185, 0
    %v5434 = vsel %vm2473, %v5188, 0
    %v5437 = vsel %vm2473, %v5191, 0
    %v5440 = vsel %vm2473, %v5194, 0
    %v5443 = vsel %vm2473, %v5197, 0
    %v5446 = vsel %vm2473, %v5200, 0
    %v5449 = vsel %vm2473, %v5203, 0
    %v5452 = vsel %vm2473, %v5206, 0
    %5454 = vmatprep.subr.bf16.mxu0 0
    %5455 = vmatpush1.bf16.msra.mxu0 %v5322
    %5456 = vmatprep.subr.bf16.mxu0 0
    %5457 = vmatpush1.bf16.msra.mxu0 %v5323
    %5458 = vmatprep.subr.bf16.mxu0 0
    %5459 = vmatpush1.bf16.msra.mxu0 %v5324
    %5460 = vmatprep.subr.bf16.mxu0 0
    %5461 = vmatpush1.bf16.msra.mxu0 %v5325
    %5462 = vmatprep.subr.bf16.mxu0 0
    %5463 = vmatpush1.bf16.msra.mxu0 %v5326
    %5464 = vmatprep.subr.bf16.mxu0 0
    %5465 = vmatpush1.bf16.msra.mxu0 %v5327
    %5466 = vmatprep.subr.bf16.mxu0 0
    %5467 = vmatpush1.bf16.msra.mxu0 %v5328
    %5468 = vmatprep.subr.bf16.mxu0 0
    %5469 = vmatpush1.bf16.msra.mxu0 %v5329
    %5470 = vmatprep.subr.bf16.mxu0 0
    %5471 = vmatpush1.bf16.msra.mxu0 %v5330
    %5472 = vmatprep.subr.bf16.mxu0 0
    %5473 = vmatpush1.bf16.msra.mxu0 %v5331
    %5474 = vmatprep.subr.bf16.mxu0 0
    %5475 = vmatpush1.bf16.msra.mxu0 %v5332
    %5476 = vmatprep.subr.bf16.mxu0 0
    %5477 = vmatpush1.bf16.msra.mxu0 %v5333
    %5478 = vmatprep.subr.bf16.mxu0 0
    %5479 = vmatpush1.bf16.msra.mxu0 %v5334
    %5480 = vmatprep.subr.bf16.mxu0 0
    %5481 = vmatpush1.bf16.msra.mxu0 %v5335
    %5482 = vmatprep.subr.bf16.mxu0 0
    %5483 = vmatpush1.bf16.msra.mxu0 %v5336
    %5484 = vmatprep.subr.bf16.mxu0 0
    %5485 = vmatpush1.bf16.msra.mxu0 %v5337
    %5486 = vmatprep.mubr.bf16.mxu0 %v5112
    %5487 = vmatmul.mubr.bf16.gmra.mrb[0].mxu0 %v5111
    %v5488 = vpop.f32.mrb[0].mxu0
    %v5489 = vadd.f32 %v5248, %v5488
    %v5490 = vpop.f32.mrb[0].mxu0
    %v5491 = vpop.f32.mrb[0].mxu0
    %v5492 = vadd.f32 %v5248, %v5491
    %v5493 = vpop.f32.mrb[0].mxu0
    %5494 = vmatprep.mubr.bf16.mxu0 %v5115
    %5495 = vmatmul.mubr.bf16.gmra.mrb[0].mxu0 %v5114
    %v5496 = vpop.f32.mrb[0].mxu0
    %v5497 = vadd.f32 %v5248, %v5496
    %v5498 = vpop.f32.mrb[0].mxu0
    %v5499 = vpop.f32.mrb[0].mxu0
    %v5500 = vadd.f32 %v5248, %v5499
    %v5501 = vpop.f32.mrb[0].mxu0
    %5502 = vmatprep.mubr.bf16.mxu0 %v5118
    %5503 = vmatmul.mubr.bf16.gmra.mrb[0].mxu0 %v5117
    %v5504 = vpop.f32.mrb[0].mxu0
    %v5505 = vadd.f32 %v5248, %v5504
    %v5506 = vpop.f32.mrb[0].mxu0
    %v5507 = vpop.f32.mrb[0].mxu0
    %v5508 = vadd.f32 %v5248, %v5507
    %v5509 = vpop.f32.mrb[0].mxu0
    %5510 = vmatprep.mubr.bf16.mxu0 %v5121
    %5511 = vmatmul.mubr.bf16.gmra.mrb[0].mxu0 %v5120
    %v5512 = vpop.f32.mrb[0].mxu0
    %v5513 = vadd.f32 %v5248, %v5512
    %v5514 = vpop.f32.mrb[0].mxu0
    %v5515 = vpop.f32.mrb[0].mxu0
    %v5516 = vadd.f32 %v5248, %v5515
    %v5517 = vpop.f32.mrb[0].mxu0
    %5518 = vmatprep.mubr.bf16.mxu0 %v5124
    %5519 = vmatmul.mubr.bf16.gmra.mrb[0].mxu0 %v5123
    %v5520 = vpop.f32.mrb[0].mxu0
    %v5521 = vadd.f32 %v5248, %v5520
    %v5522 = vpop.f32.mrb[0].mxu0
    %v5523 = vpop.f32.mrb[0].mxu0
    %v5524 = vadd.f32 %v5248, %v5523
    %v5525 = vpop.f32.mrb[0].mxu0
    %5526 = vmatprep.mubr.bf16.mxu0 %v5127
    %5527 = vmatmul.mubr.bf16.gmra.mrb[0].mxu0 %v5126
    %v5528 = vpop.f32.mrb[0].mxu0
    %v5529 = vadd.f32 %v5248, %v5528
    %v5530 = vpop.f32.mrb[0].mxu0
    %v5531 = vpop.f32.mrb[0].mxu0
    %v5532 = vadd.f32 %v5248, %v5531
    %v5533 = vpop.f32.mrb[0].mxu0
    %5534 = vmatprep.mubr.bf16.mxu0 %v5130
    %5535 = vmatmul.mubr.bf16.gmra.mrb[0].mxu0 %v5129
    %v5536 = vpop.f32.mrb[0].mxu0
    %v5537 = vadd.f32 %v5248, %v5536
    %v5538 = vpop.f32.mrb[0].mxu0
    %v5539 = vpop.f32.mrb[0].mxu0
    %v5540 = vadd.f32 %v5248, %v5539
    %v5541 = vpop.f32.mrb[0].mxu0
    %5542 = vmatprep.mubr.bf16.mxu0 %v5133
    %5543 = vmatmul.mubr.bf16.gmra.mrb[0].mxu0 %v5132
    %v5544 = vpop.f32.mrb[0].mxu0
    %v5545 = vadd.f32 %v5248, %v5544
    %v5546 = vpop.f32.mrb[0].mxu0
    %v5547 = vpop.f32.mrb[0].mxu0
    %v5548 = vadd.f32 %v5248, %v5547
    %v5549 = vpop.f32.mrb[0].mxu0
    %5550 = vmatprep.mubr.bf16.mxu0 %v5136
    %5551 = vmatmul.mubr.bf16.gmra.mrb[0].mxu0 %v5135
    %v5552 = vpop.f32.mrb[0].mxu0
    %v5553 = vadd.f32 %v5248, %v5552
    %v5554 = vpop.f32.mrb[0].mxu0
    %v5555 = vpop.f32.mrb[0].mxu0
    %v5556 = vadd.f32 %v5248, %v5555
    %v5557 = vpop.f32.mrb[0].mxu0
    %5558 = vmatprep.mubr.bf16.mxu0 %v5139
    %5559 = vmatmul.mubr.bf16.gmra.mrb[0].mxu0 %v5138
    %v5560 = vpop.f32.mrb[0].mxu0
    %v5561 = vadd.f32 %v5248, %v5560
    %v5562 = vpop.f32.mrb[0].mxu0
    %v5563 = vpop.f32.mrb[0].mxu0
    %v5564 = vadd.f32 %v5248, %v5563
    %v5565 = vpop.f32.mrb[0].mxu0
    %5566 = vmatprep.mubr.bf16.mxu0 %v5142
    %5567 = vmatmul.mubr.bf16.gmra.mrb[0].mxu0 %v5141
    %v5568 = vpop.f32.mrb[0].mxu0
    %v5569 = vadd.f32 %v5248, %v5568
    %v5570 = vpop.f32.mrb[0].mxu0
    %v5571 = vpop.f32.mrb[0].mxu0
    %v5572 = vadd.f32 %v5248, %v5571
    %v5573 = vpop.f32.mrb[0].mxu0
    %5574 = vmatprep.mubr.bf16.mxu0 %v5145
    %5575 = vmatmul.mubr.bf16.gmra.mrb[0].mxu0 %v5144
    %v5576 = vpop.f32.mrb[0].mxu0
    %v5577 = vadd.f32 %v5248, %v5576
    %v5578 = vpop.f32.mrb[0].mxu0
    %v5579 = vpop.f32.mrb[0].mxu0
    %v5580 = vadd.f32 %v5248, %v5579
    %v5581 = vpop.f32.mrb[0].mxu0
    %5582 = vmatprep.mubr.bf16.mxu0 %v5148
    %5583 = vmatmul.mubr.bf16.gmra.mrb[0].mxu0 %v5147
    %v5584 = vpop.f32.mrb[0].mxu0
    %v5585 = vadd.f32 %v5248, %v5584
    %v5586 = vpop.f32.mrb[0].mxu0
    %v5587 = vpop.f32.mrb[0].mxu0
    %v5588 = vadd.f32 %v5248, %v5587
    %v5589 = vpop.f32.mrb[0].mxu0
    %5590 = vmatprep.mubr.bf16.mxu0 %v5151
    %5591 = vmatmul.mubr.bf16.gmra.mrb[0].mxu0 %v5150
    %v5592 = vpop.f32.mrb[0].mxu0
    %v5593 = vadd.f32 %v5248, %v5592
    %v5594 = vpop.f32.mrb[0].mxu0
    %v5595 = vpop.f32.mrb[0].mxu0
    %v5596 = vadd.f32 %v5248, %v5595
    %v5597 = vpop.f32.mrb[0].mxu0
    %5598 = vmatprep.mubr.bf16.mxu0 %v5154
    %5599 = vmatmul.mubr.bf16.gmra.mrb[0].mxu0 %v5153
    %v5600 = vpop.f32.mrb[0].mxu0
    %v5601 = vadd.f32 %v5248, %v5600
    %v5602 = vpop.f32.mrb[0].mxu0
    %v5603 = vpop.f32.mrb[0].mxu0
    %v5604 = vadd.f32 %v5248, %v5603
    %v5605 = vpop.f32.mrb[0].mxu0
    %5606 = vmatprep.mubr.bf16.mxu0 %v5157
    %5607 = vmatmul.mubr.bf16.gmra.mrb[0].mxu0 %v5156
    %v5608 = vpop.f32.mrb[0].mxu0
    %v5609 = vadd.f32 %v5248, %v5608
    %v5610 = vpop.f32.mrb[0].mxu0
    %v5611 = vpop.f32.mrb[0].mxu0
    %v5612 = vadd.f32 %v5248, %v5611
    %v5613 = vpop.f32.mrb[0].mxu0
    %5614 = vmatprep.mubr.bf16.mxu0 %v5160
    %5615 = vmatmul.mubr.bf16.gmra.mrb[0].mxu0 %v5159
    %v5616 = vpop.f32.mrb[0].mxu0
    %v5617 = vadd.f32 %v5248, %v5616
    %v5618 = vpop.f32.mrb[0].mxu0
    %v5619 = vpop.f32.mrb[0].mxu0
    %v5620 = vadd.f32 %v5248, %v5619
    %v5621 = vpop.f32.mrb[0].mxu0
    %5622 = vmatprep.mubr.bf16.mxu0 %v5163
    %5623 = vmatmul.mubr.bf16.gmra.mrb[0].mxu0 %v5162
    %v5624 = vpop.f32.mrb[0].mxu0
    %v5625 = vadd.f32 %v5248, %v5624
    %v5626 = vpop.f32.mrb[0].mxu0
    %v5627 = vpop.f32.mrb[0].mxu0
    %v5628 = vadd.f32 %v5248, %v5627
    %v5629 = vpop.f32.mrb[0].mxu0
    %5630 = vmatprep.mubr.bf16.mxu0 %v5166
    %5631 = vmatmul.mubr.bf16.gmra.mrb[0].mxu0 %v5165
    %v5632 = vpop.f32.mrb[0].mxu0
    %v5633 = vadd.f32 %v5248, %v5632
    %v5634 = vpop.f32.mrb[0].mxu0
    %v5635 = vpop.f32.mrb[0].mxu0
    %v5636 = vadd.f32 %v5248, %v5635
    %v5637 = vpop.f32.mrb[0].mxu0
    %5638 = vmatprep.mubr.bf16.mxu0 %v5169
    %5639 = vmatmul.mubr.bf16.gmra.mrb[0].mxu0 %v5168
    %v5640 = vpop.f32.mrb[0].mxu0
    %v5641 = vadd.f32 %v5248, %v5640
    %v5642 = vpop.f32.mrb[0].mxu0
    %v5643 = vpop.f32.mrb[0].mxu0
    %v5644 = vadd.f32 %v5248, %v5643
    %v5645 = vpop.f32.mrb[0].mxu0
    %5646 = vmatprep.mubr.bf16.mxu0 %v5172
    %5647 = vmatmul.mubr.bf16.gmra.mrb[0].mxu0 %v5171
    %v5648 = vpop.f32.mrb[0].mxu0
    %v5649 = vadd.f32 %v5248, %v5648
    %v5650 = vpop.f32.mrb[0].mxu0
    %v5651 = vpop.f32.mrb[0].mxu0
    %v5652 = vadd.f32 %v5248, %v5651
    %v5653 = vpop.f32.mrb[0].mxu0
    %5654 = vmatprep.mubr.bf16.mxu0 %v5175
    %5655 = vmatmul.mubr.bf16.gmra.mrb[0].mxu0 %v5174
    %v5656 = vpop.f32.mrb[0].mxu0
    %v5657 = vadd.f32 %v5248, %v5656
    %v5658 = vpop.f32.mrb[0].mxu0
    %v5659 = vpop.f32.mrb[0].mxu0
    %v5660 = vadd.f32 %v5248, %v5659
    %v5661 = vpop.f32.mrb[0].mxu0
    %5662 = vmatprep.mubr.bf16.mxu0 %v5178
    %5663 = vmatmul.mubr.bf16.gmra.mrb[0].mxu0 %v5177
    %v5664 = vpop.f32.mrb[0].mxu0
    %v5665 = vadd.f32 %v5248, %v5664
    %v5666 = vpop.f32.mrb[0].mxu0
    %v5667 = vpop.f32.mrb[0].mxu0
    %v5668 = vadd.f32 %v5248, %v5667
    %v5669 = vpop.f32.mrb[0].mxu0
    %5670 = vmatprep.mubr.bf16.mxu0 %v5181
    %5671 = vmatmul.mubr.bf16.gmra.mrb[0].mxu0 %v5180
    %v5672 = vpop.f32.mrb[0].mxu0
    %v5673 = vadd.f32 %v5248, %v5672
    %v5674 = vpop.f32.mrb[0].mxu0
    %v5675 = vpop.f32.mrb[0].mxu0
    %v5676 = vadd.f32 %v5248, %v5675
    %v5677 = vpop.f32.mrb[0].mxu0
    %5678 = vmatprep.mubr.bf16.mxu0 %v5184
    %5679 = vmatmul.mubr.bf16.gmra.mrb[0].mxu0 %v5183
    %v5680 = vpop.f32.mrb[0].mxu0
    %v5681 = vadd.f32 %v5248, %v5680
    %v5682 = vpop.f32.mrb[0].mxu0
    %v5683 = vpop.f32.mrb[0].mxu0
    %v5684 = vadd.f32 %v5248, %v5683
    %v5685 = vpop.f32.mrb[0].mxu0
    %5686 = vmatprep.mubr.bf16.mxu0 %v5187
    %5687 = vmatmul.mubr.bf16.gmra.mrb[0].mxu0 %v5186
    %v5688 = vpop.f32.mrb[0].mxu0
    %v5689 = vadd.f32 %v5248, %v5688
    %v5690 = vpop.f32.mrb[0].mxu0
    %v5691 = vpop.f32.mrb[0].mxu0
    %v5692 = vadd.f32 %v5248, %v5691
    %v5693 = vpop.f32.mrb[0].mxu0
    %5694 = vmatprep.mubr.bf16.mxu0 %v5190
    %5695 = vmatmul.mubr.bf16.gmra.mrb[0].mxu0 %v5189
    %v5696 = vpop.f32.mrb[0].mxu0
    %v5697 = vadd.f32 %v5248, %v5696
    %v5698 = vpop.f32.mrb[0].mxu0
    %v5699 = vpop.f32.mrb[0].mxu0
    %v5700 = vadd.f32 %v5248, %v5699
    %v5701 = vpop.f32.mrb[0].mxu0
    %5702 = vmatprep.mubr.bf16.mxu0 %v5193
    %5703 = vmatmul.mubr.bf16.gmra.mrb[0].mxu0 %v5192
    %v5704 = vpop.f32.mrb[0].mxu0
    %v5705 = vadd.f32 %v5248, %v5704
    %v5706 = vpop.f32.mrb[0].mxu0
    %v5707 = vpop.f32.mrb[0].mxu0
    %v5708 = vadd.f32 %v5248, %v5707
    %v5709 = vpop.f32.mrb[0].mxu0
    %5710 = vmatprep.mubr.bf16.mxu0 %v5196
    %5711 = vmatmul.mubr.bf16.gmra.mrb[0].mxu0 %v5195
    %v5712 = vpop.f32.mrb[0].mxu0
    %v5713 = vadd.f32 %v5248, %v5712
    %v5714 = vpop.f32.mrb[0].mxu0
    %v5715 = vpop.f32.mrb[0].mxu0
    %v5716 = vadd.f32 %v5248, %v5715
    %v5717 = vpop.f32.mrb[0].mxu0
    %5718 = vmatprep.mubr.bf16.mxu0 %v5199
    %5719 = vmatmul.mubr.bf16.gmra.mrb[0].mxu0 %v5198
    %v5720 = vpop.f32.mrb[0].mxu0
    %v5721 = vadd.f32 %v5248, %v5720
    %v5722 = vpop.f32.mrb[0].mxu0
    %v5723 = vpop.f32.mrb[0].mxu0
    %v5724 = vadd.f32 %v5248, %v5723
    %v5725 = vpop.f32.mrb[0].mxu0
    %5726 = vmatprep.mubr.bf16.mxu0 %v5202
    %5727 = vmatmul.mubr.bf16.gmra.mrb[0].mxu0 %v5201
    %v5728 = vpop.f32.mrb[0].mxu0
    %v5729 = vadd.f32 %v5248, %v5728
    %v5730 = vpop.f32.mrb[0].mxu0
    %v5731 = vpop.f32.mrb[0].mxu0
    %v5732 = vadd.f32 %v5248, %v5731
    %v5733 = vpop.f32.mrb[0].mxu0
    %5734 = vmatprep.mubr.bf16.mxu0 %v5205
    %5735 = vmatmul.mubr.bf16.gmra.mrb[0].mxu0 %v5204
    %v5736 = vpop.f32.mrb[0].mxu0
    %v5737 = vadd.f32 %v5248, %v5736
    %v5738 = vpop.f32.mrb[0].mxu0
    %v5739 = vpop.f32.mrb[0].mxu0
    %v5740 = vadd.f32 %v5248, %v5739
    %v5741 = vpop.f32.mrb[0].mxu0
    %5742 = vdwg.mxu0
    %5743 = vmatprep.subr.bf16.mxu0 0
    %5744 = vmatpush1.bf16.msra.mxu0 %v5338
    %5745 = vmatprep.subr.bf16.mxu0 0
    %5746 = vmatpush1.bf16.msra.mxu0 %v5339
    %5747 = vmatprep.subr.bf16.mxu0 0
    %5748 = vmatpush1.bf16.msra.mxu0 0
    %5749 = vmatprep.subr.bf16.mxu0 0
    %5750 = vmatpush1.bf16.msra.mxu0 0
    %5751 = vmatprep.subr.bf16.mxu0 0
    %5752 = vmatpush1.bf16.msra.mxu0 0
    %5753 = vmatprep.subr.bf16.mxu0 0
    %5754 = vmatpush1.bf16.msra.mxu0 0
    %5755 = vmatprep.subr.bf16.mxu0 0
    %5756 = vmatpush1.bf16.msra.mxu0 0
    %5757 = vmatprep.subr.bf16.mxu0 0
    %5758 = vmatpush1.bf16.msra.mxu0 0
    %5759 = vmatprep.subr.bf16.mxu0 0
    %5760 = vmatpush1.bf16.msra.mxu0 0
    %5761 = vmatprep.subr.bf16.mxu0 0
    %5762 = vmatpush1.bf16.msra.mxu0 0
    %5763 = vmatprep.subr.bf16.mxu0 0
    %5764 = vmatpush1.bf16.msra.mxu0 0
    %5765 = vmatprep.subr.bf16.mxu0 0
    %5766 = vmatpush1.bf16.msra.mxu0 0
    %5767 = vmatprep.subr.bf16.mxu0 0
    %5768 = vmatpush1.bf16.msra.mxu0 0
    %5769 = vmatprep.subr.bf16.mxu0 0
    %5770 = vmatpush1.bf16.msra.mxu0 0
    %5771 = vmatprep.subr.bf16.mxu0 0
    %5772 = vmatpush1.bf16.msra.mxu0 0
    %5773 = vmatprep.subr.bf16.mxu0 0
    %5774 = vmatpush1.bf16.msra.mxu0 0
    %5775 = vmatprep.mubr.bf16.mxu0 0
    %5776 = vmatmul.mubr.bf16.gmra.mrb[0].mxu0 %v5359
    %v5777 = vpop.f32.mrb[0].mxu0
    %v5778 = vadd.f32 %v5489, %v5777
    %v5779 = vpop.f32.mrb[0].mxu0
    %v5780 = vpop.f32.mrb[0].mxu0
    %v5781 = vadd.f32 %v5492, %v5780
    %v5782 = vpop.f32.mrb[0].mxu0
    %5783 = vmatprep.mubr.bf16.mxu0 0
    %5784 = vmatmul.mubr.bf16.gmra.mrb[0].mxu0 %v5362
    %v5785 = vpop.f32.mrb[0].mxu0
    %v5786 = vadd.f32 %v5497, %v5785
    %v5787 = vpop.f32.mrb[0].mxu0
    %v5788 = vpop.f32.mrb[0].mxu0
    %v5789 = vadd.f32 %v5500, %v5788
    %v5790 = vpop.f32.mrb[0].mxu0
    %5791 = vmatprep.mubr.bf16.mxu0 0
    %5792 = vmatmul.mubr.bf16.gmra.mrb[0].mxu0 %v5365
    %v5793 = vpop.f32.mrb[0].mxu0
    %v5794 = vadd.f32 %v5505, %v5793
    %v5795 = vpop.f32.mrb[0].mxu0
    %v5796 = vpop.f32.mrb[0].mxu0
    %v5797 = vadd.f32 %v5508, %v5796
    %v5798 = vpop.f32.mrb[0].mxu0
    %5799 = vmatprep.mubr.bf16.mxu0 0
    %5800 = vmatmul.mubr.bf16.gmra.mrb[0].mxu0 %v5368
    %v5801 = vpop.f32.mrb[0].mxu0
    %v5802 = vadd.f32 %v5513, %v5801
    %v5803 = vpop.f32.mrb[0].mxu0
    %v5804 = vpop.f32.mrb[0].mxu0
    %v5805 = vadd.f32 %v5516, %v5804
    %v5806 = vpop.f32.mrb[0].mxu0
    %5807 = vmatprep.mubr.bf16.mxu0 0
    %5808 = vmatmul.mubr.bf16.gmra.mrb[0].mxu0 %v5371
    %v5809 = vpop.f32.mrb[0].mxu0
    %v5810 = vadd.f32 %v5521, %v5809
    %v5811 = vpop.f32.mrb[0].mxu0
    %v5812 = vpop.f32.mrb[0].mxu0
    %v5813 = vadd.f32 %v5524, %v5812
    %v5814 = vpop.f32.mrb[0].mxu0
    %5815 = vmatprep.mubr.bf16.mxu0 0
    %5816 = vmatmul.mubr.bf16.gmra.mrb[0].mxu0 %v5374
    %v5817 = vpop.f32.mrb[0].mxu0
    %v5818 = vadd.f32 %v5529, %v5817
    %v5819 = vpop.f32.mrb[0].mxu0
    %v5820 = vpop.f32.mrb[0].mxu0
    %v5821 = vadd.f32 %v5532, %v5820
    %v5822 = vpop.f32.mrb[0].mxu0
    %5823 = vmatprep.mubr.bf16.mxu0 0
    %5824 = vmatmul.mubr.bf16.gmra.mrb[0].mxu0 %v5377
    %v5825 = vpop.f32.mrb[0].mxu0
    %v5826 = vadd.f32 %v5537, %v5825
    %v5827 = vpop.f32.mrb[0].mxu0
    %v5828 = vpop.f32.mrb[0].mxu0
    %v5829 = vadd.f32 %v5540, %v5828
    %v5830 = vpop.f32.mrb[0].mxu0
    %5831 = vmatprep.mubr.bf16.mxu0 0
    %5832 = vmatmul.mubr.bf16.gmra.mrb[0].mxu0 %v5380
    %v5833 = vpop.f32.mrb[0].mxu0
    %v5834 = vadd.f32 %v5545, %v5833
    %v5835 = vpop.f32.mrb[0].mxu0
    %v5836 = vpop.f32.mrb[0].mxu0
    %v5837 = vadd.f32 %v5548, %v5836
    %v5838 = vpop.f32.mrb[0].mxu0
    %5839 = vmatprep.mubr.bf16.mxu0 0
    %5840 = vmatmul.mubr.bf16.gmra.mrb[0].mxu0 %v5383
    %v5841 = vpop.f32.mrb[0].mxu0
    %v5842 = vadd.f32 %v5553, %v5841
    %v5843 = vpop.f32.mrb[0].mxu0
    %v5844 = vpop.f32.mrb[0].mxu0
    %v5845 = vadd.f32 %v5556, %v5844
    %v5846 = vpop.f32.mrb[0].mxu0
    %5847 = vmatprep.mubr.bf16.mxu0 0
    %5848 = vmatmul.mubr.bf16.gmra.mrb[0].mxu0 %v5386
    %v5849 = vpop.f32.mrb[0].mxu0
    %v5850 = vadd.f32 %v5561, %v5849
    %v5851 = vpop.f32.mrb[0].mxu0
    %v5852 = vpop.f32.mrb[0].mxu0
    %v5853 = vadd.f32 %v5564, %v5852
    %v5854 = vpop.f32.mrb[0].mxu0
    %5855 = vmatprep.mubr.bf16.mxu0 0
    %5856 = vmatmul.mubr.bf16.gmra.mrb[0].mxu0 %v5389
    %v5857 = vpop.f32.mrb[0].mxu0
    %v5858 = vadd.f32 %v5569, %v5857
    %v5859 = vpop.f32.mrb[0].mxu0
    %v5860 = vpop.f32.mrb[0].mxu0
    %v5861 = vadd.f32 %v5572, %v5860
    %v5862 = vpop.f32.mrb[0].mxu0
    %5863 = vmatprep.mubr.bf16.mxu0 0
    %5864 = vmatmul.mubr.bf16.gmra.mrb[0].mxu0 %v5392
    %v5865 = vpop.f32.mrb[0].mxu0
    %v5866 = vadd.f32 %v5577, %v5865
    %v5867 = vpop.f32.mrb[0].mxu0
    %v5868 = vpop.f32.mrb[0].mxu0
    %v5869 = vadd.f32 %v5580, %v5868
    %v5870 = vpop.f32.mrb[0].mxu0
    %5871 = vmatprep.mubr.bf16.mxu0 0
    %5872 = vmatmul.mubr.bf16.gmra.mrb[0].mxu0 %v5395
    %v5873 = vpop.f32.mrb[0].mxu0
    %v5874 = vadd.f32 %v5585, %v5873
    %v5875 = vpop.f32.mrb[0].mxu0
    %v5876 = vpop.f32.mrb[0].mxu0
    %v5877 = vadd.f32 %v5588, %v5876
    %v5878 = vpop.f32.mrb[0].mxu0
    %5879 = vmatprep.mubr.bf16.mxu0 0
    %5880 = vmatmul.mubr.bf16.gmra.mrb[0].mxu0 %v5398
    %v5881 = vpop.f32.mrb[0].mxu0
    %v5882 = vadd.f32 %v5593, %v5881
    %v5883 = vpop.f32.mrb[0].mxu0
    %v5884 = vpop.f32.mrb[0].mxu0
    %v5885 = vadd.f32 %v5596, %v5884
    %v5886 = vpop.f32.mrb[0].mxu0
    %5887 = vmatprep.mubr.bf16.mxu0 0
    %5888 = vmatmul.mubr.bf16.gmra.mrb[0].mxu0 %v5401
    %v5889 = vpop.f32.mrb[0].mxu0
    %v5890 = vadd.f32 %v5601, %v5889
    %v5891 = vpop.f32.mrb[0].mxu0
    %v5892 = vpop.f32.mrb[0].mxu0
    %v5893 = vadd.f32 %v5604, %v5892
    %v5894 = vpop.f32.mrb[0].mxu0
    %5895 = vmatprep.mubr.bf16.mxu0 0
    %5896 = vmatmul.mubr.bf16.gmra.mrb[0].mxu0 %v5404
    %v5897 = vpop.f32.mrb[0].mxu0
    %v5898 = vadd.f32 %v5609, %v5897
    %v5899 = vpop.f32.mrb[0].mxu0
    %v5900 = vpop.f32.mrb[0].mxu0
    %v5901 = vadd.f32 %v5612, %v5900
    %v5902 = vpop.f32.mrb[0].mxu0
    %5903 = vmatprep.mubr.bf16.mxu0 0
    %5904 = vmatmul.mubr.bf16.gmra.mrb[0].mxu0 %v5407
    %v5905 = vpop.f32.mrb[0].mxu0
    %v5906 = vadd.f32 %v5617, %v5905
    %v5907 = vpop.f32.mrb[0].mxu0
    %v5908 = vpop.f32.mrb[0].mxu0
    %v5909 = vadd.f32 %v5620, %v5908
    %v5910 = vpop.f32.mrb[0].mxu0
    %5911 = vmatprep.mubr.bf16.mxu0 0
    %5912 = vmatmul.mubr.bf16.gmra.mrb[0].mxu0 %v5410
    %v5913 = vpop.f32.mrb[0].mxu0
    %v5914 = vadd.f32 %v5625, %v5913
    %v5915 = vpop.f32.mrb[0].mxu0
    %v5916 = vpop.f32.mrb[0].mxu0
    %v5917 = vadd.f32 %v5628, %v5916
    %v5918 = vpop.f32.mrb[0].mxu0
    %5919 = vmatprep.mubr.bf16.mxu0 0
    %5920 = vmatmul.mubr.bf16.gmra.mrb[0].mxu0 %v5413
    %v5921 = vpop.f32.mrb[0].mxu0
    %v5922 = vadd.f32 %v5633, %v5921
    %v5923 = vpop.f32.mrb[0].mxu0
    %v5924 = vpop.f32.mrb[0].mxu0
    %v5925 = vadd.f32 %v5636, %v5924
    %v5926 = vpop.f32.mrb[0].mxu0
    %5927 = vmatprep.mubr.bf16.mxu0 0
    %5928 = vmatmul.mubr.bf16.gmra.mrb[0].mxu0 %v5416
    %v5929 = vpop.f32.mrb[0].mxu0
    %v5930 = vadd.f32 %v5641, %v5929
    %v5931 = vpop.f32.mrb[0].mxu0
    %v5932 = vpop.f32.mrb[0].mxu0
    %v5933 = vadd.f32 %v5644, %v5932
    %v5934 = vpop.f32.mrb[0].mxu0
    %5935 = vmatprep.mubr.bf16.mxu0 0
    %5936 = vmatmul.mubr.bf16.gmra.mrb[0].mxu0 %v5419
    %v5937 = vpop.f32.mrb[0].mxu0
    %v5938 = vadd.f32 %v5649, %v5937
    %v5939 = vpop.f32.mrb[0].mxu0
    %v5940 = vpop.f32.mrb[0].mxu0
    %v5941 = vadd.f32 %v5652, %v5940
    %v5942 = vpop.f32.mrb[0].mxu0
    %5943 = vmatprep.mubr.bf16.mxu0 0
    %5944 = vmatmul.mubr.bf16.gmra.mrb[0].mxu0 %v5422
    %v5945 = vpop.f32.mrb[0].mxu0
    %v5946 = vadd.f32 %v5657, %v5945
    %v5947 = vpop.f32.mrb[0].mxu0
    %v5948 = vpop.f32.mrb[0].mxu0
    %v5949 = vadd.f32 %v5660, %v5948
    %v5950 = vpop.f32.mrb[0].mxu0
    %5951 = vmatprep.mubr.bf16.mxu0 0
    %5952 = vmatmul.mubr.bf16.gmra.mrb[0].mxu0 %v5425
    %v5953 = vpop.f32.mrb[0].mxu0
    %v5954 = vadd.f32 %v5665, %v5953
    %v5955 = vpop.f32.mrb[0].mxu0
    %v5956 = vpop.f32.mrb[0].mxu0
    %v5957 = vadd.f32 %v5668, %v5956
    %v5958 = vpop.f32.mrb[0].mxu0
    %5959 = vmatprep.mubr.bf16.mxu0 0
    %5960 = vmatmul.mubr.bf16.gmra.mrb[0].mxu0 %v5428
    %v5961 = vpop.f32.mrb[0].mxu0
    %v5962 = vadd.f32 %v5673, %v5961
    %v5963 = vpop.f32.mrb[0].mxu0
    %v5964 = vpop.f32.mrb[0].mxu0
    %v5965 = vadd.f32 %v5676, %v5964
    %v5966 = vpop.f32.mrb[0].mxu0
    %5967 = vmatprep.mubr.bf16.mxu0 0
    %5968 = vmatmul.mubr.bf16.gmra.mrb[0].mxu0 %v5431
    %v5969 = vpop.f32.mrb[0].mxu0
    %v5970 = vadd.f32 %v5681, %v5969
    %v5971 = vpop.f32.mrb[0].mxu0
    %v5972 = vpop.f32.mrb[0].mxu0
    %v5973 = vadd.f32 %v5684, %v5972
    %v5974 = vpop.f32.mrb[0].mxu0
    %5975 = vmatprep.mubr.bf16.mxu0 0
    %5976 = vmatmul.mubr.bf16.gmra.mrb[0].mxu0 %v5434
    %v5977 = vpop.f32.mrb[0].mxu0
    %v5978 = vadd.f32 %v5689, %v5977
    %v5979 = vpop.f32.mrb[0].mxu0
    %v5980 = vpop.f32.mrb[0].mxu0
    %v5981 = vadd.f32 %v5692, %v5980
    %v5982 = vpop.f32.mrb[0].mxu0
    %5983 = vmatprep.mubr.bf16.mxu0 0
    %5984 = vmatmul.mubr.bf16.gmra.mrb[0].mxu0 %v5437
    %v5985 = vpop.f32.mrb[0].mxu0
    %v5986 = vadd.f32 %v5697, %v5985
    %v5987 = vpop.f32.mrb[0].mxu0
    %v5988 = vpop.f32.mrb[0].mxu0
    %v5989 = vadd.f32 %v5700, %v5988
    %v5990 = vpop.f32.mrb[0].mxu0
    %5991 = vmatprep.mubr.bf16.mxu0 0
    %5992 = vmatmul.mubr.bf16.gmra.mrb[0].mxu0 %v5440
    %v5993 = vpop.f32.mrb[0].mxu0
    %v5994 = vadd.f32 %v5705, %v5993
    %v5995 = vpop.f32.mrb[0].mxu0
    %v5996 = vpop.f32.mrb[0].mxu0
    %v5997 = vadd.f32 %v5708, %v5996
    %v5998 = vpop.f32.mrb[0].mxu0
    %5999 = vmatprep.mubr.bf16.mxu0 0
    %6000 = vmatmul.mubr.bf16.gmra.mrb[0].mxu0 %v5443
    %v6001 = vpop.f32.mrb[0].mxu0
    %v6002 = vadd.f32 %v5713, %v6001
    %v6003 = vpop.f32.mrb[0].mxu0
    %v6004 = vpop.f32.mrb[0].mxu0
    %v6005 = vadd.f32 %v5716, %v6004
    %v6006 = vpop.f32.mrb[0].mxu0
    %6007 = vmatprep.mubr.bf16.mxu0 0
    %6008 = vmatmul.mubr.bf16.gmra.mrb[0].mxu0 %v5446
    %v6009 = vpop.f32.mrb[0].mxu0
    %v6010 = vadd.f32 %v5721, %v6009
    %v6011 = vpop.f32.mrb[0].mxu0
    %v6012 = vpop.f32.mrb[0].mxu0
    %v6013 = vadd.f32 %v5724, %v6012
    %v6014 = vpop.f32.mrb[0].mxu0
    %6015 = vmatprep.mubr.bf16.mxu0 0
    %6016 = vmatmul.mubr.bf16.gmra.mrb[0].mxu0 %v5449
    %v6017 = vpop.f32.mrb[0].mxu0
    %v6018 = vadd.f32 %v5729, %v6017
    %v6019 = vpop.f32.mrb[0].mxu0
    %v6020 = vpop.f32.mrb[0].mxu0
    %v6021 = vadd.f32 %v5732, %v6020
    %v6022 = vpop.f32.mrb[0].mxu0
    %6023 = vmatprep.mubr.bf16.mxu0 0
    %6024 = vmatmul.mubr.bf16.gmra.mrb[0].mxu0 %v5452
    %v6025 = vpop.f32.mrb[0].mxu0
    %v6026 = vadd.f32 %v5737, %v6025
    %v6027 = vpop.f32.mrb[0].mxu0
    %v6028 = vpop.f32.mrb[0].mxu0
    %v6029 = vadd.f32 %v5740, %v6028
    %v6030 = vpop.f32.mrb[0].mxu0
    %6031 = vdwg.mxu0
    %v6032 = vmax.f32 %v5778, 0.0
    %v6033 = vmax.f32 %v5781, 0.0
    %v6034 = vmax.f32 %v5786, 0.0
    %v6035 = vmax.f32 %v5789, 0.0
    %v6036 = vmax.f32 %v5794, 0.0
    %v6037 = vmax.f32 %v5797, 0.0
    %v6038 = vmax.f32 %v5802, 0.0
    %v6039 = vmax.f32 %v5805, 0.0
    %v6040 = vmax.f32 %v5810, 0.0
    %v6041 = vmax.f32 %v5813, 0.0
    %v6042 = vmax.f32 %v5818, 0.0
    %v6043 = vmax.f32 %v5821, 0.0
    %v6044 = vmax.f32 %v5826, 0.0
    %v6045 = vmax.f32 %v5829, 0.0
    %v6046 = vmax.f32 %v5834, 0.0
    %v6047 = vmax.f32 %v5837, 0.0
    %v6048 = vmax.f32 %v5842, 0.0
    %v6049 = vmax.f32 %v5845, 0.0
    %v6050 = vmax.f32 %v5850, 0.0
    %v6051 = vmax.f32 %v5853, 0.0
    %v6052 = vmax.f32 %v5858, 0.0
    %v6053 = vmax.f32 %v5861, 0.0
    %v6054 = vmax.f32 %v5866, 0.0
    %v6055 = vmax.f32 %v5869, 0.0
    %v6056 = vmax.f32 %v5874, 0.0
    %v6057 = vmax.f32 %v5877, 0.0
    %v6058 = vmax.f32 %v5882, 0.0
    %v6059 = vmax.f32 %v5885, 0.0
    %v6060 = vmax.f32 %v5890, 0.0
    %v6061 = vmax.f32 %v5893, 0.0
    %v6062 = vmax.f32 %v5898, 0.0
    %v6063 = vmax.f32 %v5901, 0.0
    %v6064 = vmax.f32 %v5906, 0.0
    %v6065 = vmax.f32 %v5909, 0.0
    %v6066 = vmax.f32 %v5914, 0.0
    %v6067 = vmax.f32 %v5917, 0.0
    %v6068 = vmax.f32 %v5922, 0.0
    %v6069 = vmax.f32 %v5925, 0.0
    %v6070 = vmax.f32 %v5930, 0.0
    %v6071 = vmax.f32 %v5933, 0.0
    %v6072 = vmax.f32 %v5938, 0.0
    %v6073 = vmax.f32 %v5941, 0.0
    %v6074 = vmax.f32 %v5946, 0.0
    %v6075 = vmax.f32 %v5949, 0.0
    %v6076 = vmax.f32 %v5954, 0.0
    %v6077 = vmax.f32 %v5957, 0.0
    %v6078 = vmax.f32 %v5962, 0.0
    %v6079 = vmax.f32 %v5965, 0.0
    %v6080 = vmax.f32 %v5970, 0.0
    %v6081 = vmax.f32 %v5973, 0.0
    %v6082 = vmax.f32 %v5978, 0.0
    %v6083 = vmax.f32 %v5981, 0.0
    %v6084 = vmax.f32 %v5986, 0.0
    %v6085 = vmax.f32 %v5989, 0.0
    %v6086 = vmax.f32 %v5994, 0.0
    %v6087 = vmax.f32 %v5997, 0.0
    %v6088 = vmax.f32 %v6002, 0.0
    %v6089 = vmax.f32 %v6005, 0.0
    %v6090 = vmax.f32 %v6010, 0.0
    %v6091 = vmax.f32 %v6013, 0.0
    %v6092 = vmax.f32 %v6018, 0.0
    %v6093 = vmax.f32 %v6021, 0.0
    %v6094 = vmax.f32 %v6026, 0.0
    %v6095 = vmax.f32 %v6029, 0.0
    %vm6096 = vcmask 523264
    %6097 = vst.msk [vmem:[#allocation5] sm:$0xff] %vm6096, %v6032
    %6098 = vst.msk [vmem:[#allocation5 + $0x8] sm:$0xff] %vm6096, %v6033
    %6099 = vst.msk [vmem:[#allocation5 + $0x10] sm:$0xff] %vm6096, %v6034
    %6100 = vst.msk [vmem:[#allocation5 + $0x18] sm:$0xff] %vm6096, %v6035
    %6101 = vst.msk [vmem:[#allocation5 + $0x20] sm:$0xff] %vm6096, %v6036
    %6102 = vst.msk [vmem:[#allocation5 + $0x28] sm:$0xff] %vm6096, %v6037
    %6103 = vst.msk [vmem:[#allocation5 + $0x30] sm:$0xff] %vm6096, %v6038
    %6104 = vst.msk [vmem:[#allocation5 + $0x38] sm:$0xff] %vm6096, %v6039
    %6105 = vst.msk [vmem:[#allocation5 + $0x40] sm:$0xff] %vm6096, %v6040
    %6106 = vst.msk [vmem:[#allocation5 + $0x48] sm:$0xff] %vm6096, %v6041
    %6107 = vst.msk [vmem:[#allocation5 + $0x50] sm:$0xff] %vm6096, %v6042
    %6108 = vst.msk [vmem:[#allocation5 + $0x58] sm:$0xff] %vm6096, %v6043
    %6109 = vst.msk [vmem:[#allocation5 + $0x60] sm:$0xff] %vm6096, %v6044
    %6110 = vst.msk [vmem:[#allocation5 + $0x68] sm:$0xff] %vm6096, %v6045
    %6111 = vst.msk [vmem:[#allocation5 + $0x70] sm:$0xff] %vm6096, %v6046
    %6112 = vst.msk [vmem:[#allocation5 + $0x78] sm:$0xff] %vm6096, %v6047
    %6113 = vst.msk [vmem:[#allocation5 + $0x80] sm:$0xff] %vm6096, %v6048
    %6114 = vst.msk [vmem:[#allocation5 + $0x88] sm:$0xff] %vm6096, %v6049
    %6115 = vst.msk [vmem:[#allocation5 + $0x90] sm:$0xff] %vm6096, %v6050
    %6116 = vst.msk [vmem:[#allocation5 + $0x98] sm:$0xff] %vm6096, %v6051
    %6117 = vst.msk [vmem:[#allocation5 + $0xa0] sm:$0xff] %vm6096, %v6052
    %6118 = vst.msk [vmem:[#allocation5 + $0xa8] sm:$0xff] %vm6096, %v6053
    %6119 = vst.msk [vmem:[#allocation5 + $0xb0] sm:$0xff] %vm6096, %v6054
    %6120 = vst.msk [vmem:[#allocation5 + $0xb8] sm:$0xff] %vm6096, %v6055
    %6121 = vst.msk [vmem:[#allocation5 + $0xc0] sm:$0xff] %vm6096, %v6056
    %6122 = vst.msk [vmem:[#allocation5 + $0xc8] sm:$0xff] %vm6096, %v6057
    %6123 = vst.msk [vmem:[#allocation5 + $0xd0] sm:$0xff] %vm6096, %v6058
    %6124 = vst.msk [vmem:[#allocation5 + $0xd8] sm:$0xff] %vm6096, %v6059
    %6125 = vst.msk [vmem:[#allocation5 + $0xe0] sm:$0xff] %vm6096, %v6060
    %6126 = vst.msk [vmem:[#allocation5 + $0xe8] sm:$0xff] %vm6096, %v6061
    %6127 = vst.msk [vmem:[#allocation5 + $0xf0] sm:$0xff] %vm6096, %v6062
    %6128 = vst.msk [vmem:[#allocation5 + $0xf8] sm:$0xff] %vm6096, %v6063
    %6129 = vst.msk [vmem:[#allocation5 + $0x100] sm:$0xff] %vm6096, %v6064
    %6130 = vst.msk [vmem:[#allocation5 + $0x108] sm:$0xff] %vm6096, %v6065
    %6131 = vst.msk [vmem:[#allocation5 + $0x110] sm:$0xff] %vm6096, %v6066
    %6132 = vst.msk [vmem:[#allocation5 + $0x118] sm:$0xff] %vm6096, %v6067
    %6133 = vst.msk [vmem:[#allocation5 + $0x120] sm:$0xff] %vm6096, %v6068
    %6134 = vst.msk [vmem:[#allocation5 + $0x128] sm:$0xff] %vm6096, %v6069
    %6135 = vst.msk [vmem:[#allocation5 + $0x130] sm:$0xff] %vm6096, %v6070
    %6136 = vst.msk [vmem:[#allocation5 + $0x138] sm:$0xff] %vm6096, %v6071
    %6137 = vst.msk [vmem:[#allocation5 + $0x140] sm:$0xff] %vm6096, %v6072
    %6138 = vst.msk [vmem:[#allocation5 + $0x148] sm:$0xff] %vm6096, %v6073
    %6139 = vst.msk [vmem:[#allocation5 + $0x150] sm:$0xff] %vm6096, %v6074
    %6140 = vst.msk [vmem:[#allocation5 + $0x158] sm:$0xff] %vm6096, %v6075
    %6141 = vst.msk [vmem:[#allocation5 + $0x160] sm:$0xff] %vm6096, %v6076
    %6142 = vst.msk [vmem:[#allocation5 + $0x168] sm:$0xff] %vm6096, %v6077
    %6143 = vst.msk [vmem:[#allocation5 + $0x170] sm:$0xff] %vm6096, %v6078
    %6144 = vst.msk [vmem:[#allocation5 + $0x178] sm:$0xff] %vm6096, %v6079
    %6145 = vst.msk [vmem:[#allocation5 + $0x180] sm:$0xff] %vm6096, %v6080
    %6146 = vst.msk [vmem:[#allocation5 + $0x188] sm:$0xff] %vm6096, %v6081
    %6147 = vst.msk [vmem:[#allocation5 + $0x190] sm:$0xff] %vm6096, %v6082
    %6148 = vst.msk [vmem:[#allocation5 + $0x198] sm:$0xff] %vm6096, %v6083
    %6149 = vst.msk [vmem:[#allocation5 + $0x1a0] sm:$0xff] %vm6096, %v6084
    %6150 = vst.msk [vmem:[#allocation5 + $0x1a8] sm:$0xff] %vm6096, %v6085
    %6151 = vst.msk [vmem:[#allocation5 + $0x1b0] sm:$0xff] %vm6096, %v6086
    %6152 = vst.msk [vmem:[#allocation5 + $0x1b8] sm:$0xff] %vm6096, %v6087
    %6153 = vst.msk [vmem:[#allocation5 + $0x1c0] sm:$0xff] %vm6096, %v6088
    %6154 = vst.msk [vmem:[#allocation5 + $0x1c8] sm:$0xff] %vm6096, %v6089
    %6155 = vst.msk [vmem:[#allocation5 + $0x1d0] sm:$0xff] %vm6096, %v6090
    %6156 = vst.msk [vmem:[#allocation5 + $0x1d8] sm:$0xff] %vm6096, %v6091
    %6157 = vst.msk [vmem:[#allocation5 + $0x1e0] sm:$0xff] %vm6096, %v6092
    %6158 = vst.msk [vmem:[#allocation5 + $0x1e8] sm:$0xff] %vm6096, %v6093
    %6159 = vst.msk [vmem:[#allocation5 + $0x1f0] sm:$0xff] %vm6096, %v6094
    %6160 = vst.msk [vmem:[#allocation5 + $0x1f8] sm:$0xff] %vm6096, %v6095
    %v6161 = vld [vmem:[#allocation5] sm:$0xff]
    %v6162 = vld [vmem:[#allocation5 + $0x8] sm:$0xff]
    %v6163 = vld [vmem:[#allocation5 + $0x10] sm:$0xff]
    %v6164 = vld [vmem:[#allocation5 + $0x18] sm:$0xff]
    %v6165 = vmax.f32 %v6161, %v6163
    %v6166 = vmax.f32 %v6162, %v6164
    %v6168 = vrot.slane %v6165, 1
    %v6170 = vmax.f32 %v6165, %v6168
    %vm6171 = vcmask 516096
    %6172 = vst.msk [vmem:[#allocation6] sm:$0x1] %vm6171, %v6170
    %v6175 = vunpack.c.l.s4 1983009808
    %v6176 = vunpack.c.0.s8 %v6175
    %v6177 = vlaneseq
    %v6178 = vshrl.u32 %v6177, 7
    %v6179 = vsub.s32 %v6176, %v6178
    %v6180 = vrot.slane %v6170, %v6179
    %v6181 = vcombine.high %v6180, %v6180
    %6182 = vrot.lane.b32.xlu0 %v6181, 64
    %v6183 = vpop.permute.xlu0 %6182
    %vm6185 = vcmask 1040896
    %6186 = vst.msk [vmem:[#allocation6] sm:$0x1] %vm6185, %v6183
    %v6187 = vcombine.high %v6170, %v6170
    %v6189 = vunpack.c.l.s4 1983009808
    %v6190 = vunpack.c.0.s8 %v6189
    %v6191 = vlaneseq
    %v6192 = vshrl.u32 %v6191, 7
    %v6193 = vsub.s32 %v6190, %v6192
    %v6194 = vrot.slane %v6187, %v6193
    %6196 = vst.msk [vmem:[#allocation6 + $0x2] sm:$0x1] %vm6171, %v6194
    %v6197 = vcombine.high %v6194, %v6194
    %6198 = vrot.lane.b32.xlu0 %v6197, 64
    %v6199 = vpop.permute.xlu0 %6198
    %6201 = vst.msk [vmem:[#allocation6 + $0x2] sm:$0x1] %vm6185, %v6199
    %v6203 = vrot.slane %v6166, 1
    %v6205 = vmax.f32 %v6166, %v6203
    %6206 = vst.msk [vmem:[#allocation6 + $0x4] sm:$0x1] %vm6171, %v6205
    %v6209 = vunpack.c.l.s4 1983009808
    %v6210 = vunpack.c.0.s8 %v6209
    %v6211 = vlaneseq
    %v6212 = vshrl.u32 %v6211, 7
    %v6213 = vsub.s32 %v6210, %v6212
    %v6214 = vrot.slane %v6205, %v6213
    %v6215 = vcombine.high %v6214, %v6214
    %6216 = vrot.lane.b32.xlu0 %v6215, 64
    %v6217 = vpop.permute.xlu0 %6216
    %6219 = vst.msk [vmem:[#allocation6 + $0x4] sm:$0x1] %vm6185, %v6217
    %v6220 = vcombine.high %v6205, %v6205
    %v6222 = vunpack.c.l.s4 1983009808
    %v6223 = vunpack.c.0.s8 %v6222
    %v6224 = vlaneseq
    %v6225 = vshrl.u32 %v6224, 7
    %v6226 = vsub.s32 %v6223, %v6225
    %v6227 = vrot.slane %v6220, %v6226
    %6229 = vst.msk [vmem:[#allocation6 + $0x6] sm:$0x1] %vm6171, %v6227
    %v6230 = vld [vmem:[#allocation5 + $0x20] sm:$0xff]
    %v6231 = vld [vmem:[#allocation5 + $0x28] sm:$0xff]
    %v6232 = vld [vmem:[#allocation5 + $0x30] sm:$0xff]
    %v6233 = vld [vmem:[#allocation5 + $0x38] sm:$0xff]
    %v6234 = vmax.f32 %v6230, %v6232
    %v6235 = vmax.f32 %v6231, %v6233
    %v6237 = vrot.slane %v6234, 1
    %v6239 = vmax.f32 %v6234, %v6237
    %v6242 = vunpack.c.l.s4 1983009808
    %v6243 = vunpack.c.0.s8 %v6242
    %v6244 = vlaneseq
    %v6245 = vshrl.u32 %v6244, 7
    %v6246 = vsub.s32 %v6243, %v6245
    %v6247 = vrot.slane %v6239, %v6246
    %6248 = vrot.lane.b32.xlu0 %v6247, 64
    %v6249 = vpop.permute.xlu0 %6248
    %6251 = vst.msk [vmem:[#allocation6 + $0x6] sm:$0x1] %vm6185, %v6249
    %v6252 = vcombine.high %v6247, %v6247
    %6254 = vst.msk [vmem:[#allocation6 + $0x8] sm:$0x1] %vm6171, %v6252
    %v6255 = vcombine.high %v6239, %v6239
    %v6257 = vunpack.c.l.s4 1983009808
    %v6258 = vunpack.c.0.s8 %v6257
    %v6259 = vlaneseq
    %v6260 = vshrl.u32 %v6259, 7
    %v6261 = vsub.s32 %v6258, %v6260
    %v6262 = vrot.slane %v6255, %v6261
    %6263 = vrot.lane.b32.xlu0 %v6262, 64
    %v6264 = vpop.permute.xlu0 %6263
    %6266 = vst.msk [vmem:[#allocation6 + $0x8] sm:$0x1] %vm6185, %v6264
    %v6267 = vcombine.high %v6262, %v6262
    %6269 = vst.msk [vmem:[#allocation6 + $0xa] sm:$0x1] %vm6171, %v6267
    %v6271 = vrot.slane %v6235, 1
    %v6273 = vmax.f32 %v6235, %v6271
    %v6276 = vunpack.c.l.s4 1983009808
    %v6277 = vunpack.c.0.s8 %v6276
    %v6278 = vlaneseq
    %v6279 = vshrl.u32 %v6278, 7
    %v6280 = vsub.s32 %v6277, %v6279
    %v6281 = vrot.slane %v6273, %v6280
    %6282 = vrot.lane.b32.xlu0 %v6281, 64
    %v6283 = vpop.permute.xlu0 %6282
    %6285 = vst.msk [vmem:[#allocation6 + $0xa] sm:$0x1] %vm6185, %v6283
    %v6286 = vcombine.high %v6281, %v6281
    %6288 = vst.msk [vmem:[#allocation6 + $0xc] sm:$0x1] %vm6171, %v6286
    %v6289 = vcombine.high %v6273, %v6273
    %v6291 = vunpack.c.l.s4 1983009808
    %v6292 = vunpack.c.0.s8 %v6291
    %v6293 = vlaneseq
    %v6294 = vshrl.u32 %v6293, 7
    %v6295 = vsub.s32 %v6292, %v6294
    %v6296 = vrot.slane %v6289, %v6295
    %6297 = vrot.lane.b32.xlu0 %v6296, 64
    %v6298 = vpop.permute.xlu0 %6297
    %6300 = vst.msk [vmem:[#allocation6 + $0xc] sm:$0x1] %vm6185, %v6298
    %v6301 = vld [vmem:[#allocation5 + $0x40] sm:$0xff]
    %v6302 = vld [vmem:[#allocation5 + $0x48] sm:$0xff]
    %v6303 = vld [vmem:[#allocation5 + $0x50] sm:$0xff]
    %v6304 = vld [vmem:[#allocation5 + $0x58] sm:$0xff]
    %v6305 = vmax.f32 %v6301, %v6303
    %v6306 = vmax.f32 %v6302, %v6304
    %v6308 = vrot.slane %v6305, 1
    %v6310 = vmax.f32 %v6305, %v6308
    %6311 = vst.msk [vmem:[#allocation6 + $0xe] sm:$0x1] %vm6171, %v6310
    %v6314 = vunpack.c.l.s4 1983009808
    %v6315 = vunpack.c.0.s8 %v6314
    %v6316 = vlaneseq
    %v6317 = vshrl.u32 %v6316, 7
    %v6318 = vsub.s32 %v6315, %v6317
    %v6319 = vrot.slane %v6310, %v6318
    %v6320 = vcombine.high %v6319, %v6319
    %6321 = vrot.lane.b32.xlu0 %v6320, 64
    %v6322 = vpop.permute.xlu0 %6321
    %6324 = vst.msk [vmem:[#allocation6 + $0xe] sm:$0x1] %vm6185, %v6322
    %v6325 = vcombine.high %v6310, %v6310
    %v6327 = vunpack.c.l.s4 1983009808
    %v6328 = vunpack.c.0.s8 %v6327
    %v6329 = vlaneseq
    %v6330 = vshrl.u32 %v6329, 7
    %v6331 = vsub.s32 %v6328, %v6330
    %v6332 = vrot.slane %v6325, %v6331
    %6334 = vst.msk [vmem:[#allocation6 + $0x10] sm:$0x1] %vm6171, %v6332
    %v6335 = vcombine.high %v6332, %v6332
    %6336 = vrot.lane.b32.xlu0 %v6335, 64
    %v6337 = vpop.permute.xlu0 %6336
    %6339 = vst.msk [vmem:[#allocation6 + $0x10] sm:$0x1] %vm6185, %v6337
    %v6341 = vrot.slane %v6306, 1
    %v6343 = vmax.f32 %v6306, %v6341
    %6344 = vst.msk [vmem:[#allocation6 + $0x12] sm:$0x1] %vm6171, %v6343
    %v6347 = vunpack.c.l.s4 1983009808
    %v6348 = vunpack.c.0.s8 %v6347
    %v6349 = vlaneseq
    %v6350 = vshrl.u32 %v6349, 7
    %v6351 = vsub.s32 %v6348, %v6350
    %v6352 = vrot.slane %v6343, %v6351
    %v6353 = vcombine.high %v6352, %v6352
    %6354 = vrot.lane.b32.xlu0 %v6353, 64
    %v6355 = vpop.permute.xlu0 %6354
    %6357 = vst.msk [vmem:[#allocation6 + $0x12] sm:$0x1] %vm6185, %v6355
    %v6358 = vcombine.high %v6343, %v6343
    %v6360 = vunpack.c.l.s4 1983009808
    %v6361 = vunpack.c.0.s8 %v6360
    %v6362 = vlaneseq
    %v6363 = vshrl.u32 %v6362, 7
    %v6364 = vsub.s32 %v6361, %v6363
    %v6365 = vrot.slane %v6358, %v6364
    %6367 = vst.msk [vmem:[#allocation6 + $0x14] sm:$0x1] %vm6171, %v6365
    %v6368 = vld [vmem:[#allocation5 + $0x60] sm:$0xff]
    %v6369 = vld [vmem:[#allocation5 + $0x68] sm:$0xff]
    %v6370 = vld [vmem:[#allocation5 + $0x70] sm:$0xff]
    %v6371 = vld [vmem:[#allocation5 + $0x78] sm:$0xff]
    %v6372 = vmax.f32 %v6368, %v6370
    %v6373 = vmax.f32 %v6369, %v6371
    %v6375 = vrot.slane %v6372, 1
    %v6377 = vmax.f32 %v6372, %v6375
    %v6380 = vunpack.c.l.s4 1983009808
    %v6381 = vunpack.c.0.s8 %v6380
    %v6382 = vlaneseq
    %v6383 = vshrl.u32 %v6382, 7
    %v6384 = vsub.s32 %v6381, %v6383
    %v6385 = vrot.slane %v6377, %v6384
    %6386 = vrot.lane.b32.xlu0 %v6385, 64
    %v6387 = vpop.permute.xlu0 %6386
    %6389 = vst.msk [vmem:[#allocation6 + $0x14] sm:$0x1] %vm6185, %v6387
    %v6390 = vcombine.high %v6385, %v6385
    %6392 = vst.msk [vmem:[#allocation6 + $0x16] sm:$0x1] %vm6171, %v6390
    %v6393 = vcombine.high %v6377, %v6377
    %v6395 = vunpack.c.l.s4 1983009808
    %v6396 = vunpack.c.0.s8 %v6395
    %v6397 = vlaneseq
    %v6398 = vshrl.u32 %v6397, 7
    %v6399 = vsub.s32 %v6396, %v6398
    %v6400 = vrot.slane %v6393, %v6399
    %6401 = vrot.lane.b32.xlu0 %v6400, 64
    %v6402 = vpop.permute.xlu0 %6401
    %6404 = vst.msk [vmem:[#allocation6 + $0x16] sm:$0x1] %vm6185, %v6402
    %v6405 = vcombine.high %v6400, %v6400
    %6407 = vst.msk [vmem:[#allocation6 + $0x18] sm:$0x1] %vm6171, %v6405
    %v6409 = vrot.slane %v6373, 1
    %v6411 = vmax.f32 %v6373, %v6409
    %v6414 = vunpack.c.l.s4 1983009808
    %v6415 = vunpack.c.0.s8 %v6414
    %v6416 = vlaneseq
    %v6417 = vshrl.u32 %v6416, 7
    %v6418 = vsub.s32 %v6415, %v6417
    %v6419 = vrot.slane %v6411, %v6418
    %6420 = vrot.lane.b32.xlu0 %v6419, 64
    %v6421 = vpop.permute.xlu0 %6420
    %6423 = vst.msk [vmem:[#allocation6 + $0x18] sm:$0x1] %vm6185, %v6421
    %v6424 = vcombine.high %v6419, %v6419
    %6426 = vst.msk [vmem:[#allocation6 + $0x1a] sm:$0x1] %vm6171, %v6424
    %v6427 = vcombine.high %v6411, %v6411
    %v6429 = vunpack.c.l.s4 1983009808
    %v6430 = vunpack.c.0.s8 %v6429
    %v6431 = vlaneseq
    %v6432 = vshrl.u32 %v6431, 7
    %v6433 = vsub.s32 %v6430, %v6432
    %v6434 = vrot.slane %v6427, %v6433
    %6435 = vrot.lane.b32.xlu0 %v6434, 64
    %v6436 = vpop.permute.xlu0 %6435
    %6438 = vst.msk [vmem:[#allocation6 + $0x1a] sm:$0x1] %vm6185, %v6436
    %v6439 = vld [vmem:[#allocation5 + $0x80] sm:$0xff]
    %v6440 = vld [vmem:[#allocation5 + $0x88] sm:$0xff]
    %v6441 = vld [vmem:[#allocation5 + $0x90] sm:$0xff]
    %v6442 = vld [vmem:[#allocation5 + $0x98] sm:$0xff]
    %v6443 = vmax.f32 %v6439, %v6441
    %v6444 = vmax.f32 %v6440, %v6442
    %v6446 = vrot.slane %v6443, 1
    %v6448 = vmax.f32 %v6443, %v6446
    %6449 = vst.msk [vmem:[#allocation6 + $0x1c] sm:$0x1] %vm6171, %v6448
    %v6452 = vunpack.c.l.s4 1983009808
    %v6453 = vunpack.c.0.s8 %v6452
    %v6454 = vlaneseq
    %v6455 = vshrl.u32 %v6454, 7
    %v6456 = vsub.s32 %v6453, %v6455
    %v6457 = vrot.slane %v6448, %v6456
    %v6458 = vcombine.high %v6457, %v6457
    %6459 = vrot.lane.b32.xlu0 %v6458, 64
    %v6460 = vpop.permute.xlu0 %6459
    %6462 = vst.msk [vmem:[#allocation6 + $0x1c] sm:$0x1] %vm6185, %v6460
    %v6463 = vcombine.high %v6448, %v6448
    %v6465 = vunpack.c.l.s4 1983009808
    %v6466 = vunpack.c.0.s8 %v6465
    %v6467 = vlaneseq
    %v6468 = vshrl.u32 %v6467, 7
    %v6469 = vsub.s32 %v6466, %v6468
    %v6470 = vrot.slane %v6463, %v6469
    %6472 = vst.msk [vmem:[#allocation6 + $0x1e] sm:$0x1] %vm6171, %v6470
    %v6473 = vcombine.high %v6470, %v6470
    %6474 = vrot.lane.b32.xlu0 %v6473, 64
    %v6475 = vpop.permute.xlu0 %6474
    %6477 = vst.msk [vmem:[#allocation6 + $0x1e] sm:$0x1] %vm6185, %v6475
    %v6479 = vrot.slane %v6444, 1
    %v6481 = vmax.f32 %v6444, %v6479
    %6482 = vst.msk [vmem:[#allocation6 + $0x20] sm:$0x1] %vm6171, %v6481
    %v6485 = vunpack.c.l.s4 1983009808
    %v6486 = vunpack.c.0.s8 %v6485
    %v6487 = vlaneseq
    %v6488 = vshrl.u32 %v6487, 7
    %v6489 = vsub.s32 %v6486, %v6488
    %v6490 = vrot.slane %v6481, %v6489
    %v6491 = vcombine.high %v6490, %v6490
    %6492 = vrot.lane.b32.xlu0 %v6491, 64
    %v6493 = vpop.permute.xlu0 %6492
    %6495 = vst.msk [vmem:[#allocation6 + $0x20] sm:$0x1] %vm6185, %v6493
    %v6496 = vcombine.high %v6481, %v6481
    %v6498 = vunpack.c.l.s4 1983009808
    %v6499 = vunpack.c.0.s8 %v6498
    %v6500 = vlaneseq
    %v6501 = vshrl.u32 %v6500, 7
    %v6502 = vsub.s32 %v6499, %v6501
    %v6503 = vrot.slane %v6496, %v6502
    %6505 = vst.msk [vmem:[#allocation6 + $0x22] sm:$0x1] %vm6171, %v6503
    %v6506 = vld [vmem:[#allocation5 + $0xa0] sm:$0xff]
    %v6507 = vld [vmem:[#allocation5 + $0xa8] sm:$0xff]
    %v6508 = vld [vmem:[#allocation5 + $0xb0] sm:$0xff]
    %v6509 = vld [vmem:[#allocation5 + $0xb8] sm:$0xff]
    %v6510 = vmax.f32 %v6506, %v6508
    %v6511 = vmax.f32 %v6507, %v6509
    %v6513 = vrot.slane %v6510, 1
    %v6515 = vmax.f32 %v6510, %v6513
    %v6518 = vunpack.c.l.s4 1983009808
    %v6519 = vunpack.c.0.s8 %v6518
    %v6520 = vlaneseq
    %v6521 = vshrl.u32 %v6520, 7
    %v6522 = vsub.s32 %v6519, %v6521
    %v6523 = vrot.slane %v6515, %v6522
    %6524 = vrot.lane.b32.xlu0 %v6523, 64
    %v6525 = vpop.permute.xlu0 %6524
    %6527 = vst.msk [vmem:[#allocation6 + $0x22] sm:$0x1] %vm6185, %v6525
    %v6528 = vcombine.high %v6523, %v6523
    %6530 = vst.msk [vmem:[#allocation6 + $0x24] sm:$0x1] %vm6171, %v6528
    %v6531 = vcombine.high %v6515, %v6515
    %v6533 = vunpack.c.l.s4 1983009808
    %v6534 = vunpack.c.0.s8 %v6533
    %v6535 = vlaneseq
    %v6536 = vshrl.u32 %v6535, 7
    %v6537 = vsub.s32 %v6534, %v6536
    %v6538 = vrot.slane %v6531, %v6537
    %6539 = vrot.lane.b32.xlu0 %v6538, 64
    %v6540 = vpop.permute.xlu0 %6539
    %6542 = vst.msk [vmem:[#allocation6 + $0x24] sm:$0x1] %vm6185, %v6540
    %v6543 = vcombine.high %v6538, %v6538
    %6545 = vst.msk [vmem:[#allocation6 + $0x26] sm:$0x1] %vm6171, %v6543
    %v6547 = vrot.slane %v6511, 1
    %v6549 = vmax.f32 %v6511, %v6547
    %v6552 = vunpack.c.l.s4 1983009808
    %v6553 = vunpack.c.0.s8 %v6552
    %v6554 = vlaneseq
    %v6555 = vshrl.u32 %v6554, 7
    %v6556 = vsub.s32 %v6553, %v6555
    %v6557 = vrot.slane %v6549, %v6556
    %6558 = vrot.lane.b32.xlu0 %v6557, 64
    %v6559 = vpop.permute.xlu0 %6558
    %6561 = vst.msk [vmem:[#allocation6 + $0x26] sm:$0x1] %vm6185, %v6559
    %v6562 = vcombine.high %v6557, %v6557
    %6564 = vst.msk [vmem:[#allocation6 + $0x28] sm:$0x1] %vm6171, %v6562
    %v6565 = vcombine.high %v6549, %v6549
    %v6567 = vunpack.c.l.s4 1983009808
    %v6568 = vunpack.c.0.s8 %v6567
    %v6569 = vlaneseq
    %v6570 = vshrl.u32 %v6569, 7
    %v6571 = vsub.s32 %v6568, %v6570
    %v6572 = vrot.slane %v6565, %v6571
    %6573 = vrot.lane.b32.xlu0 %v6572, 64
    %v6574 = vpop.permute.xlu0 %6573
    %6576 = vst.msk [vmem:[#allocation6 + $0x28] sm:$0x1] %vm6185, %v6574
    %v6577 = vld [vmem:[#allocation5 + $0xc0] sm:$0xff]
    %v6578 = vld [vmem:[#allocation5 + $0xc8] sm:$0xff]
    %v6579 = vld [vmem:[#allocation5 + $0xd0] sm:$0xff]
    %v6580 = vld [vmem:[#allocation5 + $0xd8] sm:$0xff]
    %v6581 = vmax.f32 %v6577, %v6579
    %v6582 = vmax.f32 %v6578, %v6580
    %v6584 = vrot.slane %v6581, 1
    %v6586 = vmax.f32 %v6581, %v6584
    %6587 = vst.msk [vmem:[#allocation6 + $0x2a] sm:$0x1] %vm6171, %v6586
    %v6590 = vunpack.c.l.s4 1983009808
    %v6591 = vunpack.c.0.s8 %v6590
    %v6592 = vlaneseq
    %v6593 = vshrl.u32 %v6592, 7
    %v6594 = vsub.s32 %v6591, %v6593
    %v6595 = vrot.slane %v6586, %v6594
    %v6596 = vcombine.high %v6595, %v6595
    %6597 = vrot.lane.b32.xlu0 %v6596, 64
    %v6598 = vpop.permute.xlu0 %6597
    %6600 = vst.msk [vmem:[#allocation6 + $0x2a] sm:$0x1] %vm6185, %v6598
    %v6601 = vcombine.high %v6586, %v6586
    %v6603 = vunpack.c.l.s4 1983009808
    %v6604 = vunpack.c.0.s8 %v6603
    %v6605 = vlaneseq
    %v6606 = vshrl.u32 %v6605, 7
    %v6607 = vsub.s32 %v6604, %v6606
    %v6608 = vrot.slane %v6601, %v6607
    %6610 = vst.msk [vmem:[#allocation6 + $0x2c] sm:$0x1] %vm6171, %v6608
    %v6611 = vcombine.high %v6608, %v6608
    %6612 = vrot.lane.b32.xlu0 %v6611, 64
    %v6613 = vpop.permute.xlu0 %6612
    %6615 = vst.msk [vmem:[#allocation6 + $0x2c] sm:$0x1] %vm6185, %v6613
    %v6617 = vrot.slane %v6582, 1
    %v6619 = vmax.f32 %v6582, %v6617
    %6620 = vst.msk [vmem:[#allocation6 + $0x2e] sm:$0x1] %vm6171, %v6619
    %v6623 = vunpack.c.l.s4 1983009808
    %v6624 = vunpack.c.0.s8 %v6623
    %v6625 = vlaneseq
    %v6626 = vshrl.u32 %v6625, 7
    %v6627 = vsub.s32 %v6624, %v6626
    %v6628 = vrot.slane %v6619, %v6627
    %v6629 = vcombine.high %v6628, %v6628
    %6630 = vrot.lane.b32.xlu0 %v6629, 64
    %v6631 = vpop.permute.xlu0 %6630
    %6633 = vst.msk [vmem:[#allocation6 + $0x2e] sm:$0x1] %vm6185, %v6631
    %v6634 = vcombine.high %v6619, %v6619
    %v6636 = vunpack.c.l.s4 1983009808
    %v6637 = vunpack.c.0.s8 %v6636
    %v6638 = vlaneseq
    %v6639 = vshrl.u32 %v6638, 7
    %v6640 = vsub.s32 %v6637, %v6639
    %v6641 = vrot.slane %v6634, %v6640
    %6643 = vst.msk [vmem:[#allocation6 + $0x30] sm:$0x1] %vm6171, %v6641
    %v6644 = vld [vmem:[#allocation5 + $0x100] sm:$0xff]
    %v6645 = vld [vmem:[#allocation5 + $0x108] sm:$0xff]
    %v6646 = vld [vmem:[#allocation5 + $0x110] sm:$0xff]
    %v6647 = vld [vmem:[#allocation5 + $0x118] sm:$0xff]
    %v6648 = vmax.f32 %v6644, %v6646
    %v6649 = vmax.f32 %v6645, %v6647
    %v6651 = vrot.slane %v6648, 1
    %v6653 = vmax.f32 %v6648, %v6651
    %6654 = vst.msk [vmem:[#allocation6 + $0x1] sm:$0x1] %vm6171, %v6653
    %v6657 = vunpack.c.l.s4 1983009808
    %v6658 = vunpack.c.0.s8 %v6657
    %v6659 = vlaneseq
    %v6660 = vshrl.u32 %v6659, 7
    %v6661 = vsub.s32 %v6658, %v6660
    %v6662 = vrot.slane %v6653, %v6661
    %v6663 = vcombine.high %v6662, %v6662
    %6664 = vrot.lane.b32.xlu0 %v6663, 64
    %v6665 = vpop.permute.xlu0 %6664
    %6667 = vst.msk [vmem:[#allocation6 + $0x1] sm:$0x1] %vm6185, %v6665
    %v6668 = vcombine.high %v6653, %v6653
    %v6670 = vunpack.c.l.s4 1983009808
    %v6671 = vunpack.c.0.s8 %v6670
    %v6672 = vlaneseq
    %v6673 = vshrl.u32 %v6672, 7
    %v6674 = vsub.s32 %v6671, %v6673
    %v6675 = vrot.slane %v6668, %v6674
    %6677 = vst.msk [vmem:[#allocation6 + $0x3] sm:$0x1] %vm6171, %v6675
    %v6678 = vcombine.high %v6675, %v6675
    %6679 = vrot.lane.b32.xlu0 %v6678, 64
    %v6680 = vpop.permute.xlu0 %6679
    %6682 = vst.msk [vmem:[#allocation6 + $0x3] sm:$0x1] %vm6185, %v6680
    %v6684 = vrot.slane %v6649, 1
    %v6686 = vmax.f32 %v6649, %v6684
    %6687 = vst.msk [vmem:[#allocation6 + $0x5] sm:$0x1] %vm6171, %v6686
    %v6690 = vunpack.c.l.s4 1983009808
    %v6691 = vunpack.c.0.s8 %v6690
    %v6692 = vlaneseq
    %v6693 = vshrl.u32 %v6692, 7
    %v6694 = vsub.s32 %v6691, %v6693
    %v6695 = vrot.slane %v6686, %v6694
    %v6696 = vcombine.high %v6695, %v6695
    %6697 = vrot.lane.b32.xlu0 %v6696, 64
    %v6698 = vpop.permute.xlu0 %6697
    %6700 = vst.msk [vmem:[#allocation6 + $0x5] sm:$0x1] %vm6185, %v6698
    %v6701 = vcombine.high %v6686, %v6686
    %v6703 = vunpack.c.l.s4 1983009808
    %v6704 = vunpack.c.0.s8 %v6703
    %v6705 = vlaneseq
    %v6706 = vshrl.u32 %v6705, 7
    %v6707 = vsub.s32 %v6704, %v6706
    %v6708 = vrot.slane %v6701, %v6707
    %6710 = vst.msk [vmem:[#allocation6 + $0x7] sm:$0x1] %vm6171, %v6708
    %v6711 = vld [vmem:[#allocation5 + $0x120] sm:$0xff]
    %v6712 = vld [vmem:[#allocation5 + $0x128] sm:$0xff]
    %v6713 = vld [vmem:[#allocation5 + $0x130] sm:$0xff]
    %v6714 = vld [vmem:[#allocation5 + $0x138] sm:$0xff]
    %v6715 = vmax.f32 %v6711, %v6713
    %v6716 = vmax.f32 %v6712, %v6714
    %v6718 = vrot.slane %v6715, 1
    %v6720 = vmax.f32 %v6715, %v6718
    %v6723 = vunpack.c.l.s4 1983009808
    %v6724 = vunpack.c.0.s8 %v6723
    %v6725 = vlaneseq
    %v6726 = vshrl.u32 %v6725, 7
    %v6727 = vsub.s32 %v6724, %v6726
    %v6728 = vrot.slane %v6720, %v6727
    %6729 = vrot.lane.b32.xlu0 %v6728, 64
    %v6730 = vpop.permute.xlu0 %6729
    %6732 = vst.msk [vmem:[#allocation6 + $0x7] sm:$0x1] %vm6185, %v6730
    %v6733 = vcombine.high %v6728, %v6728
    %6735 = vst.msk [vmem:[#allocation6 + $0x9] sm:$0x1] %vm6171, %v6733
    %v6736 = vcombine.high %v6720, %v6720
    %v6738 = vunpack.c.l.s4 1983009808
    %v6739 = vunpack.c.0.s8 %v6738
    %v6740 = vlaneseq
    %v6741 = vshrl.u32 %v6740, 7
    %v6742 = vsub.s32 %v6739, %v6741
    %v6743 = vrot.slane %v6736, %v6742
    %6744 = vrot.lane.b32.xlu0 %v6743, 64
    %v6745 = vpop.permute.xlu0 %6744
    %6747 = vst.msk [vmem:[#allocation6 + $0x9] sm:$0x1] %vm6185, %v6745
    %v6748 = vcombine.high %v6743, %v6743
    %6750 = vst.msk [vmem:[#allocation6 + $0xb] sm:$0x1] %vm6171, %v6748
    %v6752 = vrot.slane %v6716, 1
    %v6754 = vmax.f32 %v6716, %v6752
    %v6757 = vunpack.c.l.s4 1983009808
    %v6758 = vunpack.c.0.s8 %v6757
    %v6759 = vlaneseq
    %v6760 = vshrl.u32 %v6759, 7
    %v6761 = vsub.s32 %v6758, %v6760
    %v6762 = vrot.slane %v6754, %v6761
    %6763 = vrot.lane.b32.xlu0 %v6762, 64
    %v6764 = vpop.permute.xlu0 %6763
    %6766 = vst.msk [vmem:[#allocation6 + $0xb] sm:$0x1] %vm6185, %v6764
    %v6767 = vcombine.high %v6762, %v6762
    %6769 = vst.msk [vmem:[#allocation6 + $0xd] sm:$0x1] %vm6171, %v6767
    %v6770 = vcombine.high %v6754, %v6754
    %v6772 = vunpack.c.l.s4 1983009808
    %v6773 = vunpack.c.0.s8 %v6772
    %v6774 = vlaneseq
    %v6775 = vshrl.u32 %v6774, 7
    %v6776 = vsub.s32 %v6773, %v6775
    %v6777 = vrot.slane %v6770, %v6776
    %6778 = vrot.lane.b32.xlu0 %v6777, 64
    %v6779 = vpop.permute.xlu0 %6778
    %6781 = vst.msk [vmem:[#allocation6 + $0xd] sm:$0x1] %vm6185, %v6779
    %v6782 = vld [vmem:[#allocation5 + $0x140] sm:$0xff]
    %v6783 = vld [vmem:[#allocation5 + $0x148] sm:$0xff]
    %v6784 = vld [vmem:[#allocation5 + $0x150] sm:$0xff]
    %v6785 = vld [vmem:[#allocation5 + $0x158] sm:$0xff]
    %v6786 = vmax.f32 %v6782, %v6784
    %v6787 = vmax.f32 %v6783, %v6785
    %v6789 = vrot.slane %v6786, 1
    %v6791 = vmax.f32 %v6786, %v6789
    %6792 = vst.msk [vmem:[#allocation6 + $0xf] sm:$0x1] %vm6171, %v6791
    %v6795 = vunpack.c.l.s4 1983009808
    %v6796 = vunpack.c.0.s8 %v6795
    %v6797 = vlaneseq
    %v6798 = vshrl.u32 %v6797, 7
    %v6799 = vsub.s32 %v6796, %v6798
    %v6800 = vrot.slane %v6791, %v6799
    %v6801 = vcombine.high %v6800, %v6800
    %6802 = vrot.lane.b32.xlu0 %v6801, 64
    %v6803 = vpop.permute.xlu0 %6802
    %6805 = vst.msk [vmem:[#allocation6 + $0xf] sm:$0x1] %vm6185, %v6803
    %v6806 = vcombine.high %v6791, %v6791
    %v6808 = vunpack.c.l.s4 1983009808
    %v6809 = vunpack.c.0.s8 %v6808
    %v6810 = vlaneseq
    %v6811 = vshrl.u32 %v6810, 7
    %v6812 = vsub.s32 %v6809, %v6811
    %v6813 = vrot.slane %v6806, %v6812
    %6815 = vst.msk [vmem:[#allocation6 + $0x11] sm:$0x1] %vm6171, %v6813
    %v6816 = vcombine.high %v6813, %v6813
    %6817 = vrot.lane.b32.xlu0 %v6816, 64
    %v6818 = vpop.permute.xlu0 %6817
    %6820 = vst.msk [vmem:[#allocation6 + $0x11] sm:$0x1] %vm6185, %v6818
    %v6822 = vrot.slane %v6787, 1
    %v6824 = vmax.f32 %v6787, %v6822
    %6825 = vst.msk [vmem:[#allocation6 + $0x13] sm:$0x1] %vm6171, %v6824
    %v6828 = vunpack.c.l.s4 1983009808
    %v6829 = vunpack.c.0.s8 %v6828
    %v6830 = vlaneseq
    %v6831 = vshrl.u32 %v6830, 7
    %v6832 = vsub.s32 %v6829, %v6831
    %v6833 = vrot.slane %v6824, %v6832
    %v6834 = vcombine.high %v6833, %v6833
    %6835 = vrot.lane.b32.xlu0 %v6834, 64
    %v6836 = vpop.permute.xlu0 %6835
    %6838 = vst.msk [vmem:[#allocation6 + $0x13] sm:$0x1] %vm6185, %v6836
    %v6839 = vcombine.high %v6824, %v6824
    %v6841 = vunpack.c.l.s4 1983009808
    %v6842 = vunpack.c.0.s8 %v6841
    %v6843 = vlaneseq
    %v6844 = vshrl.u32 %v6843, 7
    %v6845 = vsub.s32 %v6842, %v6844
    %v6846 = vrot.slane %v6839, %v6845
    %6848 = vst.msk [vmem:[#allocation6 + $0x15] sm:$0x1] %vm6171, %v6846
    %v6849 = vld [vmem:[#allocation5 + $0x160] sm:$0xff]
    %v6850 = vld [vmem:[#allocation5 + $0x168] sm:$0xff]
    %v6851 = vld [vmem:[#allocation5 + $0x170] sm:$0xff]
    %v6852 = vld [vmem:[#allocation5 + $0x178] sm:$0xff]
    %v6853 = vmax.f32 %v6849, %v6851
    %v6854 = vmax.f32 %v6850, %v6852
    %v6856 = vrot.slane %v6853, 1
    %v6858 = vmax.f32 %v6853, %v6856
    %v6861 = vunpack.c.l.s4 1983009808
    %v6862 = vunpack.c.0.s8 %v6861
    %v6863 = vlaneseq
    %v6864 = vshrl.u32 %v6863, 7
    %v6865 = vsub.s32 %v6862, %v6864
    %v6866 = vrot.slane %v6858, %v6865
    %6867 = vrot.lane.b32.xlu0 %v6866, 64
    %v6868 = vpop.permute.xlu0 %6867
    %6870 = vst.msk [vmem:[#allocation6 + $0x15] sm:$0x1] %vm6185, %v6868
    %v6871 = vcombine.high %v6866, %v6866
    %6873 = vst.msk [vmem:[#allocation6 + $0x17] sm:$0x1] %vm6171, %v6871
    %v6874 = vcombine.high %v6858, %v6858
    %v6876 = vunpack.c.l.s4 1983009808
    %v6877 = vunpack.c.0.s8 %v6876
    %v6878 = vlaneseq
    %v6879 = vshrl.u32 %v6878, 7
    %v6880 = vsub.s32 %v6877, %v6879
    %v6881 = vrot.slane %v6874, %v6880
    %6882 = vrot.lane.b32.xlu0 %v6881, 64
    %v6883 = vpop.permute.xlu0 %6882
    %6885 = vst.msk [vmem:[#allocation6 + $0x17] sm:$0x1] %vm6185, %v6883
    %v6886 = vcombine.high %v6881, %v6881
    %6888 = vst.msk [vmem:[#allocation6 + $0x19] sm:$0x1] %vm6171, %v6886
    %v6890 = vrot.slane %v6854, 1
    %v6892 = vmax.f32 %v6854, %v6890
    %v6895 = vunpack.c.l.s4 1983009808
    %v6896 = vunpack.c.0.s8 %v6895
    %v6897 = vlaneseq
    %v6898 = vshrl.u32 %v6897, 7
    %v6899 = vsub.s32 %v6896, %v6898
    %v6900 = vrot.slane %v6892, %v6899
    %6901 = vrot.lane.b32.xlu0 %v6900, 64
    %v6902 = vpop.permute.xlu0 %6901
    %6904 = vst.msk [vmem:[#allocation6 + $0x19] sm:$0x1] %vm6185, %v6902
    %v6905 = vcombine.high %v6900, %v6900
    %6907 = vst.msk [vmem:[#allocation6 + $0x1b] sm:$0x1] %vm6171, %v6905
    %v6908 = vcombine.high %v6892, %v6892
    %v6910 = vunpack.c.l.s4 1983009808
    %v6911 = vunpack.c.0.s8 %v6910
    %v6912 = vlaneseq
    %v6913 = vshrl.u32 %v6912, 7
    %v6914 = vsub.s32 %v6911, %v6913
    %v6915 = vrot.slane %v6908, %v6914
    %6916 = vrot.lane.b32.xlu0 %v6915, 64
    %v6917 = vpop.permute.xlu0 %6916
    %6919 = vst.msk [vmem:[#allocation6 + $0x1b] sm:$0x1] %vm6185, %v6917
    %v6920 = vld [vmem:[#allocation5 + $0x180] sm:$0xff]
    %v6921 = vld [vmem:[#allocation5 + $0x188] sm:$0xff]
    %v6922 = vld [vmem:[#allocation5 + $0x190] sm:$0xff]
    %v6923 = vld [vmem:[#allocation5 + $0x198] sm:$0xff]
    %v6924 = vmax.f32 %v6920, %v6922
    %v6925 = vmax.f32 %v6921, %v6923
    %v6927 = vrot.slane %v6924, 1
    %v6929 = vmax.f32 %v6924, %v6927
    %6930 = vst.msk [vmem:[#allocation6 + $0x1d] sm:$0x1] %vm6171, %v6929
    %v6933 = vunpack.c.l.s4 1983009808
    %v6934 = vunpack.c.0.s8 %v6933
    %v6935 = vlaneseq
    %v6936 = vshrl.u32 %v6935, 7
    %v6937 = vsub.s32 %v6934, %v6936
    %v6938 = vrot.slane %v6929, %v6937
    %v6939 = vcombine.high %v6938, %v6938
    %6940 = vrot.lane.b32.xlu0 %v6939, 64
    %v6941 = vpop.permute.xlu0 %6940
    %6943 = vst.msk [vmem:[#allocation6 + $0x1d] sm:$0x1] %vm6185, %v6941
    %v6944 = vcombine.high %v6929, %v6929
    %v6946 = vunpack.c.l.s4 1983009808
    %v6947 = vunpack.c.0.s8 %v6946
    %v6948 = vlaneseq
    %v6949 = vshrl.u32 %v6948, 7
    %v6950 = vsub.s32 %v6947, %v6949
    %v6951 = vrot.slane %v6944, %v6950
    %6953 = vst.msk [vmem:[#allocation6 + $0x1f] sm:$0x1] %vm6171, %v6951
    %v6954 = vcombine.high %v6951, %v6951
    %6955 = vrot.lane.b32.xlu0 %v6954, 64
    %v6956 = vpop.permute.xlu0 %6955
    %6958 = vst.msk [vmem:[#allocation6 + $0x1f] sm:$0x1] %vm6185, %v6956
    %v6960 = vrot.slane %v6925, 1
    %v6962 = vmax.f32 %v6925, %v6960
    %6963 = vst.msk [vmem:[#allocation6 + $0x21] sm:$0x1] %vm6171, %v6962
    %v6966 = vunpack.c.l.s4 1983009808
    %v6967 = vunpack.c.0.s8 %v6966
    %v6968 = vlaneseq
    %v6969 = vshrl.u32 %v6968, 7
    %v6970 = vsub.s32 %v6967, %v6969
    %v6971 = vrot.slane %v6962, %v6970
    %v6972 = vcombine.high %v6971, %v6971
    %6973 = vrot.lane.b32.xlu0 %v6972, 64
    %v6974 = vpop.permute.xlu0 %6973
    %6976 = vst.msk [vmem:[#allocation6 + $0x21] sm:$0x1] %vm6185, %v6974
    %v6977 = vcombine.high %v6962, %v6962
    %v6979 = vunpack.c.l.s4 1983009808
    %v6980 = vunpack.c.0.s8 %v6979
    %v6981 = vlaneseq
    %v6982 = vshrl.u32 %v6981, 7
    %v6983 = vsub.s32 %v6980, %v6982
    %v6984 = vrot.slane %v6977, %v6983
    %6986 = vst.msk [vmem:[#allocation6 + $0x23] sm:$0x1] %vm6171, %v6984
    %v6987 = vld [vmem:[#allocation5 + $0x1a0] sm:$0xff]
    %v6988 = vld [vmem:[#allocation5 + $0x1a8] sm:$0xff]
    %v6989 = vld [vmem:[#allocation5 + $0x1b0] sm:$0xff]
    %v6990 = vld [vmem:[#allocation5 + $0x1b8] sm:$0xff]
    %v6991 = vmax.f32 %v6987, %v6989
    %v6992 = vmax.f32 %v6988, %v6990
    %v6994 = vrot.slane %v6991, 1
    %v6996 = vmax.f32 %v6991, %v6994
    %v6999 = vunpack.c.l.s4 1983009808
    %v7000 = vunpack.c.0.s8 %v6999
    %v7001 = vlaneseq
    %v7002 = vshrl.u32 %v7001, 7
    %v7003 = vsub.s32 %v7000, %v7002
    %v7004 = vrot.slane %v6996, %v7003
    %7005 = vrot.lane.b32.xlu0 %v7004, 64
    %v7006 = vpop.permute.xlu0 %7005
    %7008 = vst.msk [vmem:[#allocation6 + $0x23] sm:$0x1] %vm6185, %v7006
    %v7009 = vcombine.high %v7004, %v7004
    %7011 = vst.msk [vmem:[#allocation6 + $0x25] sm:$0x1] %vm6171, %v7009
    %v7012 = vcombine.high %v6996, %v6996
    %v7014 = vunpack.c.l.s4 1983009808
    %v7015 = vunpack.c.0.s8 %v7014
    %v7016 = vlaneseq
    %v7017 = vshrl.u32 %v7016, 7
    %v7018 = vsub.s32 %v7015, %v7017
    %v7019 = vrot.slane %v7012, %v7018
    %7020 = vrot.lane.b32.xlu0 %v7019, 64
    %v7021 = vpop.permute.xlu0 %7020
    %7023 = vst.msk [vmem:[#allocation6 + $0x25] sm:$0x1] %vm6185, %v7021
    %v7024 = vcombine.high %v7019, %v7019
    %7026 = vst.msk [vmem:[#allocation6 + $0x27] sm:$0x1] %vm6171, %v7024
    %v7028 = vrot.slane %v6992, 1
    %v7030 = vmax.f32 %v6992, %v7028
    %v7033 = vunpack.c.l.s4 1983009808
    %v7034 = vunpack.c.0.s8 %v7033
    %v7035 = vlaneseq
    %v7036 = vshrl.u32 %v7035, 7
    %v7037 = vsub.s32 %v7034, %v7036
    %v7038 = vrot.slane %v7030, %v7037
    %7039 = vrot.lane.b32.xlu0 %v7038, 64
    %v7040 = vpop.permute.xlu0 %7039
    %7042 = vst.msk [vmem:[#allocation6 + $0x27] sm:$0x1] %vm6185, %v7040
    %v7043 = vcombine.high %v7038, %v7038
    %7045 = vst.msk [vmem:[#allocation6 + $0x29] sm:$0x1] %vm6171, %v7043
    %v7046 = vcombine.high %v7030, %v7030
    %v7048 = vunpack.c.l.s4 1983009808
    %v7049 = vunpack.c.0.s8 %v7048
    %v7050 = vlaneseq
    %v7051 = vshrl.u32 %v7050, 7
    %v7052 = vsub.s32 %v7049, %v7051
    %v7053 = vrot.slane %v7046, %v7052
    %7054 = vrot.lane.b32.xlu0 %v7053, 64
    %v7055 = vpop.permute.xlu0 %7054
    %7057 = vst.msk [vmem:[#allocation6 + $0x29] sm:$0x1] %vm6185, %v7055
    %v7058 = vld [vmem:[#allocation5 + $0x1c0] sm:$0xff]
    %v7059 = vld [vmem:[#allocation5 + $0x1c8] sm:$0xff]
    %v7060 = vld [vmem:[#allocation5 + $0x1d0] sm:$0xff]
    %v7061 = vld [vmem:[#allocation5 + $0x1d8] sm:$0xff]
    %v7062 = vmax.f32 %v7058, %v7060
    %v7063 = vmax.f32 %v7059, %v7061
    %v7065 = vrot.slane %v7062, 1
    %v7067 = vmax.f32 %v7062, %v7065
    %7068 = vst.msk [vmem:[#allocation6 + $0x2b] sm:$0x1] %vm6171, %v7067
    %v7071 = vunpack.c.l.s4 1983009808
    %v7072 = vunpack.c.0.s8 %v7071
    %v7073 = vlaneseq
    %v7074 = vshrl.u32 %v7073, 7
    %v7075 = vsub.s32 %v7072, %v7074
    %v7076 = vrot.slane %v7067, %v7075
    %v7077 = vcombine.high %v7076, %v7076
    %7078 = vrot.lane.b32.xlu0 %v7077, 64
    %v7079 = vpop.permute.xlu0 %7078
    %7081 = vst.msk [vmem:[#allocation6 + $0x2b] sm:$0x1] %vm6185, %v7079
    %v7082 = vcombine.high %v7067, %v7067
    %v7084 = vunpack.c.l.s4 1983009808
    %v7085 = vunpack.c.0.s8 %v7084
    %v7086 = vlaneseq
    %v7087 = vshrl.u32 %v7086, 7
    %v7088 = vsub.s32 %v7085, %v7087
    %v7089 = vrot.slane %v7082, %v7088
    %7091 = vst.msk [vmem:[#allocation6 + $0x2d] sm:$0x1] %vm6171, %v7089
    %v7092 = vcombine.high %v7089, %v7089
    %7093 = vrot.lane.b32.xlu0 %v7092, 64
    %v7094 = vpop.permute.xlu0 %7093
    %7096 = vst.msk [vmem:[#allocation6 + $0x2d] sm:$0x1] %vm6185, %v7094
    %v7098 = vrot.slane %v7063, 1
    %v7100 = vmax.f32 %v7063, %v7098
    %7101 = vst.msk [vmem:[#allocation6 + $0x2f] sm:$0x1] %vm6171, %v7100
    %v7104 = vunpack.c.l.s4 1983009808
    %v7105 = vunpack.c.0.s8 %v7104
    %v7106 = vlaneseq
    %v7107 = vshrl.u32 %v7106, 7
    %v7108 = vsub.s32 %v7105, %v7107
    %v7109 = vrot.slane %v7100, %v7108
    %v7110 = vcombine.high %v7109, %v7109
    %7111 = vrot.lane.b32.xlu0 %v7110, 64
    %v7112 = vpop.permute.xlu0 %7111
    %7114 = vst.msk [vmem:[#allocation6 + $0x2f] sm:$0x1] %vm6185, %v7112
    %v7115 = vcombine.high %v7100, %v7100
    %v7117 = vunpack.c.l.s4 1983009808
    %v7118 = vunpack.c.0.s8 %v7117
    %v7119 = vlaneseq
    %v7120 = vshrl.u32 %v7119, 7
    %v7121 = vsub.s32 %v7118, %v7120
    %v7122 = vrot.slane %v7115, %v7121
    %7124 = vst.msk [vmem:[#allocation6 + $0x31] sm:$0x1] %vm6171, %v7122
    %s7125 = smul.u32 4, 392
    %s7126 = smul.u32 %s7125, 1
    %s7127 = sshll.u32 %s7126, 4
    %7128 = dma.done [#allocation8], %s7127
    %v7129 = vld [vmem:[#allocation6] sm:$0xff]
    %v7130 = vld [vmem:[#allocation6 + $0x8] sm:$0xff]
    %v7131 = vld [vmem:[#allocation6 + $0x10] sm:$0xff]
    %v7132 = vld [vmem:[#allocation6 + $0x18] sm:$0xff]
    %v7133 = vld [vmem:[#allocation6 + $0x20] sm:$0xff]
    %v7134 = vld [vmem:[#allocation6 + $0x28] sm:$0xff]
    %v7135 = vld [vmem:[#allocation6 + $0x30] sm:$0x3]
    %v7143 = vcombine.high %v7129, %v7129
    %v7145 = vunpack.c.l.s4 1983009808
    %v7146 = vunpack.c.0.s8 %v7145
    %v7147 = vlaneseq
    %v7148 = vshrl.u32 %v7147, 7
    %v7149 = vsub.s32 %v7146, %v7148
    %v7150 = vrot.slane %v7129, %v7149
    %v7152 = vunpack.c.l.s4 1983009808
    %v7153 = vunpack.c.0.s8 %v7152
    %v7154 = vlaneseq
    %v7155 = vshrl.u32 %v7154, 7
    %v7156 = vsub.s32 %v7153, %v7155
    %v7157 = vrot.slane %v7143, %v7156
    %v7158 = vcombine.high %v7150, %v7150
    %v7159 = vcombine.high %v7157, %v7157
    %v7160 = vcombine.high %v7130, %v7130
    %v7162 = vunpack.c.l.s4 1983009808
    %v7163 = vunpack.c.0.s8 %v7162
    %v7164 = vlaneseq
    %v7165 = vshrl.u32 %v7164, 7
    %v7166 = vsub.s32 %v7163, %v7165
    %v7167 = vrot.slane %v7130, %v7166
    %v7169 = vunpack.c.l.s4 1983009808
    %v7170 = vunpack.c.0.s8 %v7169
    %v7171 = vlaneseq
    %v7172 = vshrl.u32 %v7171, 7
    %v7173 = vsub.s32 %v7170, %v7172
    %v7174 = vrot.slane %v7160, %v7173
    %v7175 = vcombine.high %v7167, %v7167
    %v7176 = vcombine.high %v7174, %v7174
    %v7177 = vcombine.high %v7131, %v7131
    %v7179 = vunpack.c.l.s4 1983009808
    %v7180 = vunpack.c.0.s8 %v7179
    %v7181 = vlaneseq
    %v7182 = vshrl.u32 %v7181, 7
    %v7183 = vsub.s32 %v7180, %v7182
    %v7184 = vrot.slane %v7131, %v7183
    %v7186 = vunpack.c.l.s4 1983009808
    %v7187 = vunpack.c.0.s8 %v7186
    %v7188 = vlaneseq
    %v7189 = vshrl.u32 %v7188, 7
    %v7190 = vsub.s32 %v7187, %v7189
    %v7191 = vrot.slane %v7177, %v7190
    %v7192 = vcombine.high %v7184, %v7184
    %v7193 = vcombine.high %v7191, %v7191
    %v7194 = vcombine.high %v7132, %v7132
    %v7196 = vunpack.c.l.s4 1983009808
    %v7197 = vunpack.c.0.s8 %v7196
    %v7198 = vlaneseq
    %v7199 = vshrl.u32 %v7198, 7
    %v7200 = vsub.s32 %v7197, %v7199
    %v7201 = vrot.slane %v7132, %v7200
    %v7203 = vunpack.c.l.s4 1983009808
    %v7204 = vunpack.c.0.s8 %v7203
    %v7205 = vlaneseq
    %v7206 = vshrl.u32 %v7205, 7
    %v7207 = vsub.s32 %v7204, %v7206
    %v7208 = vrot.slane %v7194, %v7207
    %v7209 = vcombine.high %v7201, %v7201
    %v7210 = vcombine.high %v7208, %v7208
    %v7211 = vcombine.high %v7133, %v7133
    %v7213 = vunpack.c.l.s4 1983009808
    %v7214 = vunpack.c.0.s8 %v7213
    %v7215 = vlaneseq
    %v7216 = vshrl.u32 %v7215, 7
    %v7217 = vsub.s32 %v7214, %v7216
    %v7218 = vrot.slane %v7133, %v7217
    %v7220 = vunpack.c.l.s4 1983009808
    %v7221 = vunpack.c.0.s8 %v7220
    %v7222 = vlaneseq
    %v7223 = vshrl.u32 %v7222, 7
    %v7224 = vsub.s32 %v7221, %v7223
    %v7225 = vrot.slane %v7211, %v7224
    %v7226 = vcombine.high %v7218, %v7218
    %v7227 = vcombine.high %v7225, %v7225
    %v7228 = vcombine.high %v7134, %v7134
    %v7230 = vunpack.c.l.s4 1983009808
    %v7231 = vunpack.c.0.s8 %v7230
    %v7232 = vlaneseq
    %v7233 = vshrl.u32 %v7232, 7
    %v7234 = vsub.s32 %v7231, %v7233
    %v7235 = vrot.slane %v7134, %v7234
    %v7237 = vunpack.c.l.s4 1983009808
    %v7238 = vunpack.c.0.s8 %v7237
    %v7239 = vlaneseq
    %v7240 = vshrl.u32 %v7239, 7
    %v7241 = vsub.s32 %v7238, %v7240
    %v7242 = vrot.slane %v7228, %v7241
    %v7243 = vcombine.high %v7235, %v7235
    %v7244 = vcombine.high %v7242, %v7242
    %v7246 = vunpack.c.l.s4 1983009808
    %v7247 = vunpack.c.0.s8 %v7246
    %v7248 = vlaneseq
    %v7249 = vshrl.u32 %v7248, 7
    %v7250 = vsub.s32 %v7247, %v7249
    %v7251 = vrot.slane %v7135, %v7250
    %v7277 = vpack.c.bf16 %v7150, %v7150
    %v7278 = vpack.c.bf16 %v7158, %v7158
    %v7279 = vpack.c.bf16 %v7157, %v7157
    %v7280 = vpack.c.bf16 %v7159, %v7159
    %v7281 = vpack.c.bf16 %v7167, %v7167
    %v7282 = vpack.c.bf16 %v7175, %v7175
    %v7283 = vpack.c.bf16 %v7174, %v7174
    %v7284 = vpack.c.bf16 %v7176, %v7176
    %v7285 = vpack.c.bf16 %v7184, %v7184
    %v7286 = vpack.c.bf16 %v7192, %v7192
    %v7287 = vpack.c.bf16 %v7191, %v7191
    %v7288 = vpack.c.bf16 %v7193, %v7193
    %v7289 = vpack.c.bf16 %v7201, %v7201
    %v7290 = vpack.c.bf16 %v7209, %v7209
    %v7291 = vpack.c.bf16 %v7208, %v7208
    %v7292 = vpack.c.bf16 %v7210, %v7210
    %v7293 = vpack.c.bf16 %v7218, %v7218
    %v7294 = vpack.c.bf16 %v7226, %v7226
    %v7295 = vpack.c.bf16 %v7225, %v7225
    %v7296 = vpack.c.bf16 %v7227, %v7227
    %v7297 = vpack.c.bf16 %v7235, %v7235
    %v7298 = vpack.c.bf16 %v7243, %v7243
    %v7299 = vpack.c.bf16 %v7242, %v7242
    %v7300 = vpack.c.bf16 %v7244, %v7244
    %v7301 = vpack.c.bf16 %v7251, %v7251
    %v7302 = vld [vmem:[#allocation7] sm:$0xff]
    %v7303 = vld [vmem:[#allocation7 + $0x8] sm:$0xff]
    %v7304 = vld [vmem:[#allocation7 + $0x10] sm:$0xff]
    %v7305 = vld [vmem:[#allocation7 + $0x18] sm:$0xff]
    %v7306 = vld [vmem:[#allocation7 + $0x20] sm:$0xff]
    %v7307 = vld [vmem:[#allocation7 + $0x28] sm:$0xff]
    %v7308 = vld [vmem:[#allocation7 + $0x30] sm:$0xff]
    %v7309 = vld [vmem:[#allocation7 + $0x38] sm:$0xff]
    %v7310 = vld [vmem:[#allocation7 + $0x40] sm:$0xff]
    %v7311 = vld [vmem:[#allocation7 + $0x48] sm:$0xff]
    %v7312 = vld [vmem:[#allocation7 + $0x50] sm:$0xff]
    %v7313 = vld [vmem:[#allocation7 + $0x58] sm:$0xff]
    %v7314 = vld [vmem:[#allocation7 + $0x60] sm:$0xff]
    %v7315 = vld [vmem:[#allocation7 + $0x68] sm:$0xff]
    %v7316 = vld [vmem:[#allocation7 + $0x70] sm:$0xff]
    %v7317 = vld [vmem:[#allocation7 + $0x78] sm:$0xff]
    %v7318 = vld [vmem:[#allocation7 + $0x80] sm:$0xff]
    %v7319 = vld [vmem:[#allocation7 + $0x88] sm:$0xff]
    %v7320 = vld [vmem:[#allocation7 + $0x90] sm:$0xff]
    %v7321 = vld [vmem:[#allocation7 + $0x98] sm:$0xff]
    %v7322 = vld [vmem:[#allocation7 + $0xa0] sm:$0xff]
    %v7323 = vld [vmem:[#allocation7 + $0xa8] sm:$0xff]
    %v7324 = vld [vmem:[#allocation7 + $0xb0] sm:$0xff]
    %v7325 = vld [vmem:[#allocation7 + $0xb8] sm:$0xff]
    %v7326 = vld [vmem:[#allocation7 + $0xc0] sm:$0xff]
    %v7327 = vld [vmem:[#allocation7 + $0xc8] sm:$0xff]
    %v7328 = vld [vmem:[#allocation7 + $0xd0] sm:$0xff]
    %v7329 = vld [vmem:[#allocation7 + $0xd8] sm:$0xff]
    %v7330 = vld [vmem:[#allocation7 + $0xe0] sm:$0xff]
    %v7331 = vld [vmem:[#allocation7 + $0xe8] sm:$0xff]
    %v7332 = vld [vmem:[#allocation7 + $0xf0] sm:$0xff]
    %v7333 = vld [vmem:[#allocation7 + $0xf8] sm:$0xff]
    %v7334 = vld [vmem:[#allocation7 + $0x100] sm:$0xff]
    %v7335 = vld [vmem:[#allocation7 + $0x108] sm:$0xff]
    %v7336 = vld [vmem:[#allocation7 + $0x110] sm:$0xff]
    %v7337 = vld [vmem:[#allocation7 + $0x118] sm:$0xff]
    %v7338 = vld [vmem:[#allocation7 + $0x120] sm:$0xff]
    %v7339 = vld [vmem:[#allocation7 + $0x128] sm:$0xff]
    %v7340 = vld [vmem:[#allocation7 + $0x130] sm:$0xff]
    %v7341 = vld [vmem:[#allocation7 + $0x138] sm:$0xff]
    %v7342 = vld [vmem:[#allocation7 + $0x140] sm:$0xff]
    %v7343 = vld [vmem:[#allocation7 + $0x148] sm:$0xff]
    %v7344 = vld [vmem:[#allocation7 + $0x150] sm:$0xff]
    %v7345 = vld [vmem:[#allocation7 + $0x158] sm:$0xff]
    %v7346 = vld [vmem:[#allocation7 + $0x160] sm:$0xff]
    %v7347 = vld [vmem:[#allocation7 + $0x168] sm:$0xff]
    %v7348 = vld [vmem:[#allocation7 + $0x170] sm:$0xff]
    %v7349 = vld [vmem:[#allocation7 + $0x178] sm:$0xff]
    %v7350 = vld [vmem:[#allocation7 + $0x180] sm:$0xff]
    %v7351 = vld [vmem:[#allocation7 + $0x188] sm:$0xff]
    %v7352 = vld [vmem:[#allocation7 + $0x190] sm:$0xff]
    %v7353 = vld [vmem:[#allocation7 + $0x198] sm:$0xff]
    %v7354 = vld [vmem:[#allocation7 + $0x1a0] sm:$0xff]
    %v7355 = vld [vmem:[#allocation7 + $0x1a8] sm:$0xff]
    %v7356 = vld [vmem:[#allocation7 + $0x1b0] sm:$0xff]
    %v7357 = vld [vmem:[#allocation7 + $0x1b8] sm:$0xff]
    %v7358 = vld [vmem:[#allocation7 + $0x1c0] sm:$0xff]
    %v7359 = vld [vmem:[#allocation7 + $0x1c8] sm:$0xff]
    %v7360 = vld [vmem:[#allocation7 + $0x1d0] sm:$0xff]
    %v7361 = vld [vmem:[#allocation7 + $0x1d8] sm:$0xff]
    %v7362 = vld [vmem:[#allocation7 + $0x1e0] sm:$0xff]
    %v7363 = vld [vmem:[#allocation7 + $0x1e8] sm:$0xff]
    %v7364 = vld [vmem:[#allocation7 + $0x1f0] sm:$0xff]
    %v7365 = vld [vmem:[#allocation7 + $0x1f8] sm:$0xff]
    %v7366 = vld [vmem:[#allocation7 + $0x200] sm:$0xff]
    %v7367 = vld [vmem:[#allocation7 + $0x208] sm:$0xff]
    %v7368 = vld [vmem:[#allocation7 + $0x210] sm:$0xff]
    %v7369 = vld [vmem:[#allocation7 + $0x218] sm:$0xff]
    %v7370 = vld [vmem:[#allocation7 + $0x220] sm:$0xff]
    %v7371 = vld [vmem:[#allocation7 + $0x228] sm:$0xff]
    %v7372 = vld [vmem:[#allocation7 + $0x230] sm:$0xff]
    %v7373 = vld [vmem:[#allocation7 + $0x238] sm:$0xff]
    %v7374 = vld [vmem:[#allocation7 + $0x240] sm:$0xff]
    %v7375 = vld [vmem:[#allocation7 + $0x248] sm:$0xff]
    %v7376 = vld [vmem:[#allocation7 + $0x250] sm:$0xff]
    %v7377 = vld [vmem:[#allocation7 + $0x258] sm:$0xff]
    %v7378 = vld [vmem:[#allocation7 + $0x260] sm:$0xff]
    %v7379 = vld [vmem:[#allocation7 + $0x268] sm:$0xff]
    %v7380 = vld [vmem:[#allocation7 + $0x270] sm:$0xff]
    %v7381 = vld [vmem:[#allocation7 + $0x278] sm:$0xff]
    %v7382 = vld [vmem:[#allocation7 + $0x280] sm:$0xff]
    %v7383 = vld [vmem:[#allocation7 + $0x288] sm:$0xff]
    %v7384 = vld [vmem:[#allocation7 + $0x290] sm:$0xff]
    %v7385 = vld [vmem:[#allocation7 + $0x298] sm:$0xff]
    %v7386 = vld [vmem:[#allocation7 + $0x2a0] sm:$0xff]
    %v7387 = vld [vmem:[#allocation7 + $0x2a8] sm:$0xff]
    %v7388 = vld [vmem:[#allocation7 + $0x2b0] sm:$0xff]
    %v7389 = vld [vmem:[#allocation7 + $0x2b8] sm:$0xff]
    %v7390 = vld [vmem:[#allocation7 + $0x2c0] sm:$0xff]
    %v7391 = vld [vmem:[#allocation7 + $0x2c8] sm:$0xff]
    %v7392 = vld [vmem:[#allocation7 + $0x2d0] sm:$0xff]
    %v7393 = vld [vmem:[#allocation7 + $0x2d8] sm:$0xff]
    %v7394 = vld [vmem:[#allocation7 + $0x2e0] sm:$0xff]
    %v7395 = vld [vmem:[#allocation7 + $0x2e8] sm:$0xff]
    %v7396 = vld [vmem:[#allocation7 + $0x2f0] sm:$0xff]
    %v7397 = vld [vmem:[#allocation7 + $0x2f8] sm:$0xff]
    %v7398 = vld [vmem:[#allocation7 + $0x300] sm:$0xff]
    %v7399 = vld [vmem:[#allocation7 + $0x308] sm:$0xff]
    %v7400 = vld [vmem:[#allocation7 + $0x310] sm:$0xff]
    %v7401 = vld [vmem:[#allocation7 + $0x318] sm:$0xff]
    %v7402 = vld [vmem:[#allocation7 + $0x320] sm:$0xff]
    %v7403 = vld [vmem:[#allocation7 + $0x328] sm:$0xff]
    %v7404 = vld [vmem:[#allocation7 + $0x330] sm:$0xff]
    %v7405 = vld [vmem:[#allocation7 + $0x338] sm:$0xff]
    %v7406 = vld [vmem:[#allocation7 + $0x340] sm:$0xff]
    %v7407 = vld [vmem:[#allocation7 + $0x348] sm:$0xff]
    %v7408 = vld [vmem:[#allocation7 + $0x350] sm:$0xff]
    %v7409 = vld [vmem:[#allocation7 + $0x358] sm:$0xff]
    %v7410 = vld [vmem:[#allocation7 + $0x360] sm:$0xff]
    %v7411 = vld [vmem:[#allocation7 + $0x368] sm:$0xff]
    %v7412 = vld [vmem:[#allocation7 + $0x370] sm:$0xff]
    %v7413 = vld [vmem:[#allocation7 + $0x378] sm:$0xff]
    %v7414 = vld [vmem:[#allocation7 + $0x380] sm:$0xff]
    %v7415 = vld [vmem:[#allocation7 + $0x388] sm:$0xff]
    %v7416 = vld [vmem:[#allocation7 + $0x390] sm:$0xff]
    %v7417 = vld [vmem:[#allocation7 + $0x398] sm:$0xff]
    %v7418 = vld [vmem:[#allocation7 + $0x3a0] sm:$0xff]
    %v7419 = vld [vmem:[#allocation7 + $0x3a8] sm:$0xff]
    %v7420 = vld [vmem:[#allocation7 + $0x3b0] sm:$0xff]
    %v7421 = vld [vmem:[#allocation7 + $0x3b8] sm:$0xff]
    %v7422 = vld [vmem:[#allocation7 + $0x3c0] sm:$0xff]
    %v7423 = vld [vmem:[#allocation7 + $0x3c8] sm:$0xff]
    %v7424 = vld [vmem:[#allocation7 + $0x3d0] sm:$0xff]
    %v7425 = vld [vmem:[#allocation7 + $0x3d8] sm:$0xff]
    %v7426 = vld [vmem:[#allocation7 + $0x3e0] sm:$0xff]
    %v7427 = vld [vmem:[#allocation7 + $0x3e8] sm:$0xff]
    %v7428 = vld [vmem:[#allocation7 + $0x3f0] sm:$0xff]
    %v7429 = vld [vmem:[#allocation7 + $0x3f8] sm:$0xff]
    %v7430 = vld [vmem:[#allocation7 + $0x400] sm:$0xff]
    %v7431 = vld [vmem:[#allocation7 + $0x408] sm:$0xff]
    %v7432 = vld [vmem:[#allocation7 + $0x410] sm:$0xff]
    %v7433 = vld [vmem:[#allocation7 + $0x418] sm:$0xff]
    %v7434 = vld [vmem:[#allocation7 + $0x420] sm:$0xff]
    %v7435 = vld [vmem:[#allocation7 + $0x428] sm:$0xff]
    %v7436 = vld [vmem:[#allocation7 + $0x430] sm:$0xff]
    %v7437 = vld [vmem:[#allocation7 + $0x438] sm:$0xff]
    %v7438 = vld [vmem:[#allocation7 + $0x440] sm:$0xff]
    %v7439 = vld [vmem:[#allocation7 + $0x448] sm:$0xff]
    %v7440 = vld [vmem:[#allocation7 + $0x450] sm:$0xff]
    %v7441 = vld [vmem:[#allocation7 + $0x458] sm:$0xff]
    %v7442 = vld [vmem:[#allocation7 + $0x460] sm:$0xff]
    %v7443 = vld [vmem:[#allocation7 + $0x468] sm:$0xff]
    %v7444 = vld [vmem:[#allocation7 + $0x470] sm:$0xff]
    %v7445 = vld [vmem:[#allocation7 + $0x478] sm:$0xff]
    %v7446 = vld [vmem:[#allocation7 + $0x480] sm:$0xff]
    %v7447 = vld [vmem:[#allocation7 + $0x488] sm:$0xff]
    %v7448 = vld [vmem:[#allocation7 + $0x490] sm:$0xff]
    %v7449 = vld [vmem:[#allocation7 + $0x498] sm:$0xff]
    %v7450 = vld [vmem:[#allocation7 + $0x4a0] sm:$0xff]
    %v7451 = vld [vmem:[#allocation7 + $0x4a8] sm:$0xff]
    %v7452 = vld [vmem:[#allocation7 + $0x4b0] sm:$0xff]
    %v7453 = vld [vmem:[#allocation7 + $0x4b8] sm:$0xff]
    %v7454 = vld [vmem:[#allocation7 + $0x4c0] sm:$0xff]
    %v7455 = vld [vmem:[#allocation7 + $0x4c8] sm:$0xff]
    %v7456 = vld [vmem:[#allocation7 + $0x4d0] sm:$0xff]
    %v7457 = vld [vmem:[#allocation7 + $0x4d8] sm:$0xff]
    %v7458 = vld [vmem:[#allocation7 + $0x4e0] sm:$0xff]
    %v7459 = vld [vmem:[#allocation7 + $0x4e8] sm:$0xff]
    %v7460 = vld [vmem:[#allocation7 + $0x4f0] sm:$0xff]
    %v7461 = vld [vmem:[#allocation7 + $0x4f8] sm:$0xff]
    %v7462 = vld [vmem:[#allocation7 + $0x500] sm:$0xff]
    %v7463 = vld [vmem:[#allocation7 + $0x508] sm:$0xff]
    %v7464 = vld [vmem:[#allocation7 + $0x510] sm:$0xff]
    %v7465 = vld [vmem:[#allocation7 + $0x518] sm:$0xff]
    %v7466 = vld [vmem:[#allocation7 + $0x520] sm:$0xff]
    %v7467 = vld [vmem:[#allocation7 + $0x528] sm:$0xff]
    %v7468 = vld [vmem:[#allocation7 + $0x530] sm:$0xff]
    %v7469 = vld [vmem:[#allocation7 + $0x538] sm:$0xff]
    %v7470 = vld [vmem:[#allocation7 + $0x540] sm:$0xff]
    %v7471 = vld [vmem:[#allocation7 + $0x548] sm:$0xff]
    %v7472 = vld [vmem:[#allocation7 + $0x550] sm:$0xff]
    %v7473 = vld [vmem:[#allocation7 + $0x558] sm:$0xff]
    %v7474 = vld [vmem:[#allocation7 + $0x560] sm:$0xff]
    %v7475 = vld [vmem:[#allocation7 + $0x568] sm:$0xff]
    %v7476 = vld [vmem:[#allocation7 + $0x570] sm:$0xff]
    %v7477 = vld [vmem:[#allocation7 + $0x578] sm:$0xff]
    %v7478 = vld [vmem:[#allocation7 + $0x580] sm:$0xff]
    %v7479 = vld [vmem:[#allocation7 + $0x588] sm:$0xff]
    %v7480 = vld [vmem:[#allocation7 + $0x590] sm:$0xff]
    %v7481 = vld [vmem:[#allocation7 + $0x598] sm:$0xff]
    %v7482 = vld [vmem:[#allocation7 + $0x5a0] sm:$0xff]
    %v7483 = vld [vmem:[#allocation7 + $0x5a8] sm:$0xff]
    %v7484 = vld [vmem:[#allocation7 + $0x5b0] sm:$0xff]
    %v7485 = vld [vmem:[#allocation7 + $0x5b8] sm:$0xff]
    %v7486 = vld [vmem:[#allocation7 + $0x5c0] sm:$0xff]
    %v7487 = vld [vmem:[#allocation7 + $0x5c8] sm:$0xff]
    %v7488 = vld [vmem:[#allocation7 + $0x5d0] sm:$0xff]
    %v7489 = vld [vmem:[#allocation7 + $0x5d8] sm:$0xff]
    %v7490 = vld [vmem:[#allocation7 + $0x5e0] sm:$0xff]
    %v7491 = vld [vmem:[#allocation7 + $0x5e8] sm:$0xff]
    %v7492 = vld [vmem:[#allocation7 + $0x5f0] sm:$0xff]
    %v7493 = vld [vmem:[#allocation7 + $0x5f8] sm:$0xff]
    %v7494 = vld [vmem:[#allocation7 + $0x600] sm:$0xff]
    %v7495 = vld [vmem:[#allocation7 + $0x608] sm:$0xff]
    %v7496 = vld [vmem:[#allocation7 + $0x610] sm:$0xff]
    %v7497 = vld [vmem:[#allocation7 + $0x618] sm:$0xff]
    %v7498 = vld [vmem:[%s6] sm:$0x1]
    %v7500 = vlaneseq
    %v7501 = vshrl.u32 %v7500, 7
    %v7502 = vsub.s32 0, %v7501
    %v7503 = vrot.slane %v7498, %v7502
    %v7506 = vsel %vm6096, %v7301, 0
    %7508 = vmatprep.subr.bf16.mxu0 0
    %7509 = vmatpush1.bf16.msra.mxu0 %v7302
    %7510 = vmatprep.subr.bf16.mxu0 0
    %7511 = vmatpush1.bf16.msra.mxu0 %v7303
    %7512 = vmatprep.subr.bf16.mxu0 0
    %7513 = vmatpush1.bf16.msra.mxu0 %v7304
    %7514 = vmatprep.subr.bf16.mxu0 0
    %7515 = vmatpush1.bf16.msra.mxu0 %v7305
    %7516 = vmatprep.subr.bf16.mxu0 0
    %7517 = vmatpush1.bf16.msra.mxu0 %v7306
    %7518 = vmatprep.subr.bf16.mxu0 0
    %7519 = vmatpush1.bf16.msra.mxu0 %v7307
    %7520 = vmatprep.subr.bf16.mxu0 0
    %7521 = vmatpush1.bf16.msra.mxu0 %v7308
    %7522 = vmatprep.subr.bf16.mxu0 0
    %7523 = vmatpush1.bf16.msra.mxu0 %v7309
    %7524 = vmatprep.subr.bf16.mxu0 0
    %7525 = vmatpush1.bf16.msra.mxu0 %v7310
    %7526 = vmatprep.subr.bf16.mxu0 0
    %7527 = vmatpush1.bf16.msra.mxu0 %v7311
    %7528 = vmatprep.subr.bf16.mxu0 0
    %7529 = vmatpush1.bf16.msra.mxu0 %v7312
    %7530 = vmatprep.subr.bf16.mxu0 0
    %7531 = vmatpush1.bf16.msra.mxu0 %v7313
    %7532 = vmatprep.subr.bf16.mxu0 0
    %7533 = vmatpush1.bf16.msra.mxu0 %v7314
    %7534 = vmatprep.subr.bf16.mxu0 0
    %7535 = vmatpush1.bf16.msra.mxu0 %v7315
    %7536 = vmatprep.subr.bf16.mxu0 0
    %7537 = vmatpush1.bf16.msra.mxu0 %v7316
    %7538 = vmatprep.subr.bf16.mxu0 0
    %7539 = vmatpush1.bf16.msra.mxu0 %v7317
    %7540 = vmatprep.mubr.bf16.mxu0 %v7278
    %7541 = vmatmul.mubr.bf16.gmra.mrb[0].mxu0 %v7277
    %v7542 = vpop.f32.mrb[0].mxu0
    %v7543 = vadd.f32 %v7503, %v7542
    %v7544 = vpop.f32.mrb[0].mxu0
    %v7545 = vpop.f32.mrb[0].mxu0
    %v7546 = vpop.f32.mrb[0].mxu0
    %7547 = vdwg.mxu0
    %7548 = vmatprep.subr.bf16.mxu0 0
    %7549 = vmatpush1.bf16.msra.mxu0 %v7318
    %7550 = vmatprep.subr.bf16.mxu0 0
    %7551 = vmatpush1.bf16.msra.mxu0 %v7319
    %7552 = vmatprep.subr.bf16.mxu0 0
    %7553 = vmatpush1.bf16.msra.mxu0 %v7320
    %7554 = vmatprep.subr.bf16.mxu0 0
    %7555 = vmatpush1.bf16.msra.mxu0 %v7321
    %7556 = vmatprep.subr.bf16.mxu0 0
    %7557 = vmatpush1.bf16.msra.mxu0 %v7322
    %7558 = vmatprep.subr.bf16.mxu0 0
    %7559 = vmatpush1.bf16.msra.mxu0 %v7323
    %7560 = vmatprep.subr.bf16.mxu0 0
    %7561 = vmatpush1.bf16.msra.mxu0 %v7324
    %7562 = vmatprep.subr.bf16.mxu0 0
    %7563 = vmatpush1.bf16.msra.mxu0 %v7325
    %7564 = vmatprep.subr.bf16.mxu0 0
    %7565 = vmatpush1.bf16.msra.mxu0 %v7326
    %7566 = vmatprep.subr.bf16.mxu0 0
    %7567 = vmatpush1.bf16.msra.mxu0 %v7327
    %7568 = vmatprep.subr.bf16.mxu0 0
    %7569 = vmatpush1.bf16.msra.mxu0 %v7328
    %7570 = vmatprep.subr.bf16.mxu0 0
    %7571 = vmatpush1.bf16.msra.mxu0 %v7329
    %7572 = vmatprep.subr.bf16.mxu0 0
    %7573 = vmatpush1.bf16.msra.mxu0 %v7330
    %7574 = vmatprep.subr.bf16.mxu0 0
    %7575 = vmatpush1.bf16.msra.mxu0 %v7331
    %7576 = vmatprep.subr.bf16.mxu0 0
    %7577 = vmatpush1.bf16.msra.mxu0 %v7332
    %7578 = vmatprep.subr.bf16.mxu0 0
    %7579 = vmatpush1.bf16.msra.mxu0 %v7333
    %7580 = vmatprep.mubr.bf16.mxu0 %v7280
    %7581 = vmatmul.mubr.bf16.gmra.mrb[0].mxu0 %v7279
    %v7582 = vpop.f32.mrb[0].mxu0
    %v7583 = vadd.f32 %v7543, %v7582
    %v7584 = vpop.f32.mrb[0].mxu0
    %v7585 = vpop.f32.mrb[0].mxu0
    %v7586 = vpop.f32.mrb[0].mxu0
    %7587 = vdwg.mxu0
    %7588 = vmatprep.subr.bf16.mxu0 0
    %7589 = vmatpush1.bf16.msra.mxu0 %v7334
    %7590 = vmatprep.subr.bf16.mxu0 0
    %7591 = vmatpush1.bf16.msra.mxu0 %v7335
    %7592 = vmatprep.subr.bf16.mxu0 0
    %7593 = vmatpush1.bf16.msra.mxu0 %v7336
    %7594 = vmatprep.subr.bf16.mxu0 0
    %7595 = vmatpush1.bf16.msra.mxu0 %v7337
    %7596 = vmatprep.subr.bf16.mxu0 0
    %7597 = vmatpush1.bf16.msra.mxu0 %v7338
    %7598 = vmatprep.subr.bf16.mxu0 0
    %7599 = vmatpush1.bf16.msra.mxu0 %v7339
    %7600 = vmatprep.subr.bf16.mxu0 0
    %7601 = vmatpush1.bf16.msra.mxu0 %v7340
    %7602 = vmatprep.subr.bf16.mxu0 0
    %7603 = vmatpush1.bf16.msra.mxu0 %v7341
    %7604 = vmatprep.subr.bf16.mxu0 0
    %7605 = vmatpush1.bf16.msra.mxu0 %v7342
    %7606 = vmatprep.subr.bf16.mxu0 0
    %7607 = vmatpush1.bf16.msra.mxu0 %v7343
    %7608 = vmatprep.subr.bf16.mxu0 0
    %7609 = vmatpush1.bf16.msra.mxu0 %v7344
    %7610 = vmatprep.subr.bf16.mxu0 0
    %7611 = vmatpush1.bf16.msra.mxu0 %v7345
    %7612 = vmatprep.subr.bf16.mxu0 0
    %7613 = vmatpush1.bf16.msra.mxu0 %v7346
    %7614 = vmatprep.subr.bf16.mxu0 0
    %7615 = vmatpush1.bf16.msra.mxu0 %v7347
    %7616 = vmatprep.subr.bf16.mxu0 0
    %7617 = vmatpush1.bf16.msra.mxu0 %v7348
    %7618 = vmatprep.subr.bf16.mxu0 0
    %7619 = vmatpush1.bf16.msra.mxu0 %v7349
    %7620 = vmatprep.mubr.bf16.mxu0 %v7282
    %7621 = vmatmul.mubr.bf16.gmra.mrb[0].mxu0 %v7281
    %v7622 = vpop.f32.mrb[0].mxu0
    %v7623 = vadd.f32 %v7583, %v7622
    %v7624 = vpop.f32.mrb[0].mxu0
    %v7625 = vpop.f32.mrb[0].mxu0
    %v7626 = vpop.f32.mrb[0].mxu0
    %7627 = vdwg.mxu0
    %7628 = vmatprep.subr.bf16.mxu0 0
    %7629 = vmatpush1.bf16.msra.mxu0 %v7350
    %7630 = vmatprep.subr.bf16.mxu0 0
    %7631 = vmatpush1.bf16.msra.mxu0 %v7351
    %7632 = vmatprep.subr.bf16.mxu0 0
    %7633 = vmatpush1.bf16.msra.mxu0 %v7352
    %7634 = vmatprep.subr.bf16.mxu0 0
    %7635 = vmatpush1.bf16.msra.mxu0 %v7353
    %7636 = vmatprep.subr.bf16.mxu0 0
    %7637 = vmatpush1.bf16.msra.mxu0 %v7354
    %7638 = vmatprep.subr.bf16.mxu0 0
    %7639 = vmatpush1.bf16.msra.mxu0 %v7355
    %7640 = vmatprep.subr.bf16.mxu0 0
    %7641 = vmatpush1.bf16.msra.mxu0 %v7356
    %7642 = vmatprep.subr.bf16.mxu0 0
    %7643 = vmatpush1.bf16.msra.mxu0 %v7357
    %7644 = vmatprep.subr.bf16.mxu0 0
    %7645 = vmatpush1.bf16.msra.mxu0 %v7358
    %7646 = vmatprep.subr.bf16.mxu0 0
    %7647 = vmatpush1.bf16.msra.mxu0 %v7359
    %7648 = vmatprep.subr.bf16.mxu0 0
    %7649 = vmatpush1.bf16.msra.mxu0 %v7360
    %7650 = vmatprep.subr.bf16.mxu0 0
    %7651 = vmatpush1.bf16.msra.mxu0 %v7361
    %7652 = vmatprep.subr.bf16.mxu0 0
    %7653 = vmatpush1.bf16.msra.mxu0 %v7362
    %7654 = vmatprep.subr.bf16.mxu0 0
    %7655 = vmatpush1.bf16.msra.mxu0 %v7363
    %7656 = vmatprep.subr.bf16.mxu0 0
    %7657 = vmatpush1.bf16.msra.mxu0 %v7364
    %7658 = vmatprep.subr.bf16.mxu0 0
    %7659 = vmatpush1.bf16.msra.mxu0 %v7365
    %7660 = vmatprep.mubr.bf16.mxu0 %v7284
    %7661 = vmatmul.mubr.bf16.gmra.mrb[0].mxu0 %v7283
    %v7662 = vpop.f32.mrb[0].mxu0
    %v7663 = vadd.f32 %v7623, %v7662
    %v7664 = vpop.f32.mrb[0].mxu0
    %v7665 = vpop.f32.mrb[0].mxu0
    %v7666 = vpop.f32.mrb[0].mxu0
    %7667 = vdwg.mxu0
    %7668 = vmatprep.subr.bf16.mxu0 0
    %7669 = vmatpush1.bf16.msra.mxu0 %v7366
    %7670 = vmatprep.subr.bf16.mxu0 0
    %7671 = vmatpush1.bf16.msra.mxu0 %v7367
    %7672 = vmatprep.subr.bf16.mxu0 0
    %7673 = vmatpush1.bf16.msra.mxu0 %v7368
    %7674 = vmatprep.subr.bf16.mxu0 0
    %7675 = vmatpush1.bf16.msra.mxu0 %v7369
    %7676 = vmatprep.subr.bf16.mxu0 0
    %7677 = vmatpush1.bf16.msra.mxu0 %v7370
    %7678 = vmatprep.subr.bf16.mxu0 0
    %7679 = vmatpush1.bf16.msra.mxu0 %v7371
    %7680 = vmatprep.subr.bf16.mxu0 0
    %7681 = vmatpush1.bf16.msra.mxu0 %v7372
    %7682 = vmatprep.subr.bf16.mxu0 0
    %7683 = vmatpush1.bf16.msra.mxu0 %v7373
    %7684 = vmatprep.subr.bf16.mxu0 0
    %7685 = vmatpush1.bf16.msra.mxu0 %v7374
    %7686 = vmatprep.subr.bf16.mxu0 0
    %7687 = vmatpush1.bf16.msra.mxu0 %v7375
    %7688 = vmatprep.subr.bf16.mxu0 0
    %7689 = vmatpush1.bf16.msra.mxu0 %v7376
    %7690 = vmatprep.subr.bf16.mxu0 0
    %7691 = vmatpush1.bf16.msra.mxu0 %v7377
    %7692 = vmatprep.subr.bf16.mxu0 0
    %7693 = vmatpush1.bf16.msra.mxu0 %v7378
    %7694 = vmatprep.subr.bf16.mxu0 0
    %7695 = vmatpush1.bf16.msra.mxu0 %v7379
    %7696 = vmatprep.subr.bf16.mxu0 0
    %7697 = vmatpush1.bf16.msra.mxu0 %v7380
    %7698 = vmatprep.subr.bf16.mxu0 0
    %7699 = vmatpush1.bf16.msra.mxu0 %v7381
    %7700 = vmatprep.mubr.bf16.mxu0 %v7286
    %7701 = vmatmul.mubr.bf16.gmra.mrb[0].mxu0 %v7285
    %v7702 = vpop.f32.mrb[0].mxu0
    %v7703 = vadd.f32 %v7663, %v7702
    %v7704 = vpop.f32.mrb[0].mxu0
    %v7705 = vpop.f32.mrb[0].mxu0
    %v7706 = vpop.f32.mrb[0].mxu0
    %7707 = vdwg.mxu0
    %7708 = vmatprep.subr.bf16.mxu0 0
    %7709 = vmatpush1.bf16.msra.mxu0 %v7382
    %7710 = vmatprep.subr.bf16.mxu0 0
    %7711 = vmatpush1.bf16.msra.mxu0 %v7383
    %7712 = vmatprep.subr.bf16.mxu0 0
    %7713 = vmatpush1.bf16.msra.mxu0 %v7384
    %7714 = vmatprep.subr.bf16.mxu0 0
    %7715 = vmatpush1.bf16.msra.mxu0 %v7385
    %7716 = vmatprep.subr.bf16.mxu0 0
    %7717 = vmatpush1.bf16.msra.mxu0 %v7386
    %7718 = vmatprep.subr.bf16.mxu0 0
    %7719 = vmatpush1.bf16.msra.mxu0 %v7387
    %7720 = vmatprep.subr.bf16.mxu0 0
    %7721 = vmatpush1.bf16.msra.mxu0 %v7388
    %7722 = vmatprep.subr.bf16.mxu0 0
    %7723 = vmatpush1.bf16.msra.mxu0 %v7389
    %7724 = vmatprep.subr.bf16.mxu0 0
    %7725 = vmatpush1.bf16.msra.mxu0 %v7390
    %7726 = vmatprep.subr.bf16.mxu0 0
    %7727 = vmatpush1.bf16.msra.mxu0 %v7391
    %7728 = vmatprep.subr.bf16.mxu0 0
    %7729 = vmatpush1.bf16.msra.mxu0 %v7392
    %7730 = vmatprep.subr.bf16.mxu0 0
    %7731 = vmatpush1.bf16.msra.mxu0 %v7393
    %7732 = vmatprep.subr.bf16.mxu0 0
    %7733 = vmatpush1.bf16.msra.mxu0 %v7394
    %7734 = vmatprep.subr.bf16.mxu0 0
    %7735 = vmatpush1.bf16.msra.mxu0 %v7395
    %7736 = vmatprep.subr.bf16.mxu0 0
    %7737 = vmatpush1.bf16.msra.mxu0 %v7396
    %7738 = vmatprep.subr.bf16.mxu0 0
    %7739 = vmatpush1.bf16.msra.mxu0 %v7397
    %7740 = vmatprep.mubr.bf16.mxu0 %v7288
    %7741 = vmatmul.mubr.bf16.gmra.mrb[0].mxu0 %v7287
    %v7742 = vpop.f32.mrb[0].mxu0
    %v7743 = vadd.f32 %v7703, %v7742
    %v7744 = vpop.f32.mrb[0].mxu0
    %v7745 = vpop.f32.mrb[0].mxu0
    %v7746 = vpop.f32.mrb[0].mxu0
    %7747 = vdwg.mxu0
    %7748 = vmatprep.subr.bf16.mxu0 0
    %7749 = vmatpush1.bf16.msra.mxu0 %v7398
    %7750 = vmatprep.subr.bf16.mxu0 0
    %7751 = vmatpush1.bf16.msra.mxu0 %v7399
    %7752 = vmatprep.subr.bf16.mxu0 0
    %7753 = vmatpush1.bf16.msra.mxu0 %v7400
    %7754 = vmatprep.subr.bf16.mxu0 0
    %7755 = vmatpush1.bf16.msra.mxu0 %v7401
    %7756 = vmatprep.subr.bf16.mxu0 0
    %7757 = vmatpush1.bf16.msra.mxu0 %v7402
    %7758 = vmatprep.subr.bf16.mxu0 0
    %7759 = vmatpush1.bf16.msra.mxu0 %v7403
    %7760 = vmatprep.subr.bf16.mxu0 0
    %7761 = vmatpush1.bf16.msra.mxu0 %v7404
    %7762 = vmatprep.subr.bf16.mxu0 0
    %7763 = vmatpush1.bf16.msra.mxu0 %v7405
    %7764 = vmatprep.subr.bf16.mxu0 0
    %7765 = vmatpush1.bf16.msra.mxu0 %v7406
    %7766 = vmatprep.subr.bf16.mxu0 0
    %7767 = vmatpush1.bf16.msra.mxu0 %v7407
    %7768 = vmatprep.subr.bf16.mxu0 0
    %7769 = vmatpush1.bf16.msra.mxu0 %v7408
    %7770 = vmatprep.subr.bf16.mxu0 0
    %7771 = vmatpush1.bf16.msra.mxu0 %v7409
    %7772 = vmatprep.subr.bf16.mxu0 0
    %7773 = vmatpush1.bf16.msra.mxu0 %v7410
    %7774 = vmatprep.subr.bf16.mxu0 0
    %7775 = vmatpush1.bf16.msra.mxu0 %v7411
    %7776 = vmatprep.subr.bf16.mxu0 0
    %7777 = vmatpush1.bf16.msra.mxu0 %v7412
    %7778 = vmatprep.subr.bf16.mxu0 0
    %7779 = vmatpush1.bf16.msra.mxu0 %v7413
    %7780 = vmatprep.mubr.bf16.mxu0 %v7290
    %7781 = vmatmul.mubr.bf16.gmra.mrb[0].mxu0 %v7289
    %v7782 = vpop.f32.mrb[0].mxu0
    %v7783 = vadd.f32 %v7743, %v7782
    %v7784 = vpop.f32.mrb[0].mxu0
    %v7785 = vpop.f32.mrb[0].mxu0
    %v7786 = vpop.f32.mrb[0].mxu0
    %7787 = vdwg.mxu0
    %7788 = vmatprep.subr.bf16.mxu0 0
    %7789 = vmatpush1.bf16.msra.mxu0 %v7414
    %7790 = vmatprep.subr.bf16.mxu0 0
    %7791 = vmatpush1.bf16.msra.mxu0 %v7415
    %7792 = vmatprep.subr.bf16.mxu0 0
    %7793 = vmatpush1.bf16.msra.mxu0 %v7416
    %7794 = vmatprep.subr.bf16.mxu0 0
    %7795 = vmatpush1.bf16.msra.mxu0 %v7417
    %7796 = vmatprep.subr.bf16.mxu0 0
    %7797 = vmatpush1.bf16.msra.mxu0 %v7418
    %7798 = vmatprep.subr.bf16.mxu0 0
    %7799 = vmatpush1.bf16.msra.mxu0 %v7419
    %7800 = vmatprep.subr.bf16.mxu0 0
    %7801 = vmatpush1.bf16.msra.mxu0 %v7420
    %7802 = vmatprep.subr.bf16.mxu0 0
    %7803 = vmatpush1.bf16.msra.mxu0 %v7421
    %7804 = vmatprep.subr.bf16.mxu0 0
    %7805 = vmatpush1.bf16.msra.mxu0 %v7422
    %7806 = vmatprep.subr.bf16.mxu0 0
    %7807 = vmatpush1.bf16.msra.mxu0 %v7423
    %7808 = vmatprep.subr.bf16.mxu0 0
    %7809 = vmatpush1.bf16.msra.mxu0 %v7424
    %7810 = vmatprep.subr.bf16.mxu0 0
    %7811 = vmatpush1.bf16.msra.mxu0 %v7425
    %7812 = vmatprep.subr.bf16.mxu0 0
    %7813 = vmatpush1.bf16.msra.mxu0 %v7426
    %7814 = vmatprep.subr.bf16.mxu0 0
    %7815 = vmatpush1.bf16.msra.mxu0 %v7427
    %7816 = vmatprep.subr.bf16.mxu0 0
    %7817 = vmatpush1.bf16.msra.mxu0 %v7428
    %7818 = vmatprep.subr.bf16.mxu0 0
    %7819 = vmatpush1.bf16.msra.mxu0 %v7429
    %7820 = vmatprep.mubr.bf16.mxu0 %v7292
    %7821 = vmatmul.mubr.bf16.gmra.mrb[0].mxu0 %v7291
    %v7822 = vpop.f32.mrb[0].mxu0
    %v7823 = vadd.f32 %v7783, %v7822
    %v7824 = vpop.f32.mrb[0].mxu0
    %v7825 = vpop.f32.mrb[0].mxu0
    %v7826 = vpop.f32.mrb[0].mxu0
    %7827 = vdwg.mxu0
    %7828 = vmatprep.subr.bf16.mxu0 0
    %7829 = vmatpush1.bf16.msra.mxu0 %v7430
    %7830 = vmatprep.subr.bf16.mxu0 0
    %7831 = vmatpush1.bf16.msra.mxu0 %v7431
    %7832 = vmatprep.subr.bf16.mxu0 0
    %7833 = vmatpush1.bf16.msra.mxu0 %v7432
    %7834 = vmatprep.subr.bf16.mxu0 0
    %7835 = vmatpush1.bf16.msra.mxu0 %v7433
    %7836 = vmatprep.subr.bf16.mxu0 0
    %7837 = vmatpush1.bf16.msra.mxu0 %v7434
    %7838 = vmatprep.subr.bf16.mxu0 0
    %7839 = vmatpush1.bf16.msra.mxu0 %v7435
    %7840 = vmatprep.subr.bf16.mxu0 0
    %7841 = vmatpush1.bf16.msra.mxu0 %v7436
    %7842 = vmatprep.subr.bf16.mxu0 0
    %7843 = vmatpush1.bf16.msra.mxu0 %v7437
    %7844 = vmatprep.subr.bf16.mxu0 0
    %7845 = vmatpush1.bf16.msra.mxu0 %v7438
    %7846 = vmatprep.subr.bf16.mxu0 0
    %7847 = vmatpush1.bf16.msra.mxu0 %v7439
    %7848 = vmatprep.subr.bf16.mxu0 0
    %7849 = vmatpush1.bf16.msra.mxu0 %v7440
    %7850 = vmatprep.subr.bf16.mxu0 0
    %7851 = vmatpush1.bf16.msra.mxu0 %v7441
    %7852 = vmatprep.subr.bf16.mxu0 0
    %7853 = vmatpush1.bf16.msra.mxu0 %v7442
    %7854 = vmatprep.subr.bf16.mxu0 0
    %7855 = vmatpush1.bf16.msra.mxu0 %v7443
    %7856 = vmatprep.subr.bf16.mxu0 0
    %7857 = vmatpush1.bf16.msra.mxu0 %v7444
    %7858 = vmatprep.subr.bf16.mxu0 0
    %7859 = vmatpush1.bf16.msra.mxu0 %v7445
    %7860 = vmatprep.mubr.bf16.mxu0 %v7294
    %7861 = vmatmul.mubr.bf16.gmra.mrb[0].mxu0 %v7293
    %v7862 = vpop.f32.mrb[0].mxu0
    %v7863 = vadd.f32 %v7823, %v7862
    %v7864 = vpop.f32.mrb[0].mxu0
    %v7865 = vpop.f32.mrb[0].mxu0
    %v7866 = vpop.f32.mrb[0].mxu0
    %7867 = vdwg.mxu0
    %7868 = vmatprep.subr.bf16.mxu0 0
    %7869 = vmatpush1.bf16.msra.mxu0 %v7446
    %7870 = vmatprep.subr.bf16.mxu0 0
    %7871 = vmatpush1.bf16.msra.mxu0 %v7447
    %7872 = vmatprep.subr.bf16.mxu0 0
    %7873 = vmatpush1.bf16.msra.mxu0 %v7448
    %7874 = vmatprep.subr.bf16.mxu0 0
    %7875 = vmatpush1.bf16.msra.mxu0 %v7449
    %7876 = vmatprep.subr.bf16.mxu0 0
    %7877 = vmatpush1.bf16.msra.mxu0 %v7450
    %7878 = vmatprep.subr.bf16.mxu0 0
    %7879 = vmatpush1.bf16.msra.mxu0 %v7451
    %7880 = vmatprep.subr.bf16.mxu0 0
    %7881 = vmatpush1.bf16.msra.mxu0 %v7452
    %7882 = vmatprep.subr.bf16.mxu0 0
    %7883 = vmatpush1.bf16.msra.mxu0 %v7453
    %7884 = vmatprep.subr.bf16.mxu0 0
    %7885 = vmatpush1.bf16.msra.mxu0 %v7454
    %7886 = vmatprep.subr.bf16.mxu0 0
    %7887 = vmatpush1.bf16.msra.mxu0 %v7455
    %7888 = vmatprep.subr.bf16.mxu0 0
    %7889 = vmatpush1.bf16.msra.mxu0 %v7456
    %7890 = vmatprep.subr.bf16.mxu0 0
    %7891 = vmatpush1.bf16.msra.mxu0 %v7457
    %7892 = vmatprep.subr.bf16.mxu0 0
    %7893 = vmatpush1.bf16.msra.mxu0 %v7458
    %7894 = vmatprep.subr.bf16.mxu0 0
    %7895 = vmatpush1.bf16.msra.mxu0 %v7459
    %7896 = vmatprep.subr.bf16.mxu0 0
    %7897 = vmatpush1.bf16.msra.mxu0 %v7460
    %7898 = vmatprep.subr.bf16.mxu0 0
    %7899 = vmatpush1.bf16.msra.mxu0 %v7461
    %7900 = vmatprep.mubr.bf16.mxu0 %v7296
    %7901 = vmatmul.mubr.bf16.gmra.mrb[0].mxu0 %v7295
    %v7902 = vpop.f32.mrb[0].mxu0
    %v7903 = vadd.f32 %v7863, %v7902
    %v7904 = vpop.f32.mrb[0].mxu0
    %v7905 = vpop.f32.mrb[0].mxu0
    %v7906 = vpop.f32.mrb[0].mxu0
    %7907 = vdwg.mxu0
    %7908 = vmatprep.subr.bf16.mxu0 0
    %7909 = vmatpush1.bf16.msra.mxu0 %v7462
    %7910 = vmatprep.subr.bf16.mxu0 0
    %7911 = vmatpush1.bf16.msra.mxu0 %v7463
    %7912 = vmatprep.subr.bf16.mxu0 0
    %7913 = vmatpush1.bf16.msra.mxu0 %v7464
    %7914 = vmatprep.subr.bf16.mxu0 0
    %7915 = vmatpush1.bf16.msra.mxu0 %v7465
    %7916 = vmatprep.subr.bf16.mxu0 0
    %7917 = vmatpush1.bf16.msra.mxu0 %v7466
    %7918 = vmatprep.subr.bf16.mxu0 0
    %7919 = vmatpush1.bf16.msra.mxu0 %v7467
    %7920 = vmatprep.subr.bf16.mxu0 0
    %7921 = vmatpush1.bf16.msra.mxu0 %v7468
    %7922 = vmatprep.subr.bf16.mxu0 0
    %7923 = vmatpush1.bf16.msra.mxu0 %v7469
    %7924 = vmatprep.subr.bf16.mxu0 0
    %7925 = vmatpush1.bf16.msra.mxu0 %v7470
    %7926 = vmatprep.subr.bf16.mxu0 0
    %7927 = vmatpush1.bf16.msra.mxu0 %v7471
    %7928 = vmatprep.subr.bf16.mxu0 0
    %7929 = vmatpush1.bf16.msra.mxu0 %v7472
    %7930 = vmatprep.subr.bf16.mxu0 0
    %7931 = vmatpush1.bf16.msra.mxu0 %v7473
    %7932 = vmatprep.subr.bf16.mxu0 0
    %7933 = vmatpush1.bf16.msra.mxu0 %v7474
    %7934 = vmatprep.subr.bf16.mxu0 0
    %7935 = vmatpush1.bf16.msra.mxu0 %v7475
    %7936 = vmatprep.subr.bf16.mxu0 0
    %7937 = vmatpush1.bf16.msra.mxu0 %v7476
    %7938 = vmatprep.subr.bf16.mxu0 0
    %7939 = vmatpush1.bf16.msra.mxu0 %v7477
    %7940 = vmatprep.mubr.bf16.mxu0 %v7298
    %7941 = vmatmul.mubr.bf16.gmra.mrb[0].mxu0 %v7297
    %v7942 = vpop.f32.mrb[0].mxu0
    %v7943 = vadd.f32 %v7903, %v7942
    %v7944 = vpop.f32.mrb[0].mxu0
    %v7945 = vpop.f32.mrb[0].mxu0
    %v7946 = vpop.f32.mrb[0].mxu0
    %7947 = vdwg.mxu0
    %7948 = vmatprep.subr.bf16.mxu0 0
    %7949 = vmatpush1.bf16.msra.mxu0 %v7478
    %7950 = vmatprep.subr.bf16.mxu0 0
    %7951 = vmatpush1.bf16.msra.mxu0 %v7479
    %7952 = vmatprep.subr.bf16.mxu0 0
    %7953 = vmatpush1.bf16.msra.mxu0 %v7480
    %7954 = vmatprep.subr.bf16.mxu0 0
    %7955 = vmatpush1.bf16.msra.mxu0 %v7481
    %7956 = vmatprep.subr.bf16.mxu0 0
    %7957 = vmatpush1.bf16.msra.mxu0 %v7482
    %7958 = vmatprep.subr.bf16.mxu0 0
    %7959 = vmatpush1.bf16.msra.mxu0 %v7483
    %7960 = vmatprep.subr.bf16.mxu0 0
    %7961 = vmatpush1.bf16.msra.mxu0 %v7484
    %7962 = vmatprep.subr.bf16.mxu0 0
    %7963 = vmatpush1.bf16.msra.mxu0 %v7485
    %7964 = vmatprep.subr.bf16.mxu0 0
    %7965 = vmatpush1.bf16.msra.mxu0 %v7486
    %7966 = vmatprep.subr.bf16.mxu0 0
    %7967 = vmatpush1.bf16.msra.mxu0 %v7487
    %7968 = vmatprep.subr.bf16.mxu0 0
    %7969 = vmatpush1.bf16.msra.mxu0 %v7488
    %7970 = vmatprep.subr.bf16.mxu0 0
    %7971 = vmatpush1.bf16.msra.mxu0 %v7489
    %7972 = vmatprep.subr.bf16.mxu0 0
    %7973 = vmatpush1.bf16.msra.mxu0 %v7490
    %7974 = vmatprep.subr.bf16.mxu0 0
    %7975 = vmatpush1.bf16.msra.mxu0 %v7491
    %7976 = vmatprep.subr.bf16.mxu0 0
    %7977 = vmatpush1.bf16.msra.mxu0 %v7492
    %7978 = vmatprep.subr.bf16.mxu0 0
    %7979 = vmatpush1.bf16.msra.mxu0 %v7493
    %7980 = vmatprep.mubr.bf16.mxu0 %v7300
    %7981 = vmatmul.mubr.bf16.gmra.mrb[0].mxu0 %v7299
    %v7982 = vpop.f32.mrb[0].mxu0
    %v7983 = vadd.f32 %v7943, %v7982
    %v7984 = vpop.f32.mrb[0].mxu0
    %v7985 = vpop.f32.mrb[0].mxu0
    %v7986 = vpop.f32.mrb[0].mxu0
    %7987 = vdwg.mxu0
    %7988 = vmatprep.subr.bf16.mxu0 0
    %7989 = vmatpush1.bf16.msra.mxu0 %v7494
    %7990 = vmatprep.subr.bf16.mxu0 0
    %7991 = vmatpush1.bf16.msra.mxu0 %v7495
    %7992 = vmatprep.subr.bf16.mxu0 0
    %7993 = vmatpush1.bf16.msra.mxu0 %v7496
    %7994 = vmatprep.subr.bf16.mxu0 0
    %7995 = vmatpush1.bf16.msra.mxu0 %v7497
    %7996 = vmatprep.subr.bf16.mxu0 0
    %7997 = vmatpush1.bf16.msra.mxu0 0
    %7998 = vmatprep.subr.bf16.mxu0 0
    %7999 = vmatpush1.bf16.msra.mxu0 0
    %8000 = vmatprep.subr.bf16.mxu0 0
    %8001 = vmatpush1.bf16.msra.mxu0 0
    %8002 = vmatprep.subr.bf16.mxu0 0
    %8003 = vmatpush1.bf16.msra.mxu0 0
    %8004 = vmatprep.subr.bf16.mxu0 0
    %8005 = vmatpush1.bf16.msra.mxu0 0
    %8006 = vmatprep.subr.bf16.mxu0 0
    %8007 = vmatpush1.bf16.msra.mxu0 0
    %8008 = vmatprep.subr.bf16.mxu0 0
    %8009 = vmatpush1.bf16.msra.mxu0 0
    %8010 = vmatprep.subr.bf16.mxu0 0
    %8011 = vmatpush1.bf16.msra.mxu0 0
    %8012 = vmatprep.subr.bf16.mxu0 0
    %8013 = vmatpush1.bf16.msra.mxu0 0
    %8014 = vmatprep.subr.bf16.mxu0 0
    %8015 = vmatpush1.bf16.msra.mxu0 0
    %8016 = vmatprep.subr.bf16.mxu0 0
    %8017 = vmatpush1.bf16.msra.mxu0 0
    %8018 = vmatprep.subr.bf16.mxu0 0
    %8019 = vmatpush1.bf16.msra.mxu0 0
    %8020 = vmatprep.mubr.bf16.mxu0 0
    %8021 = vmatmul.mubr.bf16.gmra.mrb[0].mxu0 %v7506
    %v8022 = vpop.f32.mrb[0].mxu0
    %v8023 = vadd.f32 %v7983, %v8022
    %v8024 = vpop.f32.mrb[0].mxu0
    %v8025 = vpop.f32.mrb[0].mxu0
    %v8026 = vpop.f32.mrb[0].mxu0
    %8027 = vdwg.mxu0
    %v8028 = vmax.f32 %v8023, 0.0
    %v8029 = vpack.c.bf16 %v8028, %v8028
    %v8030 = vld [vmem:[%s7] sm:$0xf]
    %v8031 = vld [vmem:[%s7 + $0x4] sm:$0xf]
    %v8032 = vld [vmem:[%s7 + $0x8] sm:$0xf]
    %v8033 = vld [vmem:[%s7 + $0xc] sm:$0xf]
    %v8034 = vld [vmem:[%s7 + $0x10] sm:$0xf]
    %v8035 = vld [vmem:[%s7 + $0x14] sm:$0xf]
    %v8036 = vld [vmem:[%s7 + $0x18] sm:$0xf]
    %v8037 = vld [vmem:[%s7 + $0x1c] sm:$0xf]
    %v8038 = vld [vmem:[%s7 + $0x20] sm:$0xf]
    %v8039 = vld [vmem:[%s7 + $0x24] sm:$0xf]
    %v8040 = vld [vmem:[%s7 + $0x28] sm:$0xf]
    %v8041 = vld [vmem:[%s7 + $0x2c] sm:$0xf]
    %v8042 = vld [vmem:[%s7 + $0x30] sm:$0xf]
    %v8043 = vld [vmem:[%s7 + $0x34] sm:$0xf]
    %v8044 = vld [vmem:[%s7 + $0x38] sm:$0xf]
    %v8045 = vld [vmem:[%s7 + $0x3c] sm:$0xf]
    %v8046 = vld [vmem:[%s8] sm:$0x1]
    %v8048 = vlaneseq
    %v8049 = vshrl.u32 %v8048, 7
    %v8050 = vsub.s32 0, %v8049
    %v8051 = vrot.slane %v8046, %v8050
    %v8069 = vunpack.c.l.b16 %v8030
    %v8070 = vunpack.c.l.b16 %v8031
    %v8071 = vunpack.c.l.b16 %v8032
    %v8072 = vunpack.c.l.b16 %v8033
    %v8073 = vunpack.c.l.b16 %v8034
    %v8074 = vunpack.c.l.b16 %v8035
    %v8075 = vunpack.c.l.b16 %v8036
    %v8076 = vunpack.c.l.b16 %v8037
    %v8077 = vunpack.c.l.b16 %v8038
    %v8078 = vunpack.c.l.b16 %v8039
    %v8079 = vunpack.c.l.b16 %v8040
    %v8080 = vunpack.c.l.b16 %v8041
    %v8081 = vunpack.c.l.b16 %v8042
    %v8082 = vunpack.c.l.b16 %v8043
    %v8083 = vunpack.c.l.b16 %v8044
    %v8084 = vunpack.c.l.b16 %v8045
    %v8085 = vpack.c.b16 %v8070, %v8069
    %v8086 = vpack.c.b16 %v8072, %v8071
    %v8087 = vpack.c.b16 %v8074, %v8073
    %v8088 = vpack.c.b16 %v8076, %v8075
    %v8089 = vpack.c.b16 %v8078, %v8077
    %v8090 = vpack.c.b16 %v8080, %v8079
    %v8091 = vpack.c.b16 %v8082, %v8081
    %v8092 = vpack.c.b16 %v8084, %v8083
    %8101 = vmatprep.subr.bf16.mxu0 0
    %8102 = vmatpush1.bf16.msra.mxu0 %v8085
    %8103 = vmatprep.subr.bf16.mxu0 0
    %8104 = vmatpush1.bf16.msra.mxu0 %v8086
    %8105 = vmatprep.subr.bf16.mxu0 0
    %8106 = vmatpush1.bf16.msra.mxu0 %v8087
    %8107 = vmatprep.subr.bf16.mxu0 0
    %8108 = vmatpush1.bf16.msra.mxu0 %v8088
    %8109 = vmatprep.subr.bf16.mxu0 0
    %8110 = vmatpush1.bf16.msra.mxu0 %v8089
    %8111 = vmatprep.subr.bf16.mxu0 0
    %8112 = vmatpush1.bf16.msra.mxu0 %v8090
    %8113 = vmatprep.subr.bf16.mxu0 0
    %8114 = vmatpush1.bf16.msra.mxu0 %v8091
    %8115 = vmatprep.subr.bf16.mxu0 0
    %8116 = vmatpush1.bf16.msra.mxu0 %v8092
    %8117 = vmatprep.subr.bf16.mxu0 0
    %8118 = vmatpush1.bf16.msra.mxu0 0
    %8119 = vmatprep.subr.bf16.mxu0 0
    %8120 = vmatpush1.bf16.msra.mxu0 0
    %8121 = vmatprep.subr.bf16.mxu0 0
    %8122 = vmatpush1.bf16.msra.mxu0 0
    %8123 = vmatprep.subr.bf16.mxu0 0
    %8124 = vmatpush1.bf16.msra.mxu0 0
    %8125 = vmatprep.subr.bf16.mxu0 0
    %8126 = vmatpush1.bf16.msra.mxu0 0
    %8127 = vmatprep.subr.bf16.mxu0 0
    %8128 = vmatpush1.bf16.msra.mxu0 0
    %8129 = vmatprep.subr.bf16.mxu0 0
    %8130 = vmatpush1.bf16.msra.mxu0 0
    %8131 = vmatprep.subr.bf16.mxu0 0
    %8132 = vmatpush1.bf16.msra.mxu0 0
    %8133 = vmatprep.mubr.bf16.mxu0 0
    %8134 = vmatmul.mubr.bf16.gmra.mrb[0].mxu0 %v8029
    %v8135 = vpop.f32.mrb[0].mxu0
    %v8136 = vadd.f32 %v8051, %v8135
    %v8137 = vpop.f32.mrb[0].mxu0
    %v8138 = vpop.f32.mrb[0].mxu0
    %v8139 = vpop.f32.mrb[0].mxu0
    %8140 = vdwg.mxu0
    %8141 = vst [vmem:[#allocation9] sm:$0x3] %v8136
    // Predicated region
    $region68: #{simple_cnn_forward.1} parent=1 // pred_check
      _
    $region69: #{simple_cnn_forward.1} parent=1 // pred_check_branch
      %8143 = sbr.rel (0) target = $region71
    $region70: #{simple_cnn_forward.1} parent=1 // pred_region
      %s8145 = ssub.s32 32, 32
      %8146 = vsyncadd [#allocation10], %s8145
      %s8148 = sshll.u32 [#allocation9], 4
      %s8149 = int_to_ptr.vmem [resolvable:$true] %s8148
      %8151 = dma.vmem_to_hbm [thread:$0]  %s8149, 32, %s9, [#allocation10]
    $region71: #{simple_cnn_forward.1} parent=1 // pred_fallthru
      _
    // Predicated region
    $region72: #{simple_cnn_forward.1} parent=1 // pred_check
      _
    $region73: #{simple_cnn_forward.1} parent=1 // pred_check_branch
      %8153 = sbr.rel (0) target = $region75
    $region74: #{simple_cnn_forward.1} parent=1 // pred_region
      %8154 = dma.done [#allocation10], 32
    $region75: #{simple_cnn_forward.1} parent=1 // pred_fallthru
      _
    %8155 = vsyncpa [#allocation10], 1
  %8156 = vsyncmov [#allocation8]
  %s8157 = vpop.sfrf %8156
  %p8158 = scmp.eq.s32.totalorder %s8157, 0
  %p8159 = pneg %p8158
  %8161 = shalt.err (%p8159)

</llo_original>
